<compile_context>
chip_gen: v7x
topology: tpu7x:2x2x1
jax: 0.10.0
libtpu: 0.0.40
codegen_flags: <defaults>
</compile_context>

<pallas_src>
import numpy as np
import jax
import jax.numpy as jnp
from jax.experimental import pallas as pl
from jax.experimental.pallas import tpu as pltpu

# ---------------- configuration ----------------
D_IN = 3
D_OUT = 1
HIDDEN = 32
FEAT = 16
HEAD = D_OUT + FEAT          # 17  (sdf | feature)
SKIP_OUT = HIDDEN - D_IN     # 29  (output width of lin1, skip layer follows)
TN_MIN = 128                 # lane-tile granularity for the points axis


def _softplus_beta100(v):
    # torch.nn.Softplus(beta=100): (1/beta)*log(1+exp(beta*x)), linear when beta*x > 20.
    # The un-selected branch may overflow to +inf; jnp.where masks it (no NaN).
    bv = v * 100.0
    return jnp.where(bv > 20.0, v, jnp.log1p(jnp.exp(bv)) * 0.01)


# ---------------- kernel ----------------
def implicit_net_kernel(x_ref, wx_ref, wh_ref, b_ref, out_ref):
    # x_ref : (3, TN)         raw points, points on lanes
    # wx_ref: (64, 3)         [W0 ; W2b/sqrt(2)]   (out, in)
    # wh_ref: (4, 32, 32)     [W1_pad, W2a/sqrt(2)_pad, W3, Whead_pad]  (out, in)
    # b_ref : (5, 32, 1)      [b0, b1_pad, b2, b3, bhead_pad]
    # out_ref: (17, TN)       row 0 = sdf, rows 1..16 = feature vector
    x = x_ref[...]                                                     # (3, TN)

    # lin0 and the x-part of the skip layer in one MXU push
    xw = jnp.dot(wx_ref[...], x, preferred_element_type=jnp.float32)   # (64, TN)

    # lin0 + softplus
    h = _softplus_beta100(xw[:HIDDEN] + b_ref[0])                      # (32, TN)

    # lin1 + softplus (padded to 32 rows; pad rows killed by zero cols of W2a)
    h = _softplus_beta100(
        jnp.dot(wh_ref[0], h, preferred_element_type=jnp.float32) + b_ref[1])

    # skip: cat([h, x]) / sqrt(2) -> lin2, folded as W2a_s @ h + (W2b_s @ x) + b2
    h = _softplus_beta100(
        jnp.dot(wh_ref[1], h, preferred_element_type=jnp.float32)
        + xw[HIDDEN:] + b_ref[2])                                      # (32, TN)

    # lin3 + softplus
    h = _softplus_beta100(
        jnp.dot(wh_ref[2], h, preferred_element_type=jnp.float32) + b_ref[3])

    # fused head: [sdf_linear ; lin4] -> single (17, TN) lane-dense store
    w_head = wh_ref[3][:HEAD, :]                                       # (17, 32)
    b_head = b_ref[4][:HEAD, :]                                        # (17, 1)
    out_ref[...] = (jnp.dot(w_head, h, preferred_element_type=jnp.float32)
                    + b_head)                                          # (17, TN)


# ---------------- parameters ----------------
def make_params(key):
    """Geometric init matching ImplicitNetwork.__init__ (multires=0, skip_in=(2,),
    inside_outside=False, bias=1.0). weight_norm is identity at init.
    Raw weights are stored transposed: (in, out), so y = x @ W + b."""
    ks = jax.random.split(key, 8)
    dims = [D_IN, HIDDEN, HIDDEN, HIDDEN, HIDDEN, FEAT]

    def gi_hidden(k, fan_in, out_dim):
        w = jax.random.normal(k, (out_dim, fan_in), jnp.float32) * (
            np.sqrt(2.0) / np.sqrt(out_dim))
        return w.T, jnp.zeros((1, out_dim), jnp.float32)

    def gi_last(k, fan_in, out_dim):
        mean = np.sqrt(np.pi) / np.sqrt(fan_in)
        w = mean + 1e-4 * jax.random.normal(k, (out_dim, fan_in), jnp.float32)
        return w.T, jnp.full((1, out_dim), -1.0, jnp.float32)

    w0, b0 = gi_hidden(ks[0], dims[0], dims[1])          # (3, 32)
    w1, b1 = gi_hidden(ks[1], dims[1], SKIP_OUT)         # (32, 29)
    w2, b2 = gi_hidden(ks[2], dims[2], dims[3])          # (32, 32), input = [h29 | x3]
    w2a, w2b = w2[:SKIP_OUT, :], w2[SKIP_OUT:, :]        # (29, 32), (3, 32)
    w3, b3 = gi_hidden(ks[3], dims[3], dims[4])          # (32, 32)
    w4, b4 = gi_last(ks[4], dims[4], dims[5])            # (32, 16)
    ws, bs = gi_last(ks[5], dims[4], D_OUT)              # (32, 1)
    return dict(w0=w0, b0=b0, w1=w1, b1=b1, w2a=w2a, w2b=w2b, b2=b2,
                w3=w3, b3=b3, w4=w4, b4=b4, ws=ws, bs=bs)


def pack_params(p):
    """Pack raw (in,out) weights into the kernel's (out,in) lane layout:
    one x-side slab, one hidden-weight slab, one bias slab (scales folded in)."""
    inv_sqrt2 = np.float32(1.0 / np.sqrt(2.0))

    # x-side: lin0 plus the x-branch of the skip layer (1/sqrt(2) folded in)
    wx = jnp.concatenate([p["w0"].T, p["w2b"].T * inv_sqrt2], axis=0)   # (64, 3)

    # hidden weights, zero-padded to (32, 32)
    w1p = jnp.zeros((HIDDEN, HIDDEN), jnp.float32).at[:SKIP_OUT, :].set(p["w1"].T)
    w2a = jnp.zeros((HIDDEN, HIDDEN), jnp.float32).at[:, :SKIP_OUT].set(
        p["w2a"].T * inv_sqrt2)
    w3 = p["w3"].T
    w_head = jnp.concatenate([p["ws"].T, p["w4"].T], axis=0)           # (17, 32)
    w_headp = jnp.zeros((HIDDEN, HIDDEN), jnp.float32).at[:HEAD, :].set(w_head)
    wh = jnp.stack([w1p, w2a, w3, w_headp], axis=0)                    # (4, 32, 32)

    # biases -> (5, 32, 1), padded with zeros
    def col(b):  # b: (1, k)
        return jnp.zeros((HIDDEN,), jnp.float32).at[:b.shape[1]].set(b[0])[:, None]

    b_head = jnp.concatenate([p["bs"], p["b4"]], axis=1)               # (1, 17)
    b = jnp.stack([col(p["b0"]), col(p["b1"]), col(p["b2"]),
                   col(p["b3"]), col(b_head)], axis=0)                 # (5, 32, 1)
    return dict(wx=wx, wh=wh, b=b)


# ---------------- wrapper ----------------
def _pick_tile(n, max_tn):
    # big tiles amortize per-step pipeline overhead; cap at n//2 so the grid
    # has >= 2 steps (v7x has 2 TensorCores sharded over the parallel axis).
    tn = min(max_tn, max(TN_MIN, n // 2))
    tn = max(TN_MIN, (tn // TN_MIN) * TN_MIN)
    while tn > TN_MIN and n % tn != 0:
        tn -= TN_MIN
    if n % tn != 0:       # tiny / odd N fallback: single full-extent block
        tn = n
    return tn


def _full_spec(arr):
    zeros = (0,) * arr.ndim
    return pl.BlockSpec(arr.shape, lambda i, z=zeros: z)


def implicit_network_forward(x, packed, max_tn=2048):
    """x: (N, 3) points. Returns (N, 17) = cat([sdf, feature], -1)."""
    N = x.shape[0]
    tn = _pick_tile(N, max_tn)
    grid = (N // tn,)

    xT = x.T                                # (3, N)   layout plumbing in wrapper
    wx, wh, b = packed["wx"], packed["wh"], packed["b"]

    in_specs = [
        pl.BlockSpec((D_IN, tn), lambda i: (0, i)),
        _full_spec(wx), _full_spec(wh), _full_spec(b),
    ]
    out_specs = pl.BlockSpec((HEAD, tn), lambda i: (0, i))
    out_shape = jax.ShapeDtypeStruct((HEAD, N), jnp.float32)

    out = pl.pallas_call(
        implicit_net_kernel,
        grid_spec=pltpu.PrefetchScalarGridSpec(
            num_scalar_prefetch=0,
            grid=grid,
            in_specs=in_specs,
            out_specs=out_specs,
        ),
        out_shape=out_shape,
        compiler_params=pltpu.CompilerParams(
            dimension_semantics=("parallel",)),
    )(xT, wx, wh, b)

    return out.T                            # (N, 17) — matches torch.cat([sdf, x], -1)


# ---------------- pure-JAX reference ----------------
def reference_forward(x, p):
    def sp(v):
        bv = v * 100.0
        return jnp.where(bv > 20.0, v, jnp.log1p(jnp.exp(bv)) * 0.01)
    h = sp(x @ p["w0"] + p["b0"])
    h = sp(h @ p["w1"] + p["b1"])
    h = jnp.concatenate([h, x], axis=-1) / np.sqrt(2.0)
    w2 = jnp.concatenate([p["w2a"], p["w2b"]], axis=0)
    h = sp(h @ w2 + p["b2"])
    h = sp(h @ p["w3"] + p["b3"])
    sdf = h @ p["ws"] + p["bs"]
    feat = h @ p["w4"] + p["b4"]
    return jnp.concatenate([sdf, feat], axis=-1)


if __name__ == "__main__":
    key = jax.random.PRNGKey(0)
    kx, kp = jax.random.split(key)

    N = 4096                                 # ray-sample batch; tn=2048, grid=(2,)
    x = jax.random.normal(kx, (N, D_IN), jnp.float32)
    raw = make_params(kp)
    packed = pack_params(raw)

    fwd = jax.jit(implicit_network_forward)
    out = fwd(x, packed)
    out = jax.block_until_ready(out)
    assert out.shape == (N, HEAD), out.shape

    ref = reference_forward(x, raw)
    err = float(jnp.max(jnp.abs(out - ref)))
    assert err < 1e-4, f"mismatch vs reference: {err}"

    print("KERNEL_OK")
</pallas_src>

<mosaic_0001>
module attributes {stable_mosaic.version = 11 : i64} {
  func.func @implicit_net_kernel(%arg0: i32, %arg1: memref<3x2048xf32, #tpu.memory_space<vmem>>, %arg2: memref<64x3xf32, #tpu.memory_space<vmem>>, %arg3: memref<4x32x32xf32, #tpu.memory_space<vmem>>, %arg4: memref<5x32x1xf32, #tpu.memory_space<vmem>>, %arg5: memref<17x2048xf32, #tpu.memory_space<vmem>>) attributes {dimension_semantics = [#tpu.dimension_semantics<parallel>], iteration_bounds = array<i64: 2>, scalar_prefetch = 0 : i64, scratch_operands = 0 : i64, tpu.core_type = #tpu.core_type<tc>, window_params = [{transform_indices = @transform_0, window_bounds = array<i64: 3, 2048>}, {pipeline_mode = #tpu.pipeline_mode<synchronous>, transform_indices = @transform_1, window_bounds = array<i64: 64, 3>}, {pipeline_mode = #tpu.pipeline_mode<synchronous>, transform_indices = @transform_2, window_bounds = array<i64: 4, 32, 32>}, {pipeline_mode = #tpu.pipeline_mode<synchronous>, transform_indices = @transform_3, window_bounds = array<i64: 5, 32, 1>}, {transform_indices = @transform_4, window_bounds = array<i64: 17, 2048>}]} {
    %c0 = arith.constant 0 : index
    %c0_0 = arith.constant 0 : index
    %0 = vector.load %arg1[%c0, %c0_0] : memref<3x2048xf32, #tpu.memory_space<vmem>>, vector<3x2048xf32>
    %c0_1 = arith.constant 0 : index
    %c0_2 = arith.constant 0 : index
    %1 = vector.load %arg2[%c0_1, %c0_2] : memref<64x3xf32, #tpu.memory_space<vmem>>, vector<64x3xf32>
    %cst = arith.constant dense<0.000000e+00> : vector<64x2048xf32>
    %2 = tpu.matmul %1, %0, %cst {dimension_numbers = #tpu.dot_dimension_numbers<[1], [0], [0], [1], [0, 0, 1, 1], [], []>} : vector<64x3xf32>, vector<3x2048xf32>, vector<64x2048xf32> -> vector<64x2048xf32>
    %3 = vector.extract_strided_slice %2 {offsets = [0, 0], sizes = [32, 2048], strides = [1, 1]} : vector<64x2048xf32> to vector<32x2048xf32>
    %c0_3 = arith.constant 0 : index
    %c0_4 = arith.constant 0 : index
    %c0_5 = arith.constant 0 : index
    %4 = vector.load %arg4[%c0_3, %c0_4, %c0_5] : memref<5x32x1xf32, #tpu.memory_space<vmem>>, vector<1x32x1xf32>
    %5 = vector.shape_cast %4 : vector<1x32x1xf32> to vector<32x1xf32>
    %6 = vector.broadcast %5 : vector<32x1xf32> to vector<32x2048xf32>
    %7 = arith.addf %3, %6 : vector<32x2048xf32>
    %cst_6 = arith.constant 1.000000e+02 : f32
    %8 = vector.broadcast %cst_6 : f32 to vector<32x2048xf32>
    %9 = arith.mulf %7, %8 : vector<32x2048xf32>
    %cst_7 = arith.constant 2.000000e+01 : f32
    %10 = vector.broadcast %cst_7 : f32 to vector<32x2048xf32>
    %11 = arith.cmpf ogt, %9, %10 : vector<32x2048xf32>
    %12 = math.exp %9 : vector<32x2048xf32>
    %13 = math.log1p %12 : vector<32x2048xf32>
    %cst_8 = arith.constant 0.00999999977 : f32
    %14 = vector.broadcast %cst_8 : f32 to vector<32x2048xf32>
    %15 = arith.mulf %13, %14 : vector<32x2048xf32>
    %16 = arith.select %11, %7, %15 : vector<32x2048xi1>, vector<32x2048xf32>
    %c0_9 = arith.constant 0 : index
    %c0_10 = arith.constant 0 : index
    %c0_11 = arith.constant 0 : index
    %17 = vector.load %arg3[%c0_9, %c0_10, %c0_11] : memref<4x32x32xf32, #tpu.memory_space<vmem>>, vector<1x32x32xf32>
    %18 = vector.shape_cast %17 : vector<1x32x32xf32> to vector<32x32xf32>
    %cst_12 = arith.constant dense<0.000000e+00> : vector<32x2048xf32>
    %19 = tpu.matmul %18, %16, %cst_12 {dimension_numbers = #tpu.dot_dimension_numbers<[1], [0], [0], [1], [0, 0, 1, 1], [], []>} : vector<32x32xf32>, vector<32x2048xf32>, vector<32x2048xf32> -> vector<32x2048xf32>
    %c1 = arith.constant 1 : index
    %c0_13 = arith.constant 0 : index
    %c0_14 = arith.constant 0 : index
    %20 = vector.load %arg4[%c1, %c0_13, %c0_14] : memref<5x32x1xf32, #tpu.memory_space<vmem>>, vector<1x32x1xf32>
    %21 = vector.shape_cast %20 : vector<1x32x1xf32> to vector<32x1xf32>
    %22 = vector.broadcast %21 : vector<32x1xf32> to vector<32x2048xf32>
    %23 = arith.addf %19, %22 : vector<32x2048xf32>
    %cst_15 = arith.constant 1.000000e+02 : f32
    %24 = vector.broadcast %cst_15 : f32 to vector<32x2048xf32>
    %25 = arith.mulf %23, %24 : vector<32x2048xf32>
    %cst_16 = arith.constant 2.000000e+01 : f32
    %26 = vector.broadcast %cst_16 : f32 to vector<32x2048xf32>
    %27 = arith.cmpf ogt, %25, %26 : vector<32x2048xf32>
    %28 = math.exp %25 : vector<32x2048xf32>
    %29 = math.log1p %28 : vector<32x2048xf32>
    %cst_17 = arith.constant 0.00999999977 : f32
    %30 = vector.broadcast %cst_17 : f32 to vector<32x2048xf32>
    %31 = arith.mulf %29, %30 : vector<32x2048xf32>
    %32 = arith.select %27, %23, %31 : vector<32x2048xi1>, vector<32x2048xf32>
    %c1_18 = arith.constant 1 : index
    %c0_19 = arith.constant 0 : index
    %c0_20 = arith.constant 0 : index
    %33 = vector.load %arg3[%c1_18, %c0_19, %c0_20] : memref<4x32x32xf32, #tpu.memory_space<vmem>>, vector<1x32x32xf32>
    %34 = vector.shape_cast %33 : vector<1x32x32xf32> to vector<32x32xf32>
    %cst_21 = arith.constant dense<0.000000e+00> : vector<32x2048xf32>
    %35 = tpu.matmul %34, %32, %cst_21 {dimension_numbers = #tpu.dot_dimension_numbers<[1], [0], [0], [1], [0, 0, 1, 1], [], []>} : vector<32x32xf32>, vector<32x2048xf32>, vector<32x2048xf32> -> vector<32x2048xf32>
    %36 = vector.extract_strided_slice %2 {offsets = [32, 0], sizes = [32, 2048], strides = [1, 1]} : vector<64x2048xf32> to vector<32x2048xf32>
    %37 = arith.addf %35, %36 : vector<32x2048xf32>
    %c2 = arith.constant 2 : index
    %c0_22 = arith.constant 0 : index
    %c0_23 = arith.constant 0 : index
    %38 = vector.load %arg4[%c2, %c0_22, %c0_23] : memref<5x32x1xf32, #tpu.memory_space<vmem>>, vector<1x32x1xf32>
    %39 = vector.shape_cast %38 : vector<1x32x1xf32> to vector<32x1xf32>
    %40 = vector.broadcast %39 : vector<32x1xf32> to vector<32x2048xf32>
    %41 = arith.addf %37, %40 : vector<32x2048xf32>
    %cst_24 = arith.constant 1.000000e+02 : f32
    %42 = vector.broadcast %cst_24 : f32 to vector<32x2048xf32>
    %43 = arith.mulf %41, %42 : vector<32x2048xf32>
    %cst_25 = arith.constant 2.000000e+01 : f32
    %44 = vector.broadcast %cst_25 : f32 to vector<32x2048xf32>
    %45 = arith.cmpf ogt, %43, %44 : vector<32x2048xf32>
    %46 = math.exp %43 : vector<32x2048xf32>
    %47 = math.log1p %46 : vector<32x2048xf32>
    %cst_26 = arith.constant 0.00999999977 : f32
    %48 = vector.broadcast %cst_26 : f32 to vector<32x2048xf32>
    %49 = arith.mulf %47, %48 : vector<32x2048xf32>
    %50 = arith.select %45, %41, %49 : vector<32x2048xi1>, vector<32x2048xf32>
    %c2_27 = arith.constant 2 : index
    %c0_28 = arith.constant 0 : index
    %c0_29 = arith.constant 0 : index
    %51 = vector.load %arg3[%c2_27, %c0_28, %c0_29] : memref<4x32x32xf32, #tpu.memory_space<vmem>>, vector<1x32x32xf32>
    %52 = vector.shape_cast %51 : vector<1x32x32xf32> to vector<32x32xf32>
    %cst_30 = arith.constant dense<0.000000e+00> : vector<32x2048xf32>
    %53 = tpu.matmul %52, %50, %cst_30 {dimension_numbers = #tpu.dot_dimension_numbers<[1], [0], [0], [1], [0, 0, 1, 1], [], []>} : vector<32x32xf32>, vector<32x2048xf32>, vector<32x2048xf32> -> vector<32x2048xf32>
    %c3 = arith.constant 3 : index
    %c0_31 = arith.constant 0 : index
    %c0_32 = arith.constant 0 : index
    %54 = vector.load %arg4[%c3, %c0_31, %c0_32] : memref<5x32x1xf32, #tpu.memory_space<vmem>>, vector<1x32x1xf32>
    %55 = vector.shape_cast %54 : vector<1x32x1xf32> to vector<32x1xf32>
    %56 = vector.broadcast %55 : vector<32x1xf32> to vector<32x2048xf32>
    %57 = arith.addf %53, %56 : vector<32x2048xf32>
    %cst_33 = arith.constant 1.000000e+02 : f32
    %58 = vector.broadcast %cst_33 : f32 to vector<32x2048xf32>
    %59 = arith.mulf %57, %58 : vector<32x2048xf32>
    %cst_34 = arith.constant 2.000000e+01 : f32
    %60 = vector.broadcast %cst_34 : f32 to vector<32x2048xf32>
    %61 = arith.cmpf ogt, %59, %60 : vector<32x2048xf32>
    %62 = math.exp %59 : vector<32x2048xf32>
    %63 = math.log1p %62 : vector<32x2048xf32>
    %cst_35 = arith.constant 0.00999999977 : f32
    %64 = vector.broadcast %cst_35 : f32 to vector<32x2048xf32>
    %65 = arith.mulf %63, %64 : vector<32x2048xf32>
    %66 = arith.select %61, %57, %65 : vector<32x2048xi1>, vector<32x2048xf32>
    %c3_36 = arith.constant 3 : index
    %c0_37 = arith.constant 0 : index
    %c0_38 = arith.constant 0 : index
    %67 = vector.load %arg3[%c3_36, %c0_37, %c0_38] : memref<4x32x32xf32, #tpu.memory_space<vmem>>, vector<1x32x32xf32>
    %68 = vector.shape_cast %67 : vector<1x32x32xf32> to vector<32x32xf32>
    %69 = vector.extract_strided_slice %68 {offsets = [0, 0], sizes = [17, 32], strides = [1, 1]} : vector<32x32xf32> to vector<17x32xf32>
    %c4 = arith.constant 4 : index
    %c0_39 = arith.constant 0 : index
    %c0_40 = arith.constant 0 : index
    %70 = vector.load %arg4[%c4, %c0_39, %c0_40] : memref<5x32x1xf32, #tpu.memory_space<vmem>>, vector<1x32x1xf32>
    %71 = vector.shape_cast %70 : vector<1x32x1xf32> to vector<32x1xf32>
    %72 = vector.extract_strided_slice %71 {offsets = [0, 0], sizes = [17, 1], strides = [1, 1]} : vector<32x1xf32> to vector<17x1xf32>
    %cst_41 = arith.constant dense<0.000000e+00> : vector<17x2048xf32>
    %73 = tpu.matmul %69, %66, %cst_41 {dimension_numbers = #tpu.dot_dimension_numbers<[1], [0], [0], [1], [0, 0, 1, 1], [], []>} : vector<17x32xf32>, vector<32x2048xf32>, vector<17x2048xf32> -> vector<17x2048xf32>
    %74 = vector.broadcast %72 : vector<17x1xf32> to vector<17x2048xf32>
    %75 = arith.addf %73, %74 : vector<17x2048xf32>
    %c0_42 = arith.constant 0 : index
    %c0_43 = arith.constant 0 : index
    %76 = vector.load %arg5[%c0_42, %c0_43] : memref<17x2048xf32, #tpu.memory_space<vmem>>, vector<17x2048xf32>
    tpu.vector_store %arg5[%c0_42, %c0_43], %75 {strides = array<i32>} : memref<17x2048xf32, #tpu.memory_space<vmem>>, vector<17x2048xf32>,
    return
  }
  func.func @transform_0(%arg0: i32) -> (i32, i32) {
    %c0_i32 = arith.constant 0 : i32
    %c0_i32_0 = arith.constant 0 : i32
    return %c0_i32, %arg0 : i32, i32
  }
  func.func @transform_1(%arg0: i32) -> (i32, i32) {
    %c0_i32 = arith.constant 0 : i32
    %c0_i32_0 = arith.constant 0 : i32
    %c0_i32_1 = arith.constant 0 : i32
    return %c0_i32, %c0_i32_0 : i32, i32
  }
  func.func @transform_2(%arg0: i32) -> (i32, i32, i32) {
    %c0_i32 = arith.constant 0 : i32
    %c0_i32_0 = arith.constant 0 : i32
    %c0_i32_1 = arith.constant 0 : i32
    %c0_i32_2 = arith.constant 0 : i32
    return %c0_i32, %c0_i32_0, %c0_i32_1 : i32, i32, i32
  }
  func.func @transform_3(%arg0: i32) -> (i32, i32, i32) {
    %c0_i32 = arith.constant 0 : i32
    %c0_i32_0 = arith.constant 0 : i32
    %c0_i32_1 = arith.constant 0 : i32
    %c0_i32_2 = arith.constant 0 : i32
    return %c0_i32, %c0_i32_0, %c0_i32_1 : i32, i32, i32
  }
  func.func @transform_4(%arg0: i32) -> (i32, i32) {
    %c0_i32 = arith.constant 0 : i32
    %c0_i32_0 = arith.constant 0 : i32
    return %c0_i32, %arg0 : i32, i32
  }
}

</mosaic_0001>

<llo_original>
// kernel: implicit_network_forward.1
$region0: #{implicit_network_forward.1}
  #allocation0 [shape = 'u32[]', space=smem, size = 0x4, offset = 0x4, fixed_abs, tag = 'smem constant byte address 0x4 - core index']
  #allocation1 [shape = 'u32[144,128]{1,0:T(1,128)}', space=vmem, size = 0x12000, scoped, tag = 'internal scratch']
  %s0 = inlined_call_operand.vmem [shape: f32[3,4096], index: 0, kind: input, shape index: {}]
  %s1 = inlined_call_operand.vmem [shape: f32[64,3], index: 1, kind: input, shape index: {}]
  %s2 = inlined_call_operand.hbm [shape: f32[4,32,32], index: 2, kind: input, shape index: {}]
  %s3 = inlined_call_operand.vmem [shape: f32[5,32,1], index: 3, kind: input, shape index: {}]
  %s4 = inlined_call_operand.hbm [shape: f32[17,4096], index: 4, kind: output, shape index: {}]
  %s5 = sld [smem:[#allocation0]]
  $region53: #{implicit_network_forward.1} parent=0
    _
  %s7 = ssub.s32 1, %s5
  %s8 = scalar_select 0, %s7, %s5
  $region1: #{implicit_network_forward.1} parent=0
    #allocation2 [shape = 'u8[65536]{0}', space=vmem, size = 0x10000, scoped, tag = 'input window, operand 2, single buffered']
    #allocation3 [shape = 's32[2]{0}', space=sflag, size = 0x8, scoped, tag = 'scoped memory for implicit_network_forward.1']
    #allocation4 [shape = 's32[2]{0}', space=sflag, size = 0x8, scoped, tag = 'scoped memory for implicit_network_forward.1']
    #allocation5 [shape = 'u8[393216]{0}', space=vmem, size = 0x60000, scoped, tag = 'output window, operand 0']
    %9 = vsyncpa [#allocation3], 0
    %10 = vsyncpa [#allocation4], 0
    %s11 = scalar_lea.sflag [#allocation4], 1
    %12 = vsyncpa %s11, 0
    loop: start=0, step=1, limit=4
    $region2: #{implicit_network_forward.1} parent=1 // loop_pre_header
      _
    $region3: #{implicit_network_forward.1} parent=1 // loop_header
      %s14 = sphi 0, %s18
      %p15 = scmp.ge.s32.totalorder %s14, 4
      %s24 = sphi 0, %s26
      %s27 = sphi 0, %s24
      %s28 = sphi 0, %s27
      %s44 = sphi 0, %s28
      %s48 = sphi 0, %s48
      %s50 = sphi 0, %s48
      %s51 = sphi 0, %s50
      %s65 = sphi 0, %s51
      %s69 = sphi 0, %s69
      %s71 = sphi 0, %s69
      %s72 = sphi 0, %s71
      %s86 = sphi 0, %s72
      %s90 = sphi 0, %s90
      %s92 = sphi 0, %s90
      %s93 = sphi 0, %s92
      %s107 = sphi 0, %s93
      %s113 = sphi 0, %s115
      %s116 = sphi 0, %s113
      %s117 = sphi 0, %s116
      %s133 = sphi 0, %s117
    $region4: #{implicit_network_forward.1} parent=1 // loop_header_branch
      %17 = sbr.rel (%p15) target = $region8
    $region5: #{implicit_network_forward.1} parent=1 // loop_body
      %s19 = ssub.s32 %s14, 1
      %s20 = ssub.s32 %s14, 2
      %s21 = sadd.s32 %s14, 1
      %s22 = ssub.s32 %s14, %s21
      %p23 = scmp.eq.s32.totalorder %s22, 0
      %s25 = sadd.s32 %s24, 1
      %s26 = scalar_select %p23, %s24, %s25
      %p29 = pneg %p23
      %p30 = scmp.eq.s32.totalorder %s14, 1
      %p31 = por %p29, %p30
      %p32 = scmp.ne.s32.totalorder %s24, %s27
      %p33 = scmp.eq.s32.totalorder %s14, 0
      %p34 = por %p32, %p33
      %p35 = scmp.ne.s32.totalorder %s24, %s27
      %p36 = scmp.eq.s32.totalorder %s19, 1
      %p37 = por %p35, %p36
      %p38 = scmp.ne.s32.totalorder %s27, %s28
      %p39 = scmp.eq.s32.totalorder %s19, 0
      %p40 = por %p38, %p39
      %p41 = scmp.ne.s32.totalorder %s27, %s28
      %p42 = scmp.eq.s32.totalorder %s20, 1
      %p43 = por %p41, %p42
      %p45 = scmp.ne.s32.totalorder %s28, %s44
      %p46 = scmp.eq.s32.totalorder %s20, 0
      %p47 = por %p45, %p46
      %s49 = sadd.s32 %s48, 1
      %p52 = scmp.eq.s32.totalorder %s14, 1
      %p53 = scmp.ne.s32.totalorder %s48, %s50
      %p54 = scmp.eq.s32.totalorder %s14, 0
      %p55 = por %p53, %p54
      %p56 = scmp.ne.s32.totalorder %s48, %s50
      %p57 = scmp.eq.s32.totalorder %s19, 1
      %p58 = por %p56, %p57
      %p59 = scmp.ne.s32.totalorder %s50, %s51
      %p60 = scmp.eq.s32.totalorder %s19, 0
      %p61 = por %p59, %p60
      %p62 = scmp.ne.s32.totalorder %s50, %s51
      %p63 = scmp.eq.s32.totalorder %s20, 1
      %p64 = por %p62, %p63
      %p66 = scmp.ne.s32.totalorder %s51, %s65
      %p67 = scmp.eq.s32.totalorder %s20, 0
      %p68 = por %p66, %p67
      %s70 = sadd.s32 %s69, 1
      %p73 = scmp.eq.s32.totalorder %s14, 1
      %p74 = scmp.ne.s32.totalorder %s69, %s71
      %p75 = scmp.eq.s32.totalorder %s14, 0
      %p76 = por %p74, %p75
      %p77 = scmp.ne.s32.totalorder %s69, %s71
      %p78 = scmp.eq.s32.totalorder %s19, 1
      %p79 = por %p77, %p78
      %p80 = scmp.ne.s32.totalorder %s71, %s72
      %p81 = scmp.eq.s32.totalorder %s19, 0
      %p82 = por %p80, %p81
      %p83 = scmp.ne.s32.totalorder %s71, %s72
      %p84 = scmp.eq.s32.totalorder %s20, 1
      %p85 = por %p83, %p84
      %p87 = scmp.ne.s32.totalorder %s72, %s86
      %p88 = scmp.eq.s32.totalorder %s20, 0
      %p89 = por %p87, %p88
      %s91 = sadd.s32 %s90, 1
      %p94 = scmp.eq.s32.totalorder %s14, 1
      %p95 = scmp.ne.s32.totalorder %s90, %s92
      %p96 = scmp.eq.s32.totalorder %s14, 0
      %p97 = por %p95, %p96
      %p98 = scmp.ne.s32.totalorder %s90, %s92
      %p99 = scmp.eq.s32.totalorder %s19, 1
      %p100 = por %p98, %p99
      %p101 = scmp.ne.s32.totalorder %s92, %s93
      %p102 = scmp.eq.s32.totalorder %s19, 0
      %p103 = por %p101, %p102
      %p104 = scmp.ne.s32.totalorder %s92, %s93
      %p105 = scmp.eq.s32.totalorder %s20, 1
      %p106 = por %p104, %p105
      %p108 = scmp.ne.s32.totalorder %s93, %s107
      %p109 = scmp.eq.s32.totalorder %s20, 0
      %p110 = por %p108, %p109
      %s111 = ssub.s32 %s14, %s21
      %p112 = scmp.eq.s32.totalorder %s111, 0
      %s114 = sadd.s32 %s113, 1
      %s115 = scalar_select %p112, %s113, %s114
      %p118 = pneg %p112
      %p119 = scmp.eq.s32.totalorder %s14, 1
      %p120 = por %p118, %p119
      %p121 = scmp.ne.s32.totalorder %s113, %s116
      %p122 = scmp.eq.s32.totalorder %s14, 0
      %p123 = por %p121, %p122
      %p124 = scmp.ne.s32.totalorder %s113, %s116
      %p125 = scmp.eq.s32.totalorder %s19, 1
      %p126 = por %p124, %p125
      %p127 = scmp.ne.s32.totalorder %s116, %s117
      %p128 = scmp.eq.s32.totalorder %s19, 0
      %p129 = por %p127, %p128
      %p130 = scmp.ne.s32.totalorder %s116, %s117
      %p131 = scmp.eq.s32.totalorder %s20, 1
      %p132 = por %p130, %p131
      %p134 = scmp.ne.s32.totalorder %s117, %s133
      %p135 = scmp.eq.s32.totalorder %s20, 0
      %p136 = por %p134, %p135
      %p137 = scmp.le.s32.totalorder 1, %s14
      %p138 = scmp.lt.s32.totalorder %s14, 3
      %p139 = pnand %p137, %p138
      %p140 = pneg %p139
      // Predicated region
      $region9: #{implicit_network_forward.1} parent=5 // pred_check
        _
      $region10: #{implicit_network_forward.1} parent=5 // pred_check_branch
        %142 = sbr.rel (%p139) target = $region12
      $region11: #{implicit_network_forward.1} parent=5 // pred_region
        %s143 = ssub.s32 %s14, 1
        // Predicated region
        $region13: #{implicit_network_forward.1} parent=11 // pred_check
          %p144 = pneg %p61
        $region14: #{implicit_network_forward.1} parent=11 // pred_check_branch
          %146 = sbr.rel (%p144) target = $region16
        $region15: #{implicit_network_forward.1} parent=11 // pred_region
          _
        $region16: #{implicit_network_forward.1} parent=11 // pred_fallthru
          _
        // Predicated region
        $region17: #{implicit_network_forward.1} parent=11 // pred_check
          %p147 = pneg %p82
        $region18: #{implicit_network_forward.1} parent=11 // pred_check_branch
          %149 = sbr.rel (%p147) target = $region20
        $region19: #{implicit_network_forward.1} parent=11 // pred_region
          %s151 = ssub.s32 2048, 2048
          %152 = vsyncadd [#allocation3], %s151
          %s153 = sshll.u32 [#allocation2], 4
          %s154 = int_to_ptr.vmem [resolvable:$true] %s153
          %159 = dma.hbm_to_vmem [thread:$0]  %s2, 2048, %s154, [#allocation3], 128, 128, 8
        $region20: #{implicit_network_forward.1} parent=11 // pred_fallthru
          _
        // Predicated region
        $region21: #{implicit_network_forward.1} parent=11 // pred_check
          %p160 = pneg %p103
        $region22: #{implicit_network_forward.1} parent=11 // pred_check_branch
          %162 = sbr.rel (%p160) target = $region24
        $region23: #{implicit_network_forward.1} parent=11 // pred_region
          _
        $region24: #{implicit_network_forward.1} parent=11 // pred_fallthru
          _
      $region12: #{implicit_network_forward.1} parent=5 // pred_fallthru
        _
      %p163 = scmp.lt.s32.totalorder %s14, 2
      // Predicated region
      $region25: #{implicit_network_forward.1} parent=5 // pred_check
        %p164 = pneg %p163
      $region26: #{implicit_network_forward.1} parent=5 // pred_check_branch
        %166 = sbr.rel (%p164) target = $region28
      $region27: #{implicit_network_forward.1} parent=5 // pred_region
        // Predicated region
        $region29: #{implicit_network_forward.1} parent=27 // pred_check
          %p167 = pneg %p34
        $region30: #{implicit_network_forward.1} parent=27 // pred_check_branch
          %169 = sbr.rel (%p167) target = $region32
        $region31: #{implicit_network_forward.1} parent=27 // pred_region
          %s170 = smul.u32 16, %s14
          %p171 = scmp.lt.s32.totalorder %s170, 31
          %s172 = scalar_select %p171, %s170, 31
          %s173 = smul.addr %s172, 4
          %s174 = scalar_lea.vmem %s0, %s173
          %s175 = smul.u32 16, %s14
        $region32: #{implicit_network_forward.1} parent=27 // pred_fallthru
          _
      $region28: #{implicit_network_forward.1} parent=5 // pred_fallthru
        _
      %p176 = scmp.le.s32.totalorder 1, %s14
      %p177 = scmp.lt.s32.totalorder %s14, 3
      %p178 = pnand %p176, %p177
      %p179 = pneg %p178
      // Predicated region
      $region33: #{implicit_network_forward.1} parent=5 // pred_check
        _
      $region34: #{implicit_network_forward.1} parent=5 // pred_check_branch
        %181 = sbr.rel (%p178) target = $region36
      $region35: #{implicit_network_forward.1} parent=5 // pred_region
        %s182 = ssub.s32 %s14, 1
        // Predicated region
        $region37: #{implicit_network_forward.1} parent=35 // pred_check
          %p183 = pneg %p82
        $region38: #{implicit_network_forward.1} parent=35 // pred_check_branch
          %185 = sbr.rel (%p183) target = $region40
        $region39: #{implicit_network_forward.1} parent=35 // pred_region
          %186 = dma.done [#allocation3], 2048
        $region40: #{implicit_network_forward.1} parent=35 // pred_fallthru
          _
        %s187 = smul.u32 16, %s19
        %p188 = scmp.lt.s32.totalorder %s187, 31
        %s189 = scalar_select %p188, %s187, 31
        %s190 = smul.addr %s189, 4
        %s191 = scalar_lea.vmem %s0, %s190
        %p192 = pneg %p40
        %p193 = pneg %p37
        %p194 = pneg %p61
        %p195 = pneg %p58
        %p196 = pneg %p82
        %p197 = pneg %p79
        %p198 = pneg %p103
        %p199 = pneg %p100
        %p200 = pneg %p129
        %p201 = pneg %p126
        %s202 = sand.u32 %s116, 1
        %s203 = scalar_lea.sflag [#allocation4], %s202
        %s204 = sand.u32 %s116, 1
        %s205 = smul.addr %s204, 384
        %s206 = scalar_lea.vmem [#allocation5], %s205
        %s207 = smul.u32 16, %s19
        %p208 = scmp.lt.s32.totalorder %s207, 31
        %s209 = scalar_select %p208, %s207, 31
        %s210 = smul.addr %s209, 4
        %s211 = scalar_lea.vmem %s0, %s210
        %s212 = smul.u32 16, %s19
        %s213 = smul.u32 16, %s19
        %v214 = vld [vmem:[%s211] sm:$0x77]
        %v215 = vld [vmem:[%s211 + $0x8] sm:$0x77]
        %v216 = vld [vmem:[%s211 + $0x10] sm:$0x77]
        %v217 = vld [vmem:[%s211 + $0x18] sm:$0x77]
        %v218 = vld [vmem:[%s211 + $0x20] sm:$0x77]
        %v219 = vld [vmem:[%s211 + $0x28] sm:$0x77]
        %v220 = vld [vmem:[%s211 + $0x30] sm:$0x77]
        %v221 = vld [vmem:[%s211 + $0x38] sm:$0x77]
        %v222 = vld [vmem:[%s1] sm:$0xff]
        %v223 = vld [vmem:[%s1 + $0x8] sm:$0xff]
        %v224 = vld [vmem:[%s1 + $0x10] sm:$0xff]
        %v225 = vld [vmem:[%s1 + $0x18] sm:$0xff]
        %v226 = vld [vmem:[%s1 + $0x20] sm:$0xff]
        %v227 = vld [vmem:[%s1 + $0x28] sm:$0xff]
        %v228 = vld [vmem:[%s1 + $0x30] sm:$0xff]
        %v229 = vld [vmem:[%s1 + $0x38] sm:$0xff]
        %v238 = vcombine.high %v214, %v214
        %v239 = vcombine.high %v215, %v215
        %v240 = vcombine.high %v216, %v216
        %v241 = vcombine.high %v217, %v217
        %v242 = vcombine.high %v218, %v218
        %v243 = vcombine.high %v219, %v219
        %v244 = vcombine.high %v220, %v220
        %v245 = vcombine.high %v221, %v221
        %vm246 = vcmask 23552
        %v248 = vsel %vm246, %v222, 0
        %v251 = vsel %vm246, %v223, 0
        %v254 = vsel %vm246, %v224, 0
        %v257 = vsel %vm246, %v225, 0
        %v260 = vsel %vm246, %v226, 0
        %v263 = vsel %vm246, %v227, 0
        %v266 = vsel %vm246, %v228, 0
        %v269 = vsel %vm246, %v229, 0
        %vm271 = vcmask 1042432
        %v272 = vsel %vm271, %v214, 0
        %v274 = vsel %vm271, %v238, 0
        %v276 = vsel %vm271, %v215, 0
        %v278 = vsel %vm271, %v239, 0
        %v280 = vsel %vm271, %v216, 0
        %v282 = vsel %vm271, %v240, 0
        %v284 = vsel %vm271, %v217, 0
        %v286 = vsel %vm271, %v241, 0
        %v288 = vsel %vm271, %v218, 0
        %v290 = vsel %vm271, %v242, 0
        %v292 = vsel %vm271, %v219, 0
        %v294 = vsel %vm271, %v243, 0
        %v296 = vsel %vm271, %v220, 0
        %v298 = vsel %vm271, %v244, 0
        %v300 = vsel %vm271, %v221, 0
        %v302 = vsel %vm271, %v245, 0
        %304 = vmatprep.subr.mxu0 %v274
        %305 = vmatpush1.msra.mxu0 %v272
        %306 = vmatprep.subr.mxu0 0.0
        %307 = vmatpush1.msra.mxu0 0.0
        %308 = vmatprep.subr.mxu0 0.0
        %309 = vmatpush1.msra.mxu0 0.0
        %310 = vmatprep.subr.mxu0 0.0
        %311 = vmatpush1.msra.mxu0 0.0
        %312 = vmatprep.subr.mxu0 0.0
        %313 = vmatpush1.msra.mxu0 0.0
        %314 = vmatprep.subr.mxu0 0.0
        %315 = vmatpush1.msra.mxu0 0.0
        %316 = vmatprep.subr.mxu0 0.0
        %317 = vmatpush1.msra.mxu0 0.0
        %318 = vmatprep.subr.mxu0 0.0
        %319 = vmatpush1.msra.mxu0 0.0
        %320 = vmatprep.subr.mxu0 0.0
        %321 = vmatpush1.msra.mxu0 0.0
        %322 = vmatprep.subr.mxu0 0.0
        %323 = vmatpush1.msra.mxu0 0.0
        %324 = vmatprep.subr.mxu0 0.0
        %325 = vmatpush1.msra.mxu0 0.0
        %326 = vmatprep.subr.mxu0 0.0
        %327 = vmatpush1.msra.mxu0 0.0
        %328 = vmatprep.subr.mxu0 0.0
        %329 = vmatpush1.msra.mxu0 0.0
        %330 = vmatprep.subr.mxu0 0.0
        %331 = vmatpush1.msra.mxu0 0.0
        %332 = vmatprep.subr.mxu0 0.0
        %333 = vmatpush1.msra.mxu0 0.0
        %334 = vmatprep.subr.mxu0 0.0
        %335 = vmatpush1.msra.mxu0 0.0
        %336 = vmatprep.subr.mxu0 0.0
        %337 = vmatpush1.msra.mxu0 0.0
        %338 = vmatprep.subr.mxu0 0.0
        %339 = vmatpush1.msra.mxu0 0.0
        %340 = vmatprep.subr.mxu0 0.0
        %341 = vmatpush1.msra.mxu0 0.0
        %342 = vmatprep.subr.mxu0 0.0
        %343 = vmatpush1.msra.mxu0 0.0
        %344 = vmatprep.subr.mxu0 0.0
        %345 = vmatpush1.msra.mxu0 0.0
        %346 = vmatprep.subr.mxu0 0.0
        %347 = vmatpush1.msra.mxu0 0.0
        %348 = vmatprep.subr.mxu0 0.0
        %349 = vmatpush1.msra.mxu0 0.0
        %350 = vmatprep.subr.mxu0 0.0
        %351 = vmatpush1.msra.mxu0 0.0
        %352 = vmatprep.subr.mxu0 0.0
        %353 = vmatpush1.msra.mxu0 0.0
        %354 = vmatprep.subr.mxu0 0.0
        %355 = vmatpush1.msra.mxu0 0.0
        %356 = vmatprep.subr.mxu0 0.0
        %357 = vmatpush1.msra.mxu0 0.0
        %358 = vmatprep.subr.mxu0 0.0
        %359 = vmatpush1.msra.mxu0 0.0
        %360 = vmatprep.subr.mxu0 0.0
        %361 = vmatpush1.msra.mxu0 0.0
        %362 = vmatprep.subr.mxu0 0.0
        %363 = vmatpush1.msra.mxu0 0.0
        %364 = vmatprep.subr.mxu0 0.0
        %365 = vmatpush1.msra.mxu0 0.0
        %366 = vmatprep.subr.mxu0 0.0
        %367 = vmatpush1.msra.mxu0 0.0
        %368 = vmatprep.mubr.f32.mxu0 0.0
        %369 = vmatmul.mubr.f32.gmra.mrb[0].mxu0 %v248
        %v370 = vpop.f32.mrb[0].mxu0
        %v371 = vadd.f32 0.0, %v370
        %v372 = vpop.f32.mrb[0].mxu0
        %v373 = vadd.f32 0.0, %v372
        %374 = vmatprep.mubr.f32.mxu0 0.0
        %375 = vmatmul.mubr.f32.gmra.mrb[0].mxu0 %v251
        %v376 = vpop.f32.mrb[0].mxu0
        %v377 = vadd.f32 0.0, %v376
        %v378 = vpop.f32.mrb[0].mxu0
        %v379 = vadd.f32 0.0, %v378
        %380 = vmatprep.mubr.f32.mxu0 0.0
        %381 = vmatmul.mubr.f32.gmra.mrb[0].mxu0 %v254
        %v382 = vpop.f32.mrb[0].mxu0
        %v383 = vadd.f32 0.0, %v382
        %v384 = vpop.f32.mrb[0].mxu0
        %v385 = vadd.f32 0.0, %v384
        %386 = vmatprep.mubr.f32.mxu0 0.0
        %387 = vmatmul.mubr.f32.gmra.mrb[0].mxu0 %v257
        %v388 = vpop.f32.mrb[0].mxu0
        %v389 = vadd.f32 0.0, %v388
        %v390 = vpop.f32.mrb[0].mxu0
        %v391 = vadd.f32 0.0, %v390
        %392 = vmatprep.mubr.f32.mxu0 0.0
        %393 = vmatmul.mubr.f32.gmra.mrb[0].mxu0 %v260
        %v394 = vpop.f32.mrb[0].mxu0
        %v395 = vadd.f32 0.0, %v394
        %v396 = vpop.f32.mrb[0].mxu0
        %v397 = vadd.f32 0.0, %v396
        %398 = vmatprep.mubr.f32.mxu0 0.0
        %399 = vmatmul.mubr.f32.gmra.mrb[0].mxu0 %v263
        %v400 = vpop.f32.mrb[0].mxu0
        %v401 = vadd.f32 0.0, %v400
        %v402 = vpop.f32.mrb[0].mxu0
        %v403 = vadd.f32 0.0, %v402
        %404 = vmatprep.mubr.f32.mxu0 0.0
        %405 = vmatmul.mubr.f32.gmra.mrb[0].mxu0 %v266
        %v406 = vpop.f32.mrb[0].mxu0
        %v407 = vadd.f32 0.0, %v406
        %v408 = vpop.f32.mrb[0].mxu0
        %v409 = vadd.f32 0.0, %v408
        %410 = vmatprep.mubr.f32.mxu0 0.0
        %411 = vmatmul.mubr.f32.gmra.mrb[0].mxu0 %v269
        %v412 = vpop.f32.mrb[0].mxu0
        %v413 = vadd.f32 0.0, %v412
        %v414 = vpop.f32.mrb[0].mxu0
        %v415 = vadd.f32 0.0, %v414
        %416 = vdwg.mxu0
        %417 = vmatprep.subr.mxu0 %v278
        %418 = vmatpush1.msra.mxu0 %v276
        %419 = vmatprep.subr.mxu0 0.0
        %420 = vmatpush1.msra.mxu0 0.0
        %421 = vmatprep.subr.mxu0 0.0
        %422 = vmatpush1.msra.mxu0 0.0
        %423 = vmatprep.subr.mxu0 0.0
        %424 = vmatpush1.msra.mxu0 0.0
        %425 = vmatprep.subr.mxu0 0.0
        %426 = vmatpush1.msra.mxu0 0.0
        %427 = vmatprep.subr.mxu0 0.0
        %428 = vmatpush1.msra.mxu0 0.0
        %429 = vmatprep.subr.mxu0 0.0
        %430 = vmatpush1.msra.mxu0 0.0
        %431 = vmatprep.subr.mxu0 0.0
        %432 = vmatpush1.msra.mxu0 0.0
        %433 = vmatprep.subr.mxu0 0.0
        %434 = vmatpush1.msra.mxu0 0.0
        %435 = vmatprep.subr.mxu0 0.0
        %436 = vmatpush1.msra.mxu0 0.0
        %437 = vmatprep.subr.mxu0 0.0
        %438 = vmatpush1.msra.mxu0 0.0
        %439 = vmatprep.subr.mxu0 0.0
        %440 = vmatpush1.msra.mxu0 0.0
        %441 = vmatprep.subr.mxu0 0.0
        %442 = vmatpush1.msra.mxu0 0.0
        %443 = vmatprep.subr.mxu0 0.0
        %444 = vmatpush1.msra.mxu0 0.0
        %445 = vmatprep.subr.mxu0 0.0
        %446 = vmatpush1.msra.mxu0 0.0
        %447 = vmatprep.subr.mxu0 0.0
        %448 = vmatpush1.msra.mxu0 0.0
        %449 = vmatprep.subr.mxu0 0.0
        %450 = vmatpush1.msra.mxu0 0.0
        %451 = vmatprep.subr.mxu0 0.0
        %452 = vmatpush1.msra.mxu0 0.0
        %453 = vmatprep.subr.mxu0 0.0
        %454 = vmatpush1.msra.mxu0 0.0
        %455 = vmatprep.subr.mxu0 0.0
        %456 = vmatpush1.msra.mxu0 0.0
        %457 = vmatprep.subr.mxu0 0.0
        %458 = vmatpush1.msra.mxu0 0.0
        %459 = vmatprep.subr.mxu0 0.0
        %460 = vmatpush1.msra.mxu0 0.0
        %461 = vmatprep.subr.mxu0 0.0
        %462 = vmatpush1.msra.mxu0 0.0
        %463 = vmatprep.subr.mxu0 0.0
        %464 = vmatpush1.msra.mxu0 0.0
        %465 = vmatprep.subr.mxu0 0.0
        %466 = vmatpush1.msra.mxu0 0.0
        %467 = vmatprep.subr.mxu0 0.0
        %468 = vmatpush1.msra.mxu0 0.0
        %469 = vmatprep.subr.mxu0 0.0
        %470 = vmatpush1.msra.mxu0 0.0
        %471 = vmatprep.subr.mxu0 0.0
        %472 = vmatpush1.msra.mxu0 0.0
        %473 = vmatprep.subr.mxu0 0.0
        %474 = vmatpush1.msra.mxu0 0.0
        %475 = vmatprep.subr.mxu0 0.0
        %476 = vmatpush1.msra.mxu0 0.0
        %477 = vmatprep.subr.mxu0 0.0
        %478 = vmatpush1.msra.mxu0 0.0
        %479 = vmatprep.subr.mxu0 0.0
        %480 = vmatpush1.msra.mxu0 0.0
        %481 = vmatprep.mubr.f32.mxu0 0.0
        %482 = vmatmul.mubr.f32.gmra.mrb[0].mxu0 %v248
        %v483 = vpop.f32.mrb[0].mxu0
        %v484 = vadd.f32 0.0, %v483
        %v485 = vpop.f32.mrb[0].mxu0
        %v486 = vadd.f32 0.0, %v485
        %487 = vmatprep.mubr.f32.mxu0 0.0
        %488 = vmatmul.mubr.f32.gmra.mrb[0].mxu0 %v251
        %v489 = vpop.f32.mrb[0].mxu0
        %v490 = vadd.f32 0.0, %v489
        %v491 = vpop.f32.mrb[0].mxu0
        %v492 = vadd.f32 0.0, %v491
        %493 = vmatprep.mubr.f32.mxu0 0.0
        %494 = vmatmul.mubr.f32.gmra.mrb[0].mxu0 %v254
        %v495 = vpop.f32.mrb[0].mxu0
        %v496 = vadd.f32 0.0, %v495
        %v497 = vpop.f32.mrb[0].mxu0
        %v498 = vadd.f32 0.0, %v497
        %499 = vmatprep.mubr.f32.mxu0 0.0
        %500 = vmatmul.mubr.f32.gmra.mrb[0].mxu0 %v257
        %v501 = vpop.f32.mrb[0].mxu0
        %v502 = vadd.f32 0.0, %v501
        %v503 = vpop.f32.mrb[0].mxu0
        %v504 = vadd.f32 0.0, %v503
        %505 = vmatprep.mubr.f32.mxu0 0.0
        %506 = vmatmul.mubr.f32.gmra.mrb[0].mxu0 %v260
        %v507 = vpop.f32.mrb[0].mxu0
        %v508 = vadd.f32 0.0, %v507
        %v509 = vpop.f32.mrb[0].mxu0
        %v510 = vadd.f32 0.0, %v509
        %511 = vmatprep.mubr.f32.mxu0 0.0
        %512 = vmatmul.mubr.f32.gmra.mrb[0].mxu0 %v263
        %v513 = vpop.f32.mrb[0].mxu0
        %v514 = vadd.f32 0.0, %v513
        %v515 = vpop.f32.mrb[0].mxu0
        %v516 = vadd.f32 0.0, %v515
        %517 = vmatprep.mubr.f32.mxu0 0.0
        %518 = vmatmul.mubr.f32.gmra.mrb[0].mxu0 %v266
        %v519 = vpop.f32.mrb[0].mxu0
        %v520 = vadd.f32 0.0, %v519
        %v521 = vpop.f32.mrb[0].mxu0
        %v522 = vadd.f32 0.0, %v521
        %523 = vmatprep.mubr.f32.mxu0 0.0
        %524 = vmatmul.mubr.f32.gmra.mrb[0].mxu0 %v269
        %v525 = vpop.f32.mrb[0].mxu0
        %v526 = vadd.f32 0.0, %v525
        %v527 = vpop.f32.mrb[0].mxu0
        %v528 = vadd.f32 0.0, %v527
        %529 = vdwg.mxu0
        %530 = vmatprep.subr.mxu0 %v282
        %531 = vmatpush1.msra.mxu0 %v280
        %532 = vmatprep.subr.mxu0 0.0
        %533 = vmatpush1.msra.mxu0 0.0
        %534 = vmatprep.subr.mxu0 0.0
        %535 = vmatpush1.msra.mxu0 0.0
        %536 = vmatprep.subr.mxu0 0.0
        %537 = vmatpush1.msra.mxu0 0.0
        %538 = vmatprep.subr.mxu0 0.0
        %539 = vmatpush1.msra.mxu0 0.0
        %540 = vmatprep.subr.mxu0 0.0
        %541 = vmatpush1.msra.mxu0 0.0
        %542 = vmatprep.subr.mxu0 0.0
        %543 = vmatpush1.msra.mxu0 0.0
        %544 = vmatprep.subr.mxu0 0.0
        %545 = vmatpush1.msra.mxu0 0.0
        %546 = vmatprep.subr.mxu0 0.0
        %547 = vmatpush1.msra.mxu0 0.0
        %548 = vmatprep.subr.mxu0 0.0
        %549 = vmatpush1.msra.mxu0 0.0
        %550 = vmatprep.subr.mxu0 0.0
        %551 = vmatpush1.msra.mxu0 0.0
        %552 = vmatprep.subr.mxu0 0.0
        %553 = vmatpush1.msra.mxu0 0.0
        %554 = vmatprep.subr.mxu0 0.0
        %555 = vmatpush1.msra.mxu0 0.0
        %556 = vmatprep.subr.mxu0 0.0
        %557 = vmatpush1.msra.mxu0 0.0
        %558 = vmatprep.subr.mxu0 0.0
        %559 = vmatpush1.msra.mxu0 0.0
        %560 = vmatprep.subr.mxu0 0.0
        %561 = vmatpush1.msra.mxu0 0.0
        %562 = vmatprep.subr.mxu0 0.0
        %563 = vmatpush1.msra.mxu0 0.0
        %564 = vmatprep.subr.mxu0 0.0
        %565 = vmatpush1.msra.mxu0 0.0
        %566 = vmatprep.subr.mxu0 0.0
        %567 = vmatpush1.msra.mxu0 0.0
        %568 = vmatprep.subr.mxu0 0.0
        %569 = vmatpush1.msra.mxu0 0.0
        %570 = vmatprep.subr.mxu0 0.0
        %571 = vmatpush1.msra.mxu0 0.0
        %572 = vmatprep.subr.mxu0 0.0
        %573 = vmatpush1.msra.mxu0 0.0
        %574 = vmatprep.subr.mxu0 0.0
        %575 = vmatpush1.msra.mxu0 0.0
        %576 = vmatprep.subr.mxu0 0.0
        %577 = vmatpush1.msra.mxu0 0.0
        %578 = vmatprep.subr.mxu0 0.0
        %579 = vmatpush1.msra.mxu0 0.0
        %580 = vmatprep.subr.mxu0 0.0
        %581 = vmatpush1.msra.mxu0 0.0
        %582 = vmatprep.subr.mxu0 0.0
        %583 = vmatpush1.msra.mxu0 0.0
        %584 = vmatprep.subr.mxu0 0.0
        %585 = vmatpush1.msra.mxu0 0.0
        %586 = vmatprep.subr.mxu0 0.0
        %587 = vmatpush1.msra.mxu0 0.0
        %588 = vmatprep.subr.mxu0 0.0
        %589 = vmatpush1.msra.mxu0 0.0
        %590 = vmatprep.subr.mxu0 0.0
        %591 = vmatpush1.msra.mxu0 0.0
        %592 = vmatprep.subr.mxu0 0.0
        %593 = vmatpush1.msra.mxu0 0.0
        %594 = vmatprep.mubr.f32.mxu0 0.0
        %595 = vmatmul.mubr.f32.gmra.mrb[0].mxu0 %v248
        %v596 = vpop.f32.mrb[0].mxu0
        %v597 = vadd.f32 0.0, %v596
        %v598 = vpop.f32.mrb[0].mxu0
        %v599 = vadd.f32 0.0, %v598
        %600 = vmatprep.mubr.f32.mxu0 0.0
        %601 = vmatmul.mubr.f32.gmra.mrb[0].mxu0 %v251
        %v602 = vpop.f32.mrb[0].mxu0
        %v603 = vadd.f32 0.0, %v602
        %v604 = vpop.f32.mrb[0].mxu0
        %v605 = vadd.f32 0.0, %v604
        %606 = vmatprep.mubr.f32.mxu0 0.0
        %607 = vmatmul.mubr.f32.gmra.mrb[0].mxu0 %v254
        %v608 = vpop.f32.mrb[0].mxu0
        %v609 = vadd.f32 0.0, %v608
        %v610 = vpop.f32.mrb[0].mxu0
        %v611 = vadd.f32 0.0, %v610
        %612 = vmatprep.mubr.f32.mxu0 0.0
        %613 = vmatmul.mubr.f32.gmra.mrb[0].mxu0 %v257
        %v614 = vpop.f32.mrb[0].mxu0
        %v615 = vadd.f32 0.0, %v614
        %v616 = vpop.f32.mrb[0].mxu0
        %v617 = vadd.f32 0.0, %v616
        %618 = vmatprep.mubr.f32.mxu0 0.0
        %619 = vmatmul.mubr.f32.gmra.mrb[0].mxu0 %v260
        %v620 = vpop.f32.mrb[0].mxu0
        %v621 = vadd.f32 0.0, %v620
        %v622 = vpop.f32.mrb[0].mxu0
        %v623 = vadd.f32 0.0, %v622
        %624 = vmatprep.mubr.f32.mxu0 0.0
        %625 = vmatmul.mubr.f32.gmra.mrb[0].mxu0 %v263
        %v626 = vpop.f32.mrb[0].mxu0
        %v627 = vadd.f32 0.0, %v626
        %v628 = vpop.f32.mrb[0].mxu0
        %v629 = vadd.f32 0.0, %v628
        %630 = vmatprep.mubr.f32.mxu0 0.0
        %631 = vmatmul.mubr.f32.gmra.mrb[0].mxu0 %v266
        %v632 = vpop.f32.mrb[0].mxu0
        %v633 = vadd.f32 0.0, %v632
        %v634 = vpop.f32.mrb[0].mxu0
        %v635 = vadd.f32 0.0, %v634
        %636 = vmatprep.mubr.f32.mxu0 0.0
        %637 = vmatmul.mubr.f32.gmra.mrb[0].mxu0 %v269
        %v638 = vpop.f32.mrb[0].mxu0
        %v639 = vadd.f32 0.0, %v638
        %v640 = vpop.f32.mrb[0].mxu0
        %v641 = vadd.f32 0.0, %v640
        %642 = vdwg.mxu0
        %643 = vmatprep.subr.mxu0 %v286
        %644 = vmatpush1.msra.mxu0 %v284
        %645 = vmatprep.subr.mxu0 0.0
        %646 = vmatpush1.msra.mxu0 0.0
        %647 = vmatprep.subr.mxu0 0.0
        %648 = vmatpush1.msra.mxu0 0.0
        %649 = vmatprep.subr.mxu0 0.0
        %650 = vmatpush1.msra.mxu0 0.0
        %651 = vmatprep.subr.mxu0 0.0
        %652 = vmatpush1.msra.mxu0 0.0
        %653 = vmatprep.subr.mxu0 0.0
        %654 = vmatpush1.msra.mxu0 0.0
        %655 = vmatprep.subr.mxu0 0.0
        %656 = vmatpush1.msra.mxu0 0.0
        %657 = vmatprep.subr.mxu0 0.0
        %658 = vmatpush1.msra.mxu0 0.0
        %659 = vmatprep.subr.mxu0 0.0
        %660 = vmatpush1.msra.mxu0 0.0
        %661 = vmatprep.subr.mxu0 0.0
        %662 = vmatpush1.msra.mxu0 0.0
        %663 = vmatprep.subr.mxu0 0.0
        %664 = vmatpush1.msra.mxu0 0.0
        %665 = vmatprep.subr.mxu0 0.0
        %666 = vmatpush1.msra.mxu0 0.0
        %667 = vmatprep.subr.mxu0 0.0
        %668 = vmatpush1.msra.mxu0 0.0
        %669 = vmatprep.subr.mxu0 0.0
        %670 = vmatpush1.msra.mxu0 0.0
        %671 = vmatprep.subr.mxu0 0.0
        %672 = vmatpush1.msra.mxu0 0.0
        %673 = vmatprep.subr.mxu0 0.0
        %674 = vmatpush1.msra.mxu0 0.0
        %675 = vmatprep.subr.mxu0 0.0
        %676 = vmatpush1.msra.mxu0 0.0
        %677 = vmatprep.subr.mxu0 0.0
        %678 = vmatpush1.msra.mxu0 0.0
        %679 = vmatprep.subr.mxu0 0.0
        %680 = vmatpush1.msra.mxu0 0.0
        %681 = vmatprep.subr.mxu0 0.0
        %682 = vmatpush1.msra.mxu0 0.0
        %683 = vmatprep.subr.mxu0 0.0
        %684 = vmatpush1.msra.mxu0 0.0
        %685 = vmatprep.subr.mxu0 0.0
        %686 = vmatpush1.msra.mxu0 0.0
        %687 = vmatprep.subr.mxu0 0.0
        %688 = vmatpush1.msra.mxu0 0.0
        %689 = vmatprep.subr.mxu0 0.0
        %690 = vmatpush1.msra.mxu0 0.0
        %691 = vmatprep.subr.mxu0 0.0
        %692 = vmatpush1.msra.mxu0 0.0
        %693 = vmatprep.subr.mxu0 0.0
        %694 = vmatpush1.msra.mxu0 0.0
        %695 = vmatprep.subr.mxu0 0.0
        %696 = vmatpush1.msra.mxu0 0.0
        %697 = vmatprep.subr.mxu0 0.0
        %698 = vmatpush1.msra.mxu0 0.0
        %699 = vmatprep.subr.mxu0 0.0
        %700 = vmatpush1.msra.mxu0 0.0
        %701 = vmatprep.subr.mxu0 0.0
        %702 = vmatpush1.msra.mxu0 0.0
        %703 = vmatprep.subr.mxu0 0.0
        %704 = vmatpush1.msra.mxu0 0.0
        %705 = vmatprep.subr.mxu0 0.0
        %706 = vmatpush1.msra.mxu0 0.0
        %707 = vmatprep.mubr.f32.mxu0 0.0
        %708 = vmatmul.mubr.f32.gmra.mrb[0].mxu0 %v248
        %v709 = vpop.f32.mrb[0].mxu0
        %v710 = vadd.f32 0.0, %v709
        %v711 = vpop.f32.mrb[0].mxu0
        %v712 = vadd.f32 0.0, %v711
        %713 = vmatprep.mubr.f32.mxu0 0.0
        %714 = vmatmul.mubr.f32.gmra.mrb[0].mxu0 %v251
        %v715 = vpop.f32.mrb[0].mxu0
        %v716 = vadd.f32 0.0, %v715
        %v717 = vpop.f32.mrb[0].mxu0
        %v718 = vadd.f32 0.0, %v717
        %719 = vmatprep.mubr.f32.mxu0 0.0
        %720 = vmatmul.mubr.f32.gmra.mrb[0].mxu0 %v254
        %v721 = vpop.f32.mrb[0].mxu0
        %v722 = vadd.f32 0.0, %v721
        %v723 = vpop.f32.mrb[0].mxu0
        %v724 = vadd.f32 0.0, %v723
        %725 = vmatprep.mubr.f32.mxu0 0.0
        %726 = vmatmul.mubr.f32.gmra.mrb[0].mxu0 %v257
        %v727 = vpop.f32.mrb[0].mxu0
        %v728 = vadd.f32 0.0, %v727
        %v729 = vpop.f32.mrb[0].mxu0
        %v730 = vadd.f32 0.0, %v729
        %731 = vmatprep.mubr.f32.mxu0 0.0
        %732 = vmatmul.mubr.f32.gmra.mrb[0].mxu0 %v260
        %v733 = vpop.f32.mrb[0].mxu0
        %v734 = vadd.f32 0.0, %v733
        %v735 = vpop.f32.mrb[0].mxu0
        %v736 = vadd.f32 0.0, %v735
        %737 = vmatprep.mubr.f32.mxu0 0.0
        %738 = vmatmul.mubr.f32.gmra.mrb[0].mxu0 %v263
        %v739 = vpop.f32.mrb[0].mxu0
        %v740 = vadd.f32 0.0, %v739
        %v741 = vpop.f32.mrb[0].mxu0
        %v742 = vadd.f32 0.0, %v741
        %743 = vmatprep.mubr.f32.mxu0 0.0
        %744 = vmatmul.mubr.f32.gmra.mrb[0].mxu0 %v266
        %v745 = vpop.f32.mrb[0].mxu0
        %v746 = vadd.f32 0.0, %v745
        %v747 = vpop.f32.mrb[0].mxu0
        %v748 = vadd.f32 0.0, %v747
        %749 = vmatprep.mubr.f32.mxu0 0.0
        %750 = vmatmul.mubr.f32.gmra.mrb[0].mxu0 %v269
        %v751 = vpop.f32.mrb[0].mxu0
        %v752 = vadd.f32 0.0, %v751
        %v753 = vpop.f32.mrb[0].mxu0
        %v754 = vadd.f32 0.0, %v753
        %755 = vdwg.mxu0
        %756 = vmatprep.subr.mxu0 %v290
        %757 = vmatpush1.msra.mxu0 %v288
        %758 = vmatprep.subr.mxu0 0.0
        %759 = vmatpush1.msra.mxu0 0.0
        %760 = vmatprep.subr.mxu0 0.0
        %761 = vmatpush1.msra.mxu0 0.0
        %762 = vmatprep.subr.mxu0 0.0
        %763 = vmatpush1.msra.mxu0 0.0
        %764 = vmatprep.subr.mxu0 0.0
        %765 = vmatpush1.msra.mxu0 0.0
        %766 = vmatprep.subr.mxu0 0.0
        %767 = vmatpush1.msra.mxu0 0.0
        %768 = vmatprep.subr.mxu0 0.0
        %769 = vmatpush1.msra.mxu0 0.0
        %770 = vmatprep.subr.mxu0 0.0
        %771 = vmatpush1.msra.mxu0 0.0
        %772 = vmatprep.subr.mxu0 0.0
        %773 = vmatpush1.msra.mxu0 0.0
        %774 = vmatprep.subr.mxu0 0.0
        %775 = vmatpush1.msra.mxu0 0.0
        %776 = vmatprep.subr.mxu0 0.0
        %777 = vmatpush1.msra.mxu0 0.0
        %778 = vmatprep.subr.mxu0 0.0
        %779 = vmatpush1.msra.mxu0 0.0
        %780 = vmatprep.subr.mxu0 0.0
        %781 = vmatpush1.msra.mxu0 0.0
        %782 = vmatprep.subr.mxu0 0.0
        %783 = vmatpush1.msra.mxu0 0.0
        %784 = vmatprep.subr.mxu0 0.0
        %785 = vmatpush1.msra.mxu0 0.0
        %786 = vmatprep.subr.mxu0 0.0
        %787 = vmatpush1.msra.mxu0 0.0
        %788 = vmatprep.subr.mxu0 0.0
        %789 = vmatpush1.msra.mxu0 0.0
        %790 = vmatprep.subr.mxu0 0.0
        %791 = vmatpush1.msra.mxu0 0.0
        %792 = vmatprep.subr.mxu0 0.0
        %793 = vmatpush1.msra.mxu0 0.0
        %794 = vmatprep.subr.mxu0 0.0
        %795 = vmatpush1.msra.mxu0 0.0
        %796 = vmatprep.subr.mxu0 0.0
        %797 = vmatpush1.msra.mxu0 0.0
        %798 = vmatprep.subr.mxu0 0.0
        %799 = vmatpush1.msra.mxu0 0.0
        %800 = vmatprep.subr.mxu0 0.0
        %801 = vmatpush1.msra.mxu0 0.0
        %802 = vmatprep.subr.mxu0 0.0
        %803 = vmatpush1.msra.mxu0 0.0
        %804 = vmatprep.subr.mxu0 0.0
        %805 = vmatpush1.msra.mxu0 0.0
        %806 = vmatprep.subr.mxu0 0.0
        %807 = vmatpush1.msra.mxu0 0.0
        %808 = vmatprep.subr.mxu0 0.0
        %809 = vmatpush1.msra.mxu0 0.0
        %810 = vmatprep.subr.mxu0 0.0
        %811 = vmatpush1.msra.mxu0 0.0
        %812 = vmatprep.subr.mxu0 0.0
        %813 = vmatpush1.msra.mxu0 0.0
        %814 = vmatprep.subr.mxu0 0.0
        %815 = vmatpush1.msra.mxu0 0.0
        %816 = vmatprep.subr.mxu0 0.0
        %817 = vmatpush1.msra.mxu0 0.0
        %818 = vmatprep.subr.mxu0 0.0
        %819 = vmatpush1.msra.mxu0 0.0
        %820 = vmatprep.mubr.f32.mxu0 0.0
        %821 = vmatmul.mubr.f32.gmra.mrb[0].mxu0 %v248
        %v822 = vpop.f32.mrb[0].mxu0
        %v823 = vadd.f32 0.0, %v822
        %v824 = vpop.f32.mrb[0].mxu0
        %v825 = vadd.f32 0.0, %v824
        %826 = vmatprep.mubr.f32.mxu0 0.0
        %827 = vmatmul.mubr.f32.gmra.mrb[0].mxu0 %v251
        %v828 = vpop.f32.mrb[0].mxu0
        %v829 = vadd.f32 0.0, %v828
        %v830 = vpop.f32.mrb[0].mxu0
        %v831 = vadd.f32 0.0, %v830
        %832 = vmatprep.mubr.f32.mxu0 0.0
        %833 = vmatmul.mubr.f32.gmra.mrb[0].mxu0 %v254
        %v834 = vpop.f32.mrb[0].mxu0
        %v835 = vadd.f32 0.0, %v834
        %v836 = vpop.f32.mrb[0].mxu0
        %v837 = vadd.f32 0.0, %v836
        %838 = vmatprep.mubr.f32.mxu0 0.0
        %839 = vmatmul.mubr.f32.gmra.mrb[0].mxu0 %v257
        %v840 = vpop.f32.mrb[0].mxu0
        %v841 = vadd.f32 0.0, %v840
        %v842 = vpop.f32.mrb[0].mxu0
        %v843 = vadd.f32 0.0, %v842
        %844 = vmatprep.mubr.f32.mxu0 0.0
        %845 = vmatmul.mubr.f32.gmra.mrb[0].mxu0 %v260
        %v846 = vpop.f32.mrb[0].mxu0
        %v847 = vadd.f32 0.0, %v846
        %v848 = vpop.f32.mrb[0].mxu0
        %v849 = vadd.f32 0.0, %v848
        %850 = vmatprep.mubr.f32.mxu0 0.0
        %851 = vmatmul.mubr.f32.gmra.mrb[0].mxu0 %v263
        %v852 = vpop.f32.mrb[0].mxu0
        %v853 = vadd.f32 0.0, %v852
        %v854 = vpop.f32.mrb[0].mxu0
        %v855 = vadd.f32 0.0, %v854
        %856 = vmatprep.mubr.f32.mxu0 0.0
        %857 = vmatmul.mubr.f32.gmra.mrb[0].mxu0 %v266
        %v858 = vpop.f32.mrb[0].mxu0
        %v859 = vadd.f32 0.0, %v858
        %v860 = vpop.f32.mrb[0].mxu0
        %v861 = vadd.f32 0.0, %v860
        %862 = vmatprep.mubr.f32.mxu0 0.0
        %863 = vmatmul.mubr.f32.gmra.mrb[0].mxu0 %v269
        %v864 = vpop.f32.mrb[0].mxu0
        %v865 = vadd.f32 0.0, %v864
        %v866 = vpop.f32.mrb[0].mxu0
        %v867 = vadd.f32 0.0, %v866
        %868 = vdwg.mxu0
        %869 = vmatprep.subr.mxu0 %v294
        %870 = vmatpush1.msra.mxu0 %v292
        %871 = vmatprep.subr.mxu0 0.0
        %872 = vmatpush1.msra.mxu0 0.0
        %873 = vmatprep.subr.mxu0 0.0
        %874 = vmatpush1.msra.mxu0 0.0
        %875 = vmatprep.subr.mxu0 0.0
        %876 = vmatpush1.msra.mxu0 0.0
        %877 = vmatprep.subr.mxu0 0.0
        %878 = vmatpush1.msra.mxu0 0.0
        %879 = vmatprep.subr.mxu0 0.0
        %880 = vmatpush1.msra.mxu0 0.0
        %881 = vmatprep.subr.mxu0 0.0
        %882 = vmatpush1.msra.mxu0 0.0
        %883 = vmatprep.subr.mxu0 0.0
        %884 = vmatpush1.msra.mxu0 0.0
        %885 = vmatprep.subr.mxu0 0.0
        %886 = vmatpush1.msra.mxu0 0.0
        %887 = vmatprep.subr.mxu0 0.0
        %888 = vmatpush1.msra.mxu0 0.0
        %889 = vmatprep.subr.mxu0 0.0
        %890 = vmatpush1.msra.mxu0 0.0
        %891 = vmatprep.subr.mxu0 0.0
        %892 = vmatpush1.msra.mxu0 0.0
        %893 = vmatprep.subr.mxu0 0.0
        %894 = vmatpush1.msra.mxu0 0.0
        %895 = vmatprep.subr.mxu0 0.0
        %896 = vmatpush1.msra.mxu0 0.0
        %897 = vmatprep.subr.mxu0 0.0
        %898 = vmatpush1.msra.mxu0 0.0
        %899 = vmatprep.subr.mxu0 0.0
        %900 = vmatpush1.msra.mxu0 0.0
        %901 = vmatprep.subr.mxu0 0.0
        %902 = vmatpush1.msra.mxu0 0.0
        %903 = vmatprep.subr.mxu0 0.0
        %904 = vmatpush1.msra.mxu0 0.0
        %905 = vmatprep.subr.mxu0 0.0
        %906 = vmatpush1.msra.mxu0 0.0
        %907 = vmatprep.subr.mxu0 0.0
        %908 = vmatpush1.msra.mxu0 0.0
        %909 = vmatprep.subr.mxu0 0.0
        %910 = vmatpush1.msra.mxu0 0.0
        %911 = vmatprep.subr.mxu0 0.0
        %912 = vmatpush1.msra.mxu0 0.0
        %913 = vmatprep.subr.mxu0 0.0
        %914 = vmatpush1.msra.mxu0 0.0
        %915 = vmatprep.subr.mxu0 0.0
        %916 = vmatpush1.msra.mxu0 0.0
        %917 = vmatprep.subr.mxu0 0.0
        %918 = vmatpush1.msra.mxu0 0.0
        %919 = vmatprep.subr.mxu0 0.0
        %920 = vmatpush1.msra.mxu0 0.0
        %921 = vmatprep.subr.mxu0 0.0
        %922 = vmatpush1.msra.mxu0 0.0
        %923 = vmatprep.subr.mxu0 0.0
        %924 = vmatpush1.msra.mxu0 0.0
        %925 = vmatprep.subr.mxu0 0.0
        %926 = vmatpush1.msra.mxu0 0.0
        %927 = vmatprep.subr.mxu0 0.0
        %928 = vmatpush1.msra.mxu0 0.0
        %929 = vmatprep.subr.mxu0 0.0
        %930 = vmatpush1.msra.mxu0 0.0
        %931 = vmatprep.subr.mxu0 0.0
        %932 = vmatpush1.msra.mxu0 0.0
        %933 = vmatprep.mubr.f32.mxu0 0.0
        %934 = vmatmul.mubr.f32.gmra.mrb[0].mxu0 %v248
        %v935 = vpop.f32.mrb[0].mxu0
        %v936 = vadd.f32 0.0, %v935
        %v937 = vpop.f32.mrb[0].mxu0
        %v938 = vadd.f32 0.0, %v937
        %939 = vmatprep.mubr.f32.mxu0 0.0
        %940 = vmatmul.mubr.f32.gmra.mrb[0].mxu0 %v251
        %v941 = vpop.f32.mrb[0].mxu0
        %v942 = vadd.f32 0.0, %v941
        %v943 = vpop.f32.mrb[0].mxu0
        %v944 = vadd.f32 0.0, %v943
        %945 = vmatprep.mubr.f32.mxu0 0.0
        %946 = vmatmul.mubr.f32.gmra.mrb[0].mxu0 %v254
        %v947 = vpop.f32.mrb[0].mxu0
        %v948 = vadd.f32 0.0, %v947
        %v949 = vpop.f32.mrb[0].mxu0
        %v950 = vadd.f32 0.0, %v949
        %951 = vmatprep.mubr.f32.mxu0 0.0
        %952 = vmatmul.mubr.f32.gmra.mrb[0].mxu0 %v257
        %v953 = vpop.f32.mrb[0].mxu0
        %v954 = vadd.f32 0.0, %v953
        %v955 = vpop.f32.mrb[0].mxu0
        %v956 = vadd.f32 0.0, %v955
        %957 = vmatprep.mubr.f32.mxu0 0.0
        %958 = vmatmul.mubr.f32.gmra.mrb[0].mxu0 %v260
        %v959 = vpop.f32.mrb[0].mxu0
        %v960 = vadd.f32 0.0, %v959
        %v961 = vpop.f32.mrb[0].mxu0
        %v962 = vadd.f32 0.0, %v961
        %963 = vmatprep.mubr.f32.mxu0 0.0
        %964 = vmatmul.mubr.f32.gmra.mrb[0].mxu0 %v263
        %v965 = vpop.f32.mrb[0].mxu0
        %v966 = vadd.f32 0.0, %v965
        %v967 = vpop.f32.mrb[0].mxu0
        %v968 = vadd.f32 0.0, %v967
        %969 = vmatprep.mubr.f32.mxu0 0.0
        %970 = vmatmul.mubr.f32.gmra.mrb[0].mxu0 %v266
        %v971 = vpop.f32.mrb[0].mxu0
        %v972 = vadd.f32 0.0, %v971
        %v973 = vpop.f32.mrb[0].mxu0
        %v974 = vadd.f32 0.0, %v973
        %975 = vmatprep.mubr.f32.mxu0 0.0
        %976 = vmatmul.mubr.f32.gmra.mrb[0].mxu0 %v269
        %v977 = vpop.f32.mrb[0].mxu0
        %v978 = vadd.f32 0.0, %v977
        %v979 = vpop.f32.mrb[0].mxu0
        %v980 = vadd.f32 0.0, %v979
        %981 = vdwg.mxu0
        %982 = vmatprep.subr.mxu0 %v298
        %983 = vmatpush1.msra.mxu0 %v296
        %984 = vmatprep.subr.mxu0 0.0
        %985 = vmatpush1.msra.mxu0 0.0
        %986 = vmatprep.subr.mxu0 0.0
        %987 = vmatpush1.msra.mxu0 0.0
        %988 = vmatprep.subr.mxu0 0.0
        %989 = vmatpush1.msra.mxu0 0.0
        %990 = vmatprep.subr.mxu0 0.0
        %991 = vmatpush1.msra.mxu0 0.0
        %992 = vmatprep.subr.mxu0 0.0
        %993 = vmatpush1.msra.mxu0 0.0
        %994 = vmatprep.subr.mxu0 0.0
        %995 = vmatpush1.msra.mxu0 0.0
        %996 = vmatprep.subr.mxu0 0.0
        %997 = vmatpush1.msra.mxu0 0.0
        %998 = vmatprep.subr.mxu0 0.0
        %999 = vmatpush1.msra.mxu0 0.0
        %1000 = vmatprep.subr.mxu0 0.0
        %1001 = vmatpush1.msra.mxu0 0.0
        %1002 = vmatprep.subr.mxu0 0.0
        %1003 = vmatpush1.msra.mxu0 0.0
        %1004 = vmatprep.subr.mxu0 0.0
        %1005 = vmatpush1.msra.mxu0 0.0
        %1006 = vmatprep.subr.mxu0 0.0
        %1007 = vmatpush1.msra.mxu0 0.0
        %1008 = vmatprep.subr.mxu0 0.0
        %1009 = vmatpush1.msra.mxu0 0.0
        %1010 = vmatprep.subr.mxu0 0.0
        %1011 = vmatpush1.msra.mxu0 0.0
        %1012 = vmatprep.subr.mxu0 0.0
        %1013 = vmatpush1.msra.mxu0 0.0
        %1014 = vmatprep.subr.mxu0 0.0
        %1015 = vmatpush1.msra.mxu0 0.0
        %1016 = vmatprep.subr.mxu0 0.0
        %1017 = vmatpush1.msra.mxu0 0.0
        %1018 = vmatprep.subr.mxu0 0.0
        %1019 = vmatpush1.msra.mxu0 0.0
        %1020 = vmatprep.subr.mxu0 0.0
        %1021 = vmatpush1.msra.mxu0 0.0
        %1022 = vmatprep.subr.mxu0 0.0
        %1023 = vmatpush1.msra.mxu0 0.0
        %1024 = vmatprep.subr.mxu0 0.0
        %1025 = vmatpush1.msra.mxu0 0.0
        %1026 = vmatprep.subr.mxu0 0.0
        %1027 = vmatpush1.msra.mxu0 0.0
        %1028 = vmatprep.subr.mxu0 0.0
        %1029 = vmatpush1.msra.mxu0 0.0
        %1030 = vmatprep.subr.mxu0 0.0
        %1031 = vmatpush1.msra.mxu0 0.0
        %1032 = vmatprep.subr.mxu0 0.0
        %1033 = vmatpush1.msra.mxu0 0.0
        %1034 = vmatprep.subr.mxu0 0.0
        %1035 = vmatpush1.msra.mxu0 0.0
        %1036 = vmatprep.subr.mxu0 0.0
        %1037 = vmatpush1.msra.mxu0 0.0
        %1038 = vmatprep.subr.mxu0 0.0
        %1039 = vmatpush1.msra.mxu0 0.0
        %1040 = vmatprep.subr.mxu0 0.0
        %1041 = vmatpush1.msra.mxu0 0.0
        %1042 = vmatprep.subr.mxu0 0.0
        %1043 = vmatpush1.msra.mxu0 0.0
        %1044 = vmatprep.subr.mxu0 0.0
        %1045 = vmatpush1.msra.mxu0 0.0
        %1046 = vmatprep.mubr.f32.mxu0 0.0
        %1047 = vmatmul.mubr.f32.gmra.mrb[0].mxu0 %v248
        %v1048 = vpop.f32.mrb[0].mxu0
        %v1049 = vadd.f32 0.0, %v1048
        %v1050 = vpop.f32.mrb[0].mxu0
        %v1051 = vadd.f32 0.0, %v1050
        %1052 = vmatprep.mubr.f32.mxu0 0.0
        %1053 = vmatmul.mubr.f32.gmra.mrb[0].mxu0 %v251
        %v1054 = vpop.f32.mrb[0].mxu0
        %v1055 = vadd.f32 0.0, %v1054
        %v1056 = vpop.f32.mrb[0].mxu0
        %v1057 = vadd.f32 0.0, %v1056
        %1058 = vmatprep.mubr.f32.mxu0 0.0
        %1059 = vmatmul.mubr.f32.gmra.mrb[0].mxu0 %v254
        %v1060 = vpop.f32.mrb[0].mxu0
        %v1061 = vadd.f32 0.0, %v1060
        %v1062 = vpop.f32.mrb[0].mxu0
        %v1063 = vadd.f32 0.0, %v1062
        %1064 = vmatprep.mubr.f32.mxu0 0.0
        %1065 = vmatmul.mubr.f32.gmra.mrb[0].mxu0 %v257
        %v1066 = vpop.f32.mrb[0].mxu0
        %v1067 = vadd.f32 0.0, %v1066
        %v1068 = vpop.f32.mrb[0].mxu0
        %v1069 = vadd.f32 0.0, %v1068
        %1070 = vmatprep.mubr.f32.mxu0 0.0
        %1071 = vmatmul.mubr.f32.gmra.mrb[0].mxu0 %v260
        %v1072 = vpop.f32.mrb[0].mxu0
        %v1073 = vadd.f32 0.0, %v1072
        %v1074 = vpop.f32.mrb[0].mxu0
        %v1075 = vadd.f32 0.0, %v1074
        %1076 = vmatprep.mubr.f32.mxu0 0.0
        %1077 = vmatmul.mubr.f32.gmra.mrb[0].mxu0 %v263
        %v1078 = vpop.f32.mrb[0].mxu0
        %v1079 = vadd.f32 0.0, %v1078
        %v1080 = vpop.f32.mrb[0].mxu0
        %v1081 = vadd.f32 0.0, %v1080
        %1082 = vmatprep.mubr.f32.mxu0 0.0
        %1083 = vmatmul.mubr.f32.gmra.mrb[0].mxu0 %v266
        %v1084 = vpop.f32.mrb[0].mxu0
        %v1085 = vadd.f32 0.0, %v1084
        %v1086 = vpop.f32.mrb[0].mxu0
        %v1087 = vadd.f32 0.0, %v1086
        %1088 = vmatprep.mubr.f32.mxu0 0.0
        %1089 = vmatmul.mubr.f32.gmra.mrb[0].mxu0 %v269
        %v1090 = vpop.f32.mrb[0].mxu0
        %v1091 = vadd.f32 0.0, %v1090
        %v1092 = vpop.f32.mrb[0].mxu0
        %v1093 = vadd.f32 0.0, %v1092
        %1094 = vdwg.mxu0
        %1095 = vmatprep.subr.mxu0 %v302
        %1096 = vmatpush1.msra.mxu0 %v300
        %1097 = vmatprep.subr.mxu0 0.0
        %1098 = vmatpush1.msra.mxu0 0.0
        %1099 = vmatprep.subr.mxu0 0.0
        %1100 = vmatpush1.msra.mxu0 0.0
        %1101 = vmatprep.subr.mxu0 0.0
        %1102 = vmatpush1.msra.mxu0 0.0
        %1103 = vmatprep.subr.mxu0 0.0
        %1104 = vmatpush1.msra.mxu0 0.0
        %1105 = vmatprep.subr.mxu0 0.0
        %1106 = vmatpush1.msra.mxu0 0.0
        %1107 = vmatprep.subr.mxu0 0.0
        %1108 = vmatpush1.msra.mxu0 0.0
        %1109 = vmatprep.subr.mxu0 0.0
        %1110 = vmatpush1.msra.mxu0 0.0
        %1111 = vmatprep.subr.mxu0 0.0
        %1112 = vmatpush1.msra.mxu0 0.0
        %1113 = vmatprep.subr.mxu0 0.0
        %1114 = vmatpush1.msra.mxu0 0.0
        %1115 = vmatprep.subr.mxu0 0.0
        %1116 = vmatpush1.msra.mxu0 0.0
        %1117 = vmatprep.subr.mxu0 0.0
        %1118 = vmatpush1.msra.mxu0 0.0
        %1119 = vmatprep.subr.mxu0 0.0
        %1120 = vmatpush1.msra.mxu0 0.0
        %1121 = vmatprep.subr.mxu0 0.0
        %1122 = vmatpush1.msra.mxu0 0.0
        %1123 = vmatprep.subr.mxu0 0.0
        %1124 = vmatpush1.msra.mxu0 0.0
        %1125 = vmatprep.subr.mxu0 0.0
        %1126 = vmatpush1.msra.mxu0 0.0
        %1127 = vmatprep.subr.mxu0 0.0
        %1128 = vmatpush1.msra.mxu0 0.0
        %1129 = vmatprep.subr.mxu0 0.0
        %1130 = vmatpush1.msra.mxu0 0.0
        %1131 = vmatprep.subr.mxu0 0.0
        %1132 = vmatpush1.msra.mxu0 0.0
        %1133 = vmatprep.subr.mxu0 0.0
        %1134 = vmatpush1.msra.mxu0 0.0
        %1135 = vmatprep.subr.mxu0 0.0
        %1136 = vmatpush1.msra.mxu0 0.0
        %1137 = vmatprep.subr.mxu0 0.0
        %1138 = vmatpush1.msra.mxu0 0.0
        %1139 = vmatprep.subr.mxu0 0.0
        %1140 = vmatpush1.msra.mxu0 0.0
        %1141 = vmatprep.subr.mxu0 0.0
        %1142 = vmatpush1.msra.mxu0 0.0
        %1143 = vmatprep.subr.mxu0 0.0
        %1144 = vmatpush1.msra.mxu0 0.0
        %1145 = vmatprep.subr.mxu0 0.0
        %1146 = vmatpush1.msra.mxu0 0.0
        %1147 = vmatprep.subr.mxu0 0.0
        %1148 = vmatpush1.msra.mxu0 0.0
        %1149 = vmatprep.subr.mxu0 0.0
        %1150 = vmatpush1.msra.mxu0 0.0
        %1151 = vmatprep.subr.mxu0 0.0
        %1152 = vmatpush1.msra.mxu0 0.0
        %1153 = vmatprep.subr.mxu0 0.0
        %1154 = vmatpush1.msra.mxu0 0.0
        %1155 = vmatprep.subr.mxu0 0.0
        %1156 = vmatpush1.msra.mxu0 0.0
        %1157 = vmatprep.subr.mxu0 0.0
        %1158 = vmatpush1.msra.mxu0 0.0
        %1159 = vmatprep.mubr.f32.mxu0 0.0
        %1160 = vmatmul.mubr.f32.gmra.mrb[0].mxu0 %v248
        %v1161 = vpop.f32.mrb[0].mxu0
        %v1162 = vadd.f32 0.0, %v1161
        %v1163 = vpop.f32.mrb[0].mxu0
        %v1164 = vadd.f32 0.0, %v1163
        %1165 = vmatprep.mubr.f32.mxu0 0.0
        %1166 = vmatmul.mubr.f32.gmra.mrb[0].mxu0 %v251
        %v1167 = vpop.f32.mrb[0].mxu0
        %v1168 = vadd.f32 0.0, %v1167
        %v1169 = vpop.f32.mrb[0].mxu0
        %v1170 = vadd.f32 0.0, %v1169
        %1171 = vmatprep.mubr.f32.mxu0 0.0
        %1172 = vmatmul.mubr.f32.gmra.mrb[0].mxu0 %v254
        %v1173 = vpop.f32.mrb[0].mxu0
        %v1174 = vadd.f32 0.0, %v1173
        %v1175 = vpop.f32.mrb[0].mxu0
        %v1176 = vadd.f32 0.0, %v1175
        %1177 = vmatprep.mubr.f32.mxu0 0.0
        %1178 = vmatmul.mubr.f32.gmra.mrb[0].mxu0 %v257
        %v1179 = vpop.f32.mrb[0].mxu0
        %v1180 = vadd.f32 0.0, %v1179
        %v1181 = vpop.f32.mrb[0].mxu0
        %v1182 = vadd.f32 0.0, %v1181
        %1183 = vmatprep.mubr.f32.mxu0 0.0
        %1184 = vmatmul.mubr.f32.gmra.mrb[0].mxu0 %v260
        %v1185 = vpop.f32.mrb[0].mxu0
        %v1186 = vadd.f32 0.0, %v1185
        %v1187 = vpop.f32.mrb[0].mxu0
        %v1188 = vadd.f32 0.0, %v1187
        %1189 = vmatprep.mubr.f32.mxu0 0.0
        %1190 = vmatmul.mubr.f32.gmra.mrb[0].mxu0 %v263
        %v1191 = vpop.f32.mrb[0].mxu0
        %v1192 = vadd.f32 0.0, %v1191
        %v1193 = vpop.f32.mrb[0].mxu0
        %v1194 = vadd.f32 0.0, %v1193
        %1195 = vmatprep.mubr.f32.mxu0 0.0
        %1196 = vmatmul.mubr.f32.gmra.mrb[0].mxu0 %v266
        %v1197 = vpop.f32.mrb[0].mxu0
        %v1198 = vadd.f32 0.0, %v1197
        %v1199 = vpop.f32.mrb[0].mxu0
        %v1200 = vadd.f32 0.0, %v1199
        %1201 = vmatprep.mubr.f32.mxu0 0.0
        %1202 = vmatmul.mubr.f32.gmra.mrb[0].mxu0 %v269
        %v1203 = vpop.f32.mrb[0].mxu0
        %v1204 = vadd.f32 0.0, %v1203
        %v1205 = vpop.f32.mrb[0].mxu0
        %v1206 = vadd.f32 0.0, %v1205
        %1207 = vdwg.mxu0
        %v1208 = vld [vmem:[%s3] sm:$0xff]
        %v1209 = vld [vmem:[%s3 + $0x8] sm:$0xff]
        %v1210 = vld [vmem:[%s3 + $0x10] sm:$0xff]
        %v1211 = vld [vmem:[%s3 + $0x18] sm:$0xff]
        %1213 = vset.pattern.permute.xlu0 0
        %1214 = vperm.xlu0 %1213, %v1208
        %v1215 = vpop.permute.xlu0 %1214
        %1218 = vset.pattern.permute.xlu0 0
        %1219 = vperm.xlu0 %1218, %v1209
        %v1220 = vpop.permute.xlu0 %1219
        %1223 = vset.pattern.permute.xlu0 0
        %1224 = vperm.xlu0 %1223, %v1210
        %v1225 = vpop.permute.xlu0 %1224
        %1228 = vset.pattern.permute.xlu0 0
        %1229 = vperm.xlu0 %1228, %v1211
        %v1230 = vpop.permute.xlu0 %1229
        %v1232 = vadd.f32 %v371, %v1215
        %v1233 = vadd.f32 %v373, %v1215
        %v1234 = vadd.f32 %v484, %v1215
        %v1235 = vadd.f32 %v486, %v1215
        %v1236 = vadd.f32 %v597, %v1215
        %v1237 = vadd.f32 %v599, %v1215
        %v1238 = vadd.f32 %v710, %v1215
        %v1239 = vadd.f32 %v712, %v1215
        %v1240 = vadd.f32 %v823, %v1215
        %v1241 = vadd.f32 %v825, %v1215
        %v1242 = vadd.f32 %v936, %v1215
        %v1243 = vadd.f32 %v938, %v1215
        %v1244 = vadd.f32 %v1049, %v1215
        %v1245 = vadd.f32 %v1051, %v1215
        %v1246 = vadd.f32 %v1162, %v1215
        %v1247 = vadd.f32 %v1164, %v1215
        %v1248 = vadd.f32 %v377, %v1220
        %v1249 = vadd.f32 %v379, %v1220
        %v1250 = vadd.f32 %v490, %v1220
        %v1251 = vadd.f32 %v492, %v1220
        %v1252 = vadd.f32 %v603, %v1220
        %v1253 = vadd.f32 %v605, %v1220
        %v1254 = vadd.f32 %v716, %v1220
        %v1255 = vadd.f32 %v718, %v1220
        %v1256 = vadd.f32 %v829, %v1220
        %v1257 = vadd.f32 %v831, %v1220
        %v1258 = vadd.f32 %v942, %v1220
        %v1259 = vadd.f32 %v944, %v1220
        %v1260 = vadd.f32 %v1055, %v1220
        %v1261 = vadd.f32 %v1057, %v1220
        %v1262 = vadd.f32 %v1168, %v1220
        %v1263 = vadd.f32 %v1170, %v1220
        %v1264 = vadd.f32 %v383, %v1225
        %v1265 = vadd.f32 %v385, %v1225
        %v1266 = vadd.f32 %v496, %v1225
        %v1267 = vadd.f32 %v498, %v1225
        %v1268 = vadd.f32 %v609, %v1225
        %v1269 = vadd.f32 %v611, %v1225
        %v1270 = vadd.f32 %v722, %v1225
        %v1271 = vadd.f32 %v724, %v1225
        %v1272 = vadd.f32 %v835, %v1225
        %v1273 = vadd.f32 %v837, %v1225
        %v1274 = vadd.f32 %v948, %v1225
        %v1275 = vadd.f32 %v950, %v1225
        %v1276 = vadd.f32 %v1061, %v1225
        %v1277 = vadd.f32 %v1063, %v1225
        %v1278 = vadd.f32 %v1174, %v1225
        %v1279 = vadd.f32 %v1176, %v1225
        %v1280 = vadd.f32 %v389, %v1230
        %v1281 = vadd.f32 %v391, %v1230
        %v1282 = vadd.f32 %v502, %v1230
        %v1283 = vadd.f32 %v504, %v1230
        %v1284 = vadd.f32 %v615, %v1230
        %v1285 = vadd.f32 %v617, %v1230
        %v1286 = vadd.f32 %v728, %v1230
        %v1287 = vadd.f32 %v730, %v1230
        %v1288 = vadd.f32 %v841, %v1230
        %v1289 = vadd.f32 %v843, %v1230
        %v1290 = vadd.f32 %v954, %v1230
        %v1291 = vadd.f32 %v956, %v1230
        %v1292 = vadd.f32 %v1067, %v1230
        %v1293 = vadd.f32 %v1069, %v1230
        %v1294 = vadd.f32 %v1180, %v1230
        %v1295 = vadd.f32 %v1182, %v1230
        %v1296 = vmul.f32 %v1232, 100.0
        %v1297 = vmul.f32 %v1233, 100.0
        %v1298 = vmul.f32 %v1234, 100.0
        %v1299 = vmul.f32 %v1235, 100.0
        %v1300 = vmul.f32 %v1236, 100.0
        %v1301 = vmul.f32 %v1237, 100.0
        %v1302 = vmul.f32 %v1238, 100.0
        %v1303 = vmul.f32 %v1239, 100.0
        %v1304 = vmul.f32 %v1240, 100.0
        %v1305 = vmul.f32 %v1241, 100.0
        %v1306 = vmul.f32 %v1242, 100.0
        %v1307 = vmul.f32 %v1243, 100.0
        %v1308 = vmul.f32 %v1244, 100.0
        %v1309 = vmul.f32 %v1245, 100.0
        %v1310 = vmul.f32 %v1246, 100.0
        %v1311 = vmul.f32 %v1247, 100.0
        %v1312 = vmul.f32 %v1248, 100.0
        %v1313 = vmul.f32 %v1249, 100.0
        %v1314 = vmul.f32 %v1250, 100.0
        %v1315 = vmul.f32 %v1251, 100.0
        %v1316 = vmul.f32 %v1252, 100.0
        %v1317 = vmul.f32 %v1253, 100.0
        %v1318 = vmul.f32 %v1254, 100.0
        %v1319 = vmul.f32 %v1255, 100.0
        %v1320 = vmul.f32 %v1256, 100.0
        %v1321 = vmul.f32 %v1257, 100.0
        %v1322 = vmul.f32 %v1258, 100.0
        %v1323 = vmul.f32 %v1259, 100.0
        %v1324 = vmul.f32 %v1260, 100.0
        %v1325 = vmul.f32 %v1261, 100.0
        %v1326 = vmul.f32 %v1262, 100.0
        %v1327 = vmul.f32 %v1263, 100.0
        %v1328 = vmul.f32 %v1264, 100.0
        %v1329 = vmul.f32 %v1265, 100.0
        %v1330 = vmul.f32 %v1266, 100.0
        %v1331 = vmul.f32 %v1267, 100.0
        %v1332 = vmul.f32 %v1268, 100.0
        %v1333 = vmul.f32 %v1269, 100.0
        %v1334 = vmul.f32 %v1270, 100.0
        %v1335 = vmul.f32 %v1271, 100.0
        %v1336 = vmul.f32 %v1272, 100.0
        %v1337 = vmul.f32 %v1273, 100.0
        %v1338 = vmul.f32 %v1274, 100.0
        %v1339 = vmul.f32 %v1275, 100.0
        %v1340 = vmul.f32 %v1276, 100.0
        %v1341 = vmul.f32 %v1277, 100.0
        %v1342 = vmul.f32 %v1278, 100.0
        %v1343 = vmul.f32 %v1279, 100.0
        %v1344 = vmul.f32 %v1280, 100.0
        %v1345 = vmul.f32 %v1281, 100.0
        %v1346 = vmul.f32 %v1282, 100.0
        %v1347 = vmul.f32 %v1283, 100.0
        %v1348 = vmul.f32 %v1284, 100.0
        %v1349 = vmul.f32 %v1285, 100.0
        %v1350 = vmul.f32 %v1286, 100.0
        %v1351 = vmul.f32 %v1287, 100.0
        %v1352 = vmul.f32 %v1288, 100.0
        %v1353 = vmul.f32 %v1289, 100.0
        %v1354 = vmul.f32 %v1290, 100.0
        %v1355 = vmul.f32 %v1291, 100.0
        %v1356 = vmul.f32 %v1292, 100.0
        %v1357 = vmul.f32 %v1293, 100.0
        %v1358 = vmul.f32 %v1294, 100.0
        %v1359 = vmul.f32 %v1295, 100.0
        %vm1360 = vcmp.gt.f32.partialorder %v1296, 20.0
        %vm1361 = vcmp.gt.f32.partialorder %v1297, 20.0
        %vm1362 = vcmp.gt.f32.partialorder %v1298, 20.0
        %vm1363 = vcmp.gt.f32.partialorder %v1299, 20.0
        %vm1364 = vcmp.gt.f32.partialorder %v1300, 20.0
        %vm1365 = vcmp.gt.f32.partialorder %v1301, 20.0
        %vm1366 = vcmp.gt.f32.partialorder %v1302, 20.0
        %vm1367 = vcmp.gt.f32.partialorder %v1303, 20.0
        %vm1368 = vcmp.gt.f32.partialorder %v1304, 20.0
        %vm1369 = vcmp.gt.f32.partialorder %v1305, 20.0
        %vm1370 = vcmp.gt.f32.partialorder %v1306, 20.0
        %vm1371 = vcmp.gt.f32.partialorder %v1307, 20.0
        %vm1372 = vcmp.gt.f32.partialorder %v1308, 20.0
        %vm1373 = vcmp.gt.f32.partialorder %v1309, 20.0
        %vm1374 = vcmp.gt.f32.partialorder %v1310, 20.0
        %vm1375 = vcmp.gt.f32.partialorder %v1311, 20.0
        %vm1376 = vcmp.gt.f32.partialorder %v1312, 20.0
        %vm1377 = vcmp.gt.f32.partialorder %v1313, 20.0
        %vm1378 = vcmp.gt.f32.partialorder %v1314, 20.0
        %vm1379 = vcmp.gt.f32.partialorder %v1315, 20.0
        %vm1380 = vcmp.gt.f32.partialorder %v1316, 20.0
        %vm1381 = vcmp.gt.f32.partialorder %v1317, 20.0
        %vm1382 = vcmp.gt.f32.partialorder %v1318, 20.0
        %vm1383 = vcmp.gt.f32.partialorder %v1319, 20.0
        %vm1384 = vcmp.gt.f32.partialorder %v1320, 20.0
        %vm1385 = vcmp.gt.f32.partialorder %v1321, 20.0
        %vm1386 = vcmp.gt.f32.partialorder %v1322, 20.0
        %vm1387 = vcmp.gt.f32.partialorder %v1323, 20.0
        %vm1388 = vcmp.gt.f32.partialorder %v1324, 20.0
        %vm1389 = vcmp.gt.f32.partialorder %v1325, 20.0
        %vm1390 = vcmp.gt.f32.partialorder %v1326, 20.0
        %vm1391 = vcmp.gt.f32.partialorder %v1327, 20.0
        %vm1392 = vcmp.gt.f32.partialorder %v1328, 20.0
        %vm1393 = vcmp.gt.f32.partialorder %v1329, 20.0
        %vm1394 = vcmp.gt.f32.partialorder %v1330, 20.0
        %vm1395 = vcmp.gt.f32.partialorder %v1331, 20.0
        %vm1396 = vcmp.gt.f32.partialorder %v1332, 20.0
        %vm1397 = vcmp.gt.f32.partialorder %v1333, 20.0
        %vm1398 = vcmp.gt.f32.partialorder %v1334, 20.0
        %vm1399 = vcmp.gt.f32.partialorder %v1335, 20.0
        %vm1400 = vcmp.gt.f32.partialorder %v1336, 20.0
        %vm1401 = vcmp.gt.f32.partialorder %v1337, 20.0
        %vm1402 = vcmp.gt.f32.partialorder %v1338, 20.0
        %vm1403 = vcmp.gt.f32.partialorder %v1339, 20.0
        %vm1404 = vcmp.gt.f32.partialorder %v1340, 20.0
        %vm1405 = vcmp.gt.f32.partialorder %v1341, 20.0
        %vm1406 = vcmp.gt.f32.partialorder %v1342, 20.0
        %vm1407 = vcmp.gt.f32.partialorder %v1343, 20.0
        %vm1408 = vcmp.gt.f32.partialorder %v1344, 20.0
        %vm1409 = vcmp.gt.f32.partialorder %v1345, 20.0
        %vm1410 = vcmp.gt.f32.partialorder %v1346, 20.0
        %vm1411 = vcmp.gt.f32.partialorder %v1347, 20.0
        %vm1412 = vcmp.gt.f32.partialorder %v1348, 20.0
        %vm1413 = vcmp.gt.f32.partialorder %v1349, 20.0
        %vm1414 = vcmp.gt.f32.partialorder %v1350, 20.0
        %vm1415 = vcmp.gt.f32.partialorder %v1351, 20.0
        %vm1416 = vcmp.gt.f32.partialorder %v1352, 20.0
        %vm1417 = vcmp.gt.f32.partialorder %v1353, 20.0
        %vm1418 = vcmp.gt.f32.partialorder %v1354, 20.0
        %vm1419 = vcmp.gt.f32.partialorder %v1355, 20.0
        %vm1420 = vcmp.gt.f32.partialorder %v1356, 20.0
        %vm1421 = vcmp.gt.f32.partialorder %v1357, 20.0
        %vm1422 = vcmp.gt.f32.partialorder %v1358, 20.0
        %vm1423 = vcmp.gt.f32.partialorder %v1359, 20.0
        %v1424 = vmul.f32 %v1296, 1.442695
        %v1425 = vpow.pop %v1424
        %v1426 = vmul.f32 %v1297, 1.442695
        %v1427 = vpow.pop %v1426
        %v1428 = vmul.f32 %v1298, 1.442695
        %v1429 = vpow.pop %v1428
        %v1430 = vmul.f32 %v1299, 1.442695
        %v1431 = vpow.pop %v1430
        %v1432 = vmul.f32 %v1300, 1.442695
        %v1433 = vpow.pop %v1432
        %v1434 = vmul.f32 %v1301, 1.442695
        %v1435 = vpow.pop %v1434
        %v1436 = vmul.f32 %v1302, 1.442695
        %v1437 = vpow.pop %v1436
        %v1438 = vmul.f32 %v1303, 1.442695
        %v1439 = vpow.pop %v1438
        %v1440 = vmul.f32 %v1304, 1.442695
        %v1441 = vpow.pop %v1440
        %v1442 = vmul.f32 %v1305, 1.442695
        %v1443 = vpow.pop %v1442
        %v1444 = vmul.f32 %v1306, 1.442695
        %v1445 = vpow.pop %v1444
        %v1446 = vmul.f32 %v1307, 1.442695
        %v1447 = vpow.pop %v1446
        %v1448 = vmul.f32 %v1308, 1.442695
        %v1449 = vpow.pop %v1448
        %v1450 = vmul.f32 %v1309, 1.442695
        %v1451 = vpow.pop %v1450
        %v1452 = vmul.f32 %v1310, 1.442695
        %v1453 = vpow.pop %v1452
        %v1454 = vmul.f32 %v1311, 1.442695
        %v1455 = vpow.pop %v1454
        %v1456 = vmul.f32 %v1312, 1.442695
        %v1457 = vpow.pop %v1456
        %v1458 = vmul.f32 %v1313, 1.442695
        %v1459 = vpow.pop %v1458
        %v1460 = vmul.f32 %v1314, 1.442695
        %v1461 = vpow.pop %v1460
        %v1462 = vmul.f32 %v1315, 1.442695
        %v1463 = vpow.pop %v1462
        %v1464 = vmul.f32 %v1316, 1.442695
        %v1465 = vpow.pop %v1464
        %v1466 = vmul.f32 %v1317, 1.442695
        %v1467 = vpow.pop %v1466
        %v1468 = vmul.f32 %v1318, 1.442695
        %v1469 = vpow.pop %v1468
        %v1470 = vmul.f32 %v1319, 1.442695
        %v1471 = vpow.pop %v1470
        %v1472 = vmul.f32 %v1320, 1.442695
        %v1473 = vpow.pop %v1472
        %v1474 = vmul.f32 %v1321, 1.442695
        %v1475 = vpow.pop %v1474
        %v1476 = vmul.f32 %v1322, 1.442695
        %v1477 = vpow.pop %v1476
        %v1478 = vmul.f32 %v1323, 1.442695
        %v1479 = vpow.pop %v1478
        %v1480 = vmul.f32 %v1324, 1.442695
        %v1481 = vpow.pop %v1480
        %v1482 = vmul.f32 %v1325, 1.442695
        %v1483 = vpow.pop %v1482
        %v1484 = vmul.f32 %v1326, 1.442695
        %v1485 = vpow.pop %v1484
        %v1486 = vmul.f32 %v1327, 1.442695
        %v1487 = vpow.pop %v1486
        %v1488 = vmul.f32 %v1328, 1.442695
        %v1489 = vpow.pop %v1488
        %v1490 = vmul.f32 %v1329, 1.442695
        %v1491 = vpow.pop %v1490
        %v1492 = vmul.f32 %v1330, 1.442695
        %v1493 = vpow.pop %v1492
        %v1494 = vmul.f32 %v1331, 1.442695
        %v1495 = vpow.pop %v1494
        %v1496 = vmul.f32 %v1332, 1.442695
        %v1497 = vpow.pop %v1496
        %v1498 = vmul.f32 %v1333, 1.442695
        %v1499 = vpow.pop %v1498
        %v1500 = vmul.f32 %v1334, 1.442695
        %v1501 = vpow.pop %v1500
        %v1502 = vmul.f32 %v1335, 1.442695
        %v1503 = vpow.pop %v1502
        %v1504 = vmul.f32 %v1336, 1.442695
        %v1505 = vpow.pop %v1504
        %v1506 = vmul.f32 %v1337, 1.442695
        %v1507 = vpow.pop %v1506
        %v1508 = vmul.f32 %v1338, 1.442695
        %v1509 = vpow.pop %v1508
        %v1510 = vmul.f32 %v1339, 1.442695
        %v1511 = vpow.pop %v1510
        %v1512 = vmul.f32 %v1340, 1.442695
        %v1513 = vpow.pop %v1512
        %v1514 = vmul.f32 %v1341, 1.442695
        %v1515 = vpow.pop %v1514
        %v1516 = vmul.f32 %v1342, 1.442695
        %v1517 = vpow.pop %v1516
        %v1518 = vmul.f32 %v1343, 1.442695
        %v1519 = vpow.pop %v1518
        %v1520 = vmul.f32 %v1344, 1.442695
        %v1521 = vpow.pop %v1520
        %v1522 = vmul.f32 %v1345, 1.442695
        %v1523 = vpow.pop %v1522
        %v1524 = vmul.f32 %v1346, 1.442695
        %v1525 = vpow.pop %v1524
        %v1526 = vmul.f32 %v1347, 1.442695
        %v1527 = vpow.pop %v1526
        %v1528 = vmul.f32 %v1348, 1.442695
        %v1529 = vpow.pop %v1528
        %v1530 = vmul.f32 %v1349, 1.442695
        %v1531 = vpow.pop %v1530
        %v1532 = vmul.f32 %v1350, 1.442695
        %v1533 = vpow.pop %v1532
        %v1534 = vmul.f32 %v1351, 1.442695
        %v1535 = vpow.pop %v1534
        %v1536 = vmul.f32 %v1352, 1.442695
        %v1537 = vpow.pop %v1536
        %v1538 = vmul.f32 %v1353, 1.442695
        %v1539 = vpow.pop %v1538
        %v1540 = vmul.f32 %v1354, 1.442695
        %v1541 = vpow.pop %v1540
        %v1542 = vmul.f32 %v1355, 1.442695
        %v1543 = vpow.pop %v1542
        %v1544 = vmul.f32 %v1356, 1.442695
        %v1545 = vpow.pop %v1544
        %v1546 = vmul.f32 %v1357, 1.442695
        %v1547 = vpow.pop %v1546
        %v1548 = vmul.f32 %v1358, 1.442695
        %v1549 = vpow.pop %v1548
        %v1550 = vmul.f32 %v1359, 1.442695
        %v1551 = vpow.pop %v1550
        %v1552 = vadd.f32 %v1425, 1.0
        %v1553 = vlog2.pop %v1552
        %v1554 = vmul.f32 %v1553, 0.6931472
        %v1555 = vmul.f32 -0.5, %v1425
        %v1556 = vadd.f32 %v1555, 1.0
        %v1557 = vmul.f32 %v1556, %v1425
        %v1558 = vand.u32 2147483647, %v1425
        %vm1559 = vcmp.lt.f32.partialorder %v1558, 0.0004427343
        %v1560 = vsel %vm1559, %v1557, %v1554
        %v1561 = vadd.f32 %v1427, 1.0
        %v1562 = vlog2.pop %v1561
        %v1563 = vmul.f32 %v1562, 0.6931472
        %v1564 = vmul.f32 -0.5, %v1427
        %v1565 = vadd.f32 %v1564, 1.0
        %v1566 = vmul.f32 %v1565, %v1427
        %v1567 = vand.u32 2147483647, %v1427
        %vm1568 = vcmp.lt.f32.partialorder %v1567, 0.0004427343
        %v1569 = vsel %vm1568, %v1566, %v1563
        %v1570 = vadd.f32 %v1429, 1.0
        %v1571 = vlog2.pop %v1570
        %v1572 = vmul.f32 %v1571, 0.6931472
        %v1573 = vmul.f32 -0.5, %v1429
        %v1574 = vadd.f32 %v1573, 1.0
        %v1575 = vmul.f32 %v1574, %v1429
        %v1576 = vand.u32 2147483647, %v1429
        %vm1577 = vcmp.lt.f32.partialorder %v1576, 0.0004427343
        %v1578 = vsel %vm1577, %v1575, %v1572
        %v1579 = vadd.f32 %v1431, 1.0
        %v1580 = vlog2.pop %v1579
        %v1581 = vmul.f32 %v1580, 0.6931472
        %v1582 = vmul.f32 -0.5, %v1431
        %v1583 = vadd.f32 %v1582, 1.0
        %v1584 = vmul.f32 %v1583, %v1431
        %v1585 = vand.u32 2147483647, %v1431
        %vm1586 = vcmp.lt.f32.partialorder %v1585, 0.0004427343
        %v1587 = vsel %vm1586, %v1584, %v1581
        %v1588 = vadd.f32 %v1433, 1.0
        %v1589 = vlog2.pop %v1588
        %v1590 = vmul.f32 %v1589, 0.6931472
        %v1591 = vmul.f32 -0.5, %v1433
        %v1592 = vadd.f32 %v1591, 1.0
        %v1593 = vmul.f32 %v1592, %v1433
        %v1594 = vand.u32 2147483647, %v1433
        %vm1595 = vcmp.lt.f32.partialorder %v1594, 0.0004427343
        %v1596 = vsel %vm1595, %v1593, %v1590
        %v1597 = vadd.f32 %v1435, 1.0
        %v1598 = vlog2.pop %v1597
        %v1599 = vmul.f32 %v1598, 0.6931472
        %v1600 = vmul.f32 -0.5, %v1435
        %v1601 = vadd.f32 %v1600, 1.0
        %v1602 = vmul.f32 %v1601, %v1435
        %v1603 = vand.u32 2147483647, %v1435
        %vm1604 = vcmp.lt.f32.partialorder %v1603, 0.0004427343
        %v1605 = vsel %vm1604, %v1602, %v1599
        %v1606 = vadd.f32 %v1437, 1.0
        %v1607 = vlog2.pop %v1606
        %v1608 = vmul.f32 %v1607, 0.6931472
        %v1609 = vmul.f32 -0.5, %v1437
        %v1610 = vadd.f32 %v1609, 1.0
        %v1611 = vmul.f32 %v1610, %v1437
        %v1612 = vand.u32 2147483647, %v1437
        %vm1613 = vcmp.lt.f32.partialorder %v1612, 0.0004427343
        %v1614 = vsel %vm1613, %v1611, %v1608
        %v1615 = vadd.f32 %v1439, 1.0
        %v1616 = vlog2.pop %v1615
        %v1617 = vmul.f32 %v1616, 0.6931472
        %v1618 = vmul.f32 -0.5, %v1439
        %v1619 = vadd.f32 %v1618, 1.0
        %v1620 = vmul.f32 %v1619, %v1439
        %v1621 = vand.u32 2147483647, %v1439
        %vm1622 = vcmp.lt.f32.partialorder %v1621, 0.0004427343
        %v1623 = vsel %vm1622, %v1620, %v1617
        %v1624 = vadd.f32 %v1441, 1.0
        %v1625 = vlog2.pop %v1624
        %v1626 = vmul.f32 %v1625, 0.6931472
        %v1627 = vmul.f32 -0.5, %v1441
        %v1628 = vadd.f32 %v1627, 1.0
        %v1629 = vmul.f32 %v1628, %v1441
        %v1630 = vand.u32 2147483647, %v1441
        %vm1631 = vcmp.lt.f32.partialorder %v1630, 0.0004427343
        %v1632 = vsel %vm1631, %v1629, %v1626
        %v1633 = vadd.f32 %v1443, 1.0
        %v1634 = vlog2.pop %v1633
        %v1635 = vmul.f32 %v1634, 0.6931472
        %v1636 = vmul.f32 -0.5, %v1443
        %v1637 = vadd.f32 %v1636, 1.0
        %v1638 = vmul.f32 %v1637, %v1443
        %v1639 = vand.u32 2147483647, %v1443
        %vm1640 = vcmp.lt.f32.partialorder %v1639, 0.0004427343
        %v1641 = vsel %vm1640, %v1638, %v1635
        %v1642 = vadd.f32 %v1445, 1.0
        %v1643 = vlog2.pop %v1642
        %v1644 = vmul.f32 %v1643, 0.6931472
        %v1645 = vmul.f32 -0.5, %v1445
        %v1646 = vadd.f32 %v1645, 1.0
        %v1647 = vmul.f32 %v1646, %v1445
        %v1648 = vand.u32 2147483647, %v1445
        %vm1649 = vcmp.lt.f32.partialorder %v1648, 0.0004427343
        %v1650 = vsel %vm1649, %v1647, %v1644
        %v1651 = vadd.f32 %v1447, 1.0
        %v1652 = vlog2.pop %v1651
        %v1653 = vmul.f32 %v1652, 0.6931472
        %v1654 = vmul.f32 -0.5, %v1447
        %v1655 = vadd.f32 %v1654, 1.0
        %v1656 = vmul.f32 %v1655, %v1447
        %v1657 = vand.u32 2147483647, %v1447
        %vm1658 = vcmp.lt.f32.partialorder %v1657, 0.0004427343
        %v1659 = vsel %vm1658, %v1656, %v1653
        %v1660 = vadd.f32 %v1449, 1.0
        %v1661 = vlog2.pop %v1660
        %v1662 = vmul.f32 %v1661, 0.6931472
        %v1663 = vmul.f32 -0.5, %v1449
        %v1664 = vadd.f32 %v1663, 1.0
        %v1665 = vmul.f32 %v1664, %v1449
        %v1666 = vand.u32 2147483647, %v1449
        %vm1667 = vcmp.lt.f32.partialorder %v1666, 0.0004427343
        %v1668 = vsel %vm1667, %v1665, %v1662
        %v1669 = vadd.f32 %v1451, 1.0
        %v1670 = vlog2.pop %v1669
        %v1671 = vmul.f32 %v1670, 0.6931472
        %v1672 = vmul.f32 -0.5, %v1451
        %v1673 = vadd.f32 %v1672, 1.0
        %v1674 = vmul.f32 %v1673, %v1451
        %v1675 = vand.u32 2147483647, %v1451
        %vm1676 = vcmp.lt.f32.partialorder %v1675, 0.0004427343
        %v1677 = vsel %vm1676, %v1674, %v1671
        %v1678 = vadd.f32 %v1453, 1.0
        %v1679 = vlog2.pop %v1678
        %v1680 = vmul.f32 %v1679, 0.6931472
        %v1681 = vmul.f32 -0.5, %v1453
        %v1682 = vadd.f32 %v1681, 1.0
        %v1683 = vmul.f32 %v1682, %v1453
        %v1684 = vand.u32 2147483647, %v1453
        %vm1685 = vcmp.lt.f32.partialorder %v1684, 0.0004427343
        %v1686 = vsel %vm1685, %v1683, %v1680
        %v1687 = vadd.f32 %v1455, 1.0
        %v1688 = vlog2.pop %v1687
        %v1689 = vmul.f32 %v1688, 0.6931472
        %v1690 = vmul.f32 -0.5, %v1455
        %v1691 = vadd.f32 %v1690, 1.0
        %v1692 = vmul.f32 %v1691, %v1455
        %v1693 = vand.u32 2147483647, %v1455
        %vm1694 = vcmp.lt.f32.partialorder %v1693, 0.0004427343
        %v1695 = vsel %vm1694, %v1692, %v1689
        %v1696 = vadd.f32 %v1457, 1.0
        %v1697 = vlog2.pop %v1696
        %v1698 = vmul.f32 %v1697, 0.6931472
        %v1699 = vmul.f32 -0.5, %v1457
        %v1700 = vadd.f32 %v1699, 1.0
        %v1701 = vmul.f32 %v1700, %v1457
        %v1702 = vand.u32 2147483647, %v1457
        %vm1703 = vcmp.lt.f32.partialorder %v1702, 0.0004427343
        %v1704 = vsel %vm1703, %v1701, %v1698
        %v1705 = vadd.f32 %v1459, 1.0
        %v1706 = vlog2.pop %v1705
        %v1707 = vmul.f32 %v1706, 0.6931472
        %v1708 = vmul.f32 -0.5, %v1459
        %v1709 = vadd.f32 %v1708, 1.0
        %v1710 = vmul.f32 %v1709, %v1459
        %v1711 = vand.u32 2147483647, %v1459
        %vm1712 = vcmp.lt.f32.partialorder %v1711, 0.0004427343
        %v1713 = vsel %vm1712, %v1710, %v1707
        %v1714 = vadd.f32 %v1461, 1.0
        %v1715 = vlog2.pop %v1714
        %v1716 = vmul.f32 %v1715, 0.6931472
        %v1717 = vmul.f32 -0.5, %v1461
        %v1718 = vadd.f32 %v1717, 1.0
        %v1719 = vmul.f32 %v1718, %v1461
        %v1720 = vand.u32 2147483647, %v1461
        %vm1721 = vcmp.lt.f32.partialorder %v1720, 0.0004427343
        %v1722 = vsel %vm1721, %v1719, %v1716
        %v1723 = vadd.f32 %v1463, 1.0
        %v1724 = vlog2.pop %v1723
        %v1725 = vmul.f32 %v1724, 0.6931472
        %v1726 = vmul.f32 -0.5, %v1463
        %v1727 = vadd.f32 %v1726, 1.0
        %v1728 = vmul.f32 %v1727, %v1463
        %v1729 = vand.u32 2147483647, %v1463
        %vm1730 = vcmp.lt.f32.partialorder %v1729, 0.0004427343
        %v1731 = vsel %vm1730, %v1728, %v1725
        %v1732 = vadd.f32 %v1465, 1.0
        %v1733 = vlog2.pop %v1732
        %v1734 = vmul.f32 %v1733, 0.6931472
        %v1735 = vmul.f32 -0.5, %v1465
        %v1736 = vadd.f32 %v1735, 1.0
        %v1737 = vmul.f32 %v1736, %v1465
        %v1738 = vand.u32 2147483647, %v1465
        %vm1739 = vcmp.lt.f32.partialorder %v1738, 0.0004427343
        %v1740 = vsel %vm1739, %v1737, %v1734
        %v1741 = vadd.f32 %v1467, 1.0
        %v1742 = vlog2.pop %v1741
        %v1743 = vmul.f32 %v1742, 0.6931472
        %v1744 = vmul.f32 -0.5, %v1467
        %v1745 = vadd.f32 %v1744, 1.0
        %v1746 = vmul.f32 %v1745, %v1467
        %v1747 = vand.u32 2147483647, %v1467
        %vm1748 = vcmp.lt.f32.partialorder %v1747, 0.0004427343
        %v1749 = vsel %vm1748, %v1746, %v1743
        %v1750 = vadd.f32 %v1469, 1.0
        %v1751 = vlog2.pop %v1750
        %v1752 = vmul.f32 %v1751, 0.6931472
        %v1753 = vmul.f32 -0.5, %v1469
        %v1754 = vadd.f32 %v1753, 1.0
        %v1755 = vmul.f32 %v1754, %v1469
        %v1756 = vand.u32 2147483647, %v1469
        %vm1757 = vcmp.lt.f32.partialorder %v1756, 0.0004427343
        %v1758 = vsel %vm1757, %v1755, %v1752
        %v1759 = vadd.f32 %v1471, 1.0
        %v1760 = vlog2.pop %v1759
        %v1761 = vmul.f32 %v1760, 0.6931472
        %v1762 = vmul.f32 -0.5, %v1471
        %v1763 = vadd.f32 %v1762, 1.0
        %v1764 = vmul.f32 %v1763, %v1471
        %v1765 = vand.u32 2147483647, %v1471
        %vm1766 = vcmp.lt.f32.partialorder %v1765, 0.0004427343
        %v1767 = vsel %vm1766, %v1764, %v1761
        %v1768 = vadd.f32 %v1473, 1.0
        %v1769 = vlog2.pop %v1768
        %v1770 = vmul.f32 %v1769, 0.6931472
        %v1771 = vmul.f32 -0.5, %v1473
        %v1772 = vadd.f32 %v1771, 1.0
        %v1773 = vmul.f32 %v1772, %v1473
        %v1774 = vand.u32 2147483647, %v1473
        %vm1775 = vcmp.lt.f32.partialorder %v1774, 0.0004427343
        %v1776 = vsel %vm1775, %v1773, %v1770
        %v1777 = vadd.f32 %v1475, 1.0
        %v1778 = vlog2.pop %v1777
        %v1779 = vmul.f32 %v1778, 0.6931472
        %v1780 = vmul.f32 -0.5, %v1475
        %v1781 = vadd.f32 %v1780, 1.0
        %v1782 = vmul.f32 %v1781, %v1475
        %v1783 = vand.u32 2147483647, %v1475
        %vm1784 = vcmp.lt.f32.partialorder %v1783, 0.0004427343
        %v1785 = vsel %vm1784, %v1782, %v1779
        %v1786 = vadd.f32 %v1477, 1.0
        %v1787 = vlog2.pop %v1786
        %v1788 = vmul.f32 %v1787, 0.6931472
        %v1789 = vmul.f32 -0.5, %v1477
        %v1790 = vadd.f32 %v1789, 1.0
        %v1791 = vmul.f32 %v1790, %v1477
        %v1792 = vand.u32 2147483647, %v1477
        %vm1793 = vcmp.lt.f32.partialorder %v1792, 0.0004427343
        %v1794 = vsel %vm1793, %v1791, %v1788
        %v1795 = vadd.f32 %v1479, 1.0
        %v1796 = vlog2.pop %v1795
        %v1797 = vmul.f32 %v1796, 0.6931472
        %v1798 = vmul.f32 -0.5, %v1479
        %v1799 = vadd.f32 %v1798, 1.0
        %v1800 = vmul.f32 %v1799, %v1479
        %v1801 = vand.u32 2147483647, %v1479
        %vm1802 = vcmp.lt.f32.partialorder %v1801, 0.0004427343
        %v1803 = vsel %vm1802, %v1800, %v1797
        %v1804 = vadd.f32 %v1481, 1.0
        %v1805 = vlog2.pop %v1804
        %v1806 = vmul.f32 %v1805, 0.6931472
        %v1807 = vmul.f32 -0.5, %v1481
        %v1808 = vadd.f32 %v1807, 1.0
        %v1809 = vmul.f32 %v1808, %v1481
        %v1810 = vand.u32 2147483647, %v1481
        %vm1811 = vcmp.lt.f32.partialorder %v1810, 0.0004427343
        %v1812 = vsel %vm1811, %v1809, %v1806
        %v1813 = vadd.f32 %v1483, 1.0
        %v1814 = vlog2.pop %v1813
        %v1815 = vmul.f32 %v1814, 0.6931472
        %v1816 = vmul.f32 -0.5, %v1483
        %v1817 = vadd.f32 %v1816, 1.0
        %v1818 = vmul.f32 %v1817, %v1483
        %v1819 = vand.u32 2147483647, %v1483
        %vm1820 = vcmp.lt.f32.partialorder %v1819, 0.0004427343
        %v1821 = vsel %vm1820, %v1818, %v1815
        %v1822 = vadd.f32 %v1485, 1.0
        %v1823 = vlog2.pop %v1822
        %v1824 = vmul.f32 %v1823, 0.6931472
        %v1825 = vmul.f32 -0.5, %v1485
        %v1826 = vadd.f32 %v1825, 1.0
        %v1827 = vmul.f32 %v1826, %v1485
        %v1828 = vand.u32 2147483647, %v1485
        %vm1829 = vcmp.lt.f32.partialorder %v1828, 0.0004427343
        %v1830 = vsel %vm1829, %v1827, %v1824
        %v1831 = vadd.f32 %v1487, 1.0
        %v1832 = vlog2.pop %v1831
        %v1833 = vmul.f32 %v1832, 0.6931472
        %v1834 = vmul.f32 -0.5, %v1487
        %v1835 = vadd.f32 %v1834, 1.0
        %v1836 = vmul.f32 %v1835, %v1487
        %v1837 = vand.u32 2147483647, %v1487
        %vm1838 = vcmp.lt.f32.partialorder %v1837, 0.0004427343
        %v1839 = vsel %vm1838, %v1836, %v1833
        %v1840 = vadd.f32 %v1489, 1.0
        %v1841 = vlog2.pop %v1840
        %v1842 = vmul.f32 %v1841, 0.6931472
        %v1843 = vmul.f32 -0.5, %v1489
        %v1844 = vadd.f32 %v1843, 1.0
        %v1845 = vmul.f32 %v1844, %v1489
        %v1846 = vand.u32 2147483647, %v1489
        %vm1847 = vcmp.lt.f32.partialorder %v1846, 0.0004427343
        %v1848 = vsel %vm1847, %v1845, %v1842
        %v1849 = vadd.f32 %v1491, 1.0
        %v1850 = vlog2.pop %v1849
        %v1851 = vmul.f32 %v1850, 0.6931472
        %v1852 = vmul.f32 -0.5, %v1491
        %v1853 = vadd.f32 %v1852, 1.0
        %v1854 = vmul.f32 %v1853, %v1491
        %v1855 = vand.u32 2147483647, %v1491
        %vm1856 = vcmp.lt.f32.partialorder %v1855, 0.0004427343
        %v1857 = vsel %vm1856, %v1854, %v1851
        %v1858 = vadd.f32 %v1493, 1.0
        %v1859 = vlog2.pop %v1858
        %v1860 = vmul.f32 %v1859, 0.6931472
        %v1861 = vmul.f32 -0.5, %v1493
        %v1862 = vadd.f32 %v1861, 1.0
        %v1863 = vmul.f32 %v1862, %v1493
        %v1864 = vand.u32 2147483647, %v1493
        %vm1865 = vcmp.lt.f32.partialorder %v1864, 0.0004427343
        %v1866 = vsel %vm1865, %v1863, %v1860
        %v1867 = vadd.f32 %v1495, 1.0
        %v1868 = vlog2.pop %v1867
        %v1869 = vmul.f32 %v1868, 0.6931472
        %v1870 = vmul.f32 -0.5, %v1495
        %v1871 = vadd.f32 %v1870, 1.0
        %v1872 = vmul.f32 %v1871, %v1495
        %v1873 = vand.u32 2147483647, %v1495
        %vm1874 = vcmp.lt.f32.partialorder %v1873, 0.0004427343
        %v1875 = vsel %vm1874, %v1872, %v1869
        %v1876 = vadd.f32 %v1497, 1.0
        %v1877 = vlog2.pop %v1876
        %v1878 = vmul.f32 %v1877, 0.6931472
        %v1879 = vmul.f32 -0.5, %v1497
        %v1880 = vadd.f32 %v1879, 1.0
        %v1881 = vmul.f32 %v1880, %v1497
        %v1882 = vand.u32 2147483647, %v1497
        %vm1883 = vcmp.lt.f32.partialorder %v1882, 0.0004427343
        %v1884 = vsel %vm1883, %v1881, %v1878
        %v1885 = vadd.f32 %v1499, 1.0
        %v1886 = vlog2.pop %v1885
        %v1887 = vmul.f32 %v1886, 0.6931472
        %v1888 = vmul.f32 -0.5, %v1499
        %v1889 = vadd.f32 %v1888, 1.0
        %v1890 = vmul.f32 %v1889, %v1499
        %v1891 = vand.u32 2147483647, %v1499
        %vm1892 = vcmp.lt.f32.partialorder %v1891, 0.0004427343
        %v1893 = vsel %vm1892, %v1890, %v1887
        %v1894 = vadd.f32 %v1501, 1.0
        %v1895 = vlog2.pop %v1894
        %v1896 = vmul.f32 %v1895, 0.6931472
        %v1897 = vmul.f32 -0.5, %v1501
        %v1898 = vadd.f32 %v1897, 1.0
        %v1899 = vmul.f32 %v1898, %v1501
        %v1900 = vand.u32 2147483647, %v1501
        %vm1901 = vcmp.lt.f32.partialorder %v1900, 0.0004427343
        %v1902 = vsel %vm1901, %v1899, %v1896
        %v1903 = vadd.f32 %v1503, 1.0
        %v1904 = vlog2.pop %v1903
        %v1905 = vmul.f32 %v1904, 0.6931472
        %v1906 = vmul.f32 -0.5, %v1503
        %v1907 = vadd.f32 %v1906, 1.0
        %v1908 = vmul.f32 %v1907, %v1503
        %v1909 = vand.u32 2147483647, %v1503
        %vm1910 = vcmp.lt.f32.partialorder %v1909, 0.0004427343
        %v1911 = vsel %vm1910, %v1908, %v1905
        %v1912 = vadd.f32 %v1505, 1.0
        %v1913 = vlog2.pop %v1912
        %v1914 = vmul.f32 %v1913, 0.6931472
        %v1915 = vmul.f32 -0.5, %v1505
        %v1916 = vadd.f32 %v1915, 1.0
        %v1917 = vmul.f32 %v1916, %v1505
        %v1918 = vand.u32 2147483647, %v1505
        %vm1919 = vcmp.lt.f32.partialorder %v1918, 0.0004427343
        %v1920 = vsel %vm1919, %v1917, %v1914
        %v1921 = vadd.f32 %v1507, 1.0
        %v1922 = vlog2.pop %v1921
        %v1923 = vmul.f32 %v1922, 0.6931472
        %v1924 = vmul.f32 -0.5, %v1507
        %v1925 = vadd.f32 %v1924, 1.0
        %v1926 = vmul.f32 %v1925, %v1507
        %v1927 = vand.u32 2147483647, %v1507
        %vm1928 = vcmp.lt.f32.partialorder %v1927, 0.0004427343
        %v1929 = vsel %vm1928, %v1926, %v1923
        %v1930 = vadd.f32 %v1509, 1.0
        %v1931 = vlog2.pop %v1930
        %v1932 = vmul.f32 %v1931, 0.6931472
        %v1933 = vmul.f32 -0.5, %v1509
        %v1934 = vadd.f32 %v1933, 1.0
        %v1935 = vmul.f32 %v1934, %v1509
        %v1936 = vand.u32 2147483647, %v1509
        %vm1937 = vcmp.lt.f32.partialorder %v1936, 0.0004427343
        %v1938 = vsel %vm1937, %v1935, %v1932
        %v1939 = vadd.f32 %v1511, 1.0
        %v1940 = vlog2.pop %v1939
        %v1941 = vmul.f32 %v1940, 0.6931472
        %v1942 = vmul.f32 -0.5, %v1511
        %v1943 = vadd.f32 %v1942, 1.0
        %v1944 = vmul.f32 %v1943, %v1511
        %v1945 = vand.u32 2147483647, %v1511
        %vm1946 = vcmp.lt.f32.partialorder %v1945, 0.0004427343
        %v1947 = vsel %vm1946, %v1944, %v1941
        %v1948 = vadd.f32 %v1513, 1.0
        %v1949 = vlog2.pop %v1948
        %v1950 = vmul.f32 %v1949, 0.6931472
        %v1951 = vmul.f32 -0.5, %v1513
        %v1952 = vadd.f32 %v1951, 1.0
        %v1953 = vmul.f32 %v1952, %v1513
        %v1954 = vand.u32 2147483647, %v1513
        %vm1955 = vcmp.lt.f32.partialorder %v1954, 0.0004427343
        %v1956 = vsel %vm1955, %v1953, %v1950
        %v1957 = vadd.f32 %v1515, 1.0
        %v1958 = vlog2.pop %v1957
        %v1959 = vmul.f32 %v1958, 0.6931472
        %v1960 = vmul.f32 -0.5, %v1515
        %v1961 = vadd.f32 %v1960, 1.0
        %v1962 = vmul.f32 %v1961, %v1515
        %v1963 = vand.u32 2147483647, %v1515
        %vm1964 = vcmp.lt.f32.partialorder %v1963, 0.0004427343
        %v1965 = vsel %vm1964, %v1962, %v1959
        %v1966 = vadd.f32 %v1517, 1.0
        %v1967 = vlog2.pop %v1966
        %v1968 = vmul.f32 %v1967, 0.6931472
        %v1969 = vmul.f32 -0.5, %v1517
        %v1970 = vadd.f32 %v1969, 1.0
        %v1971 = vmul.f32 %v1970, %v1517
        %v1972 = vand.u32 2147483647, %v1517
        %vm1973 = vcmp.lt.f32.partialorder %v1972, 0.0004427343
        %v1974 = vsel %vm1973, %v1971, %v1968
        %v1975 = vadd.f32 %v1519, 1.0
        %v1976 = vlog2.pop %v1975
        %v1977 = vmul.f32 %v1976, 0.6931472
        %v1978 = vmul.f32 -0.5, %v1519
        %v1979 = vadd.f32 %v1978, 1.0
        %v1980 = vmul.f32 %v1979, %v1519
        %v1981 = vand.u32 2147483647, %v1519
        %vm1982 = vcmp.lt.f32.partialorder %v1981, 0.0004427343
        %v1983 = vsel %vm1982, %v1980, %v1977
        %v1984 = vadd.f32 %v1521, 1.0
        %v1985 = vlog2.pop %v1984
        %v1986 = vmul.f32 %v1985, 0.6931472
        %v1987 = vmul.f32 -0.5, %v1521
        %v1988 = vadd.f32 %v1987, 1.0
        %v1989 = vmul.f32 %v1988, %v1521
        %v1990 = vand.u32 2147483647, %v1521
        %vm1991 = vcmp.lt.f32.partialorder %v1990, 0.0004427343
        %v1992 = vsel %vm1991, %v1989, %v1986
        %v1993 = vadd.f32 %v1523, 1.0
        %v1994 = vlog2.pop %v1993
        %v1995 = vmul.f32 %v1994, 0.6931472
        %v1996 = vmul.f32 -0.5, %v1523
        %v1997 = vadd.f32 %v1996, 1.0
        %v1998 = vmul.f32 %v1997, %v1523
        %v1999 = vand.u32 2147483647, %v1523
        %vm2000 = vcmp.lt.f32.partialorder %v1999, 0.0004427343
        %v2001 = vsel %vm2000, %v1998, %v1995
        %v2002 = vadd.f32 %v1525, 1.0
        %v2003 = vlog2.pop %v2002
        %v2004 = vmul.f32 %v2003, 0.6931472
        %v2005 = vmul.f32 -0.5, %v1525
        %v2006 = vadd.f32 %v2005, 1.0
        %v2007 = vmul.f32 %v2006, %v1525
        %v2008 = vand.u32 2147483647, %v1525
        %vm2009 = vcmp.lt.f32.partialorder %v2008, 0.0004427343
        %v2010 = vsel %vm2009, %v2007, %v2004
        %v2011 = vadd.f32 %v1527, 1.0
        %v2012 = vlog2.pop %v2011
        %v2013 = vmul.f32 %v2012, 0.6931472
        %v2014 = vmul.f32 -0.5, %v1527
        %v2015 = vadd.f32 %v2014, 1.0
        %v2016 = vmul.f32 %v2015, %v1527
        %v2017 = vand.u32 2147483647, %v1527
        %vm2018 = vcmp.lt.f32.partialorder %v2017, 0.0004427343
        %v2019 = vsel %vm2018, %v2016, %v2013
        %v2020 = vadd.f32 %v1529, 1.0
        %v2021 = vlog2.pop %v2020
        %v2022 = vmul.f32 %v2021, 0.6931472
        %v2023 = vmul.f32 -0.5, %v1529
        %v2024 = vadd.f32 %v2023, 1.0
        %v2025 = vmul.f32 %v2024, %v1529
        %v2026 = vand.u32 2147483647, %v1529
        %vm2027 = vcmp.lt.f32.partialorder %v2026, 0.0004427343
        %v2028 = vsel %vm2027, %v2025, %v2022
        %v2029 = vadd.f32 %v1531, 1.0
        %v2030 = vlog2.pop %v2029
        %v2031 = vmul.f32 %v2030, 0.6931472
        %v2032 = vmul.f32 -0.5, %v1531
        %v2033 = vadd.f32 %v2032, 1.0
        %v2034 = vmul.f32 %v2033, %v1531
        %v2035 = vand.u32 2147483647, %v1531
        %vm2036 = vcmp.lt.f32.partialorder %v2035, 0.0004427343
        %v2037 = vsel %vm2036, %v2034, %v2031
        %v2038 = vadd.f32 %v1533, 1.0
        %v2039 = vlog2.pop %v2038
        %v2040 = vmul.f32 %v2039, 0.6931472
        %v2041 = vmul.f32 -0.5, %v1533
        %v2042 = vadd.f32 %v2041, 1.0
        %v2043 = vmul.f32 %v2042, %v1533
        %v2044 = vand.u32 2147483647, %v1533
        %vm2045 = vcmp.lt.f32.partialorder %v2044, 0.0004427343
        %v2046 = vsel %vm2045, %v2043, %v2040
        %v2047 = vadd.f32 %v1535, 1.0
        %v2048 = vlog2.pop %v2047
        %v2049 = vmul.f32 %v2048, 0.6931472
        %v2050 = vmul.f32 -0.5, %v1535
        %v2051 = vadd.f32 %v2050, 1.0
        %v2052 = vmul.f32 %v2051, %v1535
        %v2053 = vand.u32 2147483647, %v1535
        %vm2054 = vcmp.lt.f32.partialorder %v2053, 0.0004427343
        %v2055 = vsel %vm2054, %v2052, %v2049
        %v2056 = vadd.f32 %v1537, 1.0
        %v2057 = vlog2.pop %v2056
        %v2058 = vmul.f32 %v2057, 0.6931472
        %v2059 = vmul.f32 -0.5, %v1537
        %v2060 = vadd.f32 %v2059, 1.0
        %v2061 = vmul.f32 %v2060, %v1537
        %v2062 = vand.u32 2147483647, %v1537
        %vm2063 = vcmp.lt.f32.partialorder %v2062, 0.0004427343
        %v2064 = vsel %vm2063, %v2061, %v2058
        %v2065 = vadd.f32 %v1539, 1.0
        %v2066 = vlog2.pop %v2065
        %v2067 = vmul.f32 %v2066, 0.6931472
        %v2068 = vmul.f32 -0.5, %v1539
        %v2069 = vadd.f32 %v2068, 1.0
        %v2070 = vmul.f32 %v2069, %v1539
        %v2071 = vand.u32 2147483647, %v1539
        %vm2072 = vcmp.lt.f32.partialorder %v2071, 0.0004427343
        %v2073 = vsel %vm2072, %v2070, %v2067
        %v2074 = vadd.f32 %v1541, 1.0
        %v2075 = vlog2.pop %v2074
        %v2076 = vmul.f32 %v2075, 0.6931472
        %v2077 = vmul.f32 -0.5, %v1541
        %v2078 = vadd.f32 %v2077, 1.0
        %v2079 = vmul.f32 %v2078, %v1541
        %v2080 = vand.u32 2147483647, %v1541
        %vm2081 = vcmp.lt.f32.partialorder %v2080, 0.0004427343
        %v2082 = vsel %vm2081, %v2079, %v2076
        %v2083 = vadd.f32 %v1543, 1.0
        %v2084 = vlog2.pop %v2083
        %v2085 = vmul.f32 %v2084, 0.6931472
        %v2086 = vmul.f32 -0.5, %v1543
        %v2087 = vadd.f32 %v2086, 1.0
        %v2088 = vmul.f32 %v2087, %v1543
        %v2089 = vand.u32 2147483647, %v1543
        %vm2090 = vcmp.lt.f32.partialorder %v2089, 0.0004427343
        %v2091 = vsel %vm2090, %v2088, %v2085
        %v2092 = vadd.f32 %v1545, 1.0
        %v2093 = vlog2.pop %v2092
        %v2094 = vmul.f32 %v2093, 0.6931472
        %v2095 = vmul.f32 -0.5, %v1545
        %v2096 = vadd.f32 %v2095, 1.0
        %v2097 = vmul.f32 %v2096, %v1545
        %v2098 = vand.u32 2147483647, %v1545
        %vm2099 = vcmp.lt.f32.partialorder %v2098, 0.0004427343
        %v2100 = vsel %vm2099, %v2097, %v2094
        %v2101 = vadd.f32 %v1547, 1.0
        %v2102 = vlog2.pop %v2101
        %v2103 = vmul.f32 %v2102, 0.6931472
        %v2104 = vmul.f32 -0.5, %v1547
        %v2105 = vadd.f32 %v2104, 1.0
        %v2106 = vmul.f32 %v2105, %v1547
        %v2107 = vand.u32 2147483647, %v1547
        %vm2108 = vcmp.lt.f32.partialorder %v2107, 0.0004427343
        %v2109 = vsel %vm2108, %v2106, %v2103
        %v2110 = vadd.f32 %v1549, 1.0
        %v2111 = vlog2.pop %v2110
        %v2112 = vmul.f32 %v2111, 0.6931472
        %v2113 = vmul.f32 -0.5, %v1549
        %v2114 = vadd.f32 %v2113, 1.0
        %v2115 = vmul.f32 %v2114, %v1549
        %v2116 = vand.u32 2147483647, %v1549
        %vm2117 = vcmp.lt.f32.partialorder %v2116, 0.0004427343
        %v2118 = vsel %vm2117, %v2115, %v2112
        %v2119 = vadd.f32 %v1551, 1.0
        %v2120 = vlog2.pop %v2119
        %v2121 = vmul.f32 %v2120, 0.6931472
        %v2122 = vmul.f32 -0.5, %v1551
        %v2123 = vadd.f32 %v2122, 1.0
        %v2124 = vmul.f32 %v2123, %v1551
        %v2125 = vand.u32 2147483647, %v1551
        %vm2126 = vcmp.lt.f32.partialorder %v2125, 0.0004427343
        %v2127 = vsel %vm2126, %v2124, %v2121
        %v2128 = vmul.f32 %v1560, 0.01
        %v2129 = vmul.f32 %v1569, 0.01
        %v2130 = vmul.f32 %v1578, 0.01
        %v2131 = vmul.f32 %v1587, 0.01
        %v2132 = vmul.f32 %v1596, 0.01
        %v2133 = vmul.f32 %v1605, 0.01
        %v2134 = vmul.f32 %v1614, 0.01
        %v2135 = vmul.f32 %v1623, 0.01
        %v2136 = vmul.f32 %v1632, 0.01
        %v2137 = vmul.f32 %v1641, 0.01
        %v2138 = vmul.f32 %v1650, 0.01
        %v2139 = vmul.f32 %v1659, 0.01
        %v2140 = vmul.f32 %v1668, 0.01
        %v2141 = vmul.f32 %v1677, 0.01
        %v2142 = vmul.f32 %v1686, 0.01
        %v2143 = vmul.f32 %v1695, 0.01
        %v2144 = vmul.f32 %v1704, 0.01
        %v2145 = vmul.f32 %v1713, 0.01
        %v2146 = vmul.f32 %v1722, 0.01
        %v2147 = vmul.f32 %v1731, 0.01
        %v2148 = vmul.f32 %v1740, 0.01
        %v2149 = vmul.f32 %v1749, 0.01
        %v2150 = vmul.f32 %v1758, 0.01
        %v2151 = vmul.f32 %v1767, 0.01
        %v2152 = vmul.f32 %v1776, 0.01
        %v2153 = vmul.f32 %v1785, 0.01
        %v2154 = vmul.f32 %v1794, 0.01
        %v2155 = vmul.f32 %v1803, 0.01
        %v2156 = vmul.f32 %v1812, 0.01
        %v2157 = vmul.f32 %v1821, 0.01
        %v2158 = vmul.f32 %v1830, 0.01
        %v2159 = vmul.f32 %v1839, 0.01
        %v2160 = vmul.f32 %v1848, 0.01
        %v2161 = vmul.f32 %v1857, 0.01
        %v2162 = vmul.f32 %v1866, 0.01
        %v2163 = vmul.f32 %v1875, 0.01
        %v2164 = vmul.f32 %v1884, 0.01
        %v2165 = vmul.f32 %v1893, 0.01
        %v2166 = vmul.f32 %v1902, 0.01
        %v2167 = vmul.f32 %v1911, 0.01
        %v2168 = vmul.f32 %v1920, 0.01
        %v2169 = vmul.f32 %v1929, 0.01
        %v2170 = vmul.f32 %v1938, 0.01
        %v2171 = vmul.f32 %v1947, 0.01
        %v2172 = vmul.f32 %v1956, 0.01
        %v2173 = vmul.f32 %v1965, 0.01
        %v2174 = vmul.f32 %v1974, 0.01
        %v2175 = vmul.f32 %v1983, 0.01
        %v2176 = vmul.f32 %v1992, 0.01
        %v2177 = vmul.f32 %v2001, 0.01
        %v2178 = vmul.f32 %v2010, 0.01
        %v2179 = vmul.f32 %v2019, 0.01
        %v2180 = vmul.f32 %v2028, 0.01
        %v2181 = vmul.f32 %v2037, 0.01
        %v2182 = vmul.f32 %v2046, 0.01
        %v2183 = vmul.f32 %v2055, 0.01
        %v2184 = vmul.f32 %v2064, 0.01
        %v2185 = vmul.f32 %v2073, 0.01
        %v2186 = vmul.f32 %v2082, 0.01
        %v2187 = vmul.f32 %v2091, 0.01
        %v2188 = vmul.f32 %v2100, 0.01
        %v2189 = vmul.f32 %v2109, 0.01
        %v2190 = vmul.f32 %v2118, 0.01
        %v2191 = vmul.f32 %v2127, 0.01
        %v2192 = vsel %vm1360, %v1232, %v2128
        %v2193 = vsel %vm1361, %v1233, %v2129
        %v2194 = vsel %vm1362, %v1234, %v2130
        %v2195 = vsel %vm1363, %v1235, %v2131
        %v2196 = vsel %vm1364, %v1236, %v2132
        %v2197 = vsel %vm1365, %v1237, %v2133
        %v2198 = vsel %vm1366, %v1238, %v2134
        %v2199 = vsel %vm1367, %v1239, %v2135
        %v2200 = vsel %vm1368, %v1240, %v2136
        %v2201 = vsel %vm1369, %v1241, %v2137
        %v2202 = vsel %vm1370, %v1242, %v2138
        %v2203 = vsel %vm1371, %v1243, %v2139
        %v2204 = vsel %vm1372, %v1244, %v2140
        %v2205 = vsel %vm1373, %v1245, %v2141
        %v2206 = vsel %vm1374, %v1246, %v2142
        %v2207 = vsel %vm1375, %v1247, %v2143
        %v2208 = vsel %vm1376, %v1248, %v2144
        %v2209 = vsel %vm1377, %v1249, %v2145
        %v2210 = vsel %vm1378, %v1250, %v2146
        %v2211 = vsel %vm1379, %v1251, %v2147
        %v2212 = vsel %vm1380, %v1252, %v2148
        %v2213 = vsel %vm1381, %v1253, %v2149
        %v2214 = vsel %vm1382, %v1254, %v2150
        %v2215 = vsel %vm1383, %v1255, %v2151
        %v2216 = vsel %vm1384, %v1256, %v2152
        %v2217 = vsel %vm1385, %v1257, %v2153
        %v2218 = vsel %vm1386, %v1258, %v2154
        %v2219 = vsel %vm1387, %v1259, %v2155
        %v2220 = vsel %vm1388, %v1260, %v2156
        %v2221 = vsel %vm1389, %v1261, %v2157
        %v2222 = vsel %vm1390, %v1262, %v2158
        %v2223 = vsel %vm1391, %v1263, %v2159
        %v2224 = vsel %vm1392, %v1264, %v2160
        %v2225 = vsel %vm1393, %v1265, %v2161
        %v2226 = vsel %vm1394, %v1266, %v2162
        %v2227 = vsel %vm1395, %v1267, %v2163
        %v2228 = vsel %vm1396, %v1268, %v2164
        %v2229 = vsel %vm1397, %v1269, %v2165
        %v2230 = vsel %vm1398, %v1270, %v2166
        %v2231 = vsel %vm1399, %v1271, %v2167
        %v2232 = vsel %vm1400, %v1272, %v2168
        %v2233 = vsel %vm1401, %v1273, %v2169
        %v2234 = vsel %vm1402, %v1274, %v2170
        %v2235 = vsel %vm1403, %v1275, %v2171
        %v2236 = vsel %vm1404, %v1276, %v2172
        %v2237 = vsel %vm1405, %v1277, %v2173
        %v2238 = vsel %vm1406, %v1278, %v2174
        %v2239 = vsel %vm1407, %v1279, %v2175
        %v2240 = vsel %vm1408, %v1280, %v2176
        %v2241 = vsel %vm1409, %v1281, %v2177
        %v2242 = vsel %vm1410, %v1282, %v2178
        %v2243 = vsel %vm1411, %v1283, %v2179
        %v2244 = vsel %vm1412, %v1284, %v2180
        %v2245 = vsel %vm1413, %v1285, %v2181
        %v2246 = vsel %vm1414, %v1286, %v2182
        %v2247 = vsel %vm1415, %v1287, %v2183
        %v2248 = vsel %vm1416, %v1288, %v2184
        %v2249 = vsel %vm1417, %v1289, %v2185
        %v2250 = vsel %vm1418, %v1290, %v2186
        %v2251 = vsel %vm1419, %v1291, %v2187
        %v2252 = vsel %vm1420, %v1292, %v2188
        %v2253 = vsel %vm1421, %v1293, %v2189
        %v2254 = vsel %vm1422, %v1294, %v2190
        %v2255 = vsel %vm1423, %v1295, %v2191
        %v2256 = vld [vmem:[#allocation2] sm:$0xff]
        %v2257 = vld [vmem:[#allocation2 + $0x8] sm:$0xff]
        %v2258 = vld [vmem:[#allocation2 + $0x10] sm:$0xff]
        %v2259 = vld [vmem:[#allocation2 + $0x18] sm:$0xff]
        %s2260 = scalar_lea.vmem %s3, 32
        %v2261 = vld [vmem:[%s2260] sm:$0xff]
        %v2262 = vld [vmem:[%s2260 + $0x8] sm:$0xff]
        %v2263 = vld [vmem:[%s2260 + $0x10] sm:$0xff]
        %v2264 = vld [vmem:[%s2260 + $0x18] sm:$0xff]
        %2266 = vset.pattern.permute.xlu0 0
        %2267 = vperm.xlu0 %2266, %v2261
        %v2268 = vpop.permute.xlu0 %2267
        %2271 = vset.pattern.permute.xlu0 0
        %2272 = vperm.xlu0 %2271, %v2262
        %v2273 = vpop.permute.xlu0 %2272
        %2276 = vset.pattern.permute.xlu0 0
        %2277 = vperm.xlu0 %2276, %v2263
        %v2278 = vpop.permute.xlu0 %2277
        %2281 = vset.pattern.permute.xlu0 0
        %2282 = vperm.xlu0 %2281, %v2264
        %v2283 = vpop.permute.xlu0 %2282
        %vm2285 = vcmask 261120
        %v2287 = vsel %vm2285, %v2256, 0
        %v2290 = vsel %vm2285, %v2257, 0
        %v2293 = vsel %vm2285, %v2258, 0
        %v2296 = vsel %vm2285, %v2259, 0
        %2298 = vmatprep.subr.mxu0 %v2193
        %2299 = vmatpush1.msra.mxu0 %v2192
        %2300 = vmatprep.subr.mxu0 %v2209
        %2301 = vmatpush1.msra.mxu0 %v2208
        %2302 = vmatprep.subr.mxu0 %v2225
        %2303 = vmatpush1.msra.mxu0 %v2224
        %2304 = vmatprep.subr.mxu0 %v2241
        %2305 = vmatpush1.msra.mxu0 %v2240
        %2306 = vmatprep.subr.mxu0 0.0
        %2307 = vmatpush1.msra.mxu0 0.0
        %2308 = vmatprep.subr.mxu0 0.0
        %2309 = vmatpush1.msra.mxu0 0.0
        %2310 = vmatprep.subr.mxu0 0.0
        %2311 = vmatpush1.msra.mxu0 0.0
        %2312 = vmatprep.subr.mxu0 0.0
        %2313 = vmatpush1.msra.mxu0 0.0
        %2314 = vmatprep.subr.mxu0 0.0
        %2315 = vmatpush1.msra.mxu0 0.0
        %2316 = vmatprep.subr.mxu0 0.0
        %2317 = vmatpush1.msra.mxu0 0.0
        %2318 = vmatprep.subr.mxu0 0.0
        %2319 = vmatpush1.msra.mxu0 0.0
        %2320 = vmatprep.subr.mxu0 0.0
        %2321 = vmatpush1.msra.mxu0 0.0
        %2322 = vmatprep.subr.mxu0 0.0
        %2323 = vmatpush1.msra.mxu0 0.0
        %2324 = vmatprep.subr.mxu0 0.0
        %2325 = vmatpush1.msra.mxu0 0.0
        %2326 = vmatprep.subr.mxu0 0.0
        %2327 = vmatpush1.msra.mxu0 0.0
        %2328 = vmatprep.subr.mxu0 0.0
        %2329 = vmatpush1.msra.mxu0 0.0
        %2330 = vmatprep.subr.mxu0 0.0
        %2331 = vmatpush1.msra.mxu0 0.0
        %2332 = vmatprep.subr.mxu0 0.0
        %2333 = vmatpush1.msra.mxu0 0.0
        %2334 = vmatprep.subr.mxu0 0.0
        %2335 = vmatpush1.msra.mxu0 0.0
        %2336 = vmatprep.subr.mxu0 0.0
        %2337 = vmatpush1.msra.mxu0 0.0
        %2338 = vmatprep.subr.mxu0 0.0
        %2339 = vmatpush1.msra.mxu0 0.0
        %2340 = vmatprep.subr.mxu0 0.0
        %2341 = vmatpush1.msra.mxu0 0.0
        %2342 = vmatprep.subr.mxu0 0.0
        %2343 = vmatpush1.msra.mxu0 0.0
        %2344 = vmatprep.subr.mxu0 0.0
        %2345 = vmatpush1.msra.mxu0 0.0
        %2346 = vmatprep.subr.mxu0 0.0
        %2347 = vmatpush1.msra.mxu0 0.0
        %2348 = vmatprep.subr.mxu0 0.0
        %2349 = vmatpush1.msra.mxu0 0.0
        %2350 = vmatprep.subr.mxu0 0.0
        %2351 = vmatpush1.msra.mxu0 0.0
        %2352 = vmatprep.subr.mxu0 0.0
        %2353 = vmatpush1.msra.mxu0 0.0
        %2354 = vmatprep.subr.mxu0 0.0
        %2355 = vmatpush1.msra.mxu0 0.0
        %2356 = vmatprep.subr.mxu0 0.0
        %2357 = vmatpush1.msra.mxu0 0.0
        %2358 = vmatprep.subr.mxu0 0.0
        %2359 = vmatpush1.msra.mxu0 0.0
        %2360 = vmatprep.subr.mxu0 0.0
        %2361 = vmatpush1.msra.mxu0 0.0
        %2362 = vmatprep.mubr.f32.mxu0 0.0
        %2363 = vmatmul.mubr.f32.gmra.mrb[0].mxu0 %v2287
        %v2364 = vpop.f32.mrb[0].mxu0
        %v2365 = vadd.f32 %v2268, %v2364
        %v2366 = vpop.f32.mrb[0].mxu0
        %v2367 = vadd.f32 %v2268, %v2366
        %2368 = vmatprep.mubr.f32.mxu0 0.0
        %2369 = vmatmul.mubr.f32.gmra.mrb[0].mxu0 %v2290
        %v2370 = vpop.f32.mrb[0].mxu0
        %v2371 = vadd.f32 %v2273, %v2370
        %v2372 = vpop.f32.mrb[0].mxu0
        %v2373 = vadd.f32 %v2273, %v2372
        %2374 = vmatprep.mubr.f32.mxu0 0.0
        %2375 = vmatmul.mubr.f32.gmra.mrb[0].mxu0 %v2293
        %v2376 = vpop.f32.mrb[0].mxu0
        %v2377 = vadd.f32 %v2278, %v2376
        %v2378 = vpop.f32.mrb[0].mxu0
        %v2379 = vadd.f32 %v2278, %v2378
        %2380 = vmatprep.mubr.f32.mxu0 0.0
        %2381 = vmatmul.mubr.f32.gmra.mrb[0].mxu0 %v2296
        %v2382 = vpop.f32.mrb[0].mxu0
        %v2383 = vadd.f32 %v2283, %v2382
        %v2384 = vpop.f32.mrb[0].mxu0
        %v2385 = vadd.f32 %v2283, %v2384
        %2386 = vdwg.mxu0
        %2387 = vmatprep.subr.mxu0 %v2195
        %2388 = vmatpush1.msra.mxu0 %v2194
        %2389 = vmatprep.subr.mxu0 %v2211
        %2390 = vmatpush1.msra.mxu0 %v2210
        %2391 = vmatprep.subr.mxu0 %v2227
        %2392 = vmatpush1.msra.mxu0 %v2226
        %2393 = vmatprep.subr.mxu0 %v2243
        %2394 = vmatpush1.msra.mxu0 %v2242
        %2395 = vmatprep.subr.mxu0 0.0
        %2396 = vmatpush1.msra.mxu0 0.0
        %2397 = vmatprep.subr.mxu0 0.0
        %2398 = vmatpush1.msra.mxu0 0.0
        %2399 = vmatprep.subr.mxu0 0.0
        %2400 = vmatpush1.msra.mxu0 0.0
        %2401 = vmatprep.subr.mxu0 0.0
        %2402 = vmatpush1.msra.mxu0 0.0
        %2403 = vmatprep.subr.mxu0 0.0
        %2404 = vmatpush1.msra.mxu0 0.0
        %2405 = vmatprep.subr.mxu0 0.0
        %2406 = vmatpush1.msra.mxu0 0.0
        %2407 = vmatprep.subr.mxu0 0.0
        %2408 = vmatpush1.msra.mxu0 0.0
        %2409 = vmatprep.subr.mxu0 0.0
        %2410 = vmatpush1.msra.mxu0 0.0
        %2411 = vmatprep.subr.mxu0 0.0
        %2412 = vmatpush1.msra.mxu0 0.0
        %2413 = vmatprep.subr.mxu0 0.0
        %2414 = vmatpush1.msra.mxu0 0.0
        %2415 = vmatprep.subr.mxu0 0.0
        %2416 = vmatpush1.msra.mxu0 0.0
        %2417 = vmatprep.subr.mxu0 0.0
        %2418 = vmatpush1.msra.mxu0 0.0
        %2419 = vmatprep.subr.mxu0 0.0
        %2420 = vmatpush1.msra.mxu0 0.0
        %2421 = vmatprep.subr.mxu0 0.0
        %2422 = vmatpush1.msra.mxu0 0.0
        %2423 = vmatprep.subr.mxu0 0.0
        %2424 = vmatpush1.msra.mxu0 0.0
        %2425 = vmatprep.subr.mxu0 0.0
        %2426 = vmatpush1.msra.mxu0 0.0
        %2427 = vmatprep.subr.mxu0 0.0
        %2428 = vmatpush1.msra.mxu0 0.0
        %2429 = vmatprep.subr.mxu0 0.0
        %2430 = vmatpush1.msra.mxu0 0.0
        %2431 = vmatprep.subr.mxu0 0.0
        %2432 = vmatpush1.msra.mxu0 0.0
        %2433 = vmatprep.subr.mxu0 0.0
        %2434 = vmatpush1.msra.mxu0 0.0
        %2435 = vmatprep.subr.mxu0 0.0
        %2436 = vmatpush1.msra.mxu0 0.0
        %2437 = vmatprep.subr.mxu0 0.0
        %2438 = vmatpush1.msra.mxu0 0.0
        %2439 = vmatprep.subr.mxu0 0.0
        %2440 = vmatpush1.msra.mxu0 0.0
        %2441 = vmatprep.subr.mxu0 0.0
        %2442 = vmatpush1.msra.mxu0 0.0
        %2443 = vmatprep.subr.mxu0 0.0
        %2444 = vmatpush1.msra.mxu0 0.0
        %2445 = vmatprep.subr.mxu0 0.0
        %2446 = vmatpush1.msra.mxu0 0.0
        %2447 = vmatprep.subr.mxu0 0.0
        %2448 = vmatpush1.msra.mxu0 0.0
        %2449 = vmatprep.subr.mxu0 0.0
        %2450 = vmatpush1.msra.mxu0 0.0
        %2451 = vmatprep.mubr.f32.mxu0 0.0
        %2452 = vmatmul.mubr.f32.gmra.mrb[0].mxu0 %v2287
        %v2453 = vpop.f32.mrb[0].mxu0
        %v2454 = vadd.f32 %v2268, %v2453
        %v2455 = vpop.f32.mrb[0].mxu0
        %v2456 = vadd.f32 %v2268, %v2455
        %2457 = vmatprep.mubr.f32.mxu0 0.0
        %2458 = vmatmul.mubr.f32.gmra.mrb[0].mxu0 %v2290
        %v2459 = vpop.f32.mrb[0].mxu0
        %v2460 = vadd.f32 %v2273, %v2459
        %v2461 = vpop.f32.mrb[0].mxu0
        %v2462 = vadd.f32 %v2273, %v2461
        %2463 = vmatprep.mubr.f32.mxu0 0.0
        %2464 = vmatmul.mubr.f32.gmra.mrb[0].mxu0 %v2293
        %v2465 = vpop.f32.mrb[0].mxu0
        %v2466 = vadd.f32 %v2278, %v2465
        %v2467 = vpop.f32.mrb[0].mxu0
        %v2468 = vadd.f32 %v2278, %v2467
        %2469 = vmatprep.mubr.f32.mxu0 0.0
        %2470 = vmatmul.mubr.f32.gmra.mrb[0].mxu0 %v2296
        %v2471 = vpop.f32.mrb[0].mxu0
        %v2472 = vadd.f32 %v2283, %v2471
        %v2473 = vpop.f32.mrb[0].mxu0
        %v2474 = vadd.f32 %v2283, %v2473
        %2475 = vdwg.mxu0
        %2476 = vmatprep.subr.mxu0 %v2197
        %2477 = vmatpush1.msra.mxu0 %v2196
        %2478 = vmatprep.subr.mxu0 %v2213
        %2479 = vmatpush1.msra.mxu0 %v2212
        %2480 = vmatprep.subr.mxu0 %v2229
        %2481 = vmatpush1.msra.mxu0 %v2228
        %2482 = vmatprep.subr.mxu0 %v2245
        %2483 = vmatpush1.msra.mxu0 %v2244
        %2484 = vmatprep.subr.mxu0 0.0
        %2485 = vmatpush1.msra.mxu0 0.0
        %2486 = vmatprep.subr.mxu0 0.0
        %2487 = vmatpush1.msra.mxu0 0.0
        %2488 = vmatprep.subr.mxu0 0.0
        %2489 = vmatpush1.msra.mxu0 0.0
        %2490 = vmatprep.subr.mxu0 0.0
        %2491 = vmatpush1.msra.mxu0 0.0
        %2492 = vmatprep.subr.mxu0 0.0
        %2493 = vmatpush1.msra.mxu0 0.0
        %2494 = vmatprep.subr.mxu0 0.0
        %2495 = vmatpush1.msra.mxu0 0.0
        %2496 = vmatprep.subr.mxu0 0.0
        %2497 = vmatpush1.msra.mxu0 0.0
        %2498 = vmatprep.subr.mxu0 0.0
        %2499 = vmatpush1.msra.mxu0 0.0
        %2500 = vmatprep.subr.mxu0 0.0
        %2501 = vmatpush1.msra.mxu0 0.0
        %2502 = vmatprep.subr.mxu0 0.0
        %2503 = vmatpush1.msra.mxu0 0.0
        %2504 = vmatprep.subr.mxu0 0.0
        %2505 = vmatpush1.msra.mxu0 0.0
        %2506 = vmatprep.subr.mxu0 0.0
        %2507 = vmatpush1.msra.mxu0 0.0
        %2508 = vmatprep.subr.mxu0 0.0
        %2509 = vmatpush1.msra.mxu0 0.0
        %2510 = vmatprep.subr.mxu0 0.0
        %2511 = vmatpush1.msra.mxu0 0.0
        %2512 = vmatprep.subr.mxu0 0.0
        %2513 = vmatpush1.msra.mxu0 0.0
        %2514 = vmatprep.subr.mxu0 0.0
        %2515 = vmatpush1.msra.mxu0 0.0
        %2516 = vmatprep.subr.mxu0 0.0
        %2517 = vmatpush1.msra.mxu0 0.0
        %2518 = vmatprep.subr.mxu0 0.0
        %2519 = vmatpush1.msra.mxu0 0.0
        %2520 = vmatprep.subr.mxu0 0.0
        %2521 = vmatpush1.msra.mxu0 0.0
        %2522 = vmatprep.subr.mxu0 0.0
        %2523 = vmatpush1.msra.mxu0 0.0
        %2524 = vmatprep.subr.mxu0 0.0
        %2525 = vmatpush1.msra.mxu0 0.0
        %2526 = vmatprep.subr.mxu0 0.0
        %2527 = vmatpush1.msra.mxu0 0.0
        %2528 = vmatprep.subr.mxu0 0.0
        %2529 = vmatpush1.msra.mxu0 0.0
        %2530 = vmatprep.subr.mxu0 0.0
        %2531 = vmatpush1.msra.mxu0 0.0
        %2532 = vmatprep.subr.mxu0 0.0
        %2533 = vmatpush1.msra.mxu0 0.0
        %2534 = vmatprep.subr.mxu0 0.0
        %2535 = vmatpush1.msra.mxu0 0.0
        %2536 = vmatprep.subr.mxu0 0.0
        %2537 = vmatpush1.msra.mxu0 0.0
        %2538 = vmatprep.subr.mxu0 0.0
        %2539 = vmatpush1.msra.mxu0 0.0
        %2540 = vmatprep.mubr.f32.mxu0 0.0
        %2541 = vmatmul.mubr.f32.gmra.mrb[0].mxu0 %v2287
        %v2542 = vpop.f32.mrb[0].mxu0
        %v2543 = vadd.f32 %v2268, %v2542
        %v2544 = vpop.f32.mrb[0].mxu0
        %v2545 = vadd.f32 %v2268, %v2544
        %2546 = vmatprep.mubr.f32.mxu0 0.0
        %2547 = vmatmul.mubr.f32.gmra.mrb[0].mxu0 %v2290
        %v2548 = vpop.f32.mrb[0].mxu0
        %v2549 = vadd.f32 %v2273, %v2548
        %v2550 = vpop.f32.mrb[0].mxu0
        %v2551 = vadd.f32 %v2273, %v2550
        %2552 = vmatprep.mubr.f32.mxu0 0.0
        %2553 = vmatmul.mubr.f32.gmra.mrb[0].mxu0 %v2293
        %v2554 = vpop.f32.mrb[0].mxu0
        %v2555 = vadd.f32 %v2278, %v2554
        %v2556 = vpop.f32.mrb[0].mxu0
        %v2557 = vadd.f32 %v2278, %v2556
        %2558 = vmatprep.mubr.f32.mxu0 0.0
        %2559 = vmatmul.mubr.f32.gmra.mrb[0].mxu0 %v2296
        %v2560 = vpop.f32.mrb[0].mxu0
        %v2561 = vadd.f32 %v2283, %v2560
        %v2562 = vpop.f32.mrb[0].mxu0
        %v2563 = vadd.f32 %v2283, %v2562
        %2564 = vdwg.mxu0
        %2565 = vmatprep.subr.mxu0 %v2199
        %2566 = vmatpush1.msra.mxu0 %v2198
        %2567 = vmatprep.subr.mxu0 %v2215
        %2568 = vmatpush1.msra.mxu0 %v2214
        %2569 = vmatprep.subr.mxu0 %v2231
        %2570 = vmatpush1.msra.mxu0 %v2230
        %2571 = vmatprep.subr.mxu0 %v2247
        %2572 = vmatpush1.msra.mxu0 %v2246
        %2573 = vmatprep.subr.mxu0 0.0
        %2574 = vmatpush1.msra.mxu0 0.0
        %2575 = vmatprep.subr.mxu0 0.0
        %2576 = vmatpush1.msra.mxu0 0.0
        %2577 = vmatprep.subr.mxu0 0.0
        %2578 = vmatpush1.msra.mxu0 0.0
        %2579 = vmatprep.subr.mxu0 0.0
        %2580 = vmatpush1.msra.mxu0 0.0
        %2581 = vmatprep.subr.mxu0 0.0
        %2582 = vmatpush1.msra.mxu0 0.0
        %2583 = vmatprep.subr.mxu0 0.0
        %2584 = vmatpush1.msra.mxu0 0.0
        %2585 = vmatprep.subr.mxu0 0.0
        %2586 = vmatpush1.msra.mxu0 0.0
        %2587 = vmatprep.subr.mxu0 0.0
        %2588 = vmatpush1.msra.mxu0 0.0
        %2589 = vmatprep.subr.mxu0 0.0
        %2590 = vmatpush1.msra.mxu0 0.0
        %2591 = vmatprep.subr.mxu0 0.0
        %2592 = vmatpush1.msra.mxu0 0.0
        %2593 = vmatprep.subr.mxu0 0.0
        %2594 = vmatpush1.msra.mxu0 0.0
        %2595 = vmatprep.subr.mxu0 0.0
        %2596 = vmatpush1.msra.mxu0 0.0
        %2597 = vmatprep.subr.mxu0 0.0
        %2598 = vmatpush1.msra.mxu0 0.0
        %2599 = vmatprep.subr.mxu0 0.0
        %2600 = vmatpush1.msra.mxu0 0.0
        %2601 = vmatprep.subr.mxu0 0.0
        %2602 = vmatpush1.msra.mxu0 0.0
        %2603 = vmatprep.subr.mxu0 0.0
        %2604 = vmatpush1.msra.mxu0 0.0
        %2605 = vmatprep.subr.mxu0 0.0
        %2606 = vmatpush1.msra.mxu0 0.0
        %2607 = vmatprep.subr.mxu0 0.0
        %2608 = vmatpush1.msra.mxu0 0.0
        %2609 = vmatprep.subr.mxu0 0.0
        %2610 = vmatpush1.msra.mxu0 0.0
        %2611 = vmatprep.subr.mxu0 0.0
        %2612 = vmatpush1.msra.mxu0 0.0
        %2613 = vmatprep.subr.mxu0 0.0
        %2614 = vmatpush1.msra.mxu0 0.0
        %2615 = vmatprep.subr.mxu0 0.0
        %2616 = vmatpush1.msra.mxu0 0.0
        %2617 = vmatprep.subr.mxu0 0.0
        %2618 = vmatpush1.msra.mxu0 0.0
        %2619 = vmatprep.subr.mxu0 0.0
        %2620 = vmatpush1.msra.mxu0 0.0
        %2621 = vmatprep.subr.mxu0 0.0
        %2622 = vmatpush1.msra.mxu0 0.0
        %2623 = vmatprep.subr.mxu0 0.0
        %2624 = vmatpush1.msra.mxu0 0.0
        %2625 = vmatprep.subr.mxu0 0.0
        %2626 = vmatpush1.msra.mxu0 0.0
        %2627 = vmatprep.subr.mxu0 0.0
        %2628 = vmatpush1.msra.mxu0 0.0
        %2629 = vmatprep.mubr.f32.mxu0 0.0
        %2630 = vmatmul.mubr.f32.gmra.mrb[0].mxu0 %v2287
        %v2631 = vpop.f32.mrb[0].mxu0
        %v2632 = vadd.f32 %v2268, %v2631
        %v2633 = vpop.f32.mrb[0].mxu0
        %v2634 = vadd.f32 %v2268, %v2633
        %2635 = vmatprep.mubr.f32.mxu0 0.0
        %2636 = vmatmul.mubr.f32.gmra.mrb[0].mxu0 %v2290
        %v2637 = vpop.f32.mrb[0].mxu0
        %v2638 = vadd.f32 %v2273, %v2637
        %v2639 = vpop.f32.mrb[0].mxu0
        %v2640 = vadd.f32 %v2273, %v2639
        %2641 = vmatprep.mubr.f32.mxu0 0.0
        %2642 = vmatmul.mubr.f32.gmra.mrb[0].mxu0 %v2293
        %v2643 = vpop.f32.mrb[0].mxu0
        %v2644 = vadd.f32 %v2278, %v2643
        %v2645 = vpop.f32.mrb[0].mxu0
        %v2646 = vadd.f32 %v2278, %v2645
        %2647 = vmatprep.mubr.f32.mxu0 0.0
        %2648 = vmatmul.mubr.f32.gmra.mrb[0].mxu0 %v2296
        %v2649 = vpop.f32.mrb[0].mxu0
        %v2650 = vadd.f32 %v2283, %v2649
        %v2651 = vpop.f32.mrb[0].mxu0
        %v2652 = vadd.f32 %v2283, %v2651
        %2653 = vdwg.mxu0
        %2654 = vmatprep.subr.mxu0 %v2201
        %2655 = vmatpush1.msra.mxu0 %v2200
        %2656 = vmatprep.subr.mxu0 %v2217
        %2657 = vmatpush1.msra.mxu0 %v2216
        %2658 = vmatprep.subr.mxu0 %v2233
        %2659 = vmatpush1.msra.mxu0 %v2232
        %2660 = vmatprep.subr.mxu0 %v2249
        %2661 = vmatpush1.msra.mxu0 %v2248
        %2662 = vmatprep.subr.mxu0 0.0
        %2663 = vmatpush1.msra.mxu0 0.0
        %2664 = vmatprep.subr.mxu0 0.0
        %2665 = vmatpush1.msra.mxu0 0.0
        %2666 = vmatprep.subr.mxu0 0.0
        %2667 = vmatpush1.msra.mxu0 0.0
        %2668 = vmatprep.subr.mxu0 0.0
        %2669 = vmatpush1.msra.mxu0 0.0
        %2670 = vmatprep.subr.mxu0 0.0
        %2671 = vmatpush1.msra.mxu0 0.0
        %2672 = vmatprep.subr.mxu0 0.0
        %2673 = vmatpush1.msra.mxu0 0.0
        %2674 = vmatprep.subr.mxu0 0.0
        %2675 = vmatpush1.msra.mxu0 0.0
        %2676 = vmatprep.subr.mxu0 0.0
        %2677 = vmatpush1.msra.mxu0 0.0
        %2678 = vmatprep.subr.mxu0 0.0
        %2679 = vmatpush1.msra.mxu0 0.0
        %2680 = vmatprep.subr.mxu0 0.0
        %2681 = vmatpush1.msra.mxu0 0.0
        %2682 = vmatprep.subr.mxu0 0.0
        %2683 = vmatpush1.msra.mxu0 0.0
        %2684 = vmatprep.subr.mxu0 0.0
        %2685 = vmatpush1.msra.mxu0 0.0
        %2686 = vmatprep.subr.mxu0 0.0
        %2687 = vmatpush1.msra.mxu0 0.0
        %2688 = vmatprep.subr.mxu0 0.0
        %2689 = vmatpush1.msra.mxu0 0.0
        %2690 = vmatprep.subr.mxu0 0.0
        %2691 = vmatpush1.msra.mxu0 0.0
        %2692 = vmatprep.subr.mxu0 0.0
        %2693 = vmatpush1.msra.mxu0 0.0
        %2694 = vmatprep.subr.mxu0 0.0
        %2695 = vmatpush1.msra.mxu0 0.0
        %2696 = vmatprep.subr.mxu0 0.0
        %2697 = vmatpush1.msra.mxu0 0.0
        %2698 = vmatprep.subr.mxu0 0.0
        %2699 = vmatpush1.msra.mxu0 0.0
        %2700 = vmatprep.subr.mxu0 0.0
        %2701 = vmatpush1.msra.mxu0 0.0
        %2702 = vmatprep.subr.mxu0 0.0
        %2703 = vmatpush1.msra.mxu0 0.0
        %2704 = vmatprep.subr.mxu0 0.0
        %2705 = vmatpush1.msra.mxu0 0.0
        %2706 = vmatprep.subr.mxu0 0.0
        %2707 = vmatpush1.msra.mxu0 0.0
        %2708 = vmatprep.subr.mxu0 0.0
        %2709 = vmatpush1.msra.mxu0 0.0
        %2710 = vmatprep.subr.mxu0 0.0
        %2711 = vmatpush1.msra.mxu0 0.0
        %2712 = vmatprep.subr.mxu0 0.0
        %2713 = vmatpush1.msra.mxu0 0.0
        %2714 = vmatprep.subr.mxu0 0.0
        %2715 = vmatpush1.msra.mxu0 0.0
        %2716 = vmatprep.subr.mxu0 0.0
        %2717 = vmatpush1.msra.mxu0 0.0
        %2718 = vmatprep.mubr.f32.mxu0 0.0
        %2719 = vmatmul.mubr.f32.gmra.mrb[0].mxu0 %v2287
        %v2720 = vpop.f32.mrb[0].mxu0
        %v2721 = vadd.f32 %v2268, %v2720
        %v2722 = vpop.f32.mrb[0].mxu0
        %v2723 = vadd.f32 %v2268, %v2722
        %2724 = vmatprep.mubr.f32.mxu0 0.0
        %2725 = vmatmul.mubr.f32.gmra.mrb[0].mxu0 %v2290
        %v2726 = vpop.f32.mrb[0].mxu0
        %v2727 = vadd.f32 %v2273, %v2726
        %v2728 = vpop.f32.mrb[0].mxu0
        %v2729 = vadd.f32 %v2273, %v2728
        %2730 = vmatprep.mubr.f32.mxu0 0.0
        %2731 = vmatmul.mubr.f32.gmra.mrb[0].mxu0 %v2293
        %v2732 = vpop.f32.mrb[0].mxu0
        %v2733 = vadd.f32 %v2278, %v2732
        %v2734 = vpop.f32.mrb[0].mxu0
        %v2735 = vadd.f32 %v2278, %v2734
        %2736 = vmatprep.mubr.f32.mxu0 0.0
        %2737 = vmatmul.mubr.f32.gmra.mrb[0].mxu0 %v2296
        %v2738 = vpop.f32.mrb[0].mxu0
        %v2739 = vadd.f32 %v2283, %v2738
        %v2740 = vpop.f32.mrb[0].mxu0
        %v2741 = vadd.f32 %v2283, %v2740
        %2742 = vdwg.mxu0
        %2743 = vmatprep.subr.mxu0 %v2203
        %2744 = vmatpush1.msra.mxu0 %v2202
        %2745 = vmatprep.subr.mxu0 %v2219
        %2746 = vmatpush1.msra.mxu0 %v2218
        %2747 = vmatprep.subr.mxu0 %v2235
        %2748 = vmatpush1.msra.mxu0 %v2234
        %2749 = vmatprep.subr.mxu0 %v2251
        %2750 = vmatpush1.msra.mxu0 %v2250
        %2751 = vmatprep.subr.mxu0 0.0
        %2752 = vmatpush1.msra.mxu0 0.0
        %2753 = vmatprep.subr.mxu0 0.0
        %2754 = vmatpush1.msra.mxu0 0.0
        %2755 = vmatprep.subr.mxu0 0.0
        %2756 = vmatpush1.msra.mxu0 0.0
        %2757 = vmatprep.subr.mxu0 0.0
        %2758 = vmatpush1.msra.mxu0 0.0
        %2759 = vmatprep.subr.mxu0 0.0
        %2760 = vmatpush1.msra.mxu0 0.0
        %2761 = vmatprep.subr.mxu0 0.0
        %2762 = vmatpush1.msra.mxu0 0.0
        %2763 = vmatprep.subr.mxu0 0.0
        %2764 = vmatpush1.msra.mxu0 0.0
        %2765 = vmatprep.subr.mxu0 0.0
        %2766 = vmatpush1.msra.mxu0 0.0
        %2767 = vmatprep.subr.mxu0 0.0
        %2768 = vmatpush1.msra.mxu0 0.0
        %2769 = vmatprep.subr.mxu0 0.0
        %2770 = vmatpush1.msra.mxu0 0.0
        %2771 = vmatprep.subr.mxu0 0.0
        %2772 = vmatpush1.msra.mxu0 0.0
        %2773 = vmatprep.subr.mxu0 0.0
        %2774 = vmatpush1.msra.mxu0 0.0
        %2775 = vmatprep.subr.mxu0 0.0
        %2776 = vmatpush1.msra.mxu0 0.0
        %2777 = vmatprep.subr.mxu0 0.0
        %2778 = vmatpush1.msra.mxu0 0.0
        %2779 = vmatprep.subr.mxu0 0.0
        %2780 = vmatpush1.msra.mxu0 0.0
        %2781 = vmatprep.subr.mxu0 0.0
        %2782 = vmatpush1.msra.mxu0 0.0
        %2783 = vmatprep.subr.mxu0 0.0
        %2784 = vmatpush1.msra.mxu0 0.0
        %2785 = vmatprep.subr.mxu0 0.0
        %2786 = vmatpush1.msra.mxu0 0.0
        %2787 = vmatprep.subr.mxu0 0.0
        %2788 = vmatpush1.msra.mxu0 0.0
        %2789 = vmatprep.subr.mxu0 0.0
        %2790 = vmatpush1.msra.mxu0 0.0
        %2791 = vmatprep.subr.mxu0 0.0
        %2792 = vmatpush1.msra.mxu0 0.0
        %2793 = vmatprep.subr.mxu0 0.0
        %2794 = vmatpush1.msra.mxu0 0.0
        %2795 = vmatprep.subr.mxu0 0.0
        %2796 = vmatpush1.msra.mxu0 0.0
        %2797 = vmatprep.subr.mxu0 0.0
        %2798 = vmatpush1.msra.mxu0 0.0
        %2799 = vmatprep.subr.mxu0 0.0
        %2800 = vmatpush1.msra.mxu0 0.0
        %2801 = vmatprep.subr.mxu0 0.0
        %2802 = vmatpush1.msra.mxu0 0.0
        %2803 = vmatprep.subr.mxu0 0.0
        %2804 = vmatpush1.msra.mxu0 0.0
        %2805 = vmatprep.subr.mxu0 0.0
        %2806 = vmatpush1.msra.mxu0 0.0
        %2807 = vmatprep.mubr.f32.mxu0 0.0
        %2808 = vmatmul.mubr.f32.gmra.mrb[0].mxu0 %v2287
        %v2809 = vpop.f32.mrb[0].mxu0
        %v2810 = vadd.f32 %v2268, %v2809
        %v2811 = vpop.f32.mrb[0].mxu0
        %v2812 = vadd.f32 %v2268, %v2811
        %2813 = vmatprep.mubr.f32.mxu0 0.0
        %2814 = vmatmul.mubr.f32.gmra.mrb[0].mxu0 %v2290
        %v2815 = vpop.f32.mrb[0].mxu0
        %v2816 = vadd.f32 %v2273, %v2815
        %v2817 = vpop.f32.mrb[0].mxu0
        %v2818 = vadd.f32 %v2273, %v2817
        %2819 = vmatprep.mubr.f32.mxu0 0.0
        %2820 = vmatmul.mubr.f32.gmra.mrb[0].mxu0 %v2293
        %v2821 = vpop.f32.mrb[0].mxu0
        %v2822 = vadd.f32 %v2278, %v2821
        %v2823 = vpop.f32.mrb[0].mxu0
        %v2824 = vadd.f32 %v2278, %v2823
        %2825 = vmatprep.mubr.f32.mxu0 0.0
        %2826 = vmatmul.mubr.f32.gmra.mrb[0].mxu0 %v2296
        %v2827 = vpop.f32.mrb[0].mxu0
        %v2828 = vadd.f32 %v2283, %v2827
        %v2829 = vpop.f32.mrb[0].mxu0
        %v2830 = vadd.f32 %v2283, %v2829
        %2831 = vdwg.mxu0
        %2832 = vmatprep.subr.mxu0 %v2205
        %2833 = vmatpush1.msra.mxu0 %v2204
        %2834 = vmatprep.subr.mxu0 %v2221
        %2835 = vmatpush1.msra.mxu0 %v2220
        %2836 = vmatprep.subr.mxu0 %v2237
        %2837 = vmatpush1.msra.mxu0 %v2236
        %2838 = vmatprep.subr.mxu0 %v2253
        %2839 = vmatpush1.msra.mxu0 %v2252
        %2840 = vmatprep.subr.mxu0 0.0
        %2841 = vmatpush1.msra.mxu0 0.0
        %2842 = vmatprep.subr.mxu0 0.0
        %2843 = vmatpush1.msra.mxu0 0.0
        %2844 = vmatprep.subr.mxu0 0.0
        %2845 = vmatpush1.msra.mxu0 0.0
        %2846 = vmatprep.subr.mxu0 0.0
        %2847 = vmatpush1.msra.mxu0 0.0
        %2848 = vmatprep.subr.mxu0 0.0
        %2849 = vmatpush1.msra.mxu0 0.0
        %2850 = vmatprep.subr.mxu0 0.0
        %2851 = vmatpush1.msra.mxu0 0.0
        %2852 = vmatprep.subr.mxu0 0.0
        %2853 = vmatpush1.msra.mxu0 0.0
        %2854 = vmatprep.subr.mxu0 0.0
        %2855 = vmatpush1.msra.mxu0 0.0
        %2856 = vmatprep.subr.mxu0 0.0
        %2857 = vmatpush1.msra.mxu0 0.0
        %2858 = vmatprep.subr.mxu0 0.0
        %2859 = vmatpush1.msra.mxu0 0.0
        %2860 = vmatprep.subr.mxu0 0.0
        %2861 = vmatpush1.msra.mxu0 0.0
        %2862 = vmatprep.subr.mxu0 0.0
        %2863 = vmatpush1.msra.mxu0 0.0
        %2864 = vmatprep.subr.mxu0 0.0
        %2865 = vmatpush1.msra.mxu0 0.0
        %2866 = vmatprep.subr.mxu0 0.0
        %2867 = vmatpush1.msra.mxu0 0.0
        %2868 = vmatprep.subr.mxu0 0.0
        %2869 = vmatpush1.msra.mxu0 0.0
        %2870 = vmatprep.subr.mxu0 0.0
        %2871 = vmatpush1.msra.mxu0 0.0
        %2872 = vmatprep.subr.mxu0 0.0
        %2873 = vmatpush1.msra.mxu0 0.0
        %2874 = vmatprep.subr.mxu0 0.0
        %2875 = vmatpush1.msra.mxu0 0.0
        %2876 = vmatprep.subr.mxu0 0.0
        %2877 = vmatpush1.msra.mxu0 0.0
        %2878 = vmatprep.subr.mxu0 0.0
        %2879 = vmatpush1.msra.mxu0 0.0
        %2880 = vmatprep.subr.mxu0 0.0
        %2881 = vmatpush1.msra.mxu0 0.0
        %2882 = vmatprep.subr.mxu0 0.0
        %2883 = vmatpush1.msra.mxu0 0.0
        %2884 = vmatprep.subr.mxu0 0.0
        %2885 = vmatpush1.msra.mxu0 0.0
        %2886 = vmatprep.subr.mxu0 0.0
        %2887 = vmatpush1.msra.mxu0 0.0
        %2888 = vmatprep.subr.mxu0 0.0
        %2889 = vmatpush1.msra.mxu0 0.0
        %2890 = vmatprep.subr.mxu0 0.0
        %2891 = vmatpush1.msra.mxu0 0.0
        %2892 = vmatprep.subr.mxu0 0.0
        %2893 = vmatpush1.msra.mxu0 0.0
        %2894 = vmatprep.subr.mxu0 0.0
        %2895 = vmatpush1.msra.mxu0 0.0
        %2896 = vmatprep.mubr.f32.mxu0 0.0
        %2897 = vmatmul.mubr.f32.gmra.mrb[0].mxu0 %v2287
        %v2898 = vpop.f32.mrb[0].mxu0
        %v2899 = vadd.f32 %v2268, %v2898
        %v2900 = vpop.f32.mrb[0].mxu0
        %v2901 = vadd.f32 %v2268, %v2900
        %2902 = vmatprep.mubr.f32.mxu0 0.0
        %2903 = vmatmul.mubr.f32.gmra.mrb[0].mxu0 %v2290
        %v2904 = vpop.f32.mrb[0].mxu0
        %v2905 = vadd.f32 %v2273, %v2904
        %v2906 = vpop.f32.mrb[0].mxu0
        %v2907 = vadd.f32 %v2273, %v2906
        %2908 = vmatprep.mubr.f32.mxu0 0.0
        %2909 = vmatmul.mubr.f32.gmra.mrb[0].mxu0 %v2293
        %v2910 = vpop.f32.mrb[0].mxu0
        %v2911 = vadd.f32 %v2278, %v2910
        %v2912 = vpop.f32.mrb[0].mxu0
        %v2913 = vadd.f32 %v2278, %v2912
        %2914 = vmatprep.mubr.f32.mxu0 0.0
        %2915 = vmatmul.mubr.f32.gmra.mrb[0].mxu0 %v2296
        %v2916 = vpop.f32.mrb[0].mxu0
        %v2917 = vadd.f32 %v2283, %v2916
        %v2918 = vpop.f32.mrb[0].mxu0
        %v2919 = vadd.f32 %v2283, %v2918
        %2920 = vdwg.mxu0
        %2921 = vmatprep.subr.mxu0 %v2207
        %2922 = vmatpush1.msra.mxu0 %v2206
        %2923 = vmatprep.subr.mxu0 %v2223
        %2924 = vmatpush1.msra.mxu0 %v2222
        %2925 = vmatprep.subr.mxu0 %v2239
        %2926 = vmatpush1.msra.mxu0 %v2238
        %2927 = vmatprep.subr.mxu0 %v2255
        %2928 = vmatpush1.msra.mxu0 %v2254
        %2929 = vmatprep.subr.mxu0 0.0
        %2930 = vmatpush1.msra.mxu0 0.0
        %2931 = vmatprep.subr.mxu0 0.0
        %2932 = vmatpush1.msra.mxu0 0.0
        %2933 = vmatprep.subr.mxu0 0.0
        %2934 = vmatpush1.msra.mxu0 0.0
        %2935 = vmatprep.subr.mxu0 0.0
        %2936 = vmatpush1.msra.mxu0 0.0
        %2937 = vmatprep.subr.mxu0 0.0
        %2938 = vmatpush1.msra.mxu0 0.0
        %2939 = vmatprep.subr.mxu0 0.0
        %2940 = vmatpush1.msra.mxu0 0.0
        %2941 = vmatprep.subr.mxu0 0.0
        %2942 = vmatpush1.msra.mxu0 0.0
        %2943 = vmatprep.subr.mxu0 0.0
        %2944 = vmatpush1.msra.mxu0 0.0
        %2945 = vmatprep.subr.mxu0 0.0
        %2946 = vmatpush1.msra.mxu0 0.0
        %2947 = vmatprep.subr.mxu0 0.0
        %2948 = vmatpush1.msra.mxu0 0.0
        %2949 = vmatprep.subr.mxu0 0.0
        %2950 = vmatpush1.msra.mxu0 0.0
        %2951 = vmatprep.subr.mxu0 0.0
        %2952 = vmatpush1.msra.mxu0 0.0
        %2953 = vmatprep.subr.mxu0 0.0
        %2954 = vmatpush1.msra.mxu0 0.0
        %2955 = vmatprep.subr.mxu0 0.0
        %2956 = vmatpush1.msra.mxu0 0.0
        %2957 = vmatprep.subr.mxu0 0.0
        %2958 = vmatpush1.msra.mxu0 0.0
        %2959 = vmatprep.subr.mxu0 0.0
        %2960 = vmatpush1.msra.mxu0 0.0
        %2961 = vmatprep.subr.mxu0 0.0
        %2962 = vmatpush1.msra.mxu0 0.0
        %2963 = vmatprep.subr.mxu0 0.0
        %2964 = vmatpush1.msra.mxu0 0.0
        %2965 = vmatprep.subr.mxu0 0.0
        %2966 = vmatpush1.msra.mxu0 0.0
        %2967 = vmatprep.subr.mxu0 0.0
        %2968 = vmatpush1.msra.mxu0 0.0
        %2969 = vmatprep.subr.mxu0 0.0
        %2970 = vmatpush1.msra.mxu0 0.0
        %2971 = vmatprep.subr.mxu0 0.0
        %2972 = vmatpush1.msra.mxu0 0.0
        %2973 = vmatprep.subr.mxu0 0.0
        %2974 = vmatpush1.msra.mxu0 0.0
        %2975 = vmatprep.subr.mxu0 0.0
        %2976 = vmatpush1.msra.mxu0 0.0
        %2977 = vmatprep.subr.mxu0 0.0
        %2978 = vmatpush1.msra.mxu0 0.0
        %2979 = vmatprep.subr.mxu0 0.0
        %2980 = vmatpush1.msra.mxu0 0.0
        %2981 = vmatprep.subr.mxu0 0.0
        %2982 = vmatpush1.msra.mxu0 0.0
        %2983 = vmatprep.subr.mxu0 0.0
        %2984 = vmatpush1.msra.mxu0 0.0
        %2985 = vmatprep.mubr.f32.mxu0 0.0
        %2986 = vmatmul.mubr.f32.gmra.mrb[0].mxu0 %v2287
        %v2987 = vpop.f32.mrb[0].mxu0
        %v2988 = vadd.f32 %v2268, %v2987
        %v2989 = vpop.f32.mrb[0].mxu0
        %v2990 = vadd.f32 %v2268, %v2989
        %2991 = vmatprep.mubr.f32.mxu0 0.0
        %2992 = vmatmul.mubr.f32.gmra.mrb[0].mxu0 %v2290
        %v2993 = vpop.f32.mrb[0].mxu0
        %v2994 = vadd.f32 %v2273, %v2993
        %v2995 = vpop.f32.mrb[0].mxu0
        %v2996 = vadd.f32 %v2273, %v2995
        %2997 = vmatprep.mubr.f32.mxu0 0.0
        %2998 = vmatmul.mubr.f32.gmra.mrb[0].mxu0 %v2293
        %v2999 = vpop.f32.mrb[0].mxu0
        %v3000 = vadd.f32 %v2278, %v2999
        %v3001 = vpop.f32.mrb[0].mxu0
        %v3002 = vadd.f32 %v2278, %v3001
        %3003 = vmatprep.mubr.f32.mxu0 0.0
        %3004 = vmatmul.mubr.f32.gmra.mrb[0].mxu0 %v2296
        %v3005 = vpop.f32.mrb[0].mxu0
        %v3006 = vadd.f32 %v2283, %v3005
        %v3007 = vpop.f32.mrb[0].mxu0
        %v3008 = vadd.f32 %v2283, %v3007
        %3009 = vdwg.mxu0
        %v3010 = vmul.f32 %v2365, 100.0
        %v3011 = vmul.f32 %v2367, 100.0
        %v3012 = vmul.f32 %v2454, 100.0
        %v3013 = vmul.f32 %v2456, 100.0
        %v3014 = vmul.f32 %v2543, 100.0
        %v3015 = vmul.f32 %v2545, 100.0
        %v3016 = vmul.f32 %v2632, 100.0
        %v3017 = vmul.f32 %v2634, 100.0
        %v3018 = vmul.f32 %v2721, 100.0
        %v3019 = vmul.f32 %v2723, 100.0
        %v3020 = vmul.f32 %v2810, 100.0
        %v3021 = vmul.f32 %v2812, 100.0
        %v3022 = vmul.f32 %v2899, 100.0
        %v3023 = vmul.f32 %v2901, 100.0
        %v3024 = vmul.f32 %v2988, 100.0
        %v3025 = vmul.f32 %v2990, 100.0
        %v3026 = vmul.f32 %v2371, 100.0
        %v3027 = vmul.f32 %v2373, 100.0
        %v3028 = vmul.f32 %v2460, 100.0
        %v3029 = vmul.f32 %v2462, 100.0
        %v3030 = vmul.f32 %v2549, 100.0
        %v3031 = vmul.f32 %v2551, 100.0
        %v3032 = vmul.f32 %v2638, 100.0
        %v3033 = vmul.f32 %v2640, 100.0
        %v3034 = vmul.f32 %v2727, 100.0
        %v3035 = vmul.f32 %v2729, 100.0
        %v3036 = vmul.f32 %v2816, 100.0
        %v3037 = vmul.f32 %v2818, 100.0
        %v3038 = vmul.f32 %v2905, 100.0
        %v3039 = vmul.f32 %v2907, 100.0
        %v3040 = vmul.f32 %v2994, 100.0
        %v3041 = vmul.f32 %v2996, 100.0
        %v3042 = vmul.f32 %v2377, 100.0
        %v3043 = vmul.f32 %v2379, 100.0
        %v3044 = vmul.f32 %v2466, 100.0
        %v3045 = vmul.f32 %v2468, 100.0
        %v3046 = vmul.f32 %v2555, 100.0
        %v3047 = vmul.f32 %v2557, 100.0
        %v3048 = vmul.f32 %v2644, 100.0
        %v3049 = vmul.f32 %v2646, 100.0
        %v3050 = vmul.f32 %v2733, 100.0
        %v3051 = vmul.f32 %v2735, 100.0
        %v3052 = vmul.f32 %v2822, 100.0
        %v3053 = vmul.f32 %v2824, 100.0
        %v3054 = vmul.f32 %v2911, 100.0
        %v3055 = vmul.f32 %v2913, 100.0
        %v3056 = vmul.f32 %v3000, 100.0
        %v3057 = vmul.f32 %v3002, 100.0
        %v3058 = vmul.f32 %v2383, 100.0
        %v3059 = vmul.f32 %v2385, 100.0
        %v3060 = vmul.f32 %v2472, 100.0
        %v3061 = vmul.f32 %v2474, 100.0
        %v3062 = vmul.f32 %v2561, 100.0
        %v3063 = vmul.f32 %v2563, 100.0
        %v3064 = vmul.f32 %v2650, 100.0
        %v3065 = vmul.f32 %v2652, 100.0
        %v3066 = vmul.f32 %v2739, 100.0
        %v3067 = vmul.f32 %v2741, 100.0
        %v3068 = vmul.f32 %v2828, 100.0
        %v3069 = vmul.f32 %v2830, 100.0
        %v3070 = vmul.f32 %v2917, 100.0
        %v3071 = vmul.f32 %v2919, 100.0
        %v3072 = vmul.f32 %v3006, 100.0
        %v3073 = vmul.f32 %v3008, 100.0
        %vm3074 = vcmp.gt.f32.partialorder %v3010, 20.0
        %vm3075 = vcmp.gt.f32.partialorder %v3011, 20.0
        %vm3076 = vcmp.gt.f32.partialorder %v3012, 20.0
        %vm3077 = vcmp.gt.f32.partialorder %v3013, 20.0
        %vm3078 = vcmp.gt.f32.partialorder %v3014, 20.0
        %vm3079 = vcmp.gt.f32.partialorder %v3015, 20.0
        %vm3080 = vcmp.gt.f32.partialorder %v3016, 20.0
        %vm3081 = vcmp.gt.f32.partialorder %v3017, 20.0
        %vm3082 = vcmp.gt.f32.partialorder %v3018, 20.0
        %vm3083 = vcmp.gt.f32.partialorder %v3019, 20.0
        %vm3084 = vcmp.gt.f32.partialorder %v3020, 20.0
        %vm3085 = vcmp.gt.f32.partialorder %v3021, 20.0
        %vm3086 = vcmp.gt.f32.partialorder %v3022, 20.0
        %vm3087 = vcmp.gt.f32.partialorder %v3023, 20.0
        %vm3088 = vcmp.gt.f32.partialorder %v3024, 20.0
        %vm3089 = vcmp.gt.f32.partialorder %v3025, 20.0
        %vm3090 = vcmp.gt.f32.partialorder %v3026, 20.0
        %vm3091 = vcmp.gt.f32.partialorder %v3027, 20.0
        %vm3092 = vcmp.gt.f32.partialorder %v3028, 20.0
        %vm3093 = vcmp.gt.f32.partialorder %v3029, 20.0
        %vm3094 = vcmp.gt.f32.partialorder %v3030, 20.0
        %vm3095 = vcmp.gt.f32.partialorder %v3031, 20.0
        %vm3096 = vcmp.gt.f32.partialorder %v3032, 20.0
        %vm3097 = vcmp.gt.f32.partialorder %v3033, 20.0
        %vm3098 = vcmp.gt.f32.partialorder %v3034, 20.0
        %vm3099 = vcmp.gt.f32.partialorder %v3035, 20.0
        %vm3100 = vcmp.gt.f32.partialorder %v3036, 20.0
        %vm3101 = vcmp.gt.f32.partialorder %v3037, 20.0
        %vm3102 = vcmp.gt.f32.partialorder %v3038, 20.0
        %vm3103 = vcmp.gt.f32.partialorder %v3039, 20.0
        %vm3104 = vcmp.gt.f32.partialorder %v3040, 20.0
        %vm3105 = vcmp.gt.f32.partialorder %v3041, 20.0
        %vm3106 = vcmp.gt.f32.partialorder %v3042, 20.0
        %vm3107 = vcmp.gt.f32.partialorder %v3043, 20.0
        %vm3108 = vcmp.gt.f32.partialorder %v3044, 20.0
        %vm3109 = vcmp.gt.f32.partialorder %v3045, 20.0
        %vm3110 = vcmp.gt.f32.partialorder %v3046, 20.0
        %vm3111 = vcmp.gt.f32.partialorder %v3047, 20.0
        %vm3112 = vcmp.gt.f32.partialorder %v3048, 20.0
        %vm3113 = vcmp.gt.f32.partialorder %v3049, 20.0
        %vm3114 = vcmp.gt.f32.partialorder %v3050, 20.0
        %vm3115 = vcmp.gt.f32.partialorder %v3051, 20.0
        %vm3116 = vcmp.gt.f32.partialorder %v3052, 20.0
        %vm3117 = vcmp.gt.f32.partialorder %v3053, 20.0
        %vm3118 = vcmp.gt.f32.partialorder %v3054, 20.0
        %vm3119 = vcmp.gt.f32.partialorder %v3055, 20.0
        %vm3120 = vcmp.gt.f32.partialorder %v3056, 20.0
        %vm3121 = vcmp.gt.f32.partialorder %v3057, 20.0
        %vm3122 = vcmp.gt.f32.partialorder %v3058, 20.0
        %vm3123 = vcmp.gt.f32.partialorder %v3059, 20.0
        %vm3124 = vcmp.gt.f32.partialorder %v3060, 20.0
        %vm3125 = vcmp.gt.f32.partialorder %v3061, 20.0
        %vm3126 = vcmp.gt.f32.partialorder %v3062, 20.0
        %vm3127 = vcmp.gt.f32.partialorder %v3063, 20.0
        %vm3128 = vcmp.gt.f32.partialorder %v3064, 20.0
        %vm3129 = vcmp.gt.f32.partialorder %v3065, 20.0
        %vm3130 = vcmp.gt.f32.partialorder %v3066, 20.0
        %vm3131 = vcmp.gt.f32.partialorder %v3067, 20.0
        %vm3132 = vcmp.gt.f32.partialorder %v3068, 20.0
        %vm3133 = vcmp.gt.f32.partialorder %v3069, 20.0
        %vm3134 = vcmp.gt.f32.partialorder %v3070, 20.0
        %vm3135 = vcmp.gt.f32.partialorder %v3071, 20.0
        %vm3136 = vcmp.gt.f32.partialorder %v3072, 20.0
        %vm3137 = vcmp.gt.f32.partialorder %v3073, 20.0
        %v3138 = vmul.f32 %v3010, 1.442695
        %v3139 = vpow.pop %v3138
        %v3140 = vmul.f32 %v3011, 1.442695
        %v3141 = vpow.pop %v3140
        %v3142 = vmul.f32 %v3012, 1.442695
        %v3143 = vpow.pop %v3142
        %v3144 = vmul.f32 %v3013, 1.442695
        %v3145 = vpow.pop %v3144
        %v3146 = vmul.f32 %v3014, 1.442695
        %v3147 = vpow.pop %v3146
        %v3148 = vmul.f32 %v3015, 1.442695
        %v3149 = vpow.pop %v3148
        %v3150 = vmul.f32 %v3016, 1.442695
        %v3151 = vpow.pop %v3150
        %v3152 = vmul.f32 %v3017, 1.442695
        %v3153 = vpow.pop %v3152
        %v3154 = vmul.f32 %v3018, 1.442695
        %v3155 = vpow.pop %v3154
        %v3156 = vmul.f32 %v3019, 1.442695
        %v3157 = vpow.pop %v3156
        %v3158 = vmul.f32 %v3020, 1.442695
        %v3159 = vpow.pop %v3158
        %v3160 = vmul.f32 %v3021, 1.442695
        %v3161 = vpow.pop %v3160
        %v3162 = vmul.f32 %v3022, 1.442695
        %v3163 = vpow.pop %v3162
        %v3164 = vmul.f32 %v3023, 1.442695
        %v3165 = vpow.pop %v3164
        %v3166 = vmul.f32 %v3024, 1.442695
        %v3167 = vpow.pop %v3166
        %v3168 = vmul.f32 %v3025, 1.442695
        %v3169 = vpow.pop %v3168
        %v3170 = vmul.f32 %v3026, 1.442695
        %v3171 = vpow.pop %v3170
        %v3172 = vmul.f32 %v3027, 1.442695
        %v3173 = vpow.pop %v3172
        %v3174 = vmul.f32 %v3028, 1.442695
        %v3175 = vpow.pop %v3174
        %v3176 = vmul.f32 %v3029, 1.442695
        %v3177 = vpow.pop %v3176
        %v3178 = vmul.f32 %v3030, 1.442695
        %v3179 = vpow.pop %v3178
        %v3180 = vmul.f32 %v3031, 1.442695
        %v3181 = vpow.pop %v3180
        %v3182 = vmul.f32 %v3032, 1.442695
        %v3183 = vpow.pop %v3182
        %v3184 = vmul.f32 %v3033, 1.442695
        %v3185 = vpow.pop %v3184
        %v3186 = vmul.f32 %v3034, 1.442695
        %v3187 = vpow.pop %v3186
        %v3188 = vmul.f32 %v3035, 1.442695
        %v3189 = vpow.pop %v3188
        %v3190 = vmul.f32 %v3036, 1.442695
        %v3191 = vpow.pop %v3190
        %v3192 = vmul.f32 %v3037, 1.442695
        %v3193 = vpow.pop %v3192
        %v3194 = vmul.f32 %v3038, 1.442695
        %v3195 = vpow.pop %v3194
        %v3196 = vmul.f32 %v3039, 1.442695
        %v3197 = vpow.pop %v3196
        %v3198 = vmul.f32 %v3040, 1.442695
        %v3199 = vpow.pop %v3198
        %v3200 = vmul.f32 %v3041, 1.442695
        %v3201 = vpow.pop %v3200
        %v3202 = vmul.f32 %v3042, 1.442695
        %v3203 = vpow.pop %v3202
        %v3204 = vmul.f32 %v3043, 1.442695
        %v3205 = vpow.pop %v3204
        %v3206 = vmul.f32 %v3044, 1.442695
        %v3207 = vpow.pop %v3206
        %v3208 = vmul.f32 %v3045, 1.442695
        %v3209 = vpow.pop %v3208
        %v3210 = vmul.f32 %v3046, 1.442695
        %v3211 = vpow.pop %v3210
        %v3212 = vmul.f32 %v3047, 1.442695
        %v3213 = vpow.pop %v3212
        %v3214 = vmul.f32 %v3048, 1.442695
        %v3215 = vpow.pop %v3214
        %v3216 = vmul.f32 %v3049, 1.442695
        %v3217 = vpow.pop %v3216
        %v3218 = vmul.f32 %v3050, 1.442695
        %v3219 = vpow.pop %v3218
        %v3220 = vmul.f32 %v3051, 1.442695
        %v3221 = vpow.pop %v3220
        %v3222 = vmul.f32 %v3052, 1.442695
        %v3223 = vpow.pop %v3222
        %v3224 = vmul.f32 %v3053, 1.442695
        %v3225 = vpow.pop %v3224
        %v3226 = vmul.f32 %v3054, 1.442695
        %v3227 = vpow.pop %v3226
        %v3228 = vmul.f32 %v3055, 1.442695
        %v3229 = vpow.pop %v3228
        %v3230 = vmul.f32 %v3056, 1.442695
        %v3231 = vpow.pop %v3230
        %v3232 = vmul.f32 %v3057, 1.442695
        %v3233 = vpow.pop %v3232
        %v3234 = vmul.f32 %v3058, 1.442695
        %v3235 = vpow.pop %v3234
        %v3236 = vmul.f32 %v3059, 1.442695
        %v3237 = vpow.pop %v3236
        %v3238 = vmul.f32 %v3060, 1.442695
        %v3239 = vpow.pop %v3238
        %v3240 = vmul.f32 %v3061, 1.442695
        %v3241 = vpow.pop %v3240
        %v3242 = vmul.f32 %v3062, 1.442695
        %v3243 = vpow.pop %v3242
        %v3244 = vmul.f32 %v3063, 1.442695
        %v3245 = vpow.pop %v3244
        %v3246 = vmul.f32 %v3064, 1.442695
        %v3247 = vpow.pop %v3246
        %v3248 = vmul.f32 %v3065, 1.442695
        %v3249 = vpow.pop %v3248
        %v3250 = vmul.f32 %v3066, 1.442695
        %v3251 = vpow.pop %v3250
        %v3252 = vmul.f32 %v3067, 1.442695
        %v3253 = vpow.pop %v3252
        %v3254 = vmul.f32 %v3068, 1.442695
        %v3255 = vpow.pop %v3254
        %v3256 = vmul.f32 %v3069, 1.442695
        %v3257 = vpow.pop %v3256
        %v3258 = vmul.f32 %v3070, 1.442695
        %v3259 = vpow.pop %v3258
        %v3260 = vmul.f32 %v3071, 1.442695
        %v3261 = vpow.pop %v3260
        %v3262 = vmul.f32 %v3072, 1.442695
        %v3263 = vpow.pop %v3262
        %v3264 = vmul.f32 %v3073, 1.442695
        %v3265 = vpow.pop %v3264
        %v3266 = vadd.f32 %v3139, 1.0
        %v3267 = vlog2.pop %v3266
        %v3268 = vmul.f32 %v3267, 0.6931472
        %v3269 = vmul.f32 -0.5, %v3139
        %v3270 = vadd.f32 %v3269, 1.0
        %v3271 = vmul.f32 %v3270, %v3139
        %v3272 = vand.u32 2147483647, %v3139
        %vm3273 = vcmp.lt.f32.partialorder %v3272, 0.0004427343
        %v3274 = vsel %vm3273, %v3271, %v3268
        %v3275 = vadd.f32 %v3141, 1.0
        %v3276 = vlog2.pop %v3275
        %v3277 = vmul.f32 %v3276, 0.6931472
        %v3278 = vmul.f32 -0.5, %v3141
        %v3279 = vadd.f32 %v3278, 1.0
        %v3280 = vmul.f32 %v3279, %v3141
        %v3281 = vand.u32 2147483647, %v3141
        %vm3282 = vcmp.lt.f32.partialorder %v3281, 0.0004427343
        %v3283 = vsel %vm3282, %v3280, %v3277
        %v3284 = vadd.f32 %v3143, 1.0
        %v3285 = vlog2.pop %v3284
        %v3286 = vmul.f32 %v3285, 0.6931472
        %v3287 = vmul.f32 -0.5, %v3143
        %v3288 = vadd.f32 %v3287, 1.0
        %v3289 = vmul.f32 %v3288, %v3143
        %v3290 = vand.u32 2147483647, %v3143
        %vm3291 = vcmp.lt.f32.partialorder %v3290, 0.0004427343
        %v3292 = vsel %vm3291, %v3289, %v3286
        %v3293 = vadd.f32 %v3145, 1.0
        %v3294 = vlog2.pop %v3293
        %v3295 = vmul.f32 %v3294, 0.6931472
        %v3296 = vmul.f32 -0.5, %v3145
        %v3297 = vadd.f32 %v3296, 1.0
        %v3298 = vmul.f32 %v3297, %v3145
        %v3299 = vand.u32 2147483647, %v3145
        %vm3300 = vcmp.lt.f32.partialorder %v3299, 0.0004427343
        %v3301 = vsel %vm3300, %v3298, %v3295
        %v3302 = vadd.f32 %v3147, 1.0
        %v3303 = vlog2.pop %v3302
        %v3304 = vmul.f32 %v3303, 0.6931472
        %v3305 = vmul.f32 -0.5, %v3147
        %v3306 = vadd.f32 %v3305, 1.0
        %v3307 = vmul.f32 %v3306, %v3147
        %v3308 = vand.u32 2147483647, %v3147
        %vm3309 = vcmp.lt.f32.partialorder %v3308, 0.0004427343
        %v3310 = vsel %vm3309, %v3307, %v3304
        %v3311 = vadd.f32 %v3149, 1.0
        %v3312 = vlog2.pop %v3311
        %v3313 = vmul.f32 %v3312, 0.6931472
        %v3314 = vmul.f32 -0.5, %v3149
        %v3315 = vadd.f32 %v3314, 1.0
        %v3316 = vmul.f32 %v3315, %v3149
        %v3317 = vand.u32 2147483647, %v3149
        %vm3318 = vcmp.lt.f32.partialorder %v3317, 0.0004427343
        %v3319 = vsel %vm3318, %v3316, %v3313
        %v3320 = vadd.f32 %v3151, 1.0
        %v3321 = vlog2.pop %v3320
        %v3322 = vmul.f32 %v3321, 0.6931472
        %v3323 = vmul.f32 -0.5, %v3151
        %v3324 = vadd.f32 %v3323, 1.0
        %v3325 = vmul.f32 %v3324, %v3151
        %v3326 = vand.u32 2147483647, %v3151
        %vm3327 = vcmp.lt.f32.partialorder %v3326, 0.0004427343
        %v3328 = vsel %vm3327, %v3325, %v3322
        %v3329 = vadd.f32 %v3153, 1.0
        %v3330 = vlog2.pop %v3329
        %v3331 = vmul.f32 %v3330, 0.6931472
        %v3332 = vmul.f32 -0.5, %v3153
        %v3333 = vadd.f32 %v3332, 1.0
        %v3334 = vmul.f32 %v3333, %v3153
        %v3335 = vand.u32 2147483647, %v3153
        %vm3336 = vcmp.lt.f32.partialorder %v3335, 0.0004427343
        %v3337 = vsel %vm3336, %v3334, %v3331
        %v3338 = vadd.f32 %v3155, 1.0
        %v3339 = vlog2.pop %v3338
        %v3340 = vmul.f32 %v3339, 0.6931472
        %v3341 = vmul.f32 -0.5, %v3155
        %v3342 = vadd.f32 %v3341, 1.0
        %v3343 = vmul.f32 %v3342, %v3155
        %v3344 = vand.u32 2147483647, %v3155
        %vm3345 = vcmp.lt.f32.partialorder %v3344, 0.0004427343
        %v3346 = vsel %vm3345, %v3343, %v3340
        %v3347 = vadd.f32 %v3157, 1.0
        %v3348 = vlog2.pop %v3347
        %v3349 = vmul.f32 %v3348, 0.6931472
        %v3350 = vmul.f32 -0.5, %v3157
        %v3351 = vadd.f32 %v3350, 1.0
        %v3352 = vmul.f32 %v3351, %v3157
        %v3353 = vand.u32 2147483647, %v3157
        %vm3354 = vcmp.lt.f32.partialorder %v3353, 0.0004427343
        %v3355 = vsel %vm3354, %v3352, %v3349
        %v3356 = vadd.f32 %v3159, 1.0
        %v3357 = vlog2.pop %v3356
        %v3358 = vmul.f32 %v3357, 0.6931472
        %v3359 = vmul.f32 -0.5, %v3159
        %v3360 = vadd.f32 %v3359, 1.0
        %v3361 = vmul.f32 %v3360, %v3159
        %v3362 = vand.u32 2147483647, %v3159
        %vm3363 = vcmp.lt.f32.partialorder %v3362, 0.0004427343
        %v3364 = vsel %vm3363, %v3361, %v3358
        %v3365 = vadd.f32 %v3161, 1.0
        %v3366 = vlog2.pop %v3365
        %v3367 = vmul.f32 %v3366, 0.6931472
        %v3368 = vmul.f32 -0.5, %v3161
        %v3369 = vadd.f32 %v3368, 1.0
        %v3370 = vmul.f32 %v3369, %v3161
        %v3371 = vand.u32 2147483647, %v3161
        %vm3372 = vcmp.lt.f32.partialorder %v3371, 0.0004427343
        %v3373 = vsel %vm3372, %v3370, %v3367
        %v3374 = vadd.f32 %v3163, 1.0
        %v3375 = vlog2.pop %v3374
        %v3376 = vmul.f32 %v3375, 0.6931472
        %v3377 = vmul.f32 -0.5, %v3163
        %v3378 = vadd.f32 %v3377, 1.0
        %v3379 = vmul.f32 %v3378, %v3163
        %v3380 = vand.u32 2147483647, %v3163
        %vm3381 = vcmp.lt.f32.partialorder %v3380, 0.0004427343
        %v3382 = vsel %vm3381, %v3379, %v3376
        %v3383 = vadd.f32 %v3165, 1.0
        %v3384 = vlog2.pop %v3383
        %v3385 = vmul.f32 %v3384, 0.6931472
        %v3386 = vmul.f32 -0.5, %v3165
        %v3387 = vadd.f32 %v3386, 1.0
        %v3388 = vmul.f32 %v3387, %v3165
        %v3389 = vand.u32 2147483647, %v3165
        %vm3390 = vcmp.lt.f32.partialorder %v3389, 0.0004427343
        %v3391 = vsel %vm3390, %v3388, %v3385
        %v3392 = vadd.f32 %v3167, 1.0
        %v3393 = vlog2.pop %v3392
        %v3394 = vmul.f32 %v3393, 0.6931472
        %v3395 = vmul.f32 -0.5, %v3167
        %v3396 = vadd.f32 %v3395, 1.0
        %v3397 = vmul.f32 %v3396, %v3167
        %v3398 = vand.u32 2147483647, %v3167
        %vm3399 = vcmp.lt.f32.partialorder %v3398, 0.0004427343
        %v3400 = vsel %vm3399, %v3397, %v3394
        %v3401 = vadd.f32 %v3169, 1.0
        %v3402 = vlog2.pop %v3401
        %v3403 = vmul.f32 %v3402, 0.6931472
        %v3404 = vmul.f32 -0.5, %v3169
        %v3405 = vadd.f32 %v3404, 1.0
        %v3406 = vmul.f32 %v3405, %v3169
        %v3407 = vand.u32 2147483647, %v3169
        %vm3408 = vcmp.lt.f32.partialorder %v3407, 0.0004427343
        %v3409 = vsel %vm3408, %v3406, %v3403
        %v3410 = vadd.f32 %v3171, 1.0
        %v3411 = vlog2.pop %v3410
        %v3412 = vmul.f32 %v3411, 0.6931472
        %v3413 = vmul.f32 -0.5, %v3171
        %v3414 = vadd.f32 %v3413, 1.0
        %v3415 = vmul.f32 %v3414, %v3171
        %v3416 = vand.u32 2147483647, %v3171
        %vm3417 = vcmp.lt.f32.partialorder %v3416, 0.0004427343
        %v3418 = vsel %vm3417, %v3415, %v3412
        %v3419 = vadd.f32 %v3173, 1.0
        %v3420 = vlog2.pop %v3419
        %v3421 = vmul.f32 %v3420, 0.6931472
        %v3422 = vmul.f32 -0.5, %v3173
        %v3423 = vadd.f32 %v3422, 1.0
        %v3424 = vmul.f32 %v3423, %v3173
        %v3425 = vand.u32 2147483647, %v3173
        %vm3426 = vcmp.lt.f32.partialorder %v3425, 0.0004427343
        %v3427 = vsel %vm3426, %v3424, %v3421
        %v3428 = vadd.f32 %v3175, 1.0
        %v3429 = vlog2.pop %v3428
        %v3430 = vmul.f32 %v3429, 0.6931472
        %v3431 = vmul.f32 -0.5, %v3175
        %v3432 = vadd.f32 %v3431, 1.0
        %v3433 = vmul.f32 %v3432, %v3175
        %v3434 = vand.u32 2147483647, %v3175
        %vm3435 = vcmp.lt.f32.partialorder %v3434, 0.0004427343
        %v3436 = vsel %vm3435, %v3433, %v3430
        %v3437 = vadd.f32 %v3177, 1.0
        %v3438 = vlog2.pop %v3437
        %v3439 = vmul.f32 %v3438, 0.6931472
        %v3440 = vmul.f32 -0.5, %v3177
        %v3441 = vadd.f32 %v3440, 1.0
        %v3442 = vmul.f32 %v3441, %v3177
        %v3443 = vand.u32 2147483647, %v3177
        %vm3444 = vcmp.lt.f32.partialorder %v3443, 0.0004427343
        %v3445 = vsel %vm3444, %v3442, %v3439
        %v3446 = vadd.f32 %v3179, 1.0
        %v3447 = vlog2.pop %v3446
        %v3448 = vmul.f32 %v3447, 0.6931472
        %v3449 = vmul.f32 -0.5, %v3179
        %v3450 = vadd.f32 %v3449, 1.0
        %v3451 = vmul.f32 %v3450, %v3179
        %v3452 = vand.u32 2147483647, %v3179
        %vm3453 = vcmp.lt.f32.partialorder %v3452, 0.0004427343
        %v3454 = vsel %vm3453, %v3451, %v3448
        %v3455 = vadd.f32 %v3181, 1.0
        %v3456 = vlog2.pop %v3455
        %v3457 = vmul.f32 %v3456, 0.6931472
        %v3458 = vmul.f32 -0.5, %v3181
        %v3459 = vadd.f32 %v3458, 1.0
        %v3460 = vmul.f32 %v3459, %v3181
        %v3461 = vand.u32 2147483647, %v3181
        %vm3462 = vcmp.lt.f32.partialorder %v3461, 0.0004427343
        %v3463 = vsel %vm3462, %v3460, %v3457
        %v3464 = vadd.f32 %v3183, 1.0
        %v3465 = vlog2.pop %v3464
        %v3466 = vmul.f32 %v3465, 0.6931472
        %v3467 = vmul.f32 -0.5, %v3183
        %v3468 = vadd.f32 %v3467, 1.0
        %v3469 = vmul.f32 %v3468, %v3183
        %v3470 = vand.u32 2147483647, %v3183
        %vm3471 = vcmp.lt.f32.partialorder %v3470, 0.0004427343
        %v3472 = vsel %vm3471, %v3469, %v3466
        %v3473 = vadd.f32 %v3185, 1.0
        %v3474 = vlog2.pop %v3473
        %v3475 = vmul.f32 %v3474, 0.6931472
        %v3476 = vmul.f32 -0.5, %v3185
        %v3477 = vadd.f32 %v3476, 1.0
        %v3478 = vmul.f32 %v3477, %v3185
        %v3479 = vand.u32 2147483647, %v3185
        %vm3480 = vcmp.lt.f32.partialorder %v3479, 0.0004427343
        %v3481 = vsel %vm3480, %v3478, %v3475
        %v3482 = vadd.f32 %v3187, 1.0
        %v3483 = vlog2.pop %v3482
        %v3484 = vmul.f32 %v3483, 0.6931472
        %v3485 = vmul.f32 -0.5, %v3187
        %v3486 = vadd.f32 %v3485, 1.0
        %v3487 = vmul.f32 %v3486, %v3187
        %v3488 = vand.u32 2147483647, %v3187
        %vm3489 = vcmp.lt.f32.partialorder %v3488, 0.0004427343
        %v3490 = vsel %vm3489, %v3487, %v3484
        %v3491 = vadd.f32 %v3189, 1.0
        %v3492 = vlog2.pop %v3491
        %v3493 = vmul.f32 %v3492, 0.6931472
        %v3494 = vmul.f32 -0.5, %v3189
        %v3495 = vadd.f32 %v3494, 1.0
        %v3496 = vmul.f32 %v3495, %v3189
        %v3497 = vand.u32 2147483647, %v3189
        %vm3498 = vcmp.lt.f32.partialorder %v3497, 0.0004427343
        %v3499 = vsel %vm3498, %v3496, %v3493
        %v3500 = vadd.f32 %v3191, 1.0
        %v3501 = vlog2.pop %v3500
        %v3502 = vmul.f32 %v3501, 0.6931472
        %v3503 = vmul.f32 -0.5, %v3191
        %v3504 = vadd.f32 %v3503, 1.0
        %v3505 = vmul.f32 %v3504, %v3191
        %v3506 = vand.u32 2147483647, %v3191
        %vm3507 = vcmp.lt.f32.partialorder %v3506, 0.0004427343
        %v3508 = vsel %vm3507, %v3505, %v3502
        %v3509 = vadd.f32 %v3193, 1.0
        %v3510 = vlog2.pop %v3509
        %v3511 = vmul.f32 %v3510, 0.6931472
        %v3512 = vmul.f32 -0.5, %v3193
        %v3513 = vadd.f32 %v3512, 1.0
        %v3514 = vmul.f32 %v3513, %v3193
        %v3515 = vand.u32 2147483647, %v3193
        %vm3516 = vcmp.lt.f32.partialorder %v3515, 0.0004427343
        %v3517 = vsel %vm3516, %v3514, %v3511
        %v3518 = vadd.f32 %v3195, 1.0
        %v3519 = vlog2.pop %v3518
        %v3520 = vmul.f32 %v3519, 0.6931472
        %v3521 = vmul.f32 -0.5, %v3195
        %v3522 = vadd.f32 %v3521, 1.0
        %v3523 = vmul.f32 %v3522, %v3195
        %v3524 = vand.u32 2147483647, %v3195
        %vm3525 = vcmp.lt.f32.partialorder %v3524, 0.0004427343
        %v3526 = vsel %vm3525, %v3523, %v3520
        %v3527 = vadd.f32 %v3197, 1.0
        %v3528 = vlog2.pop %v3527
        %v3529 = vmul.f32 %v3528, 0.6931472
        %v3530 = vmul.f32 -0.5, %v3197
        %v3531 = vadd.f32 %v3530, 1.0
        %v3532 = vmul.f32 %v3531, %v3197
        %v3533 = vand.u32 2147483647, %v3197
        %vm3534 = vcmp.lt.f32.partialorder %v3533, 0.0004427343
        %v3535 = vsel %vm3534, %v3532, %v3529
        %v3536 = vadd.f32 %v3199, 1.0
        %v3537 = vlog2.pop %v3536
        %v3538 = vmul.f32 %v3537, 0.6931472
        %v3539 = vmul.f32 -0.5, %v3199
        %v3540 = vadd.f32 %v3539, 1.0
        %v3541 = vmul.f32 %v3540, %v3199
        %v3542 = vand.u32 2147483647, %v3199
        %vm3543 = vcmp.lt.f32.partialorder %v3542, 0.0004427343
        %v3544 = vsel %vm3543, %v3541, %v3538
        %v3545 = vadd.f32 %v3201, 1.0
        %v3546 = vlog2.pop %v3545
        %v3547 = vmul.f32 %v3546, 0.6931472
        %v3548 = vmul.f32 -0.5, %v3201
        %v3549 = vadd.f32 %v3548, 1.0
        %v3550 = vmul.f32 %v3549, %v3201
        %v3551 = vand.u32 2147483647, %v3201
        %vm3552 = vcmp.lt.f32.partialorder %v3551, 0.0004427343
        %v3553 = vsel %vm3552, %v3550, %v3547
        %v3554 = vadd.f32 %v3203, 1.0
        %v3555 = vlog2.pop %v3554
        %v3556 = vmul.f32 %v3555, 0.6931472
        %v3557 = vmul.f32 -0.5, %v3203
        %v3558 = vadd.f32 %v3557, 1.0
        %v3559 = vmul.f32 %v3558, %v3203
        %v3560 = vand.u32 2147483647, %v3203
        %vm3561 = vcmp.lt.f32.partialorder %v3560, 0.0004427343
        %v3562 = vsel %vm3561, %v3559, %v3556
        %v3563 = vadd.f32 %v3205, 1.0
        %v3564 = vlog2.pop %v3563
        %v3565 = vmul.f32 %v3564, 0.6931472
        %v3566 = vmul.f32 -0.5, %v3205
        %v3567 = vadd.f32 %v3566, 1.0
        %v3568 = vmul.f32 %v3567, %v3205
        %v3569 = vand.u32 2147483647, %v3205
        %vm3570 = vcmp.lt.f32.partialorder %v3569, 0.0004427343
        %v3571 = vsel %vm3570, %v3568, %v3565
        %v3572 = vadd.f32 %v3207, 1.0
        %v3573 = vlog2.pop %v3572
        %v3574 = vmul.f32 %v3573, 0.6931472
        %v3575 = vmul.f32 -0.5, %v3207
        %v3576 = vadd.f32 %v3575, 1.0
        %v3577 = vmul.f32 %v3576, %v3207
        %v3578 = vand.u32 2147483647, %v3207
        %vm3579 = vcmp.lt.f32.partialorder %v3578, 0.0004427343
        %v3580 = vsel %vm3579, %v3577, %v3574
        %v3581 = vadd.f32 %v3209, 1.0
        %v3582 = vlog2.pop %v3581
        %v3583 = vmul.f32 %v3582, 0.6931472
        %v3584 = vmul.f32 -0.5, %v3209
        %v3585 = vadd.f32 %v3584, 1.0
        %v3586 = vmul.f32 %v3585, %v3209
        %v3587 = vand.u32 2147483647, %v3209
        %vm3588 = vcmp.lt.f32.partialorder %v3587, 0.0004427343
        %v3589 = vsel %vm3588, %v3586, %v3583
        %v3590 = vadd.f32 %v3211, 1.0
        %v3591 = vlog2.pop %v3590
        %v3592 = vmul.f32 %v3591, 0.6931472
        %v3593 = vmul.f32 -0.5, %v3211
        %v3594 = vadd.f32 %v3593, 1.0
        %v3595 = vmul.f32 %v3594, %v3211
        %v3596 = vand.u32 2147483647, %v3211
        %vm3597 = vcmp.lt.f32.partialorder %v3596, 0.0004427343
        %v3598 = vsel %vm3597, %v3595, %v3592
        %v3599 = vadd.f32 %v3213, 1.0
        %v3600 = vlog2.pop %v3599
        %v3601 = vmul.f32 %v3600, 0.6931472
        %v3602 = vmul.f32 -0.5, %v3213
        %v3603 = vadd.f32 %v3602, 1.0
        %v3604 = vmul.f32 %v3603, %v3213
        %v3605 = vand.u32 2147483647, %v3213
        %vm3606 = vcmp.lt.f32.partialorder %v3605, 0.0004427343
        %v3607 = vsel %vm3606, %v3604, %v3601
        %v3608 = vadd.f32 %v3215, 1.0
        %v3609 = vlog2.pop %v3608
        %v3610 = vmul.f32 %v3609, 0.6931472
        %v3611 = vmul.f32 -0.5, %v3215
        %v3612 = vadd.f32 %v3611, 1.0
        %v3613 = vmul.f32 %v3612, %v3215
        %v3614 = vand.u32 2147483647, %v3215
        %vm3615 = vcmp.lt.f32.partialorder %v3614, 0.0004427343
        %v3616 = vsel %vm3615, %v3613, %v3610
        %v3617 = vadd.f32 %v3217, 1.0
        %v3618 = vlog2.pop %v3617
        %v3619 = vmul.f32 %v3618, 0.6931472
        %v3620 = vmul.f32 -0.5, %v3217
        %v3621 = vadd.f32 %v3620, 1.0
        %v3622 = vmul.f32 %v3621, %v3217
        %v3623 = vand.u32 2147483647, %v3217
        %vm3624 = vcmp.lt.f32.partialorder %v3623, 0.0004427343
        %v3625 = vsel %vm3624, %v3622, %v3619
        %v3626 = vadd.f32 %v3219, 1.0
        %v3627 = vlog2.pop %v3626
        %v3628 = vmul.f32 %v3627, 0.6931472
        %v3629 = vmul.f32 -0.5, %v3219
        %v3630 = vadd.f32 %v3629, 1.0
        %v3631 = vmul.f32 %v3630, %v3219
        %v3632 = vand.u32 2147483647, %v3219
        %vm3633 = vcmp.lt.f32.partialorder %v3632, 0.0004427343
        %v3634 = vsel %vm3633, %v3631, %v3628
        %v3635 = vadd.f32 %v3221, 1.0
        %v3636 = vlog2.pop %v3635
        %v3637 = vmul.f32 %v3636, 0.6931472
        %v3638 = vmul.f32 -0.5, %v3221
        %v3639 = vadd.f32 %v3638, 1.0
        %v3640 = vmul.f32 %v3639, %v3221
        %v3641 = vand.u32 2147483647, %v3221
        %vm3642 = vcmp.lt.f32.partialorder %v3641, 0.0004427343
        %v3643 = vsel %vm3642, %v3640, %v3637
        %v3644 = vadd.f32 %v3223, 1.0
        %v3645 = vlog2.pop %v3644
        %v3646 = vmul.f32 %v3645, 0.6931472
        %v3647 = vmul.f32 -0.5, %v3223
        %v3648 = vadd.f32 %v3647, 1.0
        %v3649 = vmul.f32 %v3648, %v3223
        %v3650 = vand.u32 2147483647, %v3223
        %vm3651 = vcmp.lt.f32.partialorder %v3650, 0.0004427343
        %v3652 = vsel %vm3651, %v3649, %v3646
        %v3653 = vadd.f32 %v3225, 1.0
        %v3654 = vlog2.pop %v3653
        %v3655 = vmul.f32 %v3654, 0.6931472
        %v3656 = vmul.f32 -0.5, %v3225
        %v3657 = vadd.f32 %v3656, 1.0
        %v3658 = vmul.f32 %v3657, %v3225
        %v3659 = vand.u32 2147483647, %v3225
        %vm3660 = vcmp.lt.f32.partialorder %v3659, 0.0004427343
        %v3661 = vsel %vm3660, %v3658, %v3655
        %v3662 = vadd.f32 %v3227, 1.0
        %v3663 = vlog2.pop %v3662
        %v3664 = vmul.f32 %v3663, 0.6931472
        %v3665 = vmul.f32 -0.5, %v3227
        %v3666 = vadd.f32 %v3665, 1.0
        %v3667 = vmul.f32 %v3666, %v3227
        %v3668 = vand.u32 2147483647, %v3227
        %vm3669 = vcmp.lt.f32.partialorder %v3668, 0.0004427343
        %v3670 = vsel %vm3669, %v3667, %v3664
        %v3671 = vadd.f32 %v3229, 1.0
        %v3672 = vlog2.pop %v3671
        %v3673 = vmul.f32 %v3672, 0.6931472
        %v3674 = vmul.f32 -0.5, %v3229
        %v3675 = vadd.f32 %v3674, 1.0
        %v3676 = vmul.f32 %v3675, %v3229
        %v3677 = vand.u32 2147483647, %v3229
        %vm3678 = vcmp.lt.f32.partialorder %v3677, 0.0004427343
        %v3679 = vsel %vm3678, %v3676, %v3673
        %v3680 = vadd.f32 %v3231, 1.0
        %v3681 = vlog2.pop %v3680
        %v3682 = vmul.f32 %v3681, 0.6931472
        %v3683 = vmul.f32 -0.5, %v3231
        %v3684 = vadd.f32 %v3683, 1.0
        %v3685 = vmul.f32 %v3684, %v3231
        %v3686 = vand.u32 2147483647, %v3231
        %vm3687 = vcmp.lt.f32.partialorder %v3686, 0.0004427343
        %v3688 = vsel %vm3687, %v3685, %v3682
        %v3689 = vadd.f32 %v3233, 1.0
        %v3690 = vlog2.pop %v3689
        %v3691 = vmul.f32 %v3690, 0.6931472
        %v3692 = vmul.f32 -0.5, %v3233
        %v3693 = vadd.f32 %v3692, 1.0
        %v3694 = vmul.f32 %v3693, %v3233
        %v3695 = vand.u32 2147483647, %v3233
        %vm3696 = vcmp.lt.f32.partialorder %v3695, 0.0004427343
        %v3697 = vsel %vm3696, %v3694, %v3691
        %v3698 = vadd.f32 %v3235, 1.0
        %v3699 = vlog2.pop %v3698
        %v3700 = vmul.f32 %v3699, 0.6931472
        %v3701 = vmul.f32 -0.5, %v3235
        %v3702 = vadd.f32 %v3701, 1.0
        %v3703 = vmul.f32 %v3702, %v3235
        %v3704 = vand.u32 2147483647, %v3235
        %vm3705 = vcmp.lt.f32.partialorder %v3704, 0.0004427343
        %v3706 = vsel %vm3705, %v3703, %v3700
        %v3707 = vadd.f32 %v3237, 1.0
        %v3708 = vlog2.pop %v3707
        %v3709 = vmul.f32 %v3708, 0.6931472
        %v3710 = vmul.f32 -0.5, %v3237
        %v3711 = vadd.f32 %v3710, 1.0
        %v3712 = vmul.f32 %v3711, %v3237
        %v3713 = vand.u32 2147483647, %v3237
        %vm3714 = vcmp.lt.f32.partialorder %v3713, 0.0004427343
        %v3715 = vsel %vm3714, %v3712, %v3709
        %v3716 = vadd.f32 %v3239, 1.0
        %v3717 = vlog2.pop %v3716
        %v3718 = vmul.f32 %v3717, 0.6931472
        %v3719 = vmul.f32 -0.5, %v3239
        %v3720 = vadd.f32 %v3719, 1.0
        %v3721 = vmul.f32 %v3720, %v3239
        %v3722 = vand.u32 2147483647, %v3239
        %vm3723 = vcmp.lt.f32.partialorder %v3722, 0.0004427343
        %v3724 = vsel %vm3723, %v3721, %v3718
        %v3725 = vadd.f32 %v3241, 1.0
        %v3726 = vlog2.pop %v3725
        %v3727 = vmul.f32 %v3726, 0.6931472
        %v3728 = vmul.f32 -0.5, %v3241
        %v3729 = vadd.f32 %v3728, 1.0
        %v3730 = vmul.f32 %v3729, %v3241
        %v3731 = vand.u32 2147483647, %v3241
        %vm3732 = vcmp.lt.f32.partialorder %v3731, 0.0004427343
        %v3733 = vsel %vm3732, %v3730, %v3727
        %v3734 = vadd.f32 %v3243, 1.0
        %v3735 = vlog2.pop %v3734
        %v3736 = vmul.f32 %v3735, 0.6931472
        %v3737 = vmul.f32 -0.5, %v3243
        %v3738 = vadd.f32 %v3737, 1.0
        %v3739 = vmul.f32 %v3738, %v3243
        %v3740 = vand.u32 2147483647, %v3243
        %vm3741 = vcmp.lt.f32.partialorder %v3740, 0.0004427343
        %v3742 = vsel %vm3741, %v3739, %v3736
        %v3743 = vadd.f32 %v3245, 1.0
        %v3744 = vlog2.pop %v3743
        %v3745 = vmul.f32 %v3744, 0.6931472
        %v3746 = vmul.f32 -0.5, %v3245
        %v3747 = vadd.f32 %v3746, 1.0
        %v3748 = vmul.f32 %v3747, %v3245
        %v3749 = vand.u32 2147483647, %v3245
        %vm3750 = vcmp.lt.f32.partialorder %v3749, 0.0004427343
        %v3751 = vsel %vm3750, %v3748, %v3745
        %v3752 = vadd.f32 %v3247, 1.0
        %v3753 = vlog2.pop %v3752
        %v3754 = vmul.f32 %v3753, 0.6931472
        %v3755 = vmul.f32 -0.5, %v3247
        %v3756 = vadd.f32 %v3755, 1.0
        %v3757 = vmul.f32 %v3756, %v3247
        %v3758 = vand.u32 2147483647, %v3247
        %vm3759 = vcmp.lt.f32.partialorder %v3758, 0.0004427343
        %v3760 = vsel %vm3759, %v3757, %v3754
        %v3761 = vadd.f32 %v3249, 1.0
        %v3762 = vlog2.pop %v3761
        %v3763 = vmul.f32 %v3762, 0.6931472
        %v3764 = vmul.f32 -0.5, %v3249
        %v3765 = vadd.f32 %v3764, 1.0
        %v3766 = vmul.f32 %v3765, %v3249
        %v3767 = vand.u32 2147483647, %v3249
        %vm3768 = vcmp.lt.f32.partialorder %v3767, 0.0004427343
        %v3769 = vsel %vm3768, %v3766, %v3763
        %v3770 = vadd.f32 %v3251, 1.0
        %v3771 = vlog2.pop %v3770
        %v3772 = vmul.f32 %v3771, 0.6931472
        %v3773 = vmul.f32 -0.5, %v3251
        %v3774 = vadd.f32 %v3773, 1.0
        %v3775 = vmul.f32 %v3774, %v3251
        %v3776 = vand.u32 2147483647, %v3251
        %vm3777 = vcmp.lt.f32.partialorder %v3776, 0.0004427343
        %v3778 = vsel %vm3777, %v3775, %v3772
        %v3779 = vadd.f32 %v3253, 1.0
        %v3780 = vlog2.pop %v3779
        %v3781 = vmul.f32 %v3780, 0.6931472
        %v3782 = vmul.f32 -0.5, %v3253
        %v3783 = vadd.f32 %v3782, 1.0
        %v3784 = vmul.f32 %v3783, %v3253
        %v3785 = vand.u32 2147483647, %v3253
        %vm3786 = vcmp.lt.f32.partialorder %v3785, 0.0004427343
        %v3787 = vsel %vm3786, %v3784, %v3781
        %v3788 = vadd.f32 %v3255, 1.0
        %v3789 = vlog2.pop %v3788
        %v3790 = vmul.f32 %v3789, 0.6931472
        %v3791 = vmul.f32 -0.5, %v3255
        %v3792 = vadd.f32 %v3791, 1.0
        %v3793 = vmul.f32 %v3792, %v3255
        %v3794 = vand.u32 2147483647, %v3255
        %vm3795 = vcmp.lt.f32.partialorder %v3794, 0.0004427343
        %v3796 = vsel %vm3795, %v3793, %v3790
        %v3797 = vadd.f32 %v3257, 1.0
        %v3798 = vlog2.pop %v3797
        %v3799 = vmul.f32 %v3798, 0.6931472
        %v3800 = vmul.f32 -0.5, %v3257
        %v3801 = vadd.f32 %v3800, 1.0
        %v3802 = vmul.f32 %v3801, %v3257
        %v3803 = vand.u32 2147483647, %v3257
        %vm3804 = vcmp.lt.f32.partialorder %v3803, 0.0004427343
        %v3805 = vsel %vm3804, %v3802, %v3799
        %v3806 = vadd.f32 %v3259, 1.0
        %v3807 = vlog2.pop %v3806
        %v3808 = vmul.f32 %v3807, 0.6931472
        %v3809 = vmul.f32 -0.5, %v3259
        %v3810 = vadd.f32 %v3809, 1.0
        %v3811 = vmul.f32 %v3810, %v3259
        %v3812 = vand.u32 2147483647, %v3259
        %vm3813 = vcmp.lt.f32.partialorder %v3812, 0.0004427343
        %v3814 = vsel %vm3813, %v3811, %v3808
        %v3815 = vadd.f32 %v3261, 1.0
        %v3816 = vlog2.pop %v3815
        %v3817 = vmul.f32 %v3816, 0.6931472
        %v3818 = vmul.f32 -0.5, %v3261
        %v3819 = vadd.f32 %v3818, 1.0
        %v3820 = vmul.f32 %v3819, %v3261
        %v3821 = vand.u32 2147483647, %v3261
        %vm3822 = vcmp.lt.f32.partialorder %v3821, 0.0004427343
        %v3823 = vsel %vm3822, %v3820, %v3817
        %v3824 = vadd.f32 %v3263, 1.0
        %v3825 = vlog2.pop %v3824
        %v3826 = vmul.f32 %v3825, 0.6931472
        %v3827 = vmul.f32 -0.5, %v3263
        %v3828 = vadd.f32 %v3827, 1.0
        %v3829 = vmul.f32 %v3828, %v3263
        %v3830 = vand.u32 2147483647, %v3263
        %vm3831 = vcmp.lt.f32.partialorder %v3830, 0.0004427343
        %v3832 = vsel %vm3831, %v3829, %v3826
        %v3833 = vadd.f32 %v3265, 1.0
        %v3834 = vlog2.pop %v3833
        %v3835 = vmul.f32 %v3834, 0.6931472
        %v3836 = vmul.f32 -0.5, %v3265
        %v3837 = vadd.f32 %v3836, 1.0
        %v3838 = vmul.f32 %v3837, %v3265
        %v3839 = vand.u32 2147483647, %v3265
        %vm3840 = vcmp.lt.f32.partialorder %v3839, 0.0004427343
        %v3841 = vsel %vm3840, %v3838, %v3835
        %v3842 = vmul.f32 %v3274, 0.01
        %v3843 = vmul.f32 %v3283, 0.01
        %v3844 = vmul.f32 %v3292, 0.01
        %v3845 = vmul.f32 %v3301, 0.01
        %v3846 = vmul.f32 %v3310, 0.01
        %v3847 = vmul.f32 %v3319, 0.01
        %v3848 = vmul.f32 %v3328, 0.01
        %v3849 = vmul.f32 %v3337, 0.01
        %v3850 = vmul.f32 %v3346, 0.01
        %v3851 = vmul.f32 %v3355, 0.01
        %v3852 = vmul.f32 %v3364, 0.01
        %v3853 = vmul.f32 %v3373, 0.01
        %v3854 = vmul.f32 %v3382, 0.01
        %v3855 = vmul.f32 %v3391, 0.01
        %v3856 = vmul.f32 %v3400, 0.01
        %v3857 = vmul.f32 %v3409, 0.01
        %v3858 = vmul.f32 %v3418, 0.01
        %v3859 = vmul.f32 %v3427, 0.01
        %v3860 = vmul.f32 %v3436, 0.01
        %v3861 = vmul.f32 %v3445, 0.01
        %v3862 = vmul.f32 %v3454, 0.01
        %v3863 = vmul.f32 %v3463, 0.01
        %v3864 = vmul.f32 %v3472, 0.01
        %v3865 = vmul.f32 %v3481, 0.01
        %v3866 = vmul.f32 %v3490, 0.01
        %v3867 = vmul.f32 %v3499, 0.01
        %v3868 = vmul.f32 %v3508, 0.01
        %v3869 = vmul.f32 %v3517, 0.01
        %v3870 = vmul.f32 %v3526, 0.01
        %v3871 = vmul.f32 %v3535, 0.01
        %v3872 = vmul.f32 %v3544, 0.01
        %v3873 = vmul.f32 %v3553, 0.01
        %v3874 = vmul.f32 %v3562, 0.01
        %v3875 = vmul.f32 %v3571, 0.01
        %v3876 = vmul.f32 %v3580, 0.01
        %v3877 = vmul.f32 %v3589, 0.01
        %v3878 = vmul.f32 %v3598, 0.01
        %v3879 = vmul.f32 %v3607, 0.01
        %v3880 = vmul.f32 %v3616, 0.01
        %v3881 = vmul.f32 %v3625, 0.01
        %v3882 = vmul.f32 %v3634, 0.01
        %v3883 = vmul.f32 %v3643, 0.01
        %v3884 = vmul.f32 %v3652, 0.01
        %v3885 = vmul.f32 %v3661, 0.01
        %v3886 = vmul.f32 %v3670, 0.01
        %v3887 = vmul.f32 %v3679, 0.01
        %v3888 = vmul.f32 %v3688, 0.01
        %v3889 = vmul.f32 %v3697, 0.01
        %v3890 = vmul.f32 %v3706, 0.01
        %v3891 = vmul.f32 %v3715, 0.01
        %v3892 = vmul.f32 %v3724, 0.01
        %v3893 = vmul.f32 %v3733, 0.01
        %v3894 = vmul.f32 %v3742, 0.01
        %v3895 = vmul.f32 %v3751, 0.01
        %v3896 = vmul.f32 %v3760, 0.01
        %v3897 = vmul.f32 %v3769, 0.01
        %v3898 = vmul.f32 %v3778, 0.01
        %v3899 = vmul.f32 %v3787, 0.01
        %v3900 = vmul.f32 %v3796, 0.01
        %v3901 = vmul.f32 %v3805, 0.01
        %v3902 = vmul.f32 %v3814, 0.01
        %v3903 = vmul.f32 %v3823, 0.01
        %v3904 = vmul.f32 %v3832, 0.01
        %v3905 = vmul.f32 %v3841, 0.01
        %v3906 = vsel %vm3074, %v2365, %v3842
        %v3907 = vsel %vm3075, %v2367, %v3843
        %v3908 = vsel %vm3076, %v2454, %v3844
        %v3909 = vsel %vm3077, %v2456, %v3845
        %v3910 = vsel %vm3078, %v2543, %v3846
        %v3911 = vsel %vm3079, %v2545, %v3847
        %v3912 = vsel %vm3080, %v2632, %v3848
        %v3913 = vsel %vm3081, %v2634, %v3849
        %v3914 = vsel %vm3082, %v2721, %v3850
        %v3915 = vsel %vm3083, %v2723, %v3851
        %v3916 = vsel %vm3084, %v2810, %v3852
        %v3917 = vsel %vm3085, %v2812, %v3853
        %v3918 = vsel %vm3086, %v2899, %v3854
        %v3919 = vsel %vm3087, %v2901, %v3855
        %v3920 = vsel %vm3088, %v2988, %v3856
        %v3921 = vsel %vm3089, %v2990, %v3857
        %v3922 = vsel %vm3090, %v2371, %v3858
        %v3923 = vsel %vm3091, %v2373, %v3859
        %v3924 = vsel %vm3092, %v2460, %v3860
        %v3925 = vsel %vm3093, %v2462, %v3861
        %v3926 = vsel %vm3094, %v2549, %v3862
        %v3927 = vsel %vm3095, %v2551, %v3863
        %v3928 = vsel %vm3096, %v2638, %v3864
        %v3929 = vsel %vm3097, %v2640, %v3865
        %v3930 = vsel %vm3098, %v2727, %v3866
        %v3931 = vsel %vm3099, %v2729, %v3867
        %v3932 = vsel %vm3100, %v2816, %v3868
        %v3933 = vsel %vm3101, %v2818, %v3869
        %v3934 = vsel %vm3102, %v2905, %v3870
        %v3935 = vsel %vm3103, %v2907, %v3871
        %v3936 = vsel %vm3104, %v2994, %v3872
        %v3937 = vsel %vm3105, %v2996, %v3873
        %v3938 = vsel %vm3106, %v2377, %v3874
        %v3939 = vsel %vm3107, %v2379, %v3875
        %v3940 = vsel %vm3108, %v2466, %v3876
        %v3941 = vsel %vm3109, %v2468, %v3877
        %v3942 = vsel %vm3110, %v2555, %v3878
        %v3943 = vsel %vm3111, %v2557, %v3879
        %v3944 = vsel %vm3112, %v2644, %v3880
        %v3945 = vsel %vm3113, %v2646, %v3881
        %v3946 = vsel %vm3114, %v2733, %v3882
        %v3947 = vsel %vm3115, %v2735, %v3883
        %v3948 = vsel %vm3116, %v2822, %v3884
        %v3949 = vsel %vm3117, %v2824, %v3885
        %v3950 = vsel %vm3118, %v2911, %v3886
        %v3951 = vsel %vm3119, %v2913, %v3887
        %v3952 = vsel %vm3120, %v3000, %v3888
        %v3953 = vsel %vm3121, %v3002, %v3889
        %v3954 = vsel %vm3122, %v2383, %v3890
        %v3955 = vsel %vm3123, %v2385, %v3891
        %v3956 = vsel %vm3124, %v2472, %v3892
        %v3957 = vsel %vm3125, %v2474, %v3893
        %v3958 = vsel %vm3126, %v2561, %v3894
        %v3959 = vsel %vm3127, %v2563, %v3895
        %v3960 = vsel %vm3128, %v2650, %v3896
        %v3961 = vsel %vm3129, %v2652, %v3897
        %v3962 = vsel %vm3130, %v2739, %v3898
        %v3963 = vsel %vm3131, %v2741, %v3899
        %v3964 = vsel %vm3132, %v2828, %v3900
        %v3965 = vsel %vm3133, %v2830, %v3901
        %v3966 = vsel %vm3134, %v2917, %v3902
        %v3967 = vsel %vm3135, %v2919, %v3903
        %v3968 = vsel %vm3136, %v3006, %v3904
        %v3969 = vsel %vm3137, %v3008, %v3905
        %s3970 = scalar_lea.vmem [#allocation2], 32
        %v3971 = vld [vmem:[%s3970] sm:$0xff]
        %v3972 = vld [vmem:[%s3970 + $0x8] sm:$0xff]
        %v3973 = vld [vmem:[%s3970 + $0x10] sm:$0xff]
        %v3974 = vld [vmem:[%s3970 + $0x18] sm:$0xff]
        %v3976 = vsel %vm2285, %v3971, 0
        %v3979 = vsel %vm2285, %v3972, 0
        %v3982 = vsel %vm2285, %v3973, 0
        %v3985 = vsel %vm2285, %v3974, 0
        %3987 = vmatprep.subr.mxu0 %v3907
        %3988 = vmatpush1.msra.mxu0 %v3906
        %3989 = vmatprep.subr.mxu0 %v3923
        %3990 = vmatpush1.msra.mxu0 %v3922
        %3991 = vmatprep.subr.mxu0 %v3939
        %3992 = vmatpush1.msra.mxu0 %v3938
        %3993 = vmatprep.subr.mxu0 %v3955
        %3994 = vmatpush1.msra.mxu0 %v3954
        %3995 = vmatprep.subr.mxu0 0.0
        %3996 = vmatpush1.msra.mxu0 0.0
        %3997 = vmatprep.subr.mxu0 0.0
        %3998 = vmatpush1.msra.mxu0 0.0
        %3999 = vmatprep.subr.mxu0 0.0
        %4000 = vmatpush1.msra.mxu0 0.0
        %4001 = vmatprep.subr.mxu0 0.0
        %4002 = vmatpush1.msra.mxu0 0.0
        %4003 = vmatprep.subr.mxu0 0.0
        %4004 = vmatpush1.msra.mxu0 0.0
        %4005 = vmatprep.subr.mxu0 0.0
        %4006 = vmatpush1.msra.mxu0 0.0
        %4007 = vmatprep.subr.mxu0 0.0
        %4008 = vmatpush1.msra.mxu0 0.0
        %4009 = vmatprep.subr.mxu0 0.0
        %4010 = vmatpush1.msra.mxu0 0.0
        %4011 = vmatprep.subr.mxu0 0.0
        %4012 = vmatpush1.msra.mxu0 0.0
        %4013 = vmatprep.subr.mxu0 0.0
        %4014 = vmatpush1.msra.mxu0 0.0
        %4015 = vmatprep.subr.mxu0 0.0
        %4016 = vmatpush1.msra.mxu0 0.0
        %4017 = vmatprep.subr.mxu0 0.0
        %4018 = vmatpush1.msra.mxu0 0.0
        %4019 = vmatprep.subr.mxu0 0.0
        %4020 = vmatpush1.msra.mxu0 0.0
        %4021 = vmatprep.subr.mxu0 0.0
        %4022 = vmatpush1.msra.mxu0 0.0
        %4023 = vmatprep.subr.mxu0 0.0
        %4024 = vmatpush1.msra.mxu0 0.0
        %4025 = vmatprep.subr.mxu0 0.0
        %4026 = vmatpush1.msra.mxu0 0.0
        %4027 = vmatprep.subr.mxu0 0.0
        %4028 = vmatpush1.msra.mxu0 0.0
        %4029 = vmatprep.subr.mxu0 0.0
        %4030 = vmatpush1.msra.mxu0 0.0
        %4031 = vmatprep.subr.mxu0 0.0
        %4032 = vmatpush1.msra.mxu0 0.0
        %4033 = vmatprep.subr.mxu0 0.0
        %4034 = vmatpush1.msra.mxu0 0.0
        %4035 = vmatprep.subr.mxu0 0.0
        %4036 = vmatpush1.msra.mxu0 0.0
        %4037 = vmatprep.subr.mxu0 0.0
        %4038 = vmatpush1.msra.mxu0 0.0
        %4039 = vmatprep.subr.mxu0 0.0
        %4040 = vmatpush1.msra.mxu0 0.0
        %4041 = vmatprep.subr.mxu0 0.0
        %4042 = vmatpush1.msra.mxu0 0.0
        %4043 = vmatprep.subr.mxu0 0.0
        %4044 = vmatpush1.msra.mxu0 0.0
        %4045 = vmatprep.subr.mxu0 0.0
        %4046 = vmatpush1.msra.mxu0 0.0
        %4047 = vmatprep.subr.mxu0 0.0
        %4048 = vmatpush1.msra.mxu0 0.0
        %4049 = vmatprep.subr.mxu0 0.0
        %4050 = vmatpush1.msra.mxu0 0.0
        %4051 = vmatprep.mubr.f32.mxu0 0.0
        %4052 = vmatmul.mubr.f32.gmra.mrb[0].mxu0 %v3976
        %v4053 = vpop.f32.mrb[0].mxu0
        %v4054 = vadd.f32 %v395, %v4053
        %v4055 = vpop.f32.mrb[0].mxu0
        %v4056 = vadd.f32 %v397, %v4055
        %4057 = vmatprep.mubr.f32.mxu0 0.0
        %4058 = vmatmul.mubr.f32.gmra.mrb[0].mxu0 %v3979
        %v4059 = vpop.f32.mrb[0].mxu0
        %v4060 = vadd.f32 %v401, %v4059
        %v4061 = vpop.f32.mrb[0].mxu0
        %v4062 = vadd.f32 %v403, %v4061
        %4063 = vmatprep.mubr.f32.mxu0 0.0
        %4064 = vmatmul.mubr.f32.gmra.mrb[0].mxu0 %v3982
        %v4065 = vpop.f32.mrb[0].mxu0
        %v4066 = vadd.f32 %v407, %v4065
        %v4067 = vpop.f32.mrb[0].mxu0
        %v4068 = vadd.f32 %v409, %v4067
        %4069 = vmatprep.mubr.f32.mxu0 0.0
        %4070 = vmatmul.mubr.f32.gmra.mrb[0].mxu0 %v3985
        %v4071 = vpop.f32.mrb[0].mxu0
        %v4072 = vadd.f32 %v413, %v4071
        %v4073 = vpop.f32.mrb[0].mxu0
        %v4074 = vadd.f32 %v415, %v4073
        %4075 = vdwg.mxu0
        %4076 = vmatprep.subr.mxu0 %v3909
        %4077 = vmatpush1.msra.mxu0 %v3908
        %4078 = vmatprep.subr.mxu0 %v3925
        %4079 = vmatpush1.msra.mxu0 %v3924
        %4080 = vmatprep.subr.mxu0 %v3941
        %4081 = vmatpush1.msra.mxu0 %v3940
        %4082 = vmatprep.subr.mxu0 %v3957
        %4083 = vmatpush1.msra.mxu0 %v3956
        %4084 = vmatprep.subr.mxu0 0.0
        %4085 = vmatpush1.msra.mxu0 0.0
        %4086 = vmatprep.subr.mxu0 0.0
        %4087 = vmatpush1.msra.mxu0 0.0
        %4088 = vmatprep.subr.mxu0 0.0
        %4089 = vmatpush1.msra.mxu0 0.0
        %4090 = vmatprep.subr.mxu0 0.0
        %4091 = vmatpush1.msra.mxu0 0.0
        %4092 = vmatprep.subr.mxu0 0.0
        %4093 = vmatpush1.msra.mxu0 0.0
        %4094 = vmatprep.subr.mxu0 0.0
        %4095 = vmatpush1.msra.mxu0 0.0
        %4096 = vmatprep.subr.mxu0 0.0
        %4097 = vmatpush1.msra.mxu0 0.0
        %4098 = vmatprep.subr.mxu0 0.0
        %4099 = vmatpush1.msra.mxu0 0.0
        %4100 = vmatprep.subr.mxu0 0.0
        %4101 = vmatpush1.msra.mxu0 0.0
        %4102 = vmatprep.subr.mxu0 0.0
        %4103 = vmatpush1.msra.mxu0 0.0
        %4104 = vmatprep.subr.mxu0 0.0
        %4105 = vmatpush1.msra.mxu0 0.0
        %4106 = vmatprep.subr.mxu0 0.0
        %4107 = vmatpush1.msra.mxu0 0.0
        %4108 = vmatprep.subr.mxu0 0.0
        %4109 = vmatpush1.msra.mxu0 0.0
        %4110 = vmatprep.subr.mxu0 0.0
        %4111 = vmatpush1.msra.mxu0 0.0
        %4112 = vmatprep.subr.mxu0 0.0
        %4113 = vmatpush1.msra.mxu0 0.0
        %4114 = vmatprep.subr.mxu0 0.0
        %4115 = vmatpush1.msra.mxu0 0.0
        %4116 = vmatprep.subr.mxu0 0.0
        %4117 = vmatpush1.msra.mxu0 0.0
        %4118 = vmatprep.subr.mxu0 0.0
        %4119 = vmatpush1.msra.mxu0 0.0
        %4120 = vmatprep.subr.mxu0 0.0
        %4121 = vmatpush1.msra.mxu0 0.0
        %4122 = vmatprep.subr.mxu0 0.0
        %4123 = vmatpush1.msra.mxu0 0.0
        %4124 = vmatprep.subr.mxu0 0.0
        %4125 = vmatpush1.msra.mxu0 0.0
        %4126 = vmatprep.subr.mxu0 0.0
        %4127 = vmatpush1.msra.mxu0 0.0
        %4128 = vmatprep.subr.mxu0 0.0
        %4129 = vmatpush1.msra.mxu0 0.0
        %4130 = vmatprep.subr.mxu0 0.0
        %4131 = vmatpush1.msra.mxu0 0.0
        %4132 = vmatprep.subr.mxu0 0.0
        %4133 = vmatpush1.msra.mxu0 0.0
        %4134 = vmatprep.subr.mxu0 0.0
        %4135 = vmatpush1.msra.mxu0 0.0
        %4136 = vmatprep.subr.mxu0 0.0
        %4137 = vmatpush1.msra.mxu0 0.0
        %4138 = vmatprep.subr.mxu0 0.0
        %4139 = vmatpush1.msra.mxu0 0.0
        %4140 = vmatprep.mubr.f32.mxu0 0.0
        %4141 = vmatmul.mubr.f32.gmra.mrb[0].mxu0 %v3976
        %v4142 = vpop.f32.mrb[0].mxu0
        %v4143 = vadd.f32 %v508, %v4142
        %v4144 = vpop.f32.mrb[0].mxu0
        %v4145 = vadd.f32 %v510, %v4144
        %4146 = vmatprep.mubr.f32.mxu0 0.0
        %4147 = vmatmul.mubr.f32.gmra.mrb[0].mxu0 %v3979
        %v4148 = vpop.f32.mrb[0].mxu0
        %v4149 = vadd.f32 %v514, %v4148
        %v4150 = vpop.f32.mrb[0].mxu0
        %v4151 = vadd.f32 %v516, %v4150
        %4152 = vmatprep.mubr.f32.mxu0 0.0
        %4153 = vmatmul.mubr.f32.gmra.mrb[0].mxu0 %v3982
        %v4154 = vpop.f32.mrb[0].mxu0
        %v4155 = vadd.f32 %v520, %v4154
        %v4156 = vpop.f32.mrb[0].mxu0
        %v4157 = vadd.f32 %v522, %v4156
        %4158 = vmatprep.mubr.f32.mxu0 0.0
        %4159 = vmatmul.mubr.f32.gmra.mrb[0].mxu0 %v3985
        %v4160 = vpop.f32.mrb[0].mxu0
        %v4161 = vadd.f32 %v526, %v4160
        %v4162 = vpop.f32.mrb[0].mxu0
        %v4163 = vadd.f32 %v528, %v4162
        %4164 = vdwg.mxu0
        %4165 = vmatprep.subr.mxu0 %v3911
        %4166 = vmatpush1.msra.mxu0 %v3910
        %4167 = vmatprep.subr.mxu0 %v3927
        %4168 = vmatpush1.msra.mxu0 %v3926
        %4169 = vmatprep.subr.mxu0 %v3943
        %4170 = vmatpush1.msra.mxu0 %v3942
        %4171 = vmatprep.subr.mxu0 %v3959
        %4172 = vmatpush1.msra.mxu0 %v3958
        %4173 = vmatprep.subr.mxu0 0.0
        %4174 = vmatpush1.msra.mxu0 0.0
        %4175 = vmatprep.subr.mxu0 0.0
        %4176 = vmatpush1.msra.mxu0 0.0
        %4177 = vmatprep.subr.mxu0 0.0
        %4178 = vmatpush1.msra.mxu0 0.0
        %4179 = vmatprep.subr.mxu0 0.0
        %4180 = vmatpush1.msra.mxu0 0.0
        %4181 = vmatprep.subr.mxu0 0.0
        %4182 = vmatpush1.msra.mxu0 0.0
        %4183 = vmatprep.subr.mxu0 0.0
        %4184 = vmatpush1.msra.mxu0 0.0
        %4185 = vmatprep.subr.mxu0 0.0
        %4186 = vmatpush1.msra.mxu0 0.0
        %4187 = vmatprep.subr.mxu0 0.0
        %4188 = vmatpush1.msra.mxu0 0.0
        %4189 = vmatprep.subr.mxu0 0.0
        %4190 = vmatpush1.msra.mxu0 0.0
        %4191 = vmatprep.subr.mxu0 0.0
        %4192 = vmatpush1.msra.mxu0 0.0
        %4193 = vmatprep.subr.mxu0 0.0
        %4194 = vmatpush1.msra.mxu0 0.0
        %4195 = vmatprep.subr.mxu0 0.0
        %4196 = vmatpush1.msra.mxu0 0.0
        %4197 = vmatprep.subr.mxu0 0.0
        %4198 = vmatpush1.msra.mxu0 0.0
        %4199 = vmatprep.subr.mxu0 0.0
        %4200 = vmatpush1.msra.mxu0 0.0
        %4201 = vmatprep.subr.mxu0 0.0
        %4202 = vmatpush1.msra.mxu0 0.0
        %4203 = vmatprep.subr.mxu0 0.0
        %4204 = vmatpush1.msra.mxu0 0.0
        %4205 = vmatprep.subr.mxu0 0.0
        %4206 = vmatpush1.msra.mxu0 0.0
        %4207 = vmatprep.subr.mxu0 0.0
        %4208 = vmatpush1.msra.mxu0 0.0
        %4209 = vmatprep.subr.mxu0 0.0
        %4210 = vmatpush1.msra.mxu0 0.0
        %4211 = vmatprep.subr.mxu0 0.0
        %4212 = vmatpush1.msra.mxu0 0.0
        %4213 = vmatprep.subr.mxu0 0.0
        %4214 = vmatpush1.msra.mxu0 0.0
        %4215 = vmatprep.subr.mxu0 0.0
        %4216 = vmatpush1.msra.mxu0 0.0
        %4217 = vmatprep.subr.mxu0 0.0
        %4218 = vmatpush1.msra.mxu0 0.0
        %4219 = vmatprep.subr.mxu0 0.0
        %4220 = vmatpush1.msra.mxu0 0.0
        %4221 = vmatprep.subr.mxu0 0.0
        %4222 = vmatpush1.msra.mxu0 0.0
        %4223 = vmatprep.subr.mxu0 0.0
        %4224 = vmatpush1.msra.mxu0 0.0
        %4225 = vmatprep.subr.mxu0 0.0
        %4226 = vmatpush1.msra.mxu0 0.0
        %4227 = vmatprep.subr.mxu0 0.0
        %4228 = vmatpush1.msra.mxu0 0.0
        %4229 = vmatprep.mubr.f32.mxu0 0.0
        %4230 = vmatmul.mubr.f32.gmra.mrb[0].mxu0 %v3976
        %v4231 = vpop.f32.mrb[0].mxu0
        %v4232 = vadd.f32 %v621, %v4231
        %v4233 = vpop.f32.mrb[0].mxu0
        %v4234 = vadd.f32 %v623, %v4233
        %4235 = vmatprep.mubr.f32.mxu0 0.0
        %4236 = vmatmul.mubr.f32.gmra.mrb[0].mxu0 %v3979
        %v4237 = vpop.f32.mrb[0].mxu0
        %v4238 = vadd.f32 %v627, %v4237
        %v4239 = vpop.f32.mrb[0].mxu0
        %v4240 = vadd.f32 %v629, %v4239
        %4241 = vmatprep.mubr.f32.mxu0 0.0
        %4242 = vmatmul.mubr.f32.gmra.mrb[0].mxu0 %v3982
        %v4243 = vpop.f32.mrb[0].mxu0
        %v4244 = vadd.f32 %v633, %v4243
        %v4245 = vpop.f32.mrb[0].mxu0
        %v4246 = vadd.f32 %v635, %v4245
        %4247 = vmatprep.mubr.f32.mxu0 0.0
        %4248 = vmatmul.mubr.f32.gmra.mrb[0].mxu0 %v3985
        %v4249 = vpop.f32.mrb[0].mxu0
        %v4250 = vadd.f32 %v639, %v4249
        %v4251 = vpop.f32.mrb[0].mxu0
        %v4252 = vadd.f32 %v641, %v4251
        %4253 = vdwg.mxu0
        %4254 = vmatprep.subr.mxu0 %v3913
        %4255 = vmatpush1.msra.mxu0 %v3912
        %4256 = vmatprep.subr.mxu0 %v3929
        %4257 = vmatpush1.msra.mxu0 %v3928
        %4258 = vmatprep.subr.mxu0 %v3945
        %4259 = vmatpush1.msra.mxu0 %v3944
        %4260 = vmatprep.subr.mxu0 %v3961
        %4261 = vmatpush1.msra.mxu0 %v3960
        %4262 = vmatprep.subr.mxu0 0.0
        %4263 = vmatpush1.msra.mxu0 0.0
        %4264 = vmatprep.subr.mxu0 0.0
        %4265 = vmatpush1.msra.mxu0 0.0
        %4266 = vmatprep.subr.mxu0 0.0
        %4267 = vmatpush1.msra.mxu0 0.0
        %4268 = vmatprep.subr.mxu0 0.0
        %4269 = vmatpush1.msra.mxu0 0.0
        %4270 = vmatprep.subr.mxu0 0.0
        %4271 = vmatpush1.msra.mxu0 0.0
        %4272 = vmatprep.subr.mxu0 0.0
        %4273 = vmatpush1.msra.mxu0 0.0
        %4274 = vmatprep.subr.mxu0 0.0
        %4275 = vmatpush1.msra.mxu0 0.0
        %4276 = vmatprep.subr.mxu0 0.0
        %4277 = vmatpush1.msra.mxu0 0.0
        %4278 = vmatprep.subr.mxu0 0.0
        %4279 = vmatpush1.msra.mxu0 0.0
        %4280 = vmatprep.subr.mxu0 0.0
        %4281 = vmatpush1.msra.mxu0 0.0
        %4282 = vmatprep.subr.mxu0 0.0
        %4283 = vmatpush1.msra.mxu0 0.0
        %4284 = vmatprep.subr.mxu0 0.0
        %4285 = vmatpush1.msra.mxu0 0.0
        %4286 = vmatprep.subr.mxu0 0.0
        %4287 = vmatpush1.msra.mxu0 0.0
        %4288 = vmatprep.subr.mxu0 0.0
        %4289 = vmatpush1.msra.mxu0 0.0
        %4290 = vmatprep.subr.mxu0 0.0
        %4291 = vmatpush1.msra.mxu0 0.0
        %4292 = vmatprep.subr.mxu0 0.0
        %4293 = vmatpush1.msra.mxu0 0.0
        %4294 = vmatprep.subr.mxu0 0.0
        %4295 = vmatpush1.msra.mxu0 0.0
        %4296 = vmatprep.subr.mxu0 0.0
        %4297 = vmatpush1.msra.mxu0 0.0
        %4298 = vmatprep.subr.mxu0 0.0
        %4299 = vmatpush1.msra.mxu0 0.0
        %4300 = vmatprep.subr.mxu0 0.0
        %4301 = vmatpush1.msra.mxu0 0.0
        %4302 = vmatprep.subr.mxu0 0.0
        %4303 = vmatpush1.msra.mxu0 0.0
        %4304 = vmatprep.subr.mxu0 0.0
        %4305 = vmatpush1.msra.mxu0 0.0
        %4306 = vmatprep.subr.mxu0 0.0
        %4307 = vmatpush1.msra.mxu0 0.0
        %4308 = vmatprep.subr.mxu0 0.0
        %4309 = vmatpush1.msra.mxu0 0.0
        %4310 = vmatprep.subr.mxu0 0.0
        %4311 = vmatpush1.msra.mxu0 0.0
        %4312 = vmatprep.subr.mxu0 0.0
        %4313 = vmatpush1.msra.mxu0 0.0
        %4314 = vmatprep.subr.mxu0 0.0
        %4315 = vmatpush1.msra.mxu0 0.0
        %4316 = vmatprep.subr.mxu0 0.0
        %4317 = vmatpush1.msra.mxu0 0.0
        %4318 = vmatprep.mubr.f32.mxu0 0.0
        %4319 = vmatmul.mubr.f32.gmra.mrb[0].mxu0 %v3976
        %v4320 = vpop.f32.mrb[0].mxu0
        %v4321 = vadd.f32 %v734, %v4320
        %v4322 = vpop.f32.mrb[0].mxu0
        %v4323 = vadd.f32 %v736, %v4322
        %4324 = vmatprep.mubr.f32.mxu0 0.0
        %4325 = vmatmul.mubr.f32.gmra.mrb[0].mxu0 %v3979
        %v4326 = vpop.f32.mrb[0].mxu0
        %v4327 = vadd.f32 %v740, %v4326
        %v4328 = vpop.f32.mrb[0].mxu0
        %v4329 = vadd.f32 %v742, %v4328
        %4330 = vmatprep.mubr.f32.mxu0 0.0
        %4331 = vmatmul.mubr.f32.gmra.mrb[0].mxu0 %v3982
        %v4332 = vpop.f32.mrb[0].mxu0
        %v4333 = vadd.f32 %v746, %v4332
        %v4334 = vpop.f32.mrb[0].mxu0
        %v4335 = vadd.f32 %v748, %v4334
        %4336 = vmatprep.mubr.f32.mxu0 0.0
        %4337 = vmatmul.mubr.f32.gmra.mrb[0].mxu0 %v3985
        %v4338 = vpop.f32.mrb[0].mxu0
        %v4339 = vadd.f32 %v752, %v4338
        %v4340 = vpop.f32.mrb[0].mxu0
        %v4341 = vadd.f32 %v754, %v4340
        %4342 = vdwg.mxu0
        %4343 = vmatprep.subr.mxu0 %v3915
        %4344 = vmatpush1.msra.mxu0 %v3914
        %4345 = vmatprep.subr.mxu0 %v3931
        %4346 = vmatpush1.msra.mxu0 %v3930
        %4347 = vmatprep.subr.mxu0 %v3947
        %4348 = vmatpush1.msra.mxu0 %v3946
        %4349 = vmatprep.subr.mxu0 %v3963
        %4350 = vmatpush1.msra.mxu0 %v3962
        %4351 = vmatprep.subr.mxu0 0.0
        %4352 = vmatpush1.msra.mxu0 0.0
        %4353 = vmatprep.subr.mxu0 0.0
        %4354 = vmatpush1.msra.mxu0 0.0
        %4355 = vmatprep.subr.mxu0 0.0
        %4356 = vmatpush1.msra.mxu0 0.0
        %4357 = vmatprep.subr.mxu0 0.0
        %4358 = vmatpush1.msra.mxu0 0.0
        %4359 = vmatprep.subr.mxu0 0.0
        %4360 = vmatpush1.msra.mxu0 0.0
        %4361 = vmatprep.subr.mxu0 0.0
        %4362 = vmatpush1.msra.mxu0 0.0
        %4363 = vmatprep.subr.mxu0 0.0
        %4364 = vmatpush1.msra.mxu0 0.0
        %4365 = vmatprep.subr.mxu0 0.0
        %4366 = vmatpush1.msra.mxu0 0.0
        %4367 = vmatprep.subr.mxu0 0.0
        %4368 = vmatpush1.msra.mxu0 0.0
        %4369 = vmatprep.subr.mxu0 0.0
        %4370 = vmatpush1.msra.mxu0 0.0
        %4371 = vmatprep.subr.mxu0 0.0
        %4372 = vmatpush1.msra.mxu0 0.0
        %4373 = vmatprep.subr.mxu0 0.0
        %4374 = vmatpush1.msra.mxu0 0.0
        %4375 = vmatprep.subr.mxu0 0.0
        %4376 = vmatpush1.msra.mxu0 0.0
        %4377 = vmatprep.subr.mxu0 0.0
        %4378 = vmatpush1.msra.mxu0 0.0
        %4379 = vmatprep.subr.mxu0 0.0
        %4380 = vmatpush1.msra.mxu0 0.0
        %4381 = vmatprep.subr.mxu0 0.0
        %4382 = vmatpush1.msra.mxu0 0.0
        %4383 = vmatprep.subr.mxu0 0.0
        %4384 = vmatpush1.msra.mxu0 0.0
        %4385 = vmatprep.subr.mxu0 0.0
        %4386 = vmatpush1.msra.mxu0 0.0
        %4387 = vmatprep.subr.mxu0 0.0
        %4388 = vmatpush1.msra.mxu0 0.0
        %4389 = vmatprep.subr.mxu0 0.0
        %4390 = vmatpush1.msra.mxu0 0.0
        %4391 = vmatprep.subr.mxu0 0.0
        %4392 = vmatpush1.msra.mxu0 0.0
        %4393 = vmatprep.subr.mxu0 0.0
        %4394 = vmatpush1.msra.mxu0 0.0
        %4395 = vmatprep.subr.mxu0 0.0
        %4396 = vmatpush1.msra.mxu0 0.0
        %4397 = vmatprep.subr.mxu0 0.0
        %4398 = vmatpush1.msra.mxu0 0.0
        %4399 = vmatprep.subr.mxu0 0.0
        %4400 = vmatpush1.msra.mxu0 0.0
        %4401 = vmatprep.subr.mxu0 0.0
        %4402 = vmatpush1.msra.mxu0 0.0
        %4403 = vmatprep.subr.mxu0 0.0
        %4404 = vmatpush1.msra.mxu0 0.0
        %4405 = vmatprep.subr.mxu0 0.0
        %4406 = vmatpush1.msra.mxu0 0.0
        %4407 = vmatprep.mubr.f32.mxu0 0.0
        %4408 = vmatmul.mubr.f32.gmra.mrb[0].mxu0 %v3976
        %v4409 = vpop.f32.mrb[0].mxu0
        %v4410 = vadd.f32 %v847, %v4409
        %v4411 = vpop.f32.mrb[0].mxu0
        %v4412 = vadd.f32 %v849, %v4411
        %4413 = vmatprep.mubr.f32.mxu0 0.0
        %4414 = vmatmul.mubr.f32.gmra.mrb[0].mxu0 %v3979
        %v4415 = vpop.f32.mrb[0].mxu0
        %v4416 = vadd.f32 %v853, %v4415
        %v4417 = vpop.f32.mrb[0].mxu0
        %v4418 = vadd.f32 %v855, %v4417
        %4419 = vmatprep.mubr.f32.mxu0 0.0
        %4420 = vmatmul.mubr.f32.gmra.mrb[0].mxu0 %v3982
        %v4421 = vpop.f32.mrb[0].mxu0
        %v4422 = vadd.f32 %v859, %v4421
        %v4423 = vpop.f32.mrb[0].mxu0
        %v4424 = vadd.f32 %v861, %v4423
        %4425 = vmatprep.mubr.f32.mxu0 0.0
        %4426 = vmatmul.mubr.f32.gmra.mrb[0].mxu0 %v3985
        %v4427 = vpop.f32.mrb[0].mxu0
        %v4428 = vadd.f32 %v865, %v4427
        %v4429 = vpop.f32.mrb[0].mxu0
        %v4430 = vadd.f32 %v867, %v4429
        %4431 = vdwg.mxu0
        %4432 = vmatprep.subr.mxu0 %v3917
        %4433 = vmatpush1.msra.mxu0 %v3916
        %4434 = vmatprep.subr.mxu0 %v3933
        %4435 = vmatpush1.msra.mxu0 %v3932
        %4436 = vmatprep.subr.mxu0 %v3949
        %4437 = vmatpush1.msra.mxu0 %v3948
        %4438 = vmatprep.subr.mxu0 %v3965
        %4439 = vmatpush1.msra.mxu0 %v3964
        %4440 = vmatprep.subr.mxu0 0.0
        %4441 = vmatpush1.msra.mxu0 0.0
        %4442 = vmatprep.subr.mxu0 0.0
        %4443 = vmatpush1.msra.mxu0 0.0
        %4444 = vmatprep.subr.mxu0 0.0
        %4445 = vmatpush1.msra.mxu0 0.0
        %4446 = vmatprep.subr.mxu0 0.0
        %4447 = vmatpush1.msra.mxu0 0.0
        %4448 = vmatprep.subr.mxu0 0.0
        %4449 = vmatpush1.msra.mxu0 0.0
        %4450 = vmatprep.subr.mxu0 0.0
        %4451 = vmatpush1.msra.mxu0 0.0
        %4452 = vmatprep.subr.mxu0 0.0
        %4453 = vmatpush1.msra.mxu0 0.0
        %4454 = vmatprep.subr.mxu0 0.0
        %4455 = vmatpush1.msra.mxu0 0.0
        %4456 = vmatprep.subr.mxu0 0.0
        %4457 = vmatpush1.msra.mxu0 0.0
        %4458 = vmatprep.subr.mxu0 0.0
        %4459 = vmatpush1.msra.mxu0 0.0
        %4460 = vmatprep.subr.mxu0 0.0
        %4461 = vmatpush1.msra.mxu0 0.0
        %4462 = vmatprep.subr.mxu0 0.0
        %4463 = vmatpush1.msra.mxu0 0.0
        %4464 = vmatprep.subr.mxu0 0.0
        %4465 = vmatpush1.msra.mxu0 0.0
        %4466 = vmatprep.subr.mxu0 0.0
        %4467 = vmatpush1.msra.mxu0 0.0
        %4468 = vmatprep.subr.mxu0 0.0
        %4469 = vmatpush1.msra.mxu0 0.0
        %4470 = vmatprep.subr.mxu0 0.0
        %4471 = vmatpush1.msra.mxu0 0.0
        %4472 = vmatprep.subr.mxu0 0.0
        %4473 = vmatpush1.msra.mxu0 0.0
        %4474 = vmatprep.subr.mxu0 0.0
        %4475 = vmatpush1.msra.mxu0 0.0
        %4476 = vmatprep.subr.mxu0 0.0
        %4477 = vmatpush1.msra.mxu0 0.0
        %4478 = vmatprep.subr.mxu0 0.0
        %4479 = vmatpush1.msra.mxu0 0.0
        %4480 = vmatprep.subr.mxu0 0.0
        %4481 = vmatpush1.msra.mxu0 0.0
        %4482 = vmatprep.subr.mxu0 0.0
        %4483 = vmatpush1.msra.mxu0 0.0
        %4484 = vmatprep.subr.mxu0 0.0
        %4485 = vmatpush1.msra.mxu0 0.0
        %4486 = vmatprep.subr.mxu0 0.0
        %4487 = vmatpush1.msra.mxu0 0.0
        %4488 = vmatprep.subr.mxu0 0.0
        %4489 = vmatpush1.msra.mxu0 0.0
        %4490 = vmatprep.subr.mxu0 0.0
        %4491 = vmatpush1.msra.mxu0 0.0
        %4492 = vmatprep.subr.mxu0 0.0
        %4493 = vmatpush1.msra.mxu0 0.0
        %4494 = vmatprep.subr.mxu0 0.0
        %4495 = vmatpush1.msra.mxu0 0.0
        %4496 = vmatprep.mubr.f32.mxu0 0.0
        %4497 = vmatmul.mubr.f32.gmra.mrb[0].mxu0 %v3976
        %v4498 = vpop.f32.mrb[0].mxu0
        %v4499 = vadd.f32 %v960, %v4498
        %v4500 = vpop.f32.mrb[0].mxu0
        %v4501 = vadd.f32 %v962, %v4500
        %4502 = vmatprep.mubr.f32.mxu0 0.0
        %4503 = vmatmul.mubr.f32.gmra.mrb[0].mxu0 %v3979
        %v4504 = vpop.f32.mrb[0].mxu0
        %v4505 = vadd.f32 %v966, %v4504
        %v4506 = vpop.f32.mrb[0].mxu0
        %v4507 = vadd.f32 %v968, %v4506
        %4508 = vmatprep.mubr.f32.mxu0 0.0
        %4509 = vmatmul.mubr.f32.gmra.mrb[0].mxu0 %v3982
        %v4510 = vpop.f32.mrb[0].mxu0
        %v4511 = vadd.f32 %v972, %v4510
        %v4512 = vpop.f32.mrb[0].mxu0
        %v4513 = vadd.f32 %v974, %v4512
        %4514 = vmatprep.mubr.f32.mxu0 0.0
        %4515 = vmatmul.mubr.f32.gmra.mrb[0].mxu0 %v3985
        %v4516 = vpop.f32.mrb[0].mxu0
        %v4517 = vadd.f32 %v978, %v4516
        %v4518 = vpop.f32.mrb[0].mxu0
        %v4519 = vadd.f32 %v980, %v4518
        %4520 = vdwg.mxu0
        %4521 = vmatprep.subr.mxu0 %v3919
        %4522 = vmatpush1.msra.mxu0 %v3918
        %4523 = vmatprep.subr.mxu0 %v3935
        %4524 = vmatpush1.msra.mxu0 %v3934
        %4525 = vmatprep.subr.mxu0 %v3951
        %4526 = vmatpush1.msra.mxu0 %v3950
        %4527 = vmatprep.subr.mxu0 %v3967
        %4528 = vmatpush1.msra.mxu0 %v3966
        %4529 = vmatprep.subr.mxu0 0.0
        %4530 = vmatpush1.msra.mxu0 0.0
        %4531 = vmatprep.subr.mxu0 0.0
        %4532 = vmatpush1.msra.mxu0 0.0
        %4533 = vmatprep.subr.mxu0 0.0
        %4534 = vmatpush1.msra.mxu0 0.0
        %4535 = vmatprep.subr.mxu0 0.0
        %4536 = vmatpush1.msra.mxu0 0.0
        %4537 = vmatprep.subr.mxu0 0.0
        %4538 = vmatpush1.msra.mxu0 0.0
        %4539 = vmatprep.subr.mxu0 0.0
        %4540 = vmatpush1.msra.mxu0 0.0
        %4541 = vmatprep.subr.mxu0 0.0
        %4542 = vmatpush1.msra.mxu0 0.0
        %4543 = vmatprep.subr.mxu0 0.0
        %4544 = vmatpush1.msra.mxu0 0.0
        %4545 = vmatprep.subr.mxu0 0.0
        %4546 = vmatpush1.msra.mxu0 0.0
        %4547 = vmatprep.subr.mxu0 0.0
        %4548 = vmatpush1.msra.mxu0 0.0
        %4549 = vmatprep.subr.mxu0 0.0
        %4550 = vmatpush1.msra.mxu0 0.0
        %4551 = vmatprep.subr.mxu0 0.0
        %4552 = vmatpush1.msra.mxu0 0.0
        %4553 = vmatprep.subr.mxu0 0.0
        %4554 = vmatpush1.msra.mxu0 0.0
        %4555 = vmatprep.subr.mxu0 0.0
        %4556 = vmatpush1.msra.mxu0 0.0
        %4557 = vmatprep.subr.mxu0 0.0
        %4558 = vmatpush1.msra.mxu0 0.0
        %4559 = vmatprep.subr.mxu0 0.0
        %4560 = vmatpush1.msra.mxu0 0.0
        %4561 = vmatprep.subr.mxu0 0.0
        %4562 = vmatpush1.msra.mxu0 0.0
        %4563 = vmatprep.subr.mxu0 0.0
        %4564 = vmatpush1.msra.mxu0 0.0
        %4565 = vmatprep.subr.mxu0 0.0
        %4566 = vmatpush1.msra.mxu0 0.0
        %4567 = vmatprep.subr.mxu0 0.0
        %4568 = vmatpush1.msra.mxu0 0.0
        %4569 = vmatprep.subr.mxu0 0.0
        %4570 = vmatpush1.msra.mxu0 0.0
        %4571 = vmatprep.subr.mxu0 0.0
        %4572 = vmatpush1.msra.mxu0 0.0
        %4573 = vmatprep.subr.mxu0 0.0
        %4574 = vmatpush1.msra.mxu0 0.0
        %4575 = vmatprep.subr.mxu0 0.0
        %4576 = vmatpush1.msra.mxu0 0.0
        %4577 = vmatprep.subr.mxu0 0.0
        %4578 = vmatpush1.msra.mxu0 0.0
        %4579 = vmatprep.subr.mxu0 0.0
        %4580 = vmatpush1.msra.mxu0 0.0
        %4581 = vmatprep.subr.mxu0 0.0
        %4582 = vmatpush1.msra.mxu0 0.0
        %4583 = vmatprep.subr.mxu0 0.0
        %4584 = vmatpush1.msra.mxu0 0.0
        %4585 = vmatprep.mubr.f32.mxu0 0.0
        %4586 = vmatmul.mubr.f32.gmra.mrb[0].mxu0 %v3976
        %v4587 = vpop.f32.mrb[0].mxu0
        %v4588 = vadd.f32 %v1073, %v4587
        %v4589 = vpop.f32.mrb[0].mxu0
        %v4590 = vadd.f32 %v1075, %v4589
        %4591 = vmatprep.mubr.f32.mxu0 0.0
        %4592 = vmatmul.mubr.f32.gmra.mrb[0].mxu0 %v3979
        %v4593 = vpop.f32.mrb[0].mxu0
        %v4594 = vadd.f32 %v1079, %v4593
        %v4595 = vpop.f32.mrb[0].mxu0
        %v4596 = vadd.f32 %v1081, %v4595
        %4597 = vmatprep.mubr.f32.mxu0 0.0
        %4598 = vmatmul.mubr.f32.gmra.mrb[0].mxu0 %v3982
        %v4599 = vpop.f32.mrb[0].mxu0
        %v4600 = vadd.f32 %v1085, %v4599
        %v4601 = vpop.f32.mrb[0].mxu0
        %v4602 = vadd.f32 %v1087, %v4601
        %4603 = vmatprep.mubr.f32.mxu0 0.0
        %4604 = vmatmul.mubr.f32.gmra.mrb[0].mxu0 %v3985
        %v4605 = vpop.f32.mrb[0].mxu0
        %v4606 = vadd.f32 %v1091, %v4605
        %v4607 = vpop.f32.mrb[0].mxu0
        %v4608 = vadd.f32 %v1093, %v4607
        %4609 = vdwg.mxu0
        %4610 = vmatprep.subr.mxu0 %v3921
        %4611 = vmatpush1.msra.mxu0 %v3920
        %4612 = vmatprep.subr.mxu0 %v3937
        %4613 = vmatpush1.msra.mxu0 %v3936
        %4614 = vmatprep.subr.mxu0 %v3953
        %4615 = vmatpush1.msra.mxu0 %v3952
        %4616 = vmatprep.subr.mxu0 %v3969
        %4617 = vmatpush1.msra.mxu0 %v3968
        %4618 = vmatprep.subr.mxu0 0.0
        %4619 = vmatpush1.msra.mxu0 0.0
        %4620 = vmatprep.subr.mxu0 0.0
        %4621 = vmatpush1.msra.mxu0 0.0
        %4622 = vmatprep.subr.mxu0 0.0
        %4623 = vmatpush1.msra.mxu0 0.0
        %4624 = vmatprep.subr.mxu0 0.0
        %4625 = vmatpush1.msra.mxu0 0.0
        %4626 = vmatprep.subr.mxu0 0.0
        %4627 = vmatpush1.msra.mxu0 0.0
        %4628 = vmatprep.subr.mxu0 0.0
        %4629 = vmatpush1.msra.mxu0 0.0
        %4630 = vmatprep.subr.mxu0 0.0
        %4631 = vmatpush1.msra.mxu0 0.0
        %4632 = vmatprep.subr.mxu0 0.0
        %4633 = vmatpush1.msra.mxu0 0.0
        %4634 = vmatprep.subr.mxu0 0.0
        %4635 = vmatpush1.msra.mxu0 0.0
        %4636 = vmatprep.subr.mxu0 0.0
        %4637 = vmatpush1.msra.mxu0 0.0
        %4638 = vmatprep.subr.mxu0 0.0
        %4639 = vmatpush1.msra.mxu0 0.0
        %4640 = vmatprep.subr.mxu0 0.0
        %4641 = vmatpush1.msra.mxu0 0.0
        %4642 = vmatprep.subr.mxu0 0.0
        %4643 = vmatpush1.msra.mxu0 0.0
        %4644 = vmatprep.subr.mxu0 0.0
        %4645 = vmatpush1.msra.mxu0 0.0
        %4646 = vmatprep.subr.mxu0 0.0
        %4647 = vmatpush1.msra.mxu0 0.0
        %4648 = vmatprep.subr.mxu0 0.0
        %4649 = vmatpush1.msra.mxu0 0.0
        %4650 = vmatprep.subr.mxu0 0.0
        %4651 = vmatpush1.msra.mxu0 0.0
        %4652 = vmatprep.subr.mxu0 0.0
        %4653 = vmatpush1.msra.mxu0 0.0
        %4654 = vmatprep.subr.mxu0 0.0
        %4655 = vmatpush1.msra.mxu0 0.0
        %4656 = vmatprep.subr.mxu0 0.0
        %4657 = vmatpush1.msra.mxu0 0.0
        %4658 = vmatprep.subr.mxu0 0.0
        %4659 = vmatpush1.msra.mxu0 0.0
        %4660 = vmatprep.subr.mxu0 0.0
        %4661 = vmatpush1.msra.mxu0 0.0
        %4662 = vmatprep.subr.mxu0 0.0
        %4663 = vmatpush1.msra.mxu0 0.0
        %4664 = vmatprep.subr.mxu0 0.0
        %4665 = vmatpush1.msra.mxu0 0.0
        %4666 = vmatprep.subr.mxu0 0.0
        %4667 = vmatpush1.msra.mxu0 0.0
        %4668 = vmatprep.subr.mxu0 0.0
        %4669 = vmatpush1.msra.mxu0 0.0
        %4670 = vmatprep.subr.mxu0 0.0
        %4671 = vmatpush1.msra.mxu0 0.0
        %4672 = vmatprep.subr.mxu0 0.0
        %4673 = vmatpush1.msra.mxu0 0.0
        %4674 = vmatprep.mubr.f32.mxu0 0.0
        %4675 = vmatmul.mubr.f32.gmra.mrb[0].mxu0 %v3976
        %v4676 = vpop.f32.mrb[0].mxu0
        %v4677 = vadd.f32 %v1186, %v4676
        %v4678 = vpop.f32.mrb[0].mxu0
        %v4679 = vadd.f32 %v1188, %v4678
        %4680 = vmatprep.mubr.f32.mxu0 0.0
        %4681 = vmatmul.mubr.f32.gmra.mrb[0].mxu0 %v3979
        %v4682 = vpop.f32.mrb[0].mxu0
        %v4683 = vadd.f32 %v1192, %v4682
        %v4684 = vpop.f32.mrb[0].mxu0
        %v4685 = vadd.f32 %v1194, %v4684
        %4686 = vmatprep.mubr.f32.mxu0 0.0
        %4687 = vmatmul.mubr.f32.gmra.mrb[0].mxu0 %v3982
        %v4688 = vpop.f32.mrb[0].mxu0
        %v4689 = vadd.f32 %v1198, %v4688
        %v4690 = vpop.f32.mrb[0].mxu0
        %v4691 = vadd.f32 %v1200, %v4690
        %4692 = vmatprep.mubr.f32.mxu0 0.0
        %4693 = vmatmul.mubr.f32.gmra.mrb[0].mxu0 %v3985
        %v4694 = vpop.f32.mrb[0].mxu0
        %v4695 = vadd.f32 %v1204, %v4694
        %v4696 = vpop.f32.mrb[0].mxu0
        %v4697 = vadd.f32 %v1206, %v4696
        %4698 = vdwg.mxu0
        %s4699 = scalar_lea.vmem %s3, 64
        %v4700 = vld [vmem:[%s4699] sm:$0xff]
        %v4701 = vld [vmem:[%s4699 + $0x8] sm:$0xff]
        %v4702 = vld [vmem:[%s4699 + $0x10] sm:$0xff]
        %v4703 = vld [vmem:[%s4699 + $0x18] sm:$0xff]
        %4705 = vset.pattern.permute.xlu0 0
        %4706 = vperm.xlu0 %4705, %v4700
        %v4707 = vpop.permute.xlu0 %4706
        %4710 = vset.pattern.permute.xlu0 0
        %4711 = vperm.xlu0 %4710, %v4701
        %v4712 = vpop.permute.xlu0 %4711
        %4715 = vset.pattern.permute.xlu0 0
        %4716 = vperm.xlu0 %4715, %v4702
        %v4717 = vpop.permute.xlu0 %4716
        %4720 = vset.pattern.permute.xlu0 0
        %4721 = vperm.xlu0 %4720, %v4703
        %v4722 = vpop.permute.xlu0 %4721
        %v4724 = vadd.f32 %v4054, %v4707
        %v4725 = vadd.f32 %v4056, %v4707
        %v4726 = vadd.f32 %v4143, %v4707
        %v4727 = vadd.f32 %v4145, %v4707
        %v4728 = vadd.f32 %v4232, %v4707
        %v4729 = vadd.f32 %v4234, %v4707
        %v4730 = vadd.f32 %v4321, %v4707
        %v4731 = vadd.f32 %v4323, %v4707
        %v4732 = vadd.f32 %v4410, %v4707
        %v4733 = vadd.f32 %v4412, %v4707
        %v4734 = vadd.f32 %v4499, %v4707
        %v4735 = vadd.f32 %v4501, %v4707
        %v4736 = vadd.f32 %v4588, %v4707
        %v4737 = vadd.f32 %v4590, %v4707
        %v4738 = vadd.f32 %v4677, %v4707
        %v4739 = vadd.f32 %v4679, %v4707
        %v4740 = vadd.f32 %v4060, %v4712
        %v4741 = vadd.f32 %v4062, %v4712
        %v4742 = vadd.f32 %v4149, %v4712
        %v4743 = vadd.f32 %v4151, %v4712
        %v4744 = vadd.f32 %v4238, %v4712
        %v4745 = vadd.f32 %v4240, %v4712
        %v4746 = vadd.f32 %v4327, %v4712
        %v4747 = vadd.f32 %v4329, %v4712
        %v4748 = vadd.f32 %v4416, %v4712
        %v4749 = vadd.f32 %v4418, %v4712
        %v4750 = vadd.f32 %v4505, %v4712
        %v4751 = vadd.f32 %v4507, %v4712
        %v4752 = vadd.f32 %v4594, %v4712
        %v4753 = vadd.f32 %v4596, %v4712
        %v4754 = vadd.f32 %v4683, %v4712
        %v4755 = vadd.f32 %v4685, %v4712
        %v4756 = vadd.f32 %v4066, %v4717
        %v4757 = vadd.f32 %v4068, %v4717
        %v4758 = vadd.f32 %v4155, %v4717
        %v4759 = vadd.f32 %v4157, %v4717
        %v4760 = vadd.f32 %v4244, %v4717
        %v4761 = vadd.f32 %v4246, %v4717
        %v4762 = vadd.f32 %v4333, %v4717
        %v4763 = vadd.f32 %v4335, %v4717
        %v4764 = vadd.f32 %v4422, %v4717
        %v4765 = vadd.f32 %v4424, %v4717
        %v4766 = vadd.f32 %v4511, %v4717
        %v4767 = vadd.f32 %v4513, %v4717
        %v4768 = vadd.f32 %v4600, %v4717
        %v4769 = vadd.f32 %v4602, %v4717
        %v4770 = vadd.f32 %v4689, %v4717
        %v4771 = vadd.f32 %v4691, %v4717
        %v4772 = vadd.f32 %v4072, %v4722
        %v4773 = vadd.f32 %v4074, %v4722
        %v4774 = vadd.f32 %v4161, %v4722
        %v4775 = vadd.f32 %v4163, %v4722
        %v4776 = vadd.f32 %v4250, %v4722
        %v4777 = vadd.f32 %v4252, %v4722
        %v4778 = vadd.f32 %v4339, %v4722
        %v4779 = vadd.f32 %v4341, %v4722
        %v4780 = vadd.f32 %v4428, %v4722
        %v4781 = vadd.f32 %v4430, %v4722
        %v4782 = vadd.f32 %v4517, %v4722
        %v4783 = vadd.f32 %v4519, %v4722
        %v4784 = vadd.f32 %v4606, %v4722
        %v4785 = vadd.f32 %v4608, %v4722
        %v4786 = vadd.f32 %v4695, %v4722
        %v4787 = vadd.f32 %v4697, %v4722
        %v4788 = vmul.f32 %v4724, 100.0
        %v4789 = vmul.f32 %v4725, 100.0
        %v4790 = vmul.f32 %v4726, 100.0
        %v4791 = vmul.f32 %v4727, 100.0
        %v4792 = vmul.f32 %v4728, 100.0
        %v4793 = vmul.f32 %v4729, 100.0
        %v4794 = vmul.f32 %v4730, 100.0
        %v4795 = vmul.f32 %v4731, 100.0
        %v4796 = vmul.f32 %v4732, 100.0
        %v4797 = vmul.f32 %v4733, 100.0
        %v4798 = vmul.f32 %v4734, 100.0
        %v4799 = vmul.f32 %v4735, 100.0
        %v4800 = vmul.f32 %v4736, 100.0
        %v4801 = vmul.f32 %v4737, 100.0
        %v4802 = vmul.f32 %v4738, 100.0
        %v4803 = vmul.f32 %v4739, 100.0
        %v4804 = vmul.f32 %v4740, 100.0
        %v4805 = vmul.f32 %v4741, 100.0
        %v4806 = vmul.f32 %v4742, 100.0
        %v4807 = vmul.f32 %v4743, 100.0
        %v4808 = vmul.f32 %v4744, 100.0
        %v4809 = vmul.f32 %v4745, 100.0
        %v4810 = vmul.f32 %v4746, 100.0
        %v4811 = vmul.f32 %v4747, 100.0
        %v4812 = vmul.f32 %v4748, 100.0
        %v4813 = vmul.f32 %v4749, 100.0
        %v4814 = vmul.f32 %v4750, 100.0
        %v4815 = vmul.f32 %v4751, 100.0
        %v4816 = vmul.f32 %v4752, 100.0
        %v4817 = vmul.f32 %v4753, 100.0
        %v4818 = vmul.f32 %v4754, 100.0
        %v4819 = vmul.f32 %v4755, 100.0
        %v4820 = vmul.f32 %v4756, 100.0
        %v4821 = vmul.f32 %v4757, 100.0
        %v4822 = vmul.f32 %v4758, 100.0
        %v4823 = vmul.f32 %v4759, 100.0
        %v4824 = vmul.f32 %v4760, 100.0
        %v4825 = vmul.f32 %v4761, 100.0
        %v4826 = vmul.f32 %v4762, 100.0
        %v4827 = vmul.f32 %v4763, 100.0
        %v4828 = vmul.f32 %v4764, 100.0
        %v4829 = vmul.f32 %v4765, 100.0
        %v4830 = vmul.f32 %v4766, 100.0
        %v4831 = vmul.f32 %v4767, 100.0
        %v4832 = vmul.f32 %v4768, 100.0
        %v4833 = vmul.f32 %v4769, 100.0
        %v4834 = vmul.f32 %v4770, 100.0
        %v4835 = vmul.f32 %v4771, 100.0
        %v4836 = vmul.f32 %v4772, 100.0
        %v4837 = vmul.f32 %v4773, 100.0
        %v4838 = vmul.f32 %v4774, 100.0
        %v4839 = vmul.f32 %v4775, 100.0
        %v4840 = vmul.f32 %v4776, 100.0
        %v4841 = vmul.f32 %v4777, 100.0
        %v4842 = vmul.f32 %v4778, 100.0
        %v4843 = vmul.f32 %v4779, 100.0
        %v4844 = vmul.f32 %v4780, 100.0
        %v4845 = vmul.f32 %v4781, 100.0
        %v4846 = vmul.f32 %v4782, 100.0
        %v4847 = vmul.f32 %v4783, 100.0
        %v4848 = vmul.f32 %v4784, 100.0
        %v4849 = vmul.f32 %v4785, 100.0
        %v4850 = vmul.f32 %v4786, 100.0
        %v4851 = vmul.f32 %v4787, 100.0
        %vm4852 = vcmp.gt.f32.partialorder %v4788, 20.0
        %vm4853 = vcmp.gt.f32.partialorder %v4789, 20.0
        %vm4854 = vcmp.gt.f32.partialorder %v4790, 20.0
        %vm4855 = vcmp.gt.f32.partialorder %v4791, 20.0
        %vm4856 = vcmp.gt.f32.partialorder %v4792, 20.0
        %vm4857 = vcmp.gt.f32.partialorder %v4793, 20.0
        %vm4858 = vcmp.gt.f32.partialorder %v4794, 20.0
        %vm4859 = vcmp.gt.f32.partialorder %v4795, 20.0
        %vm4860 = vcmp.gt.f32.partialorder %v4796, 20.0
        %vm4861 = vcmp.gt.f32.partialorder %v4797, 20.0
        %vm4862 = vcmp.gt.f32.partialorder %v4798, 20.0
        %vm4863 = vcmp.gt.f32.partialorder %v4799, 20.0
        %vm4864 = vcmp.gt.f32.partialorder %v4800, 20.0
        %vm4865 = vcmp.gt.f32.partialorder %v4801, 20.0
        %vm4866 = vcmp.gt.f32.partialorder %v4802, 20.0
        %vm4867 = vcmp.gt.f32.partialorder %v4803, 20.0
        %vm4868 = vcmp.gt.f32.partialorder %v4804, 20.0
        %vm4869 = vcmp.gt.f32.partialorder %v4805, 20.0
        %vm4870 = vcmp.gt.f32.partialorder %v4806, 20.0
        %vm4871 = vcmp.gt.f32.partialorder %v4807, 20.0
        %vm4872 = vcmp.gt.f32.partialorder %v4808, 20.0
        %vm4873 = vcmp.gt.f32.partialorder %v4809, 20.0
        %vm4874 = vcmp.gt.f32.partialorder %v4810, 20.0
        %vm4875 = vcmp.gt.f32.partialorder %v4811, 20.0
        %vm4876 = vcmp.gt.f32.partialorder %v4812, 20.0
        %vm4877 = vcmp.gt.f32.partialorder %v4813, 20.0
        %vm4878 = vcmp.gt.f32.partialorder %v4814, 20.0
        %vm4879 = vcmp.gt.f32.partialorder %v4815, 20.0
        %vm4880 = vcmp.gt.f32.partialorder %v4816, 20.0
        %vm4881 = vcmp.gt.f32.partialorder %v4817, 20.0
        %vm4882 = vcmp.gt.f32.partialorder %v4818, 20.0
        %vm4883 = vcmp.gt.f32.partialorder %v4819, 20.0
        %vm4884 = vcmp.gt.f32.partialorder %v4820, 20.0
        %vm4885 = vcmp.gt.f32.partialorder %v4821, 20.0
        %vm4886 = vcmp.gt.f32.partialorder %v4822, 20.0
        %vm4887 = vcmp.gt.f32.partialorder %v4823, 20.0
        %vm4888 = vcmp.gt.f32.partialorder %v4824, 20.0
        %vm4889 = vcmp.gt.f32.partialorder %v4825, 20.0
        %vm4890 = vcmp.gt.f32.partialorder %v4826, 20.0
        %vm4891 = vcmp.gt.f32.partialorder %v4827, 20.0
        %vm4892 = vcmp.gt.f32.partialorder %v4828, 20.0
        %vm4893 = vcmp.gt.f32.partialorder %v4829, 20.0
        %vm4894 = vcmp.gt.f32.partialorder %v4830, 20.0
        %vm4895 = vcmp.gt.f32.partialorder %v4831, 20.0
        %vm4896 = vcmp.gt.f32.partialorder %v4832, 20.0
        %vm4897 = vcmp.gt.f32.partialorder %v4833, 20.0
        %vm4898 = vcmp.gt.f32.partialorder %v4834, 20.0
        %vm4899 = vcmp.gt.f32.partialorder %v4835, 20.0
        %vm4900 = vcmp.gt.f32.partialorder %v4836, 20.0
        %vm4901 = vcmp.gt.f32.partialorder %v4837, 20.0
        %vm4902 = vcmp.gt.f32.partialorder %v4838, 20.0
        %vm4903 = vcmp.gt.f32.partialorder %v4839, 20.0
        %vm4904 = vcmp.gt.f32.partialorder %v4840, 20.0
        %vm4905 = vcmp.gt.f32.partialorder %v4841, 20.0
        %vm4906 = vcmp.gt.f32.partialorder %v4842, 20.0
        %vm4907 = vcmp.gt.f32.partialorder %v4843, 20.0
        %vm4908 = vcmp.gt.f32.partialorder %v4844, 20.0
        %vm4909 = vcmp.gt.f32.partialorder %v4845, 20.0
        %vm4910 = vcmp.gt.f32.partialorder %v4846, 20.0
        %vm4911 = vcmp.gt.f32.partialorder %v4847, 20.0
        %vm4912 = vcmp.gt.f32.partialorder %v4848, 20.0
        %vm4913 = vcmp.gt.f32.partialorder %v4849, 20.0
        %vm4914 = vcmp.gt.f32.partialorder %v4850, 20.0
        %vm4915 = vcmp.gt.f32.partialorder %v4851, 20.0
        %v4916 = vmul.f32 %v4788, 1.442695
        %v4917 = vpow.pop %v4916
        %v4918 = vmul.f32 %v4789, 1.442695
        %v4919 = vpow.pop %v4918
        %v4920 = vmul.f32 %v4790, 1.442695
        %v4921 = vpow.pop %v4920
        %v4922 = vmul.f32 %v4791, 1.442695
        %v4923 = vpow.pop %v4922
        %v4924 = vmul.f32 %v4792, 1.442695
        %v4925 = vpow.pop %v4924
        %v4926 = vmul.f32 %v4793, 1.442695
        %v4927 = vpow.pop %v4926
        %v4928 = vmul.f32 %v4794, 1.442695
        %v4929 = vpow.pop %v4928
        %v4930 = vmul.f32 %v4795, 1.442695
        %v4931 = vpow.pop %v4930
        %v4932 = vmul.f32 %v4796, 1.442695
        %v4933 = vpow.pop %v4932
        %v4934 = vmul.f32 %v4797, 1.442695
        %v4935 = vpow.pop %v4934
        %v4936 = vmul.f32 %v4798, 1.442695
        %v4937 = vpow.pop %v4936
        %v4938 = vmul.f32 %v4799, 1.442695
        %v4939 = vpow.pop %v4938
        %v4940 = vmul.f32 %v4800, 1.442695
        %v4941 = vpow.pop %v4940
        %v4942 = vmul.f32 %v4801, 1.442695
        %v4943 = vpow.pop %v4942
        %v4944 = vmul.f32 %v4802, 1.442695
        %v4945 = vpow.pop %v4944
        %v4946 = vmul.f32 %v4803, 1.442695
        %v4947 = vpow.pop %v4946
        %v4948 = vmul.f32 %v4804, 1.442695
        %v4949 = vpow.pop %v4948
        %v4950 = vmul.f32 %v4805, 1.442695
        %v4951 = vpow.pop %v4950
        %v4952 = vmul.f32 %v4806, 1.442695
        %v4953 = vpow.pop %v4952
        %v4954 = vmul.f32 %v4807, 1.442695
        %v4955 = vpow.pop %v4954
        %v4956 = vmul.f32 %v4808, 1.442695
        %v4957 = vpow.pop %v4956
        %v4958 = vmul.f32 %v4809, 1.442695
        %v4959 = vpow.pop %v4958
        %v4960 = vmul.f32 %v4810, 1.442695
        %v4961 = vpow.pop %v4960
        %v4962 = vmul.f32 %v4811, 1.442695
        %v4963 = vpow.pop %v4962
        %v4964 = vmul.f32 %v4812, 1.442695
        %v4965 = vpow.pop %v4964
        %v4966 = vmul.f32 %v4813, 1.442695
        %v4967 = vpow.pop %v4966
        %v4968 = vmul.f32 %v4814, 1.442695
        %v4969 = vpow.pop %v4968
        %v4970 = vmul.f32 %v4815, 1.442695
        %v4971 = vpow.pop %v4970
        %v4972 = vmul.f32 %v4816, 1.442695
        %v4973 = vpow.pop %v4972
        %v4974 = vmul.f32 %v4817, 1.442695
        %v4975 = vpow.pop %v4974
        %v4976 = vmul.f32 %v4818, 1.442695
        %v4977 = vpow.pop %v4976
        %v4978 = vmul.f32 %v4819, 1.442695
        %v4979 = vpow.pop %v4978
        %v4980 = vmul.f32 %v4820, 1.442695
        %v4981 = vpow.pop %v4980
        %v4982 = vmul.f32 %v4821, 1.442695
        %v4983 = vpow.pop %v4982
        %v4984 = vmul.f32 %v4822, 1.442695
        %v4985 = vpow.pop %v4984
        %v4986 = vmul.f32 %v4823, 1.442695
        %v4987 = vpow.pop %v4986
        %v4988 = vmul.f32 %v4824, 1.442695
        %v4989 = vpow.pop %v4988
        %v4990 = vmul.f32 %v4825, 1.442695
        %v4991 = vpow.pop %v4990
        %v4992 = vmul.f32 %v4826, 1.442695
        %v4993 = vpow.pop %v4992
        %v4994 = vmul.f32 %v4827, 1.442695
        %v4995 = vpow.pop %v4994
        %v4996 = vmul.f32 %v4828, 1.442695
        %v4997 = vpow.pop %v4996
        %v4998 = vmul.f32 %v4829, 1.442695
        %v4999 = vpow.pop %v4998
        %v5000 = vmul.f32 %v4830, 1.442695
        %v5001 = vpow.pop %v5000
        %v5002 = vmul.f32 %v4831, 1.442695
        %v5003 = vpow.pop %v5002
        %v5004 = vmul.f32 %v4832, 1.442695
        %v5005 = vpow.pop %v5004
        %v5006 = vmul.f32 %v4833, 1.442695
        %v5007 = vpow.pop %v5006
        %v5008 = vmul.f32 %v4834, 1.442695
        %v5009 = vpow.pop %v5008
        %v5010 = vmul.f32 %v4835, 1.442695
        %v5011 = vpow.pop %v5010
        %v5012 = vmul.f32 %v4836, 1.442695
        %v5013 = vpow.pop %v5012
        %v5014 = vmul.f32 %v4837, 1.442695
        %v5015 = vpow.pop %v5014
        %v5016 = vmul.f32 %v4838, 1.442695
        %v5017 = vpow.pop %v5016
        %v5018 = vmul.f32 %v4839, 1.442695
        %v5019 = vpow.pop %v5018
        %v5020 = vmul.f32 %v4840, 1.442695
        %v5021 = vpow.pop %v5020
        %v5022 = vmul.f32 %v4841, 1.442695
        %v5023 = vpow.pop %v5022
        %v5024 = vmul.f32 %v4842, 1.442695
        %v5025 = vpow.pop %v5024
        %v5026 = vmul.f32 %v4843, 1.442695
        %v5027 = vpow.pop %v5026
        %v5028 = vmul.f32 %v4844, 1.442695
        %v5029 = vpow.pop %v5028
        %v5030 = vmul.f32 %v4845, 1.442695
        %v5031 = vpow.pop %v5030
        %v5032 = vmul.f32 %v4846, 1.442695
        %v5033 = vpow.pop %v5032
        %v5034 = vmul.f32 %v4847, 1.442695
        %v5035 = vpow.pop %v5034
        %v5036 = vmul.f32 %v4848, 1.442695
        %v5037 = vpow.pop %v5036
        %v5038 = vmul.f32 %v4849, 1.442695
        %v5039 = vpow.pop %v5038
        %v5040 = vmul.f32 %v4850, 1.442695
        %v5041 = vpow.pop %v5040
        %v5042 = vmul.f32 %v4851, 1.442695
        %v5043 = vpow.pop %v5042
        %v5044 = vadd.f32 %v4917, 1.0
        %v5045 = vlog2.pop %v5044
        %v5046 = vmul.f32 %v5045, 0.6931472
        %v5047 = vmul.f32 -0.5, %v4917
        %v5048 = vadd.f32 %v5047, 1.0
        %v5049 = vmul.f32 %v5048, %v4917
        %v5050 = vand.u32 2147483647, %v4917
        %vm5051 = vcmp.lt.f32.partialorder %v5050, 0.0004427343
        %v5052 = vsel %vm5051, %v5049, %v5046
        %v5053 = vadd.f32 %v4919, 1.0
        %v5054 = vlog2.pop %v5053
        %v5055 = vmul.f32 %v5054, 0.6931472
        %v5056 = vmul.f32 -0.5, %v4919
        %v5057 = vadd.f32 %v5056, 1.0
        %v5058 = vmul.f32 %v5057, %v4919
        %v5059 = vand.u32 2147483647, %v4919
        %vm5060 = vcmp.lt.f32.partialorder %v5059, 0.0004427343
        %v5061 = vsel %vm5060, %v5058, %v5055
        %v5062 = vadd.f32 %v4921, 1.0
        %v5063 = vlog2.pop %v5062
        %v5064 = vmul.f32 %v5063, 0.6931472
        %v5065 = vmul.f32 -0.5, %v4921
        %v5066 = vadd.f32 %v5065, 1.0
        %v5067 = vmul.f32 %v5066, %v4921
        %v5068 = vand.u32 2147483647, %v4921
        %vm5069 = vcmp.lt.f32.partialorder %v5068, 0.0004427343
        %v5070 = vsel %vm5069, %v5067, %v5064
        %v5071 = vadd.f32 %v4923, 1.0
        %v5072 = vlog2.pop %v5071
        %v5073 = vmul.f32 %v5072, 0.6931472
        %v5074 = vmul.f32 -0.5, %v4923
        %v5075 = vadd.f32 %v5074, 1.0
        %v5076 = vmul.f32 %v5075, %v4923
        %v5077 = vand.u32 2147483647, %v4923
        %vm5078 = vcmp.lt.f32.partialorder %v5077, 0.0004427343
        %v5079 = vsel %vm5078, %v5076, %v5073
        %v5080 = vadd.f32 %v4925, 1.0
        %v5081 = vlog2.pop %v5080
        %v5082 = vmul.f32 %v5081, 0.6931472
        %v5083 = vmul.f32 -0.5, %v4925
        %v5084 = vadd.f32 %v5083, 1.0
        %v5085 = vmul.f32 %v5084, %v4925
        %v5086 = vand.u32 2147483647, %v4925
        %vm5087 = vcmp.lt.f32.partialorder %v5086, 0.0004427343
        %v5088 = vsel %vm5087, %v5085, %v5082
        %v5089 = vadd.f32 %v4927, 1.0
        %v5090 = vlog2.pop %v5089
        %v5091 = vmul.f32 %v5090, 0.6931472
        %v5092 = vmul.f32 -0.5, %v4927
        %v5093 = vadd.f32 %v5092, 1.0
        %v5094 = vmul.f32 %v5093, %v4927
        %v5095 = vand.u32 2147483647, %v4927
        %vm5096 = vcmp.lt.f32.partialorder %v5095, 0.0004427343
        %v5097 = vsel %vm5096, %v5094, %v5091
        %v5098 = vadd.f32 %v4929, 1.0
        %v5099 = vlog2.pop %v5098
        %v5100 = vmul.f32 %v5099, 0.6931472
        %v5101 = vmul.f32 -0.5, %v4929
        %v5102 = vadd.f32 %v5101, 1.0
        %v5103 = vmul.f32 %v5102, %v4929
        %v5104 = vand.u32 2147483647, %v4929
        %vm5105 = vcmp.lt.f32.partialorder %v5104, 0.0004427343
        %v5106 = vsel %vm5105, %v5103, %v5100
        %v5107 = vadd.f32 %v4931, 1.0
        %v5108 = vlog2.pop %v5107
        %v5109 = vmul.f32 %v5108, 0.6931472
        %v5110 = vmul.f32 -0.5, %v4931
        %v5111 = vadd.f32 %v5110, 1.0
        %v5112 = vmul.f32 %v5111, %v4931
        %v5113 = vand.u32 2147483647, %v4931
        %vm5114 = vcmp.lt.f32.partialorder %v5113, 0.0004427343
        %v5115 = vsel %vm5114, %v5112, %v5109
        %v5116 = vadd.f32 %v4933, 1.0
        %v5117 = vlog2.pop %v5116
        %v5118 = vmul.f32 %v5117, 0.6931472
        %v5119 = vmul.f32 -0.5, %v4933
        %v5120 = vadd.f32 %v5119, 1.0
        %v5121 = vmul.f32 %v5120, %v4933
        %v5122 = vand.u32 2147483647, %v4933
        %vm5123 = vcmp.lt.f32.partialorder %v5122, 0.0004427343
        %v5124 = vsel %vm5123, %v5121, %v5118
        %v5125 = vadd.f32 %v4935, 1.0
        %v5126 = vlog2.pop %v5125
        %v5127 = vmul.f32 %v5126, 0.6931472
        %v5128 = vmul.f32 -0.5, %v4935
        %v5129 = vadd.f32 %v5128, 1.0
        %v5130 = vmul.f32 %v5129, %v4935
        %v5131 = vand.u32 2147483647, %v4935
        %vm5132 = vcmp.lt.f32.partialorder %v5131, 0.0004427343
        %v5133 = vsel %vm5132, %v5130, %v5127
        %v5134 = vadd.f32 %v4937, 1.0
        %v5135 = vlog2.pop %v5134
        %v5136 = vmul.f32 %v5135, 0.6931472
        %v5137 = vmul.f32 -0.5, %v4937
        %v5138 = vadd.f32 %v5137, 1.0
        %v5139 = vmul.f32 %v5138, %v4937
        %v5140 = vand.u32 2147483647, %v4937
        %vm5141 = vcmp.lt.f32.partialorder %v5140, 0.0004427343
        %v5142 = vsel %vm5141, %v5139, %v5136
        %v5143 = vadd.f32 %v4939, 1.0
        %v5144 = vlog2.pop %v5143
        %v5145 = vmul.f32 %v5144, 0.6931472
        %v5146 = vmul.f32 -0.5, %v4939
        %v5147 = vadd.f32 %v5146, 1.0
        %v5148 = vmul.f32 %v5147, %v4939
        %v5149 = vand.u32 2147483647, %v4939
        %vm5150 = vcmp.lt.f32.partialorder %v5149, 0.0004427343
        %v5151 = vsel %vm5150, %v5148, %v5145
        %v5152 = vadd.f32 %v4941, 1.0
        %v5153 = vlog2.pop %v5152
        %v5154 = vmul.f32 %v5153, 0.6931472
        %v5155 = vmul.f32 -0.5, %v4941
        %v5156 = vadd.f32 %v5155, 1.0
        %v5157 = vmul.f32 %v5156, %v4941
        %v5158 = vand.u32 2147483647, %v4941
        %vm5159 = vcmp.lt.f32.partialorder %v5158, 0.0004427343
        %v5160 = vsel %vm5159, %v5157, %v5154
        %v5161 = vadd.f32 %v4943, 1.0
        %v5162 = vlog2.pop %v5161
        %v5163 = vmul.f32 %v5162, 0.6931472
        %v5164 = vmul.f32 -0.5, %v4943
        %v5165 = vadd.f32 %v5164, 1.0
        %v5166 = vmul.f32 %v5165, %v4943
        %v5167 = vand.u32 2147483647, %v4943
        %vm5168 = vcmp.lt.f32.partialorder %v5167, 0.0004427343
        %v5169 = vsel %vm5168, %v5166, %v5163
        %v5170 = vadd.f32 %v4945, 1.0
        %v5171 = vlog2.pop %v5170
        %v5172 = vmul.f32 %v5171, 0.6931472
        %v5173 = vmul.f32 -0.5, %v4945
        %v5174 = vadd.f32 %v5173, 1.0
        %v5175 = vmul.f32 %v5174, %v4945
        %v5176 = vand.u32 2147483647, %v4945
        %vm5177 = vcmp.lt.f32.partialorder %v5176, 0.0004427343
        %v5178 = vsel %vm5177, %v5175, %v5172
        %v5179 = vadd.f32 %v4947, 1.0
        %v5180 = vlog2.pop %v5179
        %v5181 = vmul.f32 %v5180, 0.6931472
        %v5182 = vmul.f32 -0.5, %v4947
        %v5183 = vadd.f32 %v5182, 1.0
        %v5184 = vmul.f32 %v5183, %v4947
        %v5185 = vand.u32 2147483647, %v4947
        %vm5186 = vcmp.lt.f32.partialorder %v5185, 0.0004427343
        %v5187 = vsel %vm5186, %v5184, %v5181
        %v5188 = vadd.f32 %v4949, 1.0
        %v5189 = vlog2.pop %v5188
        %v5190 = vmul.f32 %v5189, 0.6931472
        %v5191 = vmul.f32 -0.5, %v4949
        %v5192 = vadd.f32 %v5191, 1.0
        %v5193 = vmul.f32 %v5192, %v4949
        %v5194 = vand.u32 2147483647, %v4949
        %vm5195 = vcmp.lt.f32.partialorder %v5194, 0.0004427343
        %v5196 = vsel %vm5195, %v5193, %v5190
        %v5197 = vadd.f32 %v4951, 1.0
        %v5198 = vlog2.pop %v5197
        %v5199 = vmul.f32 %v5198, 0.6931472
        %v5200 = vmul.f32 -0.5, %v4951
        %v5201 = vadd.f32 %v5200, 1.0
        %v5202 = vmul.f32 %v5201, %v4951
        %v5203 = vand.u32 2147483647, %v4951
        %vm5204 = vcmp.lt.f32.partialorder %v5203, 0.0004427343
        %v5205 = vsel %vm5204, %v5202, %v5199
        %v5206 = vadd.f32 %v4953, 1.0
        %v5207 = vlog2.pop %v5206
        %v5208 = vmul.f32 %v5207, 0.6931472
        %v5209 = vmul.f32 -0.5, %v4953
        %v5210 = vadd.f32 %v5209, 1.0
        %v5211 = vmul.f32 %v5210, %v4953
        %v5212 = vand.u32 2147483647, %v4953
        %vm5213 = vcmp.lt.f32.partialorder %v5212, 0.0004427343
        %v5214 = vsel %vm5213, %v5211, %v5208
        %v5215 = vadd.f32 %v4955, 1.0
        %v5216 = vlog2.pop %v5215
        %v5217 = vmul.f32 %v5216, 0.6931472
        %v5218 = vmul.f32 -0.5, %v4955
        %v5219 = vadd.f32 %v5218, 1.0
        %v5220 = vmul.f32 %v5219, %v4955
        %v5221 = vand.u32 2147483647, %v4955
        %vm5222 = vcmp.lt.f32.partialorder %v5221, 0.0004427343
        %v5223 = vsel %vm5222, %v5220, %v5217
        %v5224 = vadd.f32 %v4957, 1.0
        %v5225 = vlog2.pop %v5224
        %v5226 = vmul.f32 %v5225, 0.6931472
        %v5227 = vmul.f32 -0.5, %v4957
        %v5228 = vadd.f32 %v5227, 1.0
        %v5229 = vmul.f32 %v5228, %v4957
        %v5230 = vand.u32 2147483647, %v4957
        %vm5231 = vcmp.lt.f32.partialorder %v5230, 0.0004427343
        %v5232 = vsel %vm5231, %v5229, %v5226
        %v5233 = vadd.f32 %v4959, 1.0
        %v5234 = vlog2.pop %v5233
        %v5235 = vmul.f32 %v5234, 0.6931472
        %v5236 = vmul.f32 -0.5, %v4959
        %v5237 = vadd.f32 %v5236, 1.0
        %v5238 = vmul.f32 %v5237, %v4959
        %v5239 = vand.u32 2147483647, %v4959
        %vm5240 = vcmp.lt.f32.partialorder %v5239, 0.0004427343
        %v5241 = vsel %vm5240, %v5238, %v5235
        %v5242 = vadd.f32 %v4961, 1.0
        %v5243 = vlog2.pop %v5242
        %v5244 = vmul.f32 %v5243, 0.6931472
        %v5245 = vmul.f32 -0.5, %v4961
        %v5246 = vadd.f32 %v5245, 1.0
        %v5247 = vmul.f32 %v5246, %v4961
        %v5248 = vand.u32 2147483647, %v4961
        %vm5249 = vcmp.lt.f32.partialorder %v5248, 0.0004427343
        %v5250 = vsel %vm5249, %v5247, %v5244
        %v5251 = vadd.f32 %v4963, 1.0
        %v5252 = vlog2.pop %v5251
        %v5253 = vmul.f32 %v5252, 0.6931472
        %v5254 = vmul.f32 -0.5, %v4963
        %v5255 = vadd.f32 %v5254, 1.0
        %v5256 = vmul.f32 %v5255, %v4963
        %v5257 = vand.u32 2147483647, %v4963
        %vm5258 = vcmp.lt.f32.partialorder %v5257, 0.0004427343
        %v5259 = vsel %vm5258, %v5256, %v5253
        %v5260 = vadd.f32 %v4965, 1.0
        %v5261 = vlog2.pop %v5260
        %v5262 = vmul.f32 %v5261, 0.6931472
        %v5263 = vmul.f32 -0.5, %v4965
        %v5264 = vadd.f32 %v5263, 1.0
        %v5265 = vmul.f32 %v5264, %v4965
        %v5266 = vand.u32 2147483647, %v4965
        %vm5267 = vcmp.lt.f32.partialorder %v5266, 0.0004427343
        %v5268 = vsel %vm5267, %v5265, %v5262
        %v5269 = vadd.f32 %v4967, 1.0
        %v5270 = vlog2.pop %v5269
        %v5271 = vmul.f32 %v5270, 0.6931472
        %v5272 = vmul.f32 -0.5, %v4967
        %v5273 = vadd.f32 %v5272, 1.0
        %v5274 = vmul.f32 %v5273, %v4967
        %v5275 = vand.u32 2147483647, %v4967
        %vm5276 = vcmp.lt.f32.partialorder %v5275, 0.0004427343
        %v5277 = vsel %vm5276, %v5274, %v5271
        %v5278 = vadd.f32 %v4969, 1.0
        %v5279 = vlog2.pop %v5278
        %v5280 = vmul.f32 %v5279, 0.6931472
        %v5281 = vmul.f32 -0.5, %v4969
        %v5282 = vadd.f32 %v5281, 1.0
        %v5283 = vmul.f32 %v5282, %v4969
        %v5284 = vand.u32 2147483647, %v4969
        %vm5285 = vcmp.lt.f32.partialorder %v5284, 0.0004427343
        %v5286 = vsel %vm5285, %v5283, %v5280
        %v5287 = vadd.f32 %v4971, 1.0
        %v5288 = vlog2.pop %v5287
        %v5289 = vmul.f32 %v5288, 0.6931472
        %v5290 = vmul.f32 -0.5, %v4971
        %v5291 = vadd.f32 %v5290, 1.0
        %v5292 = vmul.f32 %v5291, %v4971
        %v5293 = vand.u32 2147483647, %v4971
        %vm5294 = vcmp.lt.f32.partialorder %v5293, 0.0004427343
        %v5295 = vsel %vm5294, %v5292, %v5289
        %v5296 = vadd.f32 %v4973, 1.0
        %v5297 = vlog2.pop %v5296
        %v5298 = vmul.f32 %v5297, 0.6931472
        %v5299 = vmul.f32 -0.5, %v4973
        %v5300 = vadd.f32 %v5299, 1.0
        %v5301 = vmul.f32 %v5300, %v4973
        %v5302 = vand.u32 2147483647, %v4973
        %vm5303 = vcmp.lt.f32.partialorder %v5302, 0.0004427343
        %v5304 = vsel %vm5303, %v5301, %v5298
        %v5305 = vadd.f32 %v4975, 1.0
        %v5306 = vlog2.pop %v5305
        %v5307 = vmul.f32 %v5306, 0.6931472
        %v5308 = vmul.f32 -0.5, %v4975
        %v5309 = vadd.f32 %v5308, 1.0
        %v5310 = vmul.f32 %v5309, %v4975
        %v5311 = vand.u32 2147483647, %v4975
        %vm5312 = vcmp.lt.f32.partialorder %v5311, 0.0004427343
        %v5313 = vsel %vm5312, %v5310, %v5307
        %v5314 = vadd.f32 %v4977, 1.0
        %v5315 = vlog2.pop %v5314
        %v5316 = vmul.f32 %v5315, 0.6931472
        %v5317 = vmul.f32 -0.5, %v4977
        %v5318 = vadd.f32 %v5317, 1.0
        %v5319 = vmul.f32 %v5318, %v4977
        %v5320 = vand.u32 2147483647, %v4977
        %vm5321 = vcmp.lt.f32.partialorder %v5320, 0.0004427343
        %v5322 = vsel %vm5321, %v5319, %v5316
        %v5323 = vadd.f32 %v4979, 1.0
        %v5324 = vlog2.pop %v5323
        %v5325 = vmul.f32 %v5324, 0.6931472
        %v5326 = vmul.f32 -0.5, %v4979
        %v5327 = vadd.f32 %v5326, 1.0
        %v5328 = vmul.f32 %v5327, %v4979
        %v5329 = vand.u32 2147483647, %v4979
        %vm5330 = vcmp.lt.f32.partialorder %v5329, 0.0004427343
        %v5331 = vsel %vm5330, %v5328, %v5325
        %v5332 = vadd.f32 %v4981, 1.0
        %v5333 = vlog2.pop %v5332
        %v5334 = vmul.f32 %v5333, 0.6931472
        %v5335 = vmul.f32 -0.5, %v4981
        %v5336 = vadd.f32 %v5335, 1.0
        %v5337 = vmul.f32 %v5336, %v4981
        %v5338 = vand.u32 2147483647, %v4981
        %vm5339 = vcmp.lt.f32.partialorder %v5338, 0.0004427343
        %v5340 = vsel %vm5339, %v5337, %v5334
        %v5341 = vadd.f32 %v4983, 1.0
        %v5342 = vlog2.pop %v5341
        %v5343 = vmul.f32 %v5342, 0.6931472
        %v5344 = vmul.f32 -0.5, %v4983
        %v5345 = vadd.f32 %v5344, 1.0
        %v5346 = vmul.f32 %v5345, %v4983
        %v5347 = vand.u32 2147483647, %v4983
        %vm5348 = vcmp.lt.f32.partialorder %v5347, 0.0004427343
        %v5349 = vsel %vm5348, %v5346, %v5343
        %v5350 = vadd.f32 %v4985, 1.0
        %v5351 = vlog2.pop %v5350
        %v5352 = vmul.f32 %v5351, 0.6931472
        %v5353 = vmul.f32 -0.5, %v4985
        %v5354 = vadd.f32 %v5353, 1.0
        %v5355 = vmul.f32 %v5354, %v4985
        %v5356 = vand.u32 2147483647, %v4985
        %vm5357 = vcmp.lt.f32.partialorder %v5356, 0.0004427343
        %v5358 = vsel %vm5357, %v5355, %v5352
        %v5359 = vadd.f32 %v4987, 1.0
        %v5360 = vlog2.pop %v5359
        %v5361 = vmul.f32 %v5360, 0.6931472
        %v5362 = vmul.f32 -0.5, %v4987
        %v5363 = vadd.f32 %v5362, 1.0
        %v5364 = vmul.f32 %v5363, %v4987
        %v5365 = vand.u32 2147483647, %v4987
        %vm5366 = vcmp.lt.f32.partialorder %v5365, 0.0004427343
        %v5367 = vsel %vm5366, %v5364, %v5361
        %v5368 = vadd.f32 %v4989, 1.0
        %v5369 = vlog2.pop %v5368
        %v5370 = vmul.f32 %v5369, 0.6931472
        %v5371 = vmul.f32 -0.5, %v4989
        %v5372 = vadd.f32 %v5371, 1.0
        %v5373 = vmul.f32 %v5372, %v4989
        %v5374 = vand.u32 2147483647, %v4989
        %vm5375 = vcmp.lt.f32.partialorder %v5374, 0.0004427343
        %v5376 = vsel %vm5375, %v5373, %v5370
        %v5377 = vadd.f32 %v4991, 1.0
        %v5378 = vlog2.pop %v5377
        %v5379 = vmul.f32 %v5378, 0.6931472
        %v5380 = vmul.f32 -0.5, %v4991
        %v5381 = vadd.f32 %v5380, 1.0
        %v5382 = vmul.f32 %v5381, %v4991
        %v5383 = vand.u32 2147483647, %v4991
        %vm5384 = vcmp.lt.f32.partialorder %v5383, 0.0004427343
        %v5385 = vsel %vm5384, %v5382, %v5379
        %v5386 = vadd.f32 %v4993, 1.0
        %v5387 = vlog2.pop %v5386
        %v5388 = vmul.f32 %v5387, 0.6931472
        %v5389 = vmul.f32 -0.5, %v4993
        %v5390 = vadd.f32 %v5389, 1.0
        %v5391 = vmul.f32 %v5390, %v4993
        %v5392 = vand.u32 2147483647, %v4993
        %vm5393 = vcmp.lt.f32.partialorder %v5392, 0.0004427343
        %v5394 = vsel %vm5393, %v5391, %v5388
        %v5395 = vadd.f32 %v4995, 1.0
        %v5396 = vlog2.pop %v5395
        %v5397 = vmul.f32 %v5396, 0.6931472
        %v5398 = vmul.f32 -0.5, %v4995
        %v5399 = vadd.f32 %v5398, 1.0
        %v5400 = vmul.f32 %v5399, %v4995
        %v5401 = vand.u32 2147483647, %v4995
        %vm5402 = vcmp.lt.f32.partialorder %v5401, 0.0004427343
        %v5403 = vsel %vm5402, %v5400, %v5397
        %v5404 = vadd.f32 %v4997, 1.0
        %v5405 = vlog2.pop %v5404
        %v5406 = vmul.f32 %v5405, 0.6931472
        %v5407 = vmul.f32 -0.5, %v4997
        %v5408 = vadd.f32 %v5407, 1.0
        %v5409 = vmul.f32 %v5408, %v4997
        %v5410 = vand.u32 2147483647, %v4997
        %vm5411 = vcmp.lt.f32.partialorder %v5410, 0.0004427343
        %v5412 = vsel %vm5411, %v5409, %v5406
        %v5413 = vadd.f32 %v4999, 1.0
        %v5414 = vlog2.pop %v5413
        %v5415 = vmul.f32 %v5414, 0.6931472
        %v5416 = vmul.f32 -0.5, %v4999
        %v5417 = vadd.f32 %v5416, 1.0
        %v5418 = vmul.f32 %v5417, %v4999
        %v5419 = vand.u32 2147483647, %v4999
        %vm5420 = vcmp.lt.f32.partialorder %v5419, 0.0004427343
        %v5421 = vsel %vm5420, %v5418, %v5415
        %v5422 = vadd.f32 %v5001, 1.0
        %v5423 = vlog2.pop %v5422
        %v5424 = vmul.f32 %v5423, 0.6931472
        %v5425 = vmul.f32 -0.5, %v5001
        %v5426 = vadd.f32 %v5425, 1.0
        %v5427 = vmul.f32 %v5426, %v5001
        %v5428 = vand.u32 2147483647, %v5001
        %vm5429 = vcmp.lt.f32.partialorder %v5428, 0.0004427343
        %v5430 = vsel %vm5429, %v5427, %v5424
        %v5431 = vadd.f32 %v5003, 1.0
        %v5432 = vlog2.pop %v5431
        %v5433 = vmul.f32 %v5432, 0.6931472
        %v5434 = vmul.f32 -0.5, %v5003
        %v5435 = vadd.f32 %v5434, 1.0
        %v5436 = vmul.f32 %v5435, %v5003
        %v5437 = vand.u32 2147483647, %v5003
        %vm5438 = vcmp.lt.f32.partialorder %v5437, 0.0004427343
        %v5439 = vsel %vm5438, %v5436, %v5433
        %v5440 = vadd.f32 %v5005, 1.0
        %v5441 = vlog2.pop %v5440
        %v5442 = vmul.f32 %v5441, 0.6931472
        %v5443 = vmul.f32 -0.5, %v5005
        %v5444 = vadd.f32 %v5443, 1.0
        %v5445 = vmul.f32 %v5444, %v5005
        %v5446 = vand.u32 2147483647, %v5005
        %vm5447 = vcmp.lt.f32.partialorder %v5446, 0.0004427343
        %v5448 = vsel %vm5447, %v5445, %v5442
        %v5449 = vadd.f32 %v5007, 1.0
        %v5450 = vlog2.pop %v5449
        %v5451 = vmul.f32 %v5450, 0.6931472
        %v5452 = vmul.f32 -0.5, %v5007
        %v5453 = vadd.f32 %v5452, 1.0
        %v5454 = vmul.f32 %v5453, %v5007
        %v5455 = vand.u32 2147483647, %v5007
        %vm5456 = vcmp.lt.f32.partialorder %v5455, 0.0004427343
        %v5457 = vsel %vm5456, %v5454, %v5451
        %v5458 = vadd.f32 %v5009, 1.0
        %v5459 = vlog2.pop %v5458
        %v5460 = vmul.f32 %v5459, 0.6931472
        %v5461 = vmul.f32 -0.5, %v5009
        %v5462 = vadd.f32 %v5461, 1.0
        %v5463 = vmul.f32 %v5462, %v5009
        %v5464 = vand.u32 2147483647, %v5009
        %vm5465 = vcmp.lt.f32.partialorder %v5464, 0.0004427343
        %v5466 = vsel %vm5465, %v5463, %v5460
        %v5467 = vadd.f32 %v5011, 1.0
        %v5468 = vlog2.pop %v5467
        %v5469 = vmul.f32 %v5468, 0.6931472
        %v5470 = vmul.f32 -0.5, %v5011
        %v5471 = vadd.f32 %v5470, 1.0
        %v5472 = vmul.f32 %v5471, %v5011
        %v5473 = vand.u32 2147483647, %v5011
        %vm5474 = vcmp.lt.f32.partialorder %v5473, 0.0004427343
        %v5475 = vsel %vm5474, %v5472, %v5469
        %v5476 = vadd.f32 %v5013, 1.0
        %v5477 = vlog2.pop %v5476
        %v5478 = vmul.f32 %v5477, 0.6931472
        %v5479 = vmul.f32 -0.5, %v5013
        %v5480 = vadd.f32 %v5479, 1.0
        %v5481 = vmul.f32 %v5480, %v5013
        %v5482 = vand.u32 2147483647, %v5013
        %vm5483 = vcmp.lt.f32.partialorder %v5482, 0.0004427343
        %v5484 = vsel %vm5483, %v5481, %v5478
        %v5485 = vadd.f32 %v5015, 1.0
        %v5486 = vlog2.pop %v5485
        %v5487 = vmul.f32 %v5486, 0.6931472
        %v5488 = vmul.f32 -0.5, %v5015
        %v5489 = vadd.f32 %v5488, 1.0
        %v5490 = vmul.f32 %v5489, %v5015
        %v5491 = vand.u32 2147483647, %v5015
        %vm5492 = vcmp.lt.f32.partialorder %v5491, 0.0004427343
        %v5493 = vsel %vm5492, %v5490, %v5487
        %v5494 = vadd.f32 %v5017, 1.0
        %v5495 = vlog2.pop %v5494
        %v5496 = vmul.f32 %v5495, 0.6931472
        %v5497 = vmul.f32 -0.5, %v5017
        %v5498 = vadd.f32 %v5497, 1.0
        %v5499 = vmul.f32 %v5498, %v5017
        %v5500 = vand.u32 2147483647, %v5017
        %vm5501 = vcmp.lt.f32.partialorder %v5500, 0.0004427343
        %v5502 = vsel %vm5501, %v5499, %v5496
        %v5503 = vadd.f32 %v5019, 1.0
        %v5504 = vlog2.pop %v5503
        %v5505 = vmul.f32 %v5504, 0.6931472
        %v5506 = vmul.f32 -0.5, %v5019
        %v5507 = vadd.f32 %v5506, 1.0
        %v5508 = vmul.f32 %v5507, %v5019
        %v5509 = vand.u32 2147483647, %v5019
        %vm5510 = vcmp.lt.f32.partialorder %v5509, 0.0004427343
        %v5511 = vsel %vm5510, %v5508, %v5505
        %v5512 = vadd.f32 %v5021, 1.0
        %v5513 = vlog2.pop %v5512
        %v5514 = vmul.f32 %v5513, 0.6931472
        %v5515 = vmul.f32 -0.5, %v5021
        %v5516 = vadd.f32 %v5515, 1.0
        %v5517 = vmul.f32 %v5516, %v5021
        %v5518 = vand.u32 2147483647, %v5021
        %vm5519 = vcmp.lt.f32.partialorder %v5518, 0.0004427343
        %v5520 = vsel %vm5519, %v5517, %v5514
        %v5521 = vadd.f32 %v5023, 1.0
        %v5522 = vlog2.pop %v5521
        %v5523 = vmul.f32 %v5522, 0.6931472
        %v5524 = vmul.f32 -0.5, %v5023
        %v5525 = vadd.f32 %v5524, 1.0
        %v5526 = vmul.f32 %v5525, %v5023
        %v5527 = vand.u32 2147483647, %v5023
        %vm5528 = vcmp.lt.f32.partialorder %v5527, 0.0004427343
        %v5529 = vsel %vm5528, %v5526, %v5523
        %v5530 = vadd.f32 %v5025, 1.0
        %v5531 = vlog2.pop %v5530
        %v5532 = vmul.f32 %v5531, 0.6931472
        %v5533 = vmul.f32 -0.5, %v5025
        %v5534 = vadd.f32 %v5533, 1.0
        %v5535 = vmul.f32 %v5534, %v5025
        %v5536 = vand.u32 2147483647, %v5025
        %vm5537 = vcmp.lt.f32.partialorder %v5536, 0.0004427343
        %v5538 = vsel %vm5537, %v5535, %v5532
        %v5539 = vadd.f32 %v5027, 1.0
        %v5540 = vlog2.pop %v5539
        %v5541 = vmul.f32 %v5540, 0.6931472
        %v5542 = vmul.f32 -0.5, %v5027
        %v5543 = vadd.f32 %v5542, 1.0
        %v5544 = vmul.f32 %v5543, %v5027
        %v5545 = vand.u32 2147483647, %v5027
        %vm5546 = vcmp.lt.f32.partialorder %v5545, 0.0004427343
        %v5547 = vsel %vm5546, %v5544, %v5541
        %v5548 = vadd.f32 %v5029, 1.0
        %v5549 = vlog2.pop %v5548
        %v5550 = vmul.f32 %v5549, 0.6931472
        %v5551 = vmul.f32 -0.5, %v5029
        %v5552 = vadd.f32 %v5551, 1.0
        %v5553 = vmul.f32 %v5552, %v5029
        %v5554 = vand.u32 2147483647, %v5029
        %vm5555 = vcmp.lt.f32.partialorder %v5554, 0.0004427343
        %v5556 = vsel %vm5555, %v5553, %v5550
        %v5557 = vadd.f32 %v5031, 1.0
        %v5558 = vlog2.pop %v5557
        %v5559 = vmul.f32 %v5558, 0.6931472
        %v5560 = vmul.f32 -0.5, %v5031
        %v5561 = vadd.f32 %v5560, 1.0
        %v5562 = vmul.f32 %v5561, %v5031
        %v5563 = vand.u32 2147483647, %v5031
        %vm5564 = vcmp.lt.f32.partialorder %v5563, 0.0004427343
        %v5565 = vsel %vm5564, %v5562, %v5559
        %v5566 = vadd.f32 %v5033, 1.0
        %v5567 = vlog2.pop %v5566
        %v5568 = vmul.f32 %v5567, 0.6931472
        %v5569 = vmul.f32 -0.5, %v5033
        %v5570 = vadd.f32 %v5569, 1.0
        %v5571 = vmul.f32 %v5570, %v5033
        %v5572 = vand.u32 2147483647, %v5033
        %vm5573 = vcmp.lt.f32.partialorder %v5572, 0.0004427343
        %v5574 = vsel %vm5573, %v5571, %v5568
        %v5575 = vadd.f32 %v5035, 1.0
        %v5576 = vlog2.pop %v5575
        %v5577 = vmul.f32 %v5576, 0.6931472
        %v5578 = vmul.f32 -0.5, %v5035
        %v5579 = vadd.f32 %v5578, 1.0
        %v5580 = vmul.f32 %v5579, %v5035
        %v5581 = vand.u32 2147483647, %v5035
        %vm5582 = vcmp.lt.f32.partialorder %v5581, 0.0004427343
        %v5583 = vsel %vm5582, %v5580, %v5577
        %v5584 = vadd.f32 %v5037, 1.0
        %v5585 = vlog2.pop %v5584
        %v5586 = vmul.f32 %v5585, 0.6931472
        %v5587 = vmul.f32 -0.5, %v5037
        %v5588 = vadd.f32 %v5587, 1.0
        %v5589 = vmul.f32 %v5588, %v5037
        %v5590 = vand.u32 2147483647, %v5037
        %vm5591 = vcmp.lt.f32.partialorder %v5590, 0.0004427343
        %v5592 = vsel %vm5591, %v5589, %v5586
        %v5593 = vadd.f32 %v5039, 1.0
        %v5594 = vlog2.pop %v5593
        %v5595 = vmul.f32 %v5594, 0.6931472
        %v5596 = vmul.f32 -0.5, %v5039
        %v5597 = vadd.f32 %v5596, 1.0
        %v5598 = vmul.f32 %v5597, %v5039
        %v5599 = vand.u32 2147483647, %v5039
        %vm5600 = vcmp.lt.f32.partialorder %v5599, 0.0004427343
        %v5601 = vsel %vm5600, %v5598, %v5595
        %v5602 = vadd.f32 %v5041, 1.0
        %v5603 = vlog2.pop %v5602
        %v5604 = vmul.f32 %v5603, 0.6931472
        %v5605 = vmul.f32 -0.5, %v5041
        %v5606 = vadd.f32 %v5605, 1.0
        %v5607 = vmul.f32 %v5606, %v5041
        %v5608 = vand.u32 2147483647, %v5041
        %vm5609 = vcmp.lt.f32.partialorder %v5608, 0.0004427343
        %v5610 = vsel %vm5609, %v5607, %v5604
        %v5611 = vadd.f32 %v5043, 1.0
        %v5612 = vlog2.pop %v5611
        %v5613 = vmul.f32 %v5612, 0.6931472
        %v5614 = vmul.f32 -0.5, %v5043
        %v5615 = vadd.f32 %v5614, 1.0
        %v5616 = vmul.f32 %v5615, %v5043
        %v5617 = vand.u32 2147483647, %v5043
        %vm5618 = vcmp.lt.f32.partialorder %v5617, 0.0004427343
        %v5619 = vsel %vm5618, %v5616, %v5613
        %v5620 = vmul.f32 %v5052, 0.01
        %v5621 = vmul.f32 %v5061, 0.01
        %v5622 = vmul.f32 %v5070, 0.01
        %v5623 = vmul.f32 %v5079, 0.01
        %v5624 = vmul.f32 %v5088, 0.01
        %v5625 = vmul.f32 %v5097, 0.01
        %v5626 = vmul.f32 %v5106, 0.01
        %v5627 = vmul.f32 %v5115, 0.01
        %v5628 = vmul.f32 %v5124, 0.01
        %v5629 = vmul.f32 %v5133, 0.01
        %v5630 = vmul.f32 %v5142, 0.01
        %v5631 = vmul.f32 %v5151, 0.01
        %v5632 = vmul.f32 %v5160, 0.01
        %v5633 = vmul.f32 %v5169, 0.01
        %v5634 = vmul.f32 %v5178, 0.01
        %v5635 = vmul.f32 %v5187, 0.01
        %v5636 = vmul.f32 %v5196, 0.01
        %v5637 = vmul.f32 %v5205, 0.01
        %v5638 = vmul.f32 %v5214, 0.01
        %v5639 = vmul.f32 %v5223, 0.01
        %v5640 = vmul.f32 %v5232, 0.01
        %v5641 = vmul.f32 %v5241, 0.01
        %v5642 = vmul.f32 %v5250, 0.01
        %v5643 = vmul.f32 %v5259, 0.01
        %v5644 = vmul.f32 %v5268, 0.01
        %v5645 = vmul.f32 %v5277, 0.01
        %v5646 = vmul.f32 %v5286, 0.01
        %v5647 = vmul.f32 %v5295, 0.01
        %v5648 = vmul.f32 %v5304, 0.01
        %v5649 = vmul.f32 %v5313, 0.01
        %v5650 = vmul.f32 %v5322, 0.01
        %v5651 = vmul.f32 %v5331, 0.01
        %v5652 = vmul.f32 %v5340, 0.01
        %v5653 = vmul.f32 %v5349, 0.01
        %v5654 = vmul.f32 %v5358, 0.01
        %v5655 = vmul.f32 %v5367, 0.01
        %v5656 = vmul.f32 %v5376, 0.01
        %v5657 = vmul.f32 %v5385, 0.01
        %v5658 = vmul.f32 %v5394, 0.01
        %v5659 = vmul.f32 %v5403, 0.01
        %v5660 = vmul.f32 %v5412, 0.01
        %v5661 = vmul.f32 %v5421, 0.01
        %v5662 = vmul.f32 %v5430, 0.01
        %v5663 = vmul.f32 %v5439, 0.01
        %v5664 = vmul.f32 %v5448, 0.01
        %v5665 = vmul.f32 %v5457, 0.01
        %v5666 = vmul.f32 %v5466, 0.01
        %v5667 = vmul.f32 %v5475, 0.01
        %v5668 = vmul.f32 %v5484, 0.01
        %v5669 = vmul.f32 %v5493, 0.01
        %v5670 = vmul.f32 %v5502, 0.01
        %v5671 = vmul.f32 %v5511, 0.01
        %v5672 = vmul.f32 %v5520, 0.01
        %v5673 = vmul.f32 %v5529, 0.01
        %v5674 = vmul.f32 %v5538, 0.01
        %v5675 = vmul.f32 %v5547, 0.01
        %v5676 = vmul.f32 %v5556, 0.01
        %v5677 = vmul.f32 %v5565, 0.01
        %v5678 = vmul.f32 %v5574, 0.01
        %v5679 = vmul.f32 %v5583, 0.01
        %v5680 = vmul.f32 %v5592, 0.01
        %v5681 = vmul.f32 %v5601, 0.01
        %v5682 = vmul.f32 %v5610, 0.01
        %v5683 = vmul.f32 %v5619, 0.01
        %v5684 = vsel %vm4852, %v4724, %v5620
        %v5685 = vsel %vm4853, %v4725, %v5621
        %v5686 = vsel %vm4854, %v4726, %v5622
        %v5687 = vsel %vm4855, %v4727, %v5623
        %v5688 = vsel %vm4856, %v4728, %v5624
        %v5689 = vsel %vm4857, %v4729, %v5625
        %v5690 = vsel %vm4858, %v4730, %v5626
        %v5691 = vsel %vm4859, %v4731, %v5627
        %v5692 = vsel %vm4860, %v4732, %v5628
        %v5693 = vsel %vm4861, %v4733, %v5629
        %v5694 = vsel %vm4862, %v4734, %v5630
        %v5695 = vsel %vm4863, %v4735, %v5631
        %v5696 = vsel %vm4864, %v4736, %v5632
        %v5697 = vsel %vm4865, %v4737, %v5633
        %v5698 = vsel %vm4866, %v4738, %v5634
        %v5699 = vsel %vm4867, %v4739, %v5635
        %v5700 = vsel %vm4868, %v4740, %v5636
        %v5701 = vsel %vm4869, %v4741, %v5637
        %v5702 = vsel %vm4870, %v4742, %v5638
        %v5703 = vsel %vm4871, %v4743, %v5639
        %v5704 = vsel %vm4872, %v4744, %v5640
        %v5705 = vsel %vm4873, %v4745, %v5641
        %v5706 = vsel %vm4874, %v4746, %v5642
        %v5707 = vsel %vm4875, %v4747, %v5643
        %v5708 = vsel %vm4876, %v4748, %v5644
        %v5709 = vsel %vm4877, %v4749, %v5645
        %v5710 = vsel %vm4878, %v4750, %v5646
        %v5711 = vsel %vm4879, %v4751, %v5647
        %v5712 = vsel %vm4880, %v4752, %v5648
        %v5713 = vsel %vm4881, %v4753, %v5649
        %v5714 = vsel %vm4882, %v4754, %v5650
        %v5715 = vsel %vm4883, %v4755, %v5651
        %v5716 = vsel %vm4884, %v4756, %v5652
        %v5717 = vsel %vm4885, %v4757, %v5653
        %v5718 = vsel %vm4886, %v4758, %v5654
        %v5719 = vsel %vm4887, %v4759, %v5655
        %v5720 = vsel %vm4888, %v4760, %v5656
        %v5721 = vsel %vm4889, %v4761, %v5657
        %v5722 = vsel %vm4890, %v4762, %v5658
        %v5723 = vsel %vm4891, %v4763, %v5659
        %v5724 = vsel %vm4892, %v4764, %v5660
        %v5725 = vsel %vm4893, %v4765, %v5661
        %v5726 = vsel %vm4894, %v4766, %v5662
        %v5727 = vsel %vm4895, %v4767, %v5663
        %v5728 = vsel %vm4896, %v4768, %v5664
        %v5729 = vsel %vm4897, %v4769, %v5665
        %v5730 = vsel %vm4898, %v4770, %v5666
        %v5731 = vsel %vm4899, %v4771, %v5667
        %v5732 = vsel %vm4900, %v4772, %v5668
        %v5733 = vsel %vm4901, %v4773, %v5669
        %v5734 = vsel %vm4902, %v4774, %v5670
        %v5735 = vsel %vm4903, %v4775, %v5671
        %v5736 = vsel %vm4904, %v4776, %v5672
        %v5737 = vsel %vm4905, %v4777, %v5673
        %v5738 = vsel %vm4906, %v4778, %v5674
        %v5739 = vsel %vm4907, %v4779, %v5675
        %v5740 = vsel %vm4908, %v4780, %v5676
        %v5741 = vsel %vm4909, %v4781, %v5677
        %v5742 = vsel %vm4910, %v4782, %v5678
        %v5743 = vsel %vm4911, %v4783, %v5679
        %v5744 = vsel %vm4912, %v4784, %v5680
        %v5745 = vsel %vm4913, %v4785, %v5681
        %v5746 = vsel %vm4914, %v4786, %v5682
        %v5747 = vsel %vm4915, %v4787, %v5683
        %s5748 = scalar_lea.vmem [#allocation2], 64
        %v5749 = vld [vmem:[%s5748] sm:$0xff]
        %v5750 = vld [vmem:[%s5748 + $0x8] sm:$0xff]
        %v5751 = vld [vmem:[%s5748 + $0x10] sm:$0xff]
        %v5752 = vld [vmem:[%s5748 + $0x18] sm:$0xff]
        %s5753 = scalar_lea.vmem %s3, 96
        %v5754 = vld [vmem:[%s5753] sm:$0xff]
        %v5755 = vld [vmem:[%s5753 + $0x8] sm:$0xff]
        %v5756 = vld [vmem:[%s5753 + $0x10] sm:$0xff]
        %v5757 = vld [vmem:[%s5753 + $0x18] sm:$0xff]
        %5759 = vset.pattern.permute.xlu0 0
        %5760 = vperm.xlu0 %5759, %v5754
        %v5761 = vpop.permute.xlu0 %5760
        %5764 = vset.pattern.permute.xlu0 0
        %5765 = vperm.xlu0 %5764, %v5755
        %v5766 = vpop.permute.xlu0 %5765
        %5769 = vset.pattern.permute.xlu0 0
        %5770 = vperm.xlu0 %5769, %v5756
        %v5771 = vpop.permute.xlu0 %5770
        %5774 = vset.pattern.permute.xlu0 0
        %5775 = vperm.xlu0 %5774, %v5757
        %v5776 = vpop.permute.xlu0 %5775
        %v5779 = vsel %vm2285, %v5749, 0
        %v5782 = vsel %vm2285, %v5750, 0
        %v5785 = vsel %vm2285, %v5751, 0
        %v5788 = vsel %vm2285, %v5752, 0
        %5790 = vmatprep.subr.mxu0 %v5685
        %5791 = vmatpush1.msra.mxu0 %v5684
        %5792 = vmatprep.subr.mxu0 %v5701
        %5793 = vmatpush1.msra.mxu0 %v5700
        %5794 = vmatprep.subr.mxu0 %v5717
        %5795 = vmatpush1.msra.mxu0 %v5716
        %5796 = vmatprep.subr.mxu0 %v5733
        %5797 = vmatpush1.msra.mxu0 %v5732
        %5798 = vmatprep.subr.mxu0 0.0
        %5799 = vmatpush1.msra.mxu0 0.0
        %5800 = vmatprep.subr.mxu0 0.0
        %5801 = vmatpush1.msra.mxu0 0.0
        %5802 = vmatprep.subr.mxu0 0.0
        %5803 = vmatpush1.msra.mxu0 0.0
        %5804 = vmatprep.subr.mxu0 0.0
        %5805 = vmatpush1.msra.mxu0 0.0
        %5806 = vmatprep.subr.mxu0 0.0
        %5807 = vmatpush1.msra.mxu0 0.0
        %5808 = vmatprep.subr.mxu0 0.0
        %5809 = vmatpush1.msra.mxu0 0.0
        %5810 = vmatprep.subr.mxu0 0.0
        %5811 = vmatpush1.msra.mxu0 0.0
        %5812 = vmatprep.subr.mxu0 0.0
        %5813 = vmatpush1.msra.mxu0 0.0
        %5814 = vmatprep.subr.mxu0 0.0
        %5815 = vmatpush1.msra.mxu0 0.0
        %5816 = vmatprep.subr.mxu0 0.0
        %5817 = vmatpush1.msra.mxu0 0.0
        %5818 = vmatprep.subr.mxu0 0.0
        %5819 = vmatpush1.msra.mxu0 0.0
        %5820 = vmatprep.subr.mxu0 0.0
        %5821 = vmatpush1.msra.mxu0 0.0
        %5822 = vmatprep.subr.mxu0 0.0
        %5823 = vmatpush1.msra.mxu0 0.0
        %5824 = vmatprep.subr.mxu0 0.0
        %5825 = vmatpush1.msra.mxu0 0.0
        %5826 = vmatprep.subr.mxu0 0.0
        %5827 = vmatpush1.msra.mxu0 0.0
        %5828 = vmatprep.subr.mxu0 0.0
        %5829 = vmatpush1.msra.mxu0 0.0
        %5830 = vmatprep.subr.mxu0 0.0
        %5831 = vmatpush1.msra.mxu0 0.0
        %5832 = vmatprep.subr.mxu0 0.0
        %5833 = vmatpush1.msra.mxu0 0.0
        %5834 = vmatprep.subr.mxu0 0.0
        %5835 = vmatpush1.msra.mxu0 0.0
        %5836 = vmatprep.subr.mxu0 0.0
        %5837 = vmatpush1.msra.mxu0 0.0
        %5838 = vmatprep.subr.mxu0 0.0
        %5839 = vmatpush1.msra.mxu0 0.0
        %5840 = vmatprep.subr.mxu0 0.0
        %5841 = vmatpush1.msra.mxu0 0.0
        %5842 = vmatprep.subr.mxu0 0.0
        %5843 = vmatpush1.msra.mxu0 0.0
        %5844 = vmatprep.subr.mxu0 0.0
        %5845 = vmatpush1.msra.mxu0 0.0
        %5846 = vmatprep.subr.mxu0 0.0
        %5847 = vmatpush1.msra.mxu0 0.0
        %5848 = vmatprep.subr.mxu0 0.0
        %5849 = vmatpush1.msra.mxu0 0.0
        %5850 = vmatprep.subr.mxu0 0.0
        %5851 = vmatpush1.msra.mxu0 0.0
        %5852 = vmatprep.subr.mxu0 0.0
        %5853 = vmatpush1.msra.mxu0 0.0
        %5854 = vmatprep.mubr.f32.mxu0 0.0
        %5855 = vmatmul.mubr.f32.gmra.mrb[0].mxu0 %v5779
        %v5856 = vpop.f32.mrb[0].mxu0
        %v5857 = vadd.f32 %v5761, %v5856
        %v5858 = vpop.f32.mrb[0].mxu0
        %v5859 = vadd.f32 %v5761, %v5858
        %5860 = vmatprep.mubr.f32.mxu0 0.0
        %5861 = vmatmul.mubr.f32.gmra.mrb[0].mxu0 %v5782
        %v5862 = vpop.f32.mrb[0].mxu0
        %v5863 = vadd.f32 %v5766, %v5862
        %v5864 = vpop.f32.mrb[0].mxu0
        %v5865 = vadd.f32 %v5766, %v5864
        %5866 = vmatprep.mubr.f32.mxu0 0.0
        %5867 = vmatmul.mubr.f32.gmra.mrb[0].mxu0 %v5785
        %v5868 = vpop.f32.mrb[0].mxu0
        %v5869 = vadd.f32 %v5771, %v5868
        %v5870 = vpop.f32.mrb[0].mxu0
        %v5871 = vadd.f32 %v5771, %v5870
        %5872 = vmatprep.mubr.f32.mxu0 0.0
        %5873 = vmatmul.mubr.f32.gmra.mrb[0].mxu0 %v5788
        %v5874 = vpop.f32.mrb[0].mxu0
        %v5875 = vadd.f32 %v5776, %v5874
        %v5876 = vpop.f32.mrb[0].mxu0
        %v5877 = vadd.f32 %v5776, %v5876
        %5878 = vdwg.mxu0
        %5879 = vmatprep.subr.mxu0 %v5687
        %5880 = vmatpush1.msra.mxu0 %v5686
        %5881 = vmatprep.subr.mxu0 %v5703
        %5882 = vmatpush1.msra.mxu0 %v5702
        %5883 = vmatprep.subr.mxu0 %v5719
        %5884 = vmatpush1.msra.mxu0 %v5718
        %5885 = vmatprep.subr.mxu0 %v5735
        %5886 = vmatpush1.msra.mxu0 %v5734
        %5887 = vmatprep.subr.mxu0 0.0
        %5888 = vmatpush1.msra.mxu0 0.0
        %5889 = vmatprep.subr.mxu0 0.0
        %5890 = vmatpush1.msra.mxu0 0.0
        %5891 = vmatprep.subr.mxu0 0.0
        %5892 = vmatpush1.msra.mxu0 0.0
        %5893 = vmatprep.subr.mxu0 0.0
        %5894 = vmatpush1.msra.mxu0 0.0
        %5895 = vmatprep.subr.mxu0 0.0
        %5896 = vmatpush1.msra.mxu0 0.0
        %5897 = vmatprep.subr.mxu0 0.0
        %5898 = vmatpush1.msra.mxu0 0.0
        %5899 = vmatprep.subr.mxu0 0.0
        %5900 = vmatpush1.msra.mxu0 0.0
        %5901 = vmatprep.subr.mxu0 0.0
        %5902 = vmatpush1.msra.mxu0 0.0
        %5903 = vmatprep.subr.mxu0 0.0
        %5904 = vmatpush1.msra.mxu0 0.0
        %5905 = vmatprep.subr.mxu0 0.0
        %5906 = vmatpush1.msra.mxu0 0.0
        %5907 = vmatprep.subr.mxu0 0.0
        %5908 = vmatpush1.msra.mxu0 0.0
        %5909 = vmatprep.subr.mxu0 0.0
        %5910 = vmatpush1.msra.mxu0 0.0
        %5911 = vmatprep.subr.mxu0 0.0
        %5912 = vmatpush1.msra.mxu0 0.0
        %5913 = vmatprep.subr.mxu0 0.0
        %5914 = vmatpush1.msra.mxu0 0.0
        %5915 = vmatprep.subr.mxu0 0.0
        %5916 = vmatpush1.msra.mxu0 0.0
        %5917 = vmatprep.subr.mxu0 0.0
        %5918 = vmatpush1.msra.mxu0 0.0
        %5919 = vmatprep.subr.mxu0 0.0
        %5920 = vmatpush1.msra.mxu0 0.0
        %5921 = vmatprep.subr.mxu0 0.0
        %5922 = vmatpush1.msra.mxu0 0.0
        %5923 = vmatprep.subr.mxu0 0.0
        %5924 = vmatpush1.msra.mxu0 0.0
        %5925 = vmatprep.subr.mxu0 0.0
        %5926 = vmatpush1.msra.mxu0 0.0
        %5927 = vmatprep.subr.mxu0 0.0
        %5928 = vmatpush1.msra.mxu0 0.0
        %5929 = vmatprep.subr.mxu0 0.0
        %5930 = vmatpush1.msra.mxu0 0.0
        %5931 = vmatprep.subr.mxu0 0.0
        %5932 = vmatpush1.msra.mxu0 0.0
        %5933 = vmatprep.subr.mxu0 0.0
        %5934 = vmatpush1.msra.mxu0 0.0
        %5935 = vmatprep.subr.mxu0 0.0
        %5936 = vmatpush1.msra.mxu0 0.0
        %5937 = vmatprep.subr.mxu0 0.0
        %5938 = vmatpush1.msra.mxu0 0.0
        %5939 = vmatprep.subr.mxu0 0.0
        %5940 = vmatpush1.msra.mxu0 0.0
        %5941 = vmatprep.subr.mxu0 0.0
        %5942 = vmatpush1.msra.mxu0 0.0
        %5943 = vmatprep.mubr.f32.mxu0 0.0
        %5944 = vmatmul.mubr.f32.gmra.mrb[0].mxu0 %v5779
        %v5945 = vpop.f32.mrb[0].mxu0
        %v5946 = vadd.f32 %v5761, %v5945
        %v5947 = vpop.f32.mrb[0].mxu0
        %v5948 = vadd.f32 %v5761, %v5947
        %5949 = vmatprep.mubr.f32.mxu0 0.0
        %5950 = vmatmul.mubr.f32.gmra.mrb[0].mxu0 %v5782
        %v5951 = vpop.f32.mrb[0].mxu0
        %v5952 = vadd.f32 %v5766, %v5951
        %v5953 = vpop.f32.mrb[0].mxu0
        %v5954 = vadd.f32 %v5766, %v5953
        %5955 = vmatprep.mubr.f32.mxu0 0.0
        %5956 = vmatmul.mubr.f32.gmra.mrb[0].mxu0 %v5785
        %v5957 = vpop.f32.mrb[0].mxu0
        %v5958 = vadd.f32 %v5771, %v5957
        %v5959 = vpop.f32.mrb[0].mxu0
        %v5960 = vadd.f32 %v5771, %v5959
        %5961 = vmatprep.mubr.f32.mxu0 0.0
        %5962 = vmatmul.mubr.f32.gmra.mrb[0].mxu0 %v5788
        %v5963 = vpop.f32.mrb[0].mxu0
        %v5964 = vadd.f32 %v5776, %v5963
        %v5965 = vpop.f32.mrb[0].mxu0
        %v5966 = vadd.f32 %v5776, %v5965
        %5967 = vdwg.mxu0
        %5968 = vmatprep.subr.mxu0 %v5689
        %5969 = vmatpush1.msra.mxu0 %v5688
        %5970 = vmatprep.subr.mxu0 %v5705
        %5971 = vmatpush1.msra.mxu0 %v5704
        %5972 = vmatprep.subr.mxu0 %v5721
        %5973 = vmatpush1.msra.mxu0 %v5720
        %5974 = vmatprep.subr.mxu0 %v5737
        %5975 = vmatpush1.msra.mxu0 %v5736
        %5976 = vmatprep.subr.mxu0 0.0
        %5977 = vmatpush1.msra.mxu0 0.0
        %5978 = vmatprep.subr.mxu0 0.0
        %5979 = vmatpush1.msra.mxu0 0.0
        %5980 = vmatprep.subr.mxu0 0.0
        %5981 = vmatpush1.msra.mxu0 0.0
        %5982 = vmatprep.subr.mxu0 0.0
        %5983 = vmatpush1.msra.mxu0 0.0
        %5984 = vmatprep.subr.mxu0 0.0
        %5985 = vmatpush1.msra.mxu0 0.0
        %5986 = vmatprep.subr.mxu0 0.0
        %5987 = vmatpush1.msra.mxu0 0.0
        %5988 = vmatprep.subr.mxu0 0.0
        %5989 = vmatpush1.msra.mxu0 0.0
        %5990 = vmatprep.subr.mxu0 0.0
        %5991 = vmatpush1.msra.mxu0 0.0
        %5992 = vmatprep.subr.mxu0 0.0
        %5993 = vmatpush1.msra.mxu0 0.0
        %5994 = vmatprep.subr.mxu0 0.0
        %5995 = vmatpush1.msra.mxu0 0.0
        %5996 = vmatprep.subr.mxu0 0.0
        %5997 = vmatpush1.msra.mxu0 0.0
        %5998 = vmatprep.subr.mxu0 0.0
        %5999 = vmatpush1.msra.mxu0 0.0
        %6000 = vmatprep.subr.mxu0 0.0
        %6001 = vmatpush1.msra.mxu0 0.0
        %6002 = vmatprep.subr.mxu0 0.0
        %6003 = vmatpush1.msra.mxu0 0.0
        %6004 = vmatprep.subr.mxu0 0.0
        %6005 = vmatpush1.msra.mxu0 0.0
        %6006 = vmatprep.subr.mxu0 0.0
        %6007 = vmatpush1.msra.mxu0 0.0
        %6008 = vmatprep.subr.mxu0 0.0
        %6009 = vmatpush1.msra.mxu0 0.0
        %6010 = vmatprep.subr.mxu0 0.0
        %6011 = vmatpush1.msra.mxu0 0.0
        %6012 = vmatprep.subr.mxu0 0.0
        %6013 = vmatpush1.msra.mxu0 0.0
        %6014 = vmatprep.subr.mxu0 0.0
        %6015 = vmatpush1.msra.mxu0 0.0
        %6016 = vmatprep.subr.mxu0 0.0
        %6017 = vmatpush1.msra.mxu0 0.0
        %6018 = vmatprep.subr.mxu0 0.0
        %6019 = vmatpush1.msra.mxu0 0.0
        %6020 = vmatprep.subr.mxu0 0.0
        %6021 = vmatpush1.msra.mxu0 0.0
        %6022 = vmatprep.subr.mxu0 0.0
        %6023 = vmatpush1.msra.mxu0 0.0
        %6024 = vmatprep.subr.mxu0 0.0
        %6025 = vmatpush1.msra.mxu0 0.0
        %6026 = vmatprep.subr.mxu0 0.0
        %6027 = vmatpush1.msra.mxu0 0.0
        %6028 = vmatprep.subr.mxu0 0.0
        %6029 = vmatpush1.msra.mxu0 0.0
        %6030 = vmatprep.subr.mxu0 0.0
        %6031 = vmatpush1.msra.mxu0 0.0
        %6032 = vmatprep.mubr.f32.mxu0 0.0
        %6033 = vmatmul.mubr.f32.gmra.mrb[0].mxu0 %v5779
        %v6034 = vpop.f32.mrb[0].mxu0
        %v6035 = vadd.f32 %v5761, %v6034
        %v6036 = vpop.f32.mrb[0].mxu0
        %v6037 = vadd.f32 %v5761, %v6036
        %6038 = vmatprep.mubr.f32.mxu0 0.0
        %6039 = vmatmul.mubr.f32.gmra.mrb[0].mxu0 %v5782
        %v6040 = vpop.f32.mrb[0].mxu0
        %v6041 = vadd.f32 %v5766, %v6040
        %v6042 = vpop.f32.mrb[0].mxu0
        %v6043 = vadd.f32 %v5766, %v6042
        %6044 = vmatprep.mubr.f32.mxu0 0.0
        %6045 = vmatmul.mubr.f32.gmra.mrb[0].mxu0 %v5785
        %v6046 = vpop.f32.mrb[0].mxu0
        %v6047 = vadd.f32 %v5771, %v6046
        %v6048 = vpop.f32.mrb[0].mxu0
        %v6049 = vadd.f32 %v5771, %v6048
        %6050 = vmatprep.mubr.f32.mxu0 0.0
        %6051 = vmatmul.mubr.f32.gmra.mrb[0].mxu0 %v5788
        %v6052 = vpop.f32.mrb[0].mxu0
        %v6053 = vadd.f32 %v5776, %v6052
        %v6054 = vpop.f32.mrb[0].mxu0
        %v6055 = vadd.f32 %v5776, %v6054
        %6056 = vdwg.mxu0
        %6057 = vmatprep.subr.mxu0 %v5691
        %6058 = vmatpush1.msra.mxu0 %v5690
        %6059 = vmatprep.subr.mxu0 %v5707
        %6060 = vmatpush1.msra.mxu0 %v5706
        %6061 = vmatprep.subr.mxu0 %v5723
        %6062 = vmatpush1.msra.mxu0 %v5722
        %6063 = vmatprep.subr.mxu0 %v5739
        %6064 = vmatpush1.msra.mxu0 %v5738
        %6065 = vmatprep.subr.mxu0 0.0
        %6066 = vmatpush1.msra.mxu0 0.0
        %6067 = vmatprep.subr.mxu0 0.0
        %6068 = vmatpush1.msra.mxu0 0.0
        %6069 = vmatprep.subr.mxu0 0.0
        %6070 = vmatpush1.msra.mxu0 0.0
        %6071 = vmatprep.subr.mxu0 0.0
        %6072 = vmatpush1.msra.mxu0 0.0
        %6073 = vmatprep.subr.mxu0 0.0
        %6074 = vmatpush1.msra.mxu0 0.0
        %6075 = vmatprep.subr.mxu0 0.0
        %6076 = vmatpush1.msra.mxu0 0.0
        %6077 = vmatprep.subr.mxu0 0.0
        %6078 = vmatpush1.msra.mxu0 0.0
        %6079 = vmatprep.subr.mxu0 0.0
        %6080 = vmatpush1.msra.mxu0 0.0
        %6081 = vmatprep.subr.mxu0 0.0
        %6082 = vmatpush1.msra.mxu0 0.0
        %6083 = vmatprep.subr.mxu0 0.0
        %6084 = vmatpush1.msra.mxu0 0.0
        %6085 = vmatprep.subr.mxu0 0.0
        %6086 = vmatpush1.msra.mxu0 0.0
        %6087 = vmatprep.subr.mxu0 0.0
        %6088 = vmatpush1.msra.mxu0 0.0
        %6089 = vmatprep.subr.mxu0 0.0
        %6090 = vmatpush1.msra.mxu0 0.0
        %6091 = vmatprep.subr.mxu0 0.0
        %6092 = vmatpush1.msra.mxu0 0.0
        %6093 = vmatprep.subr.mxu0 0.0
        %6094 = vmatpush1.msra.mxu0 0.0
        %6095 = vmatprep.subr.mxu0 0.0
        %6096 = vmatpush1.msra.mxu0 0.0
        %6097 = vmatprep.subr.mxu0 0.0
        %6098 = vmatpush1.msra.mxu0 0.0
        %6099 = vmatprep.subr.mxu0 0.0
        %6100 = vmatpush1.msra.mxu0 0.0
        %6101 = vmatprep.subr.mxu0 0.0
        %6102 = vmatpush1.msra.mxu0 0.0
        %6103 = vmatprep.subr.mxu0 0.0
        %6104 = vmatpush1.msra.mxu0 0.0
        %6105 = vmatprep.subr.mxu0 0.0
        %6106 = vmatpush1.msra.mxu0 0.0
        %6107 = vmatprep.subr.mxu0 0.0
        %6108 = vmatpush1.msra.mxu0 0.0
        %6109 = vmatprep.subr.mxu0 0.0
        %6110 = vmatpush1.msra.mxu0 0.0
        %6111 = vmatprep.subr.mxu0 0.0
        %6112 = vmatpush1.msra.mxu0 0.0
        %6113 = vmatprep.subr.mxu0 0.0
        %6114 = vmatpush1.msra.mxu0 0.0
        %6115 = vmatprep.subr.mxu0 0.0
        %6116 = vmatpush1.msra.mxu0 0.0
        %6117 = vmatprep.subr.mxu0 0.0
        %6118 = vmatpush1.msra.mxu0 0.0
        %6119 = vmatprep.subr.mxu0 0.0
        %6120 = vmatpush1.msra.mxu0 0.0
        %6121 = vmatprep.mubr.f32.mxu0 0.0
        %6122 = vmatmul.mubr.f32.gmra.mrb[0].mxu0 %v5779
        %v6123 = vpop.f32.mrb[0].mxu0
        %v6124 = vadd.f32 %v5761, %v6123
        %v6125 = vpop.f32.mrb[0].mxu0
        %v6126 = vadd.f32 %v5761, %v6125
        %6127 = vmatprep.mubr.f32.mxu0 0.0
        %6128 = vmatmul.mubr.f32.gmra.mrb[0].mxu0 %v5782
        %v6129 = vpop.f32.mrb[0].mxu0
        %v6130 = vadd.f32 %v5766, %v6129
        %v6131 = vpop.f32.mrb[0].mxu0
        %v6132 = vadd.f32 %v5766, %v6131
        %6133 = vmatprep.mubr.f32.mxu0 0.0
        %6134 = vmatmul.mubr.f32.gmra.mrb[0].mxu0 %v5785
        %v6135 = vpop.f32.mrb[0].mxu0
        %v6136 = vadd.f32 %v5771, %v6135
        %v6137 = vpop.f32.mrb[0].mxu0
        %v6138 = vadd.f32 %v5771, %v6137
        %6139 = vmatprep.mubr.f32.mxu0 0.0
        %6140 = vmatmul.mubr.f32.gmra.mrb[0].mxu0 %v5788
        %v6141 = vpop.f32.mrb[0].mxu0
        %v6142 = vadd.f32 %v5776, %v6141
        %v6143 = vpop.f32.mrb[0].mxu0
        %v6144 = vadd.f32 %v5776, %v6143
        %6145 = vdwg.mxu0
        %6146 = vmatprep.subr.mxu0 %v5693
        %6147 = vmatpush1.msra.mxu0 %v5692
        %6148 = vmatprep.subr.mxu0 %v5709
        %6149 = vmatpush1.msra.mxu0 %v5708
        %6150 = vmatprep.subr.mxu0 %v5725
        %6151 = vmatpush1.msra.mxu0 %v5724
        %6152 = vmatprep.subr.mxu0 %v5741
        %6153 = vmatpush1.msra.mxu0 %v5740
        %6154 = vmatprep.subr.mxu0 0.0
        %6155 = vmatpush1.msra.mxu0 0.0
        %6156 = vmatprep.subr.mxu0 0.0
        %6157 = vmatpush1.msra.mxu0 0.0
        %6158 = vmatprep.subr.mxu0 0.0
        %6159 = vmatpush1.msra.mxu0 0.0
        %6160 = vmatprep.subr.mxu0 0.0
        %6161 = vmatpush1.msra.mxu0 0.0
        %6162 = vmatprep.subr.mxu0 0.0
        %6163 = vmatpush1.msra.mxu0 0.0
        %6164 = vmatprep.subr.mxu0 0.0
        %6165 = vmatpush1.msra.mxu0 0.0
        %6166 = vmatprep.subr.mxu0 0.0
        %6167 = vmatpush1.msra.mxu0 0.0
        %6168 = vmatprep.subr.mxu0 0.0
        %6169 = vmatpush1.msra.mxu0 0.0
        %6170 = vmatprep.subr.mxu0 0.0
        %6171 = vmatpush1.msra.mxu0 0.0
        %6172 = vmatprep.subr.mxu0 0.0
        %6173 = vmatpush1.msra.mxu0 0.0
        %6174 = vmatprep.subr.mxu0 0.0
        %6175 = vmatpush1.msra.mxu0 0.0
        %6176 = vmatprep.subr.mxu0 0.0
        %6177 = vmatpush1.msra.mxu0 0.0
        %6178 = vmatprep.subr.mxu0 0.0
        %6179 = vmatpush1.msra.mxu0 0.0
        %6180 = vmatprep.subr.mxu0 0.0
        %6181 = vmatpush1.msra.mxu0 0.0
        %6182 = vmatprep.subr.mxu0 0.0
        %6183 = vmatpush1.msra.mxu0 0.0
        %6184 = vmatprep.subr.mxu0 0.0
        %6185 = vmatpush1.msra.mxu0 0.0
        %6186 = vmatprep.subr.mxu0 0.0
        %6187 = vmatpush1.msra.mxu0 0.0
        %6188 = vmatprep.subr.mxu0 0.0
        %6189 = vmatpush1.msra.mxu0 0.0
        %6190 = vmatprep.subr.mxu0 0.0
        %6191 = vmatpush1.msra.mxu0 0.0
        %6192 = vmatprep.subr.mxu0 0.0
        %6193 = vmatpush1.msra.mxu0 0.0
        %6194 = vmatprep.subr.mxu0 0.0
        %6195 = vmatpush1.msra.mxu0 0.0
        %6196 = vmatprep.subr.mxu0 0.0
        %6197 = vmatpush1.msra.mxu0 0.0
        %6198 = vmatprep.subr.mxu0 0.0
        %6199 = vmatpush1.msra.mxu0 0.0
        %6200 = vmatprep.subr.mxu0 0.0
        %6201 = vmatpush1.msra.mxu0 0.0
        %6202 = vmatprep.subr.mxu0 0.0
        %6203 = vmatpush1.msra.mxu0 0.0
        %6204 = vmatprep.subr.mxu0 0.0
        %6205 = vmatpush1.msra.mxu0 0.0
        %6206 = vmatprep.subr.mxu0 0.0
        %6207 = vmatpush1.msra.mxu0 0.0
        %6208 = vmatprep.subr.mxu0 0.0
        %6209 = vmatpush1.msra.mxu0 0.0
        %6210 = vmatprep.mubr.f32.mxu0 0.0
        %6211 = vmatmul.mubr.f32.gmra.mrb[0].mxu0 %v5779
        %v6212 = vpop.f32.mrb[0].mxu0
        %v6213 = vadd.f32 %v5761, %v6212
        %v6214 = vpop.f32.mrb[0].mxu0
        %v6215 = vadd.f32 %v5761, %v6214
        %6216 = vmatprep.mubr.f32.mxu0 0.0
        %6217 = vmatmul.mubr.f32.gmra.mrb[0].mxu0 %v5782
        %v6218 = vpop.f32.mrb[0].mxu0
        %v6219 = vadd.f32 %v5766, %v6218
        %v6220 = vpop.f32.mrb[0].mxu0
        %v6221 = vadd.f32 %v5766, %v6220
        %6222 = vmatprep.mubr.f32.mxu0 0.0
        %6223 = vmatmul.mubr.f32.gmra.mrb[0].mxu0 %v5785
        %v6224 = vpop.f32.mrb[0].mxu0
        %v6225 = vadd.f32 %v5771, %v6224
        %v6226 = vpop.f32.mrb[0].mxu0
        %v6227 = vadd.f32 %v5771, %v6226
        %6228 = vmatprep.mubr.f32.mxu0 0.0
        %6229 = vmatmul.mubr.f32.gmra.mrb[0].mxu0 %v5788
        %v6230 = vpop.f32.mrb[0].mxu0
        %v6231 = vadd.f32 %v5776, %v6230
        %v6232 = vpop.f32.mrb[0].mxu0
        %v6233 = vadd.f32 %v5776, %v6232
        %6234 = vdwg.mxu0
        %6235 = vmatprep.subr.mxu0 %v5695
        %6236 = vmatpush1.msra.mxu0 %v5694
        %6237 = vmatprep.subr.mxu0 %v5711
        %6238 = vmatpush1.msra.mxu0 %v5710
        %6239 = vmatprep.subr.mxu0 %v5727
        %6240 = vmatpush1.msra.mxu0 %v5726
        %6241 = vmatprep.subr.mxu0 %v5743
        %6242 = vmatpush1.msra.mxu0 %v5742
        %6243 = vmatprep.subr.mxu0 0.0
        %6244 = vmatpush1.msra.mxu0 0.0
        %6245 = vmatprep.subr.mxu0 0.0
        %6246 = vmatpush1.msra.mxu0 0.0
        %6247 = vmatprep.subr.mxu0 0.0
        %6248 = vmatpush1.msra.mxu0 0.0
        %6249 = vmatprep.subr.mxu0 0.0
        %6250 = vmatpush1.msra.mxu0 0.0
        %6251 = vmatprep.subr.mxu0 0.0
        %6252 = vmatpush1.msra.mxu0 0.0
        %6253 = vmatprep.subr.mxu0 0.0
        %6254 = vmatpush1.msra.mxu0 0.0
        %6255 = vmatprep.subr.mxu0 0.0
        %6256 = vmatpush1.msra.mxu0 0.0
        %6257 = vmatprep.subr.mxu0 0.0
        %6258 = vmatpush1.msra.mxu0 0.0
        %6259 = vmatprep.subr.mxu0 0.0
        %6260 = vmatpush1.msra.mxu0 0.0
        %6261 = vmatprep.subr.mxu0 0.0
        %6262 = vmatpush1.msra.mxu0 0.0
        %6263 = vmatprep.subr.mxu0 0.0
        %6264 = vmatpush1.msra.mxu0 0.0
        %6265 = vmatprep.subr.mxu0 0.0
        %6266 = vmatpush1.msra.mxu0 0.0
        %6267 = vmatprep.subr.mxu0 0.0
        %6268 = vmatpush1.msra.mxu0 0.0
        %6269 = vmatprep.subr.mxu0 0.0
        %6270 = vmatpush1.msra.mxu0 0.0
        %6271 = vmatprep.subr.mxu0 0.0
        %6272 = vmatpush1.msra.mxu0 0.0
        %6273 = vmatprep.subr.mxu0 0.0
        %6274 = vmatpush1.msra.mxu0 0.0
        %6275 = vmatprep.subr.mxu0 0.0
        %6276 = vmatpush1.msra.mxu0 0.0
        %6277 = vmatprep.subr.mxu0 0.0
        %6278 = vmatpush1.msra.mxu0 0.0
        %6279 = vmatprep.subr.mxu0 0.0
        %6280 = vmatpush1.msra.mxu0 0.0
        %6281 = vmatprep.subr.mxu0 0.0
        %6282 = vmatpush1.msra.mxu0 0.0
        %6283 = vmatprep.subr.mxu0 0.0
        %6284 = vmatpush1.msra.mxu0 0.0
        %6285 = vmatprep.subr.mxu0 0.0
        %6286 = vmatpush1.msra.mxu0 0.0
        %6287 = vmatprep.subr.mxu0 0.0
        %6288 = vmatpush1.msra.mxu0 0.0
        %6289 = vmatprep.subr.mxu0 0.0
        %6290 = vmatpush1.msra.mxu0 0.0
        %6291 = vmatprep.subr.mxu0 0.0
        %6292 = vmatpush1.msra.mxu0 0.0
        %6293 = vmatprep.subr.mxu0 0.0
        %6294 = vmatpush1.msra.mxu0 0.0
        %6295 = vmatprep.subr.mxu0 0.0
        %6296 = vmatpush1.msra.mxu0 0.0
        %6297 = vmatprep.subr.mxu0 0.0
        %6298 = vmatpush1.msra.mxu0 0.0
        %6299 = vmatprep.mubr.f32.mxu0 0.0
        %6300 = vmatmul.mubr.f32.gmra.mrb[0].mxu0 %v5779
        %v6301 = vpop.f32.mrb[0].mxu0
        %v6302 = vadd.f32 %v5761, %v6301
        %v6303 = vpop.f32.mrb[0].mxu0
        %v6304 = vadd.f32 %v5761, %v6303
        %6305 = vmatprep.mubr.f32.mxu0 0.0
        %6306 = vmatmul.mubr.f32.gmra.mrb[0].mxu0 %v5782
        %v6307 = vpop.f32.mrb[0].mxu0
        %v6308 = vadd.f32 %v5766, %v6307
        %v6309 = vpop.f32.mrb[0].mxu0
        %v6310 = vadd.f32 %v5766, %v6309
        %6311 = vmatprep.mubr.f32.mxu0 0.0
        %6312 = vmatmul.mubr.f32.gmra.mrb[0].mxu0 %v5785
        %v6313 = vpop.f32.mrb[0].mxu0
        %v6314 = vadd.f32 %v5771, %v6313
        %v6315 = vpop.f32.mrb[0].mxu0
        %v6316 = vadd.f32 %v5771, %v6315
        %6317 = vmatprep.mubr.f32.mxu0 0.0
        %6318 = vmatmul.mubr.f32.gmra.mrb[0].mxu0 %v5788
        %v6319 = vpop.f32.mrb[0].mxu0
        %v6320 = vadd.f32 %v5776, %v6319
        %v6321 = vpop.f32.mrb[0].mxu0
        %v6322 = vadd.f32 %v5776, %v6321
        %6323 = vdwg.mxu0
        %6324 = vmatprep.subr.mxu0 %v5697
        %6325 = vmatpush1.msra.mxu0 %v5696
        %6326 = vmatprep.subr.mxu0 %v5713
        %6327 = vmatpush1.msra.mxu0 %v5712
        %6328 = vmatprep.subr.mxu0 %v5729
        %6329 = vmatpush1.msra.mxu0 %v5728
        %6330 = vmatprep.subr.mxu0 %v5745
        %6331 = vmatpush1.msra.mxu0 %v5744
        %6332 = vmatprep.subr.mxu0 0.0
        %6333 = vmatpush1.msra.mxu0 0.0
        %6334 = vmatprep.subr.mxu0 0.0
        %6335 = vmatpush1.msra.mxu0 0.0
        %6336 = vmatprep.subr.mxu0 0.0
        %6337 = vmatpush1.msra.mxu0 0.0
        %6338 = vmatprep.subr.mxu0 0.0
        %6339 = vmatpush1.msra.mxu0 0.0
        %6340 = vmatprep.subr.mxu0 0.0
        %6341 = vmatpush1.msra.mxu0 0.0
        %6342 = vmatprep.subr.mxu0 0.0
        %6343 = vmatpush1.msra.mxu0 0.0
        %6344 = vmatprep.subr.mxu0 0.0
        %6345 = vmatpush1.msra.mxu0 0.0
        %6346 = vmatprep.subr.mxu0 0.0
        %6347 = vmatpush1.msra.mxu0 0.0
        %6348 = vmatprep.subr.mxu0 0.0
        %6349 = vmatpush1.msra.mxu0 0.0
        %6350 = vmatprep.subr.mxu0 0.0
        %6351 = vmatpush1.msra.mxu0 0.0
        %6352 = vmatprep.subr.mxu0 0.0
        %6353 = vmatpush1.msra.mxu0 0.0
        %6354 = vmatprep.subr.mxu0 0.0
        %6355 = vmatpush1.msra.mxu0 0.0
        %6356 = vmatprep.subr.mxu0 0.0
        %6357 = vmatpush1.msra.mxu0 0.0
        %6358 = vmatprep.subr.mxu0 0.0
        %6359 = vmatpush1.msra.mxu0 0.0
        %6360 = vmatprep.subr.mxu0 0.0
        %6361 = vmatpush1.msra.mxu0 0.0
        %6362 = vmatprep.subr.mxu0 0.0
        %6363 = vmatpush1.msra.mxu0 0.0
        %6364 = vmatprep.subr.mxu0 0.0
        %6365 = vmatpush1.msra.mxu0 0.0
        %6366 = vmatprep.subr.mxu0 0.0
        %6367 = vmatpush1.msra.mxu0 0.0
        %6368 = vmatprep.subr.mxu0 0.0
        %6369 = vmatpush1.msra.mxu0 0.0
        %6370 = vmatprep.subr.mxu0 0.0
        %6371 = vmatpush1.msra.mxu0 0.0
        %6372 = vmatprep.subr.mxu0 0.0
        %6373 = vmatpush1.msra.mxu0 0.0
        %6374 = vmatprep.subr.mxu0 0.0
        %6375 = vmatpush1.msra.mxu0 0.0
        %6376 = vmatprep.subr.mxu0 0.0
        %6377 = vmatpush1.msra.mxu0 0.0
        %6378 = vmatprep.subr.mxu0 0.0
        %6379 = vmatpush1.msra.mxu0 0.0
        %6380 = vmatprep.subr.mxu0 0.0
        %6381 = vmatpush1.msra.mxu0 0.0
        %6382 = vmatprep.subr.mxu0 0.0
        %6383 = vmatpush1.msra.mxu0 0.0
        %6384 = vmatprep.subr.mxu0 0.0
        %6385 = vmatpush1.msra.mxu0 0.0
        %6386 = vmatprep.subr.mxu0 0.0
        %6387 = vmatpush1.msra.mxu0 0.0
        %6388 = vmatprep.mubr.f32.mxu0 0.0
        %6389 = vmatmul.mubr.f32.gmra.mrb[0].mxu0 %v5779
        %v6390 = vpop.f32.mrb[0].mxu0
        %v6391 = vadd.f32 %v5761, %v6390
        %v6392 = vpop.f32.mrb[0].mxu0
        %v6393 = vadd.f32 %v5761, %v6392
        %6394 = vmatprep.mubr.f32.mxu0 0.0
        %6395 = vmatmul.mubr.f32.gmra.mrb[0].mxu0 %v5782
        %v6396 = vpop.f32.mrb[0].mxu0
        %v6397 = vadd.f32 %v5766, %v6396
        %v6398 = vpop.f32.mrb[0].mxu0
        %v6399 = vadd.f32 %v5766, %v6398
        %6400 = vmatprep.mubr.f32.mxu0 0.0
        %6401 = vmatmul.mubr.f32.gmra.mrb[0].mxu0 %v5785
        %v6402 = vpop.f32.mrb[0].mxu0
        %v6403 = vadd.f32 %v5771, %v6402
        %v6404 = vpop.f32.mrb[0].mxu0
        %v6405 = vadd.f32 %v5771, %v6404
        %6406 = vmatprep.mubr.f32.mxu0 0.0
        %6407 = vmatmul.mubr.f32.gmra.mrb[0].mxu0 %v5788
        %v6408 = vpop.f32.mrb[0].mxu0
        %v6409 = vadd.f32 %v5776, %v6408
        %v6410 = vpop.f32.mrb[0].mxu0
        %v6411 = vadd.f32 %v5776, %v6410
        %6412 = vdwg.mxu0
        %6413 = vmatprep.subr.mxu0 %v5699
        %6414 = vmatpush1.msra.mxu0 %v5698
        %6415 = vmatprep.subr.mxu0 %v5715
        %6416 = vmatpush1.msra.mxu0 %v5714
        %6417 = vmatprep.subr.mxu0 %v5731
        %6418 = vmatpush1.msra.mxu0 %v5730
        %6419 = vmatprep.subr.mxu0 %v5747
        %6420 = vmatpush1.msra.mxu0 %v5746
        %6421 = vmatprep.subr.mxu0 0.0
        %6422 = vmatpush1.msra.mxu0 0.0
        %6423 = vmatprep.subr.mxu0 0.0
        %6424 = vmatpush1.msra.mxu0 0.0
        %6425 = vmatprep.subr.mxu0 0.0
        %6426 = vmatpush1.msra.mxu0 0.0
        %6427 = vmatprep.subr.mxu0 0.0
        %6428 = vmatpush1.msra.mxu0 0.0
        %6429 = vmatprep.subr.mxu0 0.0
        %6430 = vmatpush1.msra.mxu0 0.0
        %6431 = vmatprep.subr.mxu0 0.0
        %6432 = vmatpush1.msra.mxu0 0.0
        %6433 = vmatprep.subr.mxu0 0.0
        %6434 = vmatpush1.msra.mxu0 0.0
        %6435 = vmatprep.subr.mxu0 0.0
        %6436 = vmatpush1.msra.mxu0 0.0
        %6437 = vmatprep.subr.mxu0 0.0
        %6438 = vmatpush1.msra.mxu0 0.0
        %6439 = vmatprep.subr.mxu0 0.0
        %6440 = vmatpush1.msra.mxu0 0.0
        %6441 = vmatprep.subr.mxu0 0.0
        %6442 = vmatpush1.msra.mxu0 0.0
        %6443 = vmatprep.subr.mxu0 0.0
        %6444 = vmatpush1.msra.mxu0 0.0
        %6445 = vmatprep.subr.mxu0 0.0
        %6446 = vmatpush1.msra.mxu0 0.0
        %6447 = vmatprep.subr.mxu0 0.0
        %6448 = vmatpush1.msra.mxu0 0.0
        %6449 = vmatprep.subr.mxu0 0.0
        %6450 = vmatpush1.msra.mxu0 0.0
        %6451 = vmatprep.subr.mxu0 0.0
        %6452 = vmatpush1.msra.mxu0 0.0
        %6453 = vmatprep.subr.mxu0 0.0
        %6454 = vmatpush1.msra.mxu0 0.0
        %6455 = vmatprep.subr.mxu0 0.0
        %6456 = vmatpush1.msra.mxu0 0.0
        %6457 = vmatprep.subr.mxu0 0.0
        %6458 = vmatpush1.msra.mxu0 0.0
        %6459 = vmatprep.subr.mxu0 0.0
        %6460 = vmatpush1.msra.mxu0 0.0
        %6461 = vmatprep.subr.mxu0 0.0
        %6462 = vmatpush1.msra.mxu0 0.0
        %6463 = vmatprep.subr.mxu0 0.0
        %6464 = vmatpush1.msra.mxu0 0.0
        %6465 = vmatprep.subr.mxu0 0.0
        %6466 = vmatpush1.msra.mxu0 0.0
        %6467 = vmatprep.subr.mxu0 0.0
        %6468 = vmatpush1.msra.mxu0 0.0
        %6469 = vmatprep.subr.mxu0 0.0
        %6470 = vmatpush1.msra.mxu0 0.0
        %6471 = vmatprep.subr.mxu0 0.0
        %6472 = vmatpush1.msra.mxu0 0.0
        %6473 = vmatprep.subr.mxu0 0.0
        %6474 = vmatpush1.msra.mxu0 0.0
        %6475 = vmatprep.subr.mxu0 0.0
        %6476 = vmatpush1.msra.mxu0 0.0
        %6477 = vmatprep.mubr.f32.mxu0 0.0
        %6478 = vmatmul.mubr.f32.gmra.mrb[0].mxu0 %v5779
        %v6479 = vpop.f32.mrb[0].mxu0
        %v6480 = vadd.f32 %v5761, %v6479
        %v6481 = vpop.f32.mrb[0].mxu0
        %v6482 = vadd.f32 %v5761, %v6481
        %6483 = vmatprep.mubr.f32.mxu0 0.0
        %6484 = vmatmul.mubr.f32.gmra.mrb[0].mxu0 %v5782
        %v6485 = vpop.f32.mrb[0].mxu0
        %v6486 = vadd.f32 %v5766, %v6485
        %v6487 = vpop.f32.mrb[0].mxu0
        %v6488 = vadd.f32 %v5766, %v6487
        %6489 = vmatprep.mubr.f32.mxu0 0.0
        %6490 = vmatmul.mubr.f32.gmra.mrb[0].mxu0 %v5785
        %v6491 = vpop.f32.mrb[0].mxu0
        %v6492 = vadd.f32 %v5771, %v6491
        %v6493 = vpop.f32.mrb[0].mxu0
        %v6494 = vadd.f32 %v5771, %v6493
        %6495 = vmatprep.mubr.f32.mxu0 0.0
        %6496 = vmatmul.mubr.f32.gmra.mrb[0].mxu0 %v5788
        %v6497 = vpop.f32.mrb[0].mxu0
        %v6498 = vadd.f32 %v5776, %v6497
        %v6499 = vpop.f32.mrb[0].mxu0
        %v6500 = vadd.f32 %v5776, %v6499
        %6501 = vdwg.mxu0
        %v6502 = vmul.f32 %v5857, 100.0
        %v6503 = vmul.f32 %v5859, 100.0
        %v6504 = vmul.f32 %v5946, 100.0
        %v6505 = vmul.f32 %v5948, 100.0
        %v6506 = vmul.f32 %v6035, 100.0
        %v6507 = vmul.f32 %v6037, 100.0
        %v6508 = vmul.f32 %v6124, 100.0
        %v6509 = vmul.f32 %v6126, 100.0
        %v6510 = vmul.f32 %v6213, 100.0
        %v6511 = vmul.f32 %v6215, 100.0
        %v6512 = vmul.f32 %v6302, 100.0
        %v6513 = vmul.f32 %v6304, 100.0
        %v6514 = vmul.f32 %v6391, 100.0
        %v6515 = vmul.f32 %v6393, 100.0
        %v6516 = vmul.f32 %v6480, 100.0
        %v6517 = vmul.f32 %v6482, 100.0
        %v6518 = vmul.f32 %v5863, 100.0
        %v6519 = vmul.f32 %v5865, 100.0
        %v6520 = vmul.f32 %v5952, 100.0
        %v6521 = vmul.f32 %v5954, 100.0
        %v6522 = vmul.f32 %v6041, 100.0
        %v6523 = vmul.f32 %v6043, 100.0
        %v6524 = vmul.f32 %v6130, 100.0
        %v6525 = vmul.f32 %v6132, 100.0
        %v6526 = vmul.f32 %v6219, 100.0
        %v6527 = vmul.f32 %v6221, 100.0
        %v6528 = vmul.f32 %v6308, 100.0
        %v6529 = vmul.f32 %v6310, 100.0
        %v6530 = vmul.f32 %v6397, 100.0
        %v6531 = vmul.f32 %v6399, 100.0
        %v6532 = vmul.f32 %v6486, 100.0
        %v6533 = vmul.f32 %v6488, 100.0
        %v6534 = vmul.f32 %v5869, 100.0
        %v6535 = vmul.f32 %v5871, 100.0
        %v6536 = vmul.f32 %v5958, 100.0
        %v6537 = vmul.f32 %v5960, 100.0
        %v6538 = vmul.f32 %v6047, 100.0
        %v6539 = vmul.f32 %v6049, 100.0
        %v6540 = vmul.f32 %v6136, 100.0
        %v6541 = vmul.f32 %v6138, 100.0
        %v6542 = vmul.f32 %v6225, 100.0
        %v6543 = vmul.f32 %v6227, 100.0
        %v6544 = vmul.f32 %v6314, 100.0
        %v6545 = vmul.f32 %v6316, 100.0
        %v6546 = vmul.f32 %v6403, 100.0
        %v6547 = vmul.f32 %v6405, 100.0
        %v6548 = vmul.f32 %v6492, 100.0
        %v6549 = vmul.f32 %v6494, 100.0
        %v6550 = vmul.f32 %v5875, 100.0
        %v6551 = vmul.f32 %v5877, 100.0
        %v6552 = vmul.f32 %v5964, 100.0
        %v6553 = vmul.f32 %v5966, 100.0
        %v6554 = vmul.f32 %v6053, 100.0
        %v6555 = vmul.f32 %v6055, 100.0
        %v6556 = vmul.f32 %v6142, 100.0
        %v6557 = vmul.f32 %v6144, 100.0
        %v6558 = vmul.f32 %v6231, 100.0
        %v6559 = vmul.f32 %v6233, 100.0
        %v6560 = vmul.f32 %v6320, 100.0
        %v6561 = vmul.f32 %v6322, 100.0
        %v6562 = vmul.f32 %v6409, 100.0
        %v6563 = vmul.f32 %v6411, 100.0
        %v6564 = vmul.f32 %v6498, 100.0
        %v6565 = vmul.f32 %v6500, 100.0
        %vm6566 = vcmp.gt.f32.partialorder %v6502, 20.0
        %vm6567 = vcmp.gt.f32.partialorder %v6503, 20.0
        %vm6568 = vcmp.gt.f32.partialorder %v6504, 20.0
        %vm6569 = vcmp.gt.f32.partialorder %v6505, 20.0
        %vm6570 = vcmp.gt.f32.partialorder %v6506, 20.0
        %vm6571 = vcmp.gt.f32.partialorder %v6507, 20.0
        %vm6572 = vcmp.gt.f32.partialorder %v6508, 20.0
        %vm6573 = vcmp.gt.f32.partialorder %v6509, 20.0
        %vm6574 = vcmp.gt.f32.partialorder %v6510, 20.0
        %vm6575 = vcmp.gt.f32.partialorder %v6511, 20.0
        %vm6576 = vcmp.gt.f32.partialorder %v6512, 20.0
        %vm6577 = vcmp.gt.f32.partialorder %v6513, 20.0
        %vm6578 = vcmp.gt.f32.partialorder %v6514, 20.0
        %vm6579 = vcmp.gt.f32.partialorder %v6515, 20.0
        %vm6580 = vcmp.gt.f32.partialorder %v6516, 20.0
        %vm6581 = vcmp.gt.f32.partialorder %v6517, 20.0
        %vm6582 = vcmp.gt.f32.partialorder %v6518, 20.0
        %vm6583 = vcmp.gt.f32.partialorder %v6519, 20.0
        %vm6584 = vcmp.gt.f32.partialorder %v6520, 20.0
        %vm6585 = vcmp.gt.f32.partialorder %v6521, 20.0
        %vm6586 = vcmp.gt.f32.partialorder %v6522, 20.0
        %vm6587 = vcmp.gt.f32.partialorder %v6523, 20.0
        %vm6588 = vcmp.gt.f32.partialorder %v6524, 20.0
        %vm6589 = vcmp.gt.f32.partialorder %v6525, 20.0
        %vm6590 = vcmp.gt.f32.partialorder %v6526, 20.0
        %vm6591 = vcmp.gt.f32.partialorder %v6527, 20.0
        %vm6592 = vcmp.gt.f32.partialorder %v6528, 20.0
        %vm6593 = vcmp.gt.f32.partialorder %v6529, 20.0
        %vm6594 = vcmp.gt.f32.partialorder %v6530, 20.0
        %vm6595 = vcmp.gt.f32.partialorder %v6531, 20.0
        %vm6596 = vcmp.gt.f32.partialorder %v6532, 20.0
        %vm6597 = vcmp.gt.f32.partialorder %v6533, 20.0
        %vm6598 = vcmp.gt.f32.partialorder %v6534, 20.0
        %vm6599 = vcmp.gt.f32.partialorder %v6535, 20.0
        %vm6600 = vcmp.gt.f32.partialorder %v6536, 20.0
        %vm6601 = vcmp.gt.f32.partialorder %v6537, 20.0
        %vm6602 = vcmp.gt.f32.partialorder %v6538, 20.0
        %vm6603 = vcmp.gt.f32.partialorder %v6539, 20.0
        %vm6604 = vcmp.gt.f32.partialorder %v6540, 20.0
        %vm6605 = vcmp.gt.f32.partialorder %v6541, 20.0
        %vm6606 = vcmp.gt.f32.partialorder %v6542, 20.0
        %vm6607 = vcmp.gt.f32.partialorder %v6543, 20.0
        %vm6608 = vcmp.gt.f32.partialorder %v6544, 20.0
        %vm6609 = vcmp.gt.f32.partialorder %v6545, 20.0
        %vm6610 = vcmp.gt.f32.partialorder %v6546, 20.0
        %vm6611 = vcmp.gt.f32.partialorder %v6547, 20.0
        %vm6612 = vcmp.gt.f32.partialorder %v6548, 20.0
        %vm6613 = vcmp.gt.f32.partialorder %v6549, 20.0
        %vm6614 = vcmp.gt.f32.partialorder %v6550, 20.0
        %vm6615 = vcmp.gt.f32.partialorder %v6551, 20.0
        %vm6616 = vcmp.gt.f32.partialorder %v6552, 20.0
        %vm6617 = vcmp.gt.f32.partialorder %v6553, 20.0
        %vm6618 = vcmp.gt.f32.partialorder %v6554, 20.0
        %vm6619 = vcmp.gt.f32.partialorder %v6555, 20.0
        %vm6620 = vcmp.gt.f32.partialorder %v6556, 20.0
        %vm6621 = vcmp.gt.f32.partialorder %v6557, 20.0
        %vm6622 = vcmp.gt.f32.partialorder %v6558, 20.0
        %vm6623 = vcmp.gt.f32.partialorder %v6559, 20.0
        %vm6624 = vcmp.gt.f32.partialorder %v6560, 20.0
        %vm6625 = vcmp.gt.f32.partialorder %v6561, 20.0
        %vm6626 = vcmp.gt.f32.partialorder %v6562, 20.0
        %vm6627 = vcmp.gt.f32.partialorder %v6563, 20.0
        %vm6628 = vcmp.gt.f32.partialorder %v6564, 20.0
        %vm6629 = vcmp.gt.f32.partialorder %v6565, 20.0
        %v6630 = vmul.f32 %v6502, 1.442695
        %v6631 = vpow.pop %v6630
        %v6632 = vmul.f32 %v6503, 1.442695
        %v6633 = vpow.pop %v6632
        %v6634 = vmul.f32 %v6504, 1.442695
        %v6635 = vpow.pop %v6634
        %v6636 = vmul.f32 %v6505, 1.442695
        %v6637 = vpow.pop %v6636
        %v6638 = vmul.f32 %v6506, 1.442695
        %v6639 = vpow.pop %v6638
        %v6640 = vmul.f32 %v6507, 1.442695
        %v6641 = vpow.pop %v6640
        %v6642 = vmul.f32 %v6508, 1.442695
        %v6643 = vpow.pop %v6642
        %v6644 = vmul.f32 %v6509, 1.442695
        %v6645 = vpow.pop %v6644
        %v6646 = vmul.f32 %v6510, 1.442695
        %v6647 = vpow.pop %v6646
        %v6648 = vmul.f32 %v6511, 1.442695
        %v6649 = vpow.pop %v6648
        %v6650 = vmul.f32 %v6512, 1.442695
        %v6651 = vpow.pop %v6650
        %v6652 = vmul.f32 %v6513, 1.442695
        %v6653 = vpow.pop %v6652
        %v6654 = vmul.f32 %v6514, 1.442695
        %v6655 = vpow.pop %v6654
        %v6656 = vmul.f32 %v6515, 1.442695
        %v6657 = vpow.pop %v6656
        %v6658 = vmul.f32 %v6516, 1.442695
        %v6659 = vpow.pop %v6658
        %v6660 = vmul.f32 %v6517, 1.442695
        %v6661 = vpow.pop %v6660
        %v6662 = vmul.f32 %v6518, 1.442695
        %v6663 = vpow.pop %v6662
        %v6664 = vmul.f32 %v6519, 1.442695
        %v6665 = vpow.pop %v6664
        %v6666 = vmul.f32 %v6520, 1.442695
        %v6667 = vpow.pop %v6666
        %v6668 = vmul.f32 %v6521, 1.442695
        %v6669 = vpow.pop %v6668
        %v6670 = vmul.f32 %v6522, 1.442695
        %v6671 = vpow.pop %v6670
        %v6672 = vmul.f32 %v6523, 1.442695
        %v6673 = vpow.pop %v6672
        %v6674 = vmul.f32 %v6524, 1.442695
        %v6675 = vpow.pop %v6674
        %v6676 = vmul.f32 %v6525, 1.442695
        %v6677 = vpow.pop %v6676
        %v6678 = vmul.f32 %v6526, 1.442695
        %v6679 = vpow.pop %v6678
        %v6680 = vmul.f32 %v6527, 1.442695
        %v6681 = vpow.pop %v6680
        %v6682 = vmul.f32 %v6528, 1.442695
        %v6683 = vpow.pop %v6682
        %v6684 = vmul.f32 %v6529, 1.442695
        %v6685 = vpow.pop %v6684
        %v6686 = vmul.f32 %v6530, 1.442695
        %v6687 = vpow.pop %v6686
        %v6688 = vmul.f32 %v6531, 1.442695
        %v6689 = vpow.pop %v6688
        %v6690 = vmul.f32 %v6532, 1.442695
        %v6691 = vpow.pop %v6690
        %v6692 = vmul.f32 %v6533, 1.442695
        %v6693 = vpow.pop %v6692
        %v6694 = vmul.f32 %v6534, 1.442695
        %v6695 = vpow.pop %v6694
        %v6696 = vmul.f32 %v6535, 1.442695
        %v6697 = vpow.pop %v6696
        %v6698 = vmul.f32 %v6536, 1.442695
        %v6699 = vpow.pop %v6698
        %v6700 = vmul.f32 %v6537, 1.442695
        %v6701 = vpow.pop %v6700
        %v6702 = vmul.f32 %v6538, 1.442695
        %v6703 = vpow.pop %v6702
        %v6704 = vmul.f32 %v6539, 1.442695
        %v6705 = vpow.pop %v6704
        %v6706 = vmul.f32 %v6540, 1.442695
        %v6707 = vpow.pop %v6706
        %v6708 = vmul.f32 %v6541, 1.442695
        %v6709 = vpow.pop %v6708
        %v6710 = vmul.f32 %v6542, 1.442695
        %v6711 = vpow.pop %v6710
        %v6712 = vmul.f32 %v6543, 1.442695
        %v6713 = vpow.pop %v6712
        %v6714 = vmul.f32 %v6544, 1.442695
        %v6715 = vpow.pop %v6714
        %v6716 = vmul.f32 %v6545, 1.442695
        %v6717 = vpow.pop %v6716
        %v6718 = vmul.f32 %v6546, 1.442695
        %v6719 = vpow.pop %v6718
        %v6720 = vmul.f32 %v6547, 1.442695
        %v6721 = vpow.pop %v6720
        %v6722 = vmul.f32 %v6548, 1.442695
        %v6723 = vpow.pop %v6722
        %v6724 = vmul.f32 %v6549, 1.442695
        %v6725 = vpow.pop %v6724
        %v6726 = vmul.f32 %v6550, 1.442695
        %v6727 = vpow.pop %v6726
        %v6728 = vmul.f32 %v6551, 1.442695
        %v6729 = vpow.pop %v6728
        %v6730 = vmul.f32 %v6552, 1.442695
        %v6731 = vpow.pop %v6730
        %v6732 = vmul.f32 %v6553, 1.442695
        %v6733 = vpow.pop %v6732
        %v6734 = vmul.f32 %v6554, 1.442695
        %v6735 = vpow.pop %v6734
        %v6736 = vmul.f32 %v6555, 1.442695
        %v6737 = vpow.pop %v6736
        %v6738 = vmul.f32 %v6556, 1.442695
        %v6739 = vpow.pop %v6738
        %v6740 = vmul.f32 %v6557, 1.442695
        %v6741 = vpow.pop %v6740
        %v6742 = vmul.f32 %v6558, 1.442695
        %v6743 = vpow.pop %v6742
        %v6744 = vmul.f32 %v6559, 1.442695
        %v6745 = vpow.pop %v6744
        %v6746 = vmul.f32 %v6560, 1.442695
        %v6747 = vpow.pop %v6746
        %v6748 = vmul.f32 %v6561, 1.442695
        %v6749 = vpow.pop %v6748
        %v6750 = vmul.f32 %v6562, 1.442695
        %v6751 = vpow.pop %v6750
        %v6752 = vmul.f32 %v6563, 1.442695
        %v6753 = vpow.pop %v6752
        %v6754 = vmul.f32 %v6564, 1.442695
        %v6755 = vpow.pop %v6754
        %v6756 = vmul.f32 %v6565, 1.442695
        %v6757 = vpow.pop %v6756
        %v6758 = vadd.f32 %v6631, 1.0
        %v6759 = vlog2.pop %v6758
        %v6760 = vmul.f32 %v6759, 0.6931472
        %v6761 = vmul.f32 -0.5, %v6631
        %v6762 = vadd.f32 %v6761, 1.0
        %v6763 = vmul.f32 %v6762, %v6631
        %v6764 = vand.u32 2147483647, %v6631
        %vm6765 = vcmp.lt.f32.partialorder %v6764, 0.0004427343
        %v6766 = vsel %vm6765, %v6763, %v6760
        %v6767 = vadd.f32 %v6633, 1.0
        %v6768 = vlog2.pop %v6767
        %v6769 = vmul.f32 %v6768, 0.6931472
        %v6770 = vmul.f32 -0.5, %v6633
        %v6771 = vadd.f32 %v6770, 1.0
        %v6772 = vmul.f32 %v6771, %v6633
        %v6773 = vand.u32 2147483647, %v6633
        %vm6774 = vcmp.lt.f32.partialorder %v6773, 0.0004427343
        %v6775 = vsel %vm6774, %v6772, %v6769
        %v6776 = vadd.f32 %v6635, 1.0
        %v6777 = vlog2.pop %v6776
        %v6778 = vmul.f32 %v6777, 0.6931472
        %v6779 = vmul.f32 -0.5, %v6635
        %v6780 = vadd.f32 %v6779, 1.0
        %v6781 = vmul.f32 %v6780, %v6635
        %v6782 = vand.u32 2147483647, %v6635
        %vm6783 = vcmp.lt.f32.partialorder %v6782, 0.0004427343
        %v6784 = vsel %vm6783, %v6781, %v6778
        %v6785 = vadd.f32 %v6637, 1.0
        %v6786 = vlog2.pop %v6785
        %v6787 = vmul.f32 %v6786, 0.6931472
        %v6788 = vmul.f32 -0.5, %v6637
        %v6789 = vadd.f32 %v6788, 1.0
        %v6790 = vmul.f32 %v6789, %v6637
        %v6791 = vand.u32 2147483647, %v6637
        %vm6792 = vcmp.lt.f32.partialorder %v6791, 0.0004427343
        %v6793 = vsel %vm6792, %v6790, %v6787
        %v6794 = vadd.f32 %v6639, 1.0
        %v6795 = vlog2.pop %v6794
        %v6796 = vmul.f32 %v6795, 0.6931472
        %v6797 = vmul.f32 -0.5, %v6639
        %v6798 = vadd.f32 %v6797, 1.0
        %v6799 = vmul.f32 %v6798, %v6639
        %v6800 = vand.u32 2147483647, %v6639
        %vm6801 = vcmp.lt.f32.partialorder %v6800, 0.0004427343
        %v6802 = vsel %vm6801, %v6799, %v6796
        %v6803 = vadd.f32 %v6641, 1.0
        %v6804 = vlog2.pop %v6803
        %v6805 = vmul.f32 %v6804, 0.6931472
        %v6806 = vmul.f32 -0.5, %v6641
        %v6807 = vadd.f32 %v6806, 1.0
        %v6808 = vmul.f32 %v6807, %v6641
        %v6809 = vand.u32 2147483647, %v6641
        %vm6810 = vcmp.lt.f32.partialorder %v6809, 0.0004427343
        %v6811 = vsel %vm6810, %v6808, %v6805
        %v6812 = vadd.f32 %v6643, 1.0
        %v6813 = vlog2.pop %v6812
        %v6814 = vmul.f32 %v6813, 0.6931472
        %v6815 = vmul.f32 -0.5, %v6643
        %v6816 = vadd.f32 %v6815, 1.0
        %v6817 = vmul.f32 %v6816, %v6643
        %v6818 = vand.u32 2147483647, %v6643
        %vm6819 = vcmp.lt.f32.partialorder %v6818, 0.0004427343
        %v6820 = vsel %vm6819, %v6817, %v6814
        %v6821 = vadd.f32 %v6645, 1.0
        %v6822 = vlog2.pop %v6821
        %v6823 = vmul.f32 %v6822, 0.6931472
        %v6824 = vmul.f32 -0.5, %v6645
        %v6825 = vadd.f32 %v6824, 1.0
        %v6826 = vmul.f32 %v6825, %v6645
        %v6827 = vand.u32 2147483647, %v6645
        %vm6828 = vcmp.lt.f32.partialorder %v6827, 0.0004427343
        %v6829 = vsel %vm6828, %v6826, %v6823
        %v6830 = vadd.f32 %v6647, 1.0
        %v6831 = vlog2.pop %v6830
        %v6832 = vmul.f32 %v6831, 0.6931472
        %v6833 = vmul.f32 -0.5, %v6647
        %v6834 = vadd.f32 %v6833, 1.0
        %v6835 = vmul.f32 %v6834, %v6647
        %v6836 = vand.u32 2147483647, %v6647
        %vm6837 = vcmp.lt.f32.partialorder %v6836, 0.0004427343
        %v6838 = vsel %vm6837, %v6835, %v6832
        %v6839 = vadd.f32 %v6649, 1.0
        %v6840 = vlog2.pop %v6839
        %v6841 = vmul.f32 %v6840, 0.6931472
        %v6842 = vmul.f32 -0.5, %v6649
        %v6843 = vadd.f32 %v6842, 1.0
        %v6844 = vmul.f32 %v6843, %v6649
        %v6845 = vand.u32 2147483647, %v6649
        %vm6846 = vcmp.lt.f32.partialorder %v6845, 0.0004427343
        %v6847 = vsel %vm6846, %v6844, %v6841
        %v6848 = vadd.f32 %v6651, 1.0
        %v6849 = vlog2.pop %v6848
        %v6850 = vmul.f32 %v6849, 0.6931472
        %v6851 = vmul.f32 -0.5, %v6651
        %v6852 = vadd.f32 %v6851, 1.0
        %v6853 = vmul.f32 %v6852, %v6651
        %v6854 = vand.u32 2147483647, %v6651
        %vm6855 = vcmp.lt.f32.partialorder %v6854, 0.0004427343
        %v6856 = vsel %vm6855, %v6853, %v6850
        %v6857 = vadd.f32 %v6653, 1.0
        %v6858 = vlog2.pop %v6857
        %v6859 = vmul.f32 %v6858, 0.6931472
        %v6860 = vmul.f32 -0.5, %v6653
        %v6861 = vadd.f32 %v6860, 1.0
        %v6862 = vmul.f32 %v6861, %v6653
        %v6863 = vand.u32 2147483647, %v6653
        %vm6864 = vcmp.lt.f32.partialorder %v6863, 0.0004427343
        %v6865 = vsel %vm6864, %v6862, %v6859
        %v6866 = vadd.f32 %v6655, 1.0
        %v6867 = vlog2.pop %v6866
        %v6868 = vmul.f32 %v6867, 0.6931472
        %v6869 = vmul.f32 -0.5, %v6655
        %v6870 = vadd.f32 %v6869, 1.0
        %v6871 = vmul.f32 %v6870, %v6655
        %v6872 = vand.u32 2147483647, %v6655
        %vm6873 = vcmp.lt.f32.partialorder %v6872, 0.0004427343
        %v6874 = vsel %vm6873, %v6871, %v6868
        %v6875 = vadd.f32 %v6657, 1.0
        %v6876 = vlog2.pop %v6875
        %v6877 = vmul.f32 %v6876, 0.6931472
        %v6878 = vmul.f32 -0.5, %v6657
        %v6879 = vadd.f32 %v6878, 1.0
        %v6880 = vmul.f32 %v6879, %v6657
        %v6881 = vand.u32 2147483647, %v6657
        %vm6882 = vcmp.lt.f32.partialorder %v6881, 0.0004427343
        %v6883 = vsel %vm6882, %v6880, %v6877
        %v6884 = vadd.f32 %v6659, 1.0
        %v6885 = vlog2.pop %v6884
        %v6886 = vmul.f32 %v6885, 0.6931472
        %v6887 = vmul.f32 -0.5, %v6659
        %v6888 = vadd.f32 %v6887, 1.0
        %v6889 = vmul.f32 %v6888, %v6659
        %v6890 = vand.u32 2147483647, %v6659
        %vm6891 = vcmp.lt.f32.partialorder %v6890, 0.0004427343
        %v6892 = vsel %vm6891, %v6889, %v6886
        %v6893 = vadd.f32 %v6661, 1.0
        %v6894 = vlog2.pop %v6893
        %v6895 = vmul.f32 %v6894, 0.6931472
        %v6896 = vmul.f32 -0.5, %v6661
        %v6897 = vadd.f32 %v6896, 1.0
        %v6898 = vmul.f32 %v6897, %v6661
        %v6899 = vand.u32 2147483647, %v6661
        %vm6900 = vcmp.lt.f32.partialorder %v6899, 0.0004427343
        %v6901 = vsel %vm6900, %v6898, %v6895
        %v6902 = vadd.f32 %v6663, 1.0
        %v6903 = vlog2.pop %v6902
        %v6904 = vmul.f32 %v6903, 0.6931472
        %v6905 = vmul.f32 -0.5, %v6663
        %v6906 = vadd.f32 %v6905, 1.0
        %v6907 = vmul.f32 %v6906, %v6663
        %v6908 = vand.u32 2147483647, %v6663
        %vm6909 = vcmp.lt.f32.partialorder %v6908, 0.0004427343
        %v6910 = vsel %vm6909, %v6907, %v6904
        %v6911 = vadd.f32 %v6665, 1.0
        %v6912 = vlog2.pop %v6911
        %v6913 = vmul.f32 %v6912, 0.6931472
        %v6914 = vmul.f32 -0.5, %v6665
        %v6915 = vadd.f32 %v6914, 1.0
        %v6916 = vmul.f32 %v6915, %v6665
        %v6917 = vand.u32 2147483647, %v6665
        %vm6918 = vcmp.lt.f32.partialorder %v6917, 0.0004427343
        %v6919 = vsel %vm6918, %v6916, %v6913
        %v6920 = vadd.f32 %v6667, 1.0
        %v6921 = vlog2.pop %v6920
        %v6922 = vmul.f32 %v6921, 0.6931472
        %v6923 = vmul.f32 -0.5, %v6667
        %v6924 = vadd.f32 %v6923, 1.0
        %v6925 = vmul.f32 %v6924, %v6667
        %v6926 = vand.u32 2147483647, %v6667
        %vm6927 = vcmp.lt.f32.partialorder %v6926, 0.0004427343
        %v6928 = vsel %vm6927, %v6925, %v6922
        %v6929 = vadd.f32 %v6669, 1.0
        %v6930 = vlog2.pop %v6929
        %v6931 = vmul.f32 %v6930, 0.6931472
        %v6932 = vmul.f32 -0.5, %v6669
        %v6933 = vadd.f32 %v6932, 1.0
        %v6934 = vmul.f32 %v6933, %v6669
        %v6935 = vand.u32 2147483647, %v6669
        %vm6936 = vcmp.lt.f32.partialorder %v6935, 0.0004427343
        %v6937 = vsel %vm6936, %v6934, %v6931
        %v6938 = vadd.f32 %v6671, 1.0
        %v6939 = vlog2.pop %v6938
        %v6940 = vmul.f32 %v6939, 0.6931472
        %v6941 = vmul.f32 -0.5, %v6671
        %v6942 = vadd.f32 %v6941, 1.0
        %v6943 = vmul.f32 %v6942, %v6671
        %v6944 = vand.u32 2147483647, %v6671
        %vm6945 = vcmp.lt.f32.partialorder %v6944, 0.0004427343
        %v6946 = vsel %vm6945, %v6943, %v6940
        %v6947 = vadd.f32 %v6673, 1.0
        %v6948 = vlog2.pop %v6947
        %v6949 = vmul.f32 %v6948, 0.6931472
        %v6950 = vmul.f32 -0.5, %v6673
        %v6951 = vadd.f32 %v6950, 1.0
        %v6952 = vmul.f32 %v6951, %v6673
        %v6953 = vand.u32 2147483647, %v6673
        %vm6954 = vcmp.lt.f32.partialorder %v6953, 0.0004427343
        %v6955 = vsel %vm6954, %v6952, %v6949
        %v6956 = vadd.f32 %v6675, 1.0
        %v6957 = vlog2.pop %v6956
        %v6958 = vmul.f32 %v6957, 0.6931472
        %v6959 = vmul.f32 -0.5, %v6675
        %v6960 = vadd.f32 %v6959, 1.0
        %v6961 = vmul.f32 %v6960, %v6675
        %v6962 = vand.u32 2147483647, %v6675
        %vm6963 = vcmp.lt.f32.partialorder %v6962, 0.0004427343
        %v6964 = vsel %vm6963, %v6961, %v6958
        %v6965 = vadd.f32 %v6677, 1.0
        %v6966 = vlog2.pop %v6965
        %v6967 = vmul.f32 %v6966, 0.6931472
        %v6968 = vmul.f32 -0.5, %v6677
        %v6969 = vadd.f32 %v6968, 1.0
        %v6970 = vmul.f32 %v6969, %v6677
        %v6971 = vand.u32 2147483647, %v6677
        %vm6972 = vcmp.lt.f32.partialorder %v6971, 0.0004427343
        %v6973 = vsel %vm6972, %v6970, %v6967
        %v6974 = vadd.f32 %v6679, 1.0
        %v6975 = vlog2.pop %v6974
        %v6976 = vmul.f32 %v6975, 0.6931472
        %v6977 = vmul.f32 -0.5, %v6679
        %v6978 = vadd.f32 %v6977, 1.0
        %v6979 = vmul.f32 %v6978, %v6679
        %v6980 = vand.u32 2147483647, %v6679
        %vm6981 = vcmp.lt.f32.partialorder %v6980, 0.0004427343
        %v6982 = vsel %vm6981, %v6979, %v6976
        %v6983 = vadd.f32 %v6681, 1.0
        %v6984 = vlog2.pop %v6983
        %v6985 = vmul.f32 %v6984, 0.6931472
        %v6986 = vmul.f32 -0.5, %v6681
        %v6987 = vadd.f32 %v6986, 1.0
        %v6988 = vmul.f32 %v6987, %v6681
        %v6989 = vand.u32 2147483647, %v6681
        %vm6990 = vcmp.lt.f32.partialorder %v6989, 0.0004427343
        %v6991 = vsel %vm6990, %v6988, %v6985
        %v6992 = vadd.f32 %v6683, 1.0
        %v6993 = vlog2.pop %v6992
        %v6994 = vmul.f32 %v6993, 0.6931472
        %v6995 = vmul.f32 -0.5, %v6683
        %v6996 = vadd.f32 %v6995, 1.0
        %v6997 = vmul.f32 %v6996, %v6683
        %v6998 = vand.u32 2147483647, %v6683
        %vm6999 = vcmp.lt.f32.partialorder %v6998, 0.0004427343
        %v7000 = vsel %vm6999, %v6997, %v6994
        %v7001 = vadd.f32 %v6685, 1.0
        %v7002 = vlog2.pop %v7001
        %v7003 = vmul.f32 %v7002, 0.6931472
        %v7004 = vmul.f32 -0.5, %v6685
        %v7005 = vadd.f32 %v7004, 1.0
        %v7006 = vmul.f32 %v7005, %v6685
        %v7007 = vand.u32 2147483647, %v6685
        %vm7008 = vcmp.lt.f32.partialorder %v7007, 0.0004427343
        %v7009 = vsel %vm7008, %v7006, %v7003
        %v7010 = vadd.f32 %v6687, 1.0
        %v7011 = vlog2.pop %v7010
        %v7012 = vmul.f32 %v7011, 0.6931472
        %v7013 = vmul.f32 -0.5, %v6687
        %v7014 = vadd.f32 %v7013, 1.0
        %v7015 = vmul.f32 %v7014, %v6687
        %v7016 = vand.u32 2147483647, %v6687
        %vm7017 = vcmp.lt.f32.partialorder %v7016, 0.0004427343
        %v7018 = vsel %vm7017, %v7015, %v7012
        %v7019 = vadd.f32 %v6689, 1.0
        %v7020 = vlog2.pop %v7019
        %v7021 = vmul.f32 %v7020, 0.6931472
        %v7022 = vmul.f32 -0.5, %v6689
        %v7023 = vadd.f32 %v7022, 1.0
        %v7024 = vmul.f32 %v7023, %v6689
        %v7025 = vand.u32 2147483647, %v6689
        %vm7026 = vcmp.lt.f32.partialorder %v7025, 0.0004427343
        %v7027 = vsel %vm7026, %v7024, %v7021
        %v7028 = vadd.f32 %v6691, 1.0
        %v7029 = vlog2.pop %v7028
        %v7030 = vmul.f32 %v7029, 0.6931472
        %v7031 = vmul.f32 -0.5, %v6691
        %v7032 = vadd.f32 %v7031, 1.0
        %v7033 = vmul.f32 %v7032, %v6691
        %v7034 = vand.u32 2147483647, %v6691
        %vm7035 = vcmp.lt.f32.partialorder %v7034, 0.0004427343
        %v7036 = vsel %vm7035, %v7033, %v7030
        %v7037 = vadd.f32 %v6693, 1.0
        %v7038 = vlog2.pop %v7037
        %v7039 = vmul.f32 %v7038, 0.6931472
        %v7040 = vmul.f32 -0.5, %v6693
        %v7041 = vadd.f32 %v7040, 1.0
        %v7042 = vmul.f32 %v7041, %v6693
        %v7043 = vand.u32 2147483647, %v6693
        %vm7044 = vcmp.lt.f32.partialorder %v7043, 0.0004427343
        %v7045 = vsel %vm7044, %v7042, %v7039
        %v7046 = vadd.f32 %v6695, 1.0
        %v7047 = vlog2.pop %v7046
        %v7048 = vmul.f32 %v7047, 0.6931472
        %v7049 = vmul.f32 -0.5, %v6695
        %v7050 = vadd.f32 %v7049, 1.0
        %v7051 = vmul.f32 %v7050, %v6695
        %v7052 = vand.u32 2147483647, %v6695
        %vm7053 = vcmp.lt.f32.partialorder %v7052, 0.0004427343
        %v7054 = vsel %vm7053, %v7051, %v7048
        %v7055 = vadd.f32 %v6697, 1.0
        %v7056 = vlog2.pop %v7055
        %v7057 = vmul.f32 %v7056, 0.6931472
        %v7058 = vmul.f32 -0.5, %v6697
        %v7059 = vadd.f32 %v7058, 1.0
        %v7060 = vmul.f32 %v7059, %v6697
        %v7061 = vand.u32 2147483647, %v6697
        %vm7062 = vcmp.lt.f32.partialorder %v7061, 0.0004427343
        %v7063 = vsel %vm7062, %v7060, %v7057
        %v7064 = vadd.f32 %v6699, 1.0
        %v7065 = vlog2.pop %v7064
        %v7066 = vmul.f32 %v7065, 0.6931472
        %v7067 = vmul.f32 -0.5, %v6699
        %v7068 = vadd.f32 %v7067, 1.0
        %v7069 = vmul.f32 %v7068, %v6699
        %v7070 = vand.u32 2147483647, %v6699
        %vm7071 = vcmp.lt.f32.partialorder %v7070, 0.0004427343
        %v7072 = vsel %vm7071, %v7069, %v7066
        %v7073 = vadd.f32 %v6701, 1.0
        %v7074 = vlog2.pop %v7073
        %v7075 = vmul.f32 %v7074, 0.6931472
        %v7076 = vmul.f32 -0.5, %v6701
        %v7077 = vadd.f32 %v7076, 1.0
        %v7078 = vmul.f32 %v7077, %v6701
        %v7079 = vand.u32 2147483647, %v6701
        %vm7080 = vcmp.lt.f32.partialorder %v7079, 0.0004427343
        %v7081 = vsel %vm7080, %v7078, %v7075
        %v7082 = vadd.f32 %v6703, 1.0
        %v7083 = vlog2.pop %v7082
        %v7084 = vmul.f32 %v7083, 0.6931472
        %v7085 = vmul.f32 -0.5, %v6703
        %v7086 = vadd.f32 %v7085, 1.0
        %v7087 = vmul.f32 %v7086, %v6703
        %v7088 = vand.u32 2147483647, %v6703
        %vm7089 = vcmp.lt.f32.partialorder %v7088, 0.0004427343
        %v7090 = vsel %vm7089, %v7087, %v7084
        %v7091 = vadd.f32 %v6705, 1.0
        %v7092 = vlog2.pop %v7091
        %v7093 = vmul.f32 %v7092, 0.6931472
        %v7094 = vmul.f32 -0.5, %v6705
        %v7095 = vadd.f32 %v7094, 1.0
        %v7096 = vmul.f32 %v7095, %v6705
        %v7097 = vand.u32 2147483647, %v6705
        %vm7098 = vcmp.lt.f32.partialorder %v7097, 0.0004427343
        %v7099 = vsel %vm7098, %v7096, %v7093
        %v7100 = vadd.f32 %v6707, 1.0
        %v7101 = vlog2.pop %v7100
        %v7102 = vmul.f32 %v7101, 0.6931472
        %v7103 = vmul.f32 -0.5, %v6707
        %v7104 = vadd.f32 %v7103, 1.0
        %v7105 = vmul.f32 %v7104, %v6707
        %v7106 = vand.u32 2147483647, %v6707
        %vm7107 = vcmp.lt.f32.partialorder %v7106, 0.0004427343
        %v7108 = vsel %vm7107, %v7105, %v7102
        %v7109 = vadd.f32 %v6709, 1.0
        %v7110 = vlog2.pop %v7109
        %v7111 = vmul.f32 %v7110, 0.6931472
        %v7112 = vmul.f32 -0.5, %v6709
        %v7113 = vadd.f32 %v7112, 1.0
        %v7114 = vmul.f32 %v7113, %v6709
        %v7115 = vand.u32 2147483647, %v6709
        %vm7116 = vcmp.lt.f32.partialorder %v7115, 0.0004427343
        %v7117 = vsel %vm7116, %v7114, %v7111
        %v7118 = vadd.f32 %v6711, 1.0
        %v7119 = vlog2.pop %v7118
        %v7120 = vmul.f32 %v7119, 0.6931472
        %v7121 = vmul.f32 -0.5, %v6711
        %v7122 = vadd.f32 %v7121, 1.0
        %v7123 = vmul.f32 %v7122, %v6711
        %v7124 = vand.u32 2147483647, %v6711
        %vm7125 = vcmp.lt.f32.partialorder %v7124, 0.0004427343
        %v7126 = vsel %vm7125, %v7123, %v7120
        %v7127 = vadd.f32 %v6713, 1.0
        %v7128 = vlog2.pop %v7127
        %v7129 = vmul.f32 %v7128, 0.6931472
        %v7130 = vmul.f32 -0.5, %v6713
        %v7131 = vadd.f32 %v7130, 1.0
        %v7132 = vmul.f32 %v7131, %v6713
        %v7133 = vand.u32 2147483647, %v6713
        %vm7134 = vcmp.lt.f32.partialorder %v7133, 0.0004427343
        %v7135 = vsel %vm7134, %v7132, %v7129
        %v7136 = vadd.f32 %v6715, 1.0
        %v7137 = vlog2.pop %v7136
        %v7138 = vmul.f32 %v7137, 0.6931472
        %v7139 = vmul.f32 -0.5, %v6715
        %v7140 = vadd.f32 %v7139, 1.0
        %v7141 = vmul.f32 %v7140, %v6715
        %v7142 = vand.u32 2147483647, %v6715
        %vm7143 = vcmp.lt.f32.partialorder %v7142, 0.0004427343
        %v7144 = vsel %vm7143, %v7141, %v7138
        %v7145 = vadd.f32 %v6717, 1.0
        %v7146 = vlog2.pop %v7145
        %v7147 = vmul.f32 %v7146, 0.6931472
        %v7148 = vmul.f32 -0.5, %v6717
        %v7149 = vadd.f32 %v7148, 1.0
        %v7150 = vmul.f32 %v7149, %v6717
        %v7151 = vand.u32 2147483647, %v6717
        %vm7152 = vcmp.lt.f32.partialorder %v7151, 0.0004427343
        %v7153 = vsel %vm7152, %v7150, %v7147
        %v7154 = vadd.f32 %v6719, 1.0
        %v7155 = vlog2.pop %v7154
        %v7156 = vmul.f32 %v7155, 0.6931472
        %v7157 = vmul.f32 -0.5, %v6719
        %v7158 = vadd.f32 %v7157, 1.0
        %v7159 = vmul.f32 %v7158, %v6719
        %v7160 = vand.u32 2147483647, %v6719
        %vm7161 = vcmp.lt.f32.partialorder %v7160, 0.0004427343
        %v7162 = vsel %vm7161, %v7159, %v7156
        %v7163 = vadd.f32 %v6721, 1.0
        %v7164 = vlog2.pop %v7163
        %v7165 = vmul.f32 %v7164, 0.6931472
        %v7166 = vmul.f32 -0.5, %v6721
        %v7167 = vadd.f32 %v7166, 1.0
        %v7168 = vmul.f32 %v7167, %v6721
        %v7169 = vand.u32 2147483647, %v6721
        %vm7170 = vcmp.lt.f32.partialorder %v7169, 0.0004427343
        %v7171 = vsel %vm7170, %v7168, %v7165
        %v7172 = vadd.f32 %v6723, 1.0
        %v7173 = vlog2.pop %v7172
        %v7174 = vmul.f32 %v7173, 0.6931472
        %v7175 = vmul.f32 -0.5, %v6723
        %v7176 = vadd.f32 %v7175, 1.0
        %v7177 = vmul.f32 %v7176, %v6723
        %v7178 = vand.u32 2147483647, %v6723
        %vm7179 = vcmp.lt.f32.partialorder %v7178, 0.0004427343
        %v7180 = vsel %vm7179, %v7177, %v7174
        %v7181 = vadd.f32 %v6725, 1.0
        %v7182 = vlog2.pop %v7181
        %v7183 = vmul.f32 %v7182, 0.6931472
        %v7184 = vmul.f32 -0.5, %v6725
        %v7185 = vadd.f32 %v7184, 1.0
        %v7186 = vmul.f32 %v7185, %v6725
        %v7187 = vand.u32 2147483647, %v6725
        %vm7188 = vcmp.lt.f32.partialorder %v7187, 0.0004427343
        %v7189 = vsel %vm7188, %v7186, %v7183
        %v7190 = vadd.f32 %v6727, 1.0
        %v7191 = vlog2.pop %v7190
        %v7192 = vmul.f32 %v7191, 0.6931472
        %v7193 = vmul.f32 -0.5, %v6727
        %v7194 = vadd.f32 %v7193, 1.0
        %v7195 = vmul.f32 %v7194, %v6727
        %v7196 = vand.u32 2147483647, %v6727
        %vm7197 = vcmp.lt.f32.partialorder %v7196, 0.0004427343
        %v7198 = vsel %vm7197, %v7195, %v7192
        %v7199 = vadd.f32 %v6729, 1.0
        %v7200 = vlog2.pop %v7199
        %v7201 = vmul.f32 %v7200, 0.6931472
        %v7202 = vmul.f32 -0.5, %v6729
        %v7203 = vadd.f32 %v7202, 1.0
        %v7204 = vmul.f32 %v7203, %v6729
        %v7205 = vand.u32 2147483647, %v6729
        %vm7206 = vcmp.lt.f32.partialorder %v7205, 0.0004427343
        %v7207 = vsel %vm7206, %v7204, %v7201
        %v7208 = vadd.f32 %v6731, 1.0
        %v7209 = vlog2.pop %v7208
        %v7210 = vmul.f32 %v7209, 0.6931472
        %v7211 = vmul.f32 -0.5, %v6731
        %v7212 = vadd.f32 %v7211, 1.0
        %v7213 = vmul.f32 %v7212, %v6731
        %v7214 = vand.u32 2147483647, %v6731
        %vm7215 = vcmp.lt.f32.partialorder %v7214, 0.0004427343
        %v7216 = vsel %vm7215, %v7213, %v7210
        %v7217 = vadd.f32 %v6733, 1.0
        %v7218 = vlog2.pop %v7217
        %v7219 = vmul.f32 %v7218, 0.6931472
        %v7220 = vmul.f32 -0.5, %v6733
        %v7221 = vadd.f32 %v7220, 1.0
        %v7222 = vmul.f32 %v7221, %v6733
        %v7223 = vand.u32 2147483647, %v6733
        %vm7224 = vcmp.lt.f32.partialorder %v7223, 0.0004427343
        %v7225 = vsel %vm7224, %v7222, %v7219
        %v7226 = vadd.f32 %v6735, 1.0
        %v7227 = vlog2.pop %v7226
        %v7228 = vmul.f32 %v7227, 0.6931472
        %v7229 = vmul.f32 -0.5, %v6735
        %v7230 = vadd.f32 %v7229, 1.0
        %v7231 = vmul.f32 %v7230, %v6735
        %v7232 = vand.u32 2147483647, %v6735
        %vm7233 = vcmp.lt.f32.partialorder %v7232, 0.0004427343
        %v7234 = vsel %vm7233, %v7231, %v7228
        %v7235 = vadd.f32 %v6737, 1.0
        %v7236 = vlog2.pop %v7235
        %v7237 = vmul.f32 %v7236, 0.6931472
        %v7238 = vmul.f32 -0.5, %v6737
        %v7239 = vadd.f32 %v7238, 1.0
        %v7240 = vmul.f32 %v7239, %v6737
        %v7241 = vand.u32 2147483647, %v6737
        %vm7242 = vcmp.lt.f32.partialorder %v7241, 0.0004427343
        %v7243 = vsel %vm7242, %v7240, %v7237
        %v7244 = vadd.f32 %v6739, 1.0
        %v7245 = vlog2.pop %v7244
        %v7246 = vmul.f32 %v7245, 0.6931472
        %v7247 = vmul.f32 -0.5, %v6739
        %v7248 = vadd.f32 %v7247, 1.0
        %v7249 = vmul.f32 %v7248, %v6739
        %v7250 = vand.u32 2147483647, %v6739
        %vm7251 = vcmp.lt.f32.partialorder %v7250, 0.0004427343
        %v7252 = vsel %vm7251, %v7249, %v7246
        %v7253 = vadd.f32 %v6741, 1.0
        %v7254 = vlog2.pop %v7253
        %v7255 = vmul.f32 %v7254, 0.6931472
        %v7256 = vmul.f32 -0.5, %v6741
        %v7257 = vadd.f32 %v7256, 1.0
        %v7258 = vmul.f32 %v7257, %v6741
        %v7259 = vand.u32 2147483647, %v6741
        %vm7260 = vcmp.lt.f32.partialorder %v7259, 0.0004427343
        %v7261 = vsel %vm7260, %v7258, %v7255
        %v7262 = vadd.f32 %v6743, 1.0
        %v7263 = vlog2.pop %v7262
        %v7264 = vmul.f32 %v7263, 0.6931472
        %v7265 = vmul.f32 -0.5, %v6743
        %v7266 = vadd.f32 %v7265, 1.0
        %v7267 = vmul.f32 %v7266, %v6743
        %v7268 = vand.u32 2147483647, %v6743
        %vm7269 = vcmp.lt.f32.partialorder %v7268, 0.0004427343
        %v7270 = vsel %vm7269, %v7267, %v7264
        %v7271 = vadd.f32 %v6745, 1.0
        %v7272 = vlog2.pop %v7271
        %v7273 = vmul.f32 %v7272, 0.6931472
        %v7274 = vmul.f32 -0.5, %v6745
        %v7275 = vadd.f32 %v7274, 1.0
        %v7276 = vmul.f32 %v7275, %v6745
        %v7277 = vand.u32 2147483647, %v6745
        %vm7278 = vcmp.lt.f32.partialorder %v7277, 0.0004427343
        %v7279 = vsel %vm7278, %v7276, %v7273
        %v7280 = vadd.f32 %v6747, 1.0
        %v7281 = vlog2.pop %v7280
        %v7282 = vmul.f32 %v7281, 0.6931472
        %v7283 = vmul.f32 -0.5, %v6747
        %v7284 = vadd.f32 %v7283, 1.0
        %v7285 = vmul.f32 %v7284, %v6747
        %v7286 = vand.u32 2147483647, %v6747
        %vm7287 = vcmp.lt.f32.partialorder %v7286, 0.0004427343
        %v7288 = vsel %vm7287, %v7285, %v7282
        %v7289 = vadd.f32 %v6749, 1.0
        %v7290 = vlog2.pop %v7289
        %v7291 = vmul.f32 %v7290, 0.6931472
        %v7292 = vmul.f32 -0.5, %v6749
        %v7293 = vadd.f32 %v7292, 1.0
        %v7294 = vmul.f32 %v7293, %v6749
        %v7295 = vand.u32 2147483647, %v6749
        %vm7296 = vcmp.lt.f32.partialorder %v7295, 0.0004427343
        %v7297 = vsel %vm7296, %v7294, %v7291
        %v7298 = vadd.f32 %v6751, 1.0
        %v7299 = vlog2.pop %v7298
        %v7300 = vmul.f32 %v7299, 0.6931472
        %v7301 = vmul.f32 -0.5, %v6751
        %v7302 = vadd.f32 %v7301, 1.0
        %v7303 = vmul.f32 %v7302, %v6751
        %v7304 = vand.u32 2147483647, %v6751
        %vm7305 = vcmp.lt.f32.partialorder %v7304, 0.0004427343
        %v7306 = vsel %vm7305, %v7303, %v7300
        %v7307 = vadd.f32 %v6753, 1.0
        %v7308 = vlog2.pop %v7307
        %v7309 = vmul.f32 %v7308, 0.6931472
        %v7310 = vmul.f32 -0.5, %v6753
        %v7311 = vadd.f32 %v7310, 1.0
        %v7312 = vmul.f32 %v7311, %v6753
        %v7313 = vand.u32 2147483647, %v6753
        %vm7314 = vcmp.lt.f32.partialorder %v7313, 0.0004427343
        %v7315 = vsel %vm7314, %v7312, %v7309
        %v7316 = vadd.f32 %v6755, 1.0
        %v7317 = vlog2.pop %v7316
        %v7318 = vmul.f32 %v7317, 0.6931472
        %v7319 = vmul.f32 -0.5, %v6755
        %v7320 = vadd.f32 %v7319, 1.0
        %v7321 = vmul.f32 %v7320, %v6755
        %v7322 = vand.u32 2147483647, %v6755
        %vm7323 = vcmp.lt.f32.partialorder %v7322, 0.0004427343
        %v7324 = vsel %vm7323, %v7321, %v7318
        %v7325 = vadd.f32 %v6757, 1.0
        %v7326 = vlog2.pop %v7325
        %v7327 = vmul.f32 %v7326, 0.6931472
        %v7328 = vmul.f32 -0.5, %v6757
        %v7329 = vadd.f32 %v7328, 1.0
        %v7330 = vmul.f32 %v7329, %v6757
        %v7331 = vand.u32 2147483647, %v6757
        %vm7332 = vcmp.lt.f32.partialorder %v7331, 0.0004427343
        %v7333 = vsel %vm7332, %v7330, %v7327
        %v7334 = vmul.f32 %v6766, 0.01
        %v7335 = vmul.f32 %v6775, 0.01
        %v7336 = vmul.f32 %v6784, 0.01
        %v7337 = vmul.f32 %v6793, 0.01
        %v7338 = vmul.f32 %v6802, 0.01
        %v7339 = vmul.f32 %v6811, 0.01
        %v7340 = vmul.f32 %v6820, 0.01
        %v7341 = vmul.f32 %v6829, 0.01
        %v7342 = vmul.f32 %v6838, 0.01
        %v7343 = vmul.f32 %v6847, 0.01
        %v7344 = vmul.f32 %v6856, 0.01
        %v7345 = vmul.f32 %v6865, 0.01
        %v7346 = vmul.f32 %v6874, 0.01
        %v7347 = vmul.f32 %v6883, 0.01
        %v7348 = vmul.f32 %v6892, 0.01
        %v7349 = vmul.f32 %v6901, 0.01
        %v7350 = vmul.f32 %v6910, 0.01
        %v7351 = vmul.f32 %v6919, 0.01
        %v7352 = vmul.f32 %v6928, 0.01
        %v7353 = vmul.f32 %v6937, 0.01
        %v7354 = vmul.f32 %v6946, 0.01
        %v7355 = vmul.f32 %v6955, 0.01
        %v7356 = vmul.f32 %v6964, 0.01
        %v7357 = vmul.f32 %v6973, 0.01
        %v7358 = vmul.f32 %v6982, 0.01
        %v7359 = vmul.f32 %v6991, 0.01
        %v7360 = vmul.f32 %v7000, 0.01
        %v7361 = vmul.f32 %v7009, 0.01
        %v7362 = vmul.f32 %v7018, 0.01
        %v7363 = vmul.f32 %v7027, 0.01
        %v7364 = vmul.f32 %v7036, 0.01
        %v7365 = vmul.f32 %v7045, 0.01
        %v7366 = vmul.f32 %v7054, 0.01
        %v7367 = vmul.f32 %v7063, 0.01
        %v7368 = vmul.f32 %v7072, 0.01
        %v7369 = vmul.f32 %v7081, 0.01
        %v7370 = vmul.f32 %v7090, 0.01
        %v7371 = vmul.f32 %v7099, 0.01
        %v7372 = vmul.f32 %v7108, 0.01
        %v7373 = vmul.f32 %v7117, 0.01
        %v7374 = vmul.f32 %v7126, 0.01
        %v7375 = vmul.f32 %v7135, 0.01
        %v7376 = vmul.f32 %v7144, 0.01
        %v7377 = vmul.f32 %v7153, 0.01
        %v7378 = vmul.f32 %v7162, 0.01
        %v7379 = vmul.f32 %v7171, 0.01
        %v7380 = vmul.f32 %v7180, 0.01
        %v7381 = vmul.f32 %v7189, 0.01
        %v7382 = vmul.f32 %v7198, 0.01
        %v7383 = vmul.f32 %v7207, 0.01
        %v7384 = vmul.f32 %v7216, 0.01
        %v7385 = vmul.f32 %v7225, 0.01
        %v7386 = vmul.f32 %v7234, 0.01
        %v7387 = vmul.f32 %v7243, 0.01
        %v7388 = vmul.f32 %v7252, 0.01
        %v7389 = vmul.f32 %v7261, 0.01
        %v7390 = vmul.f32 %v7270, 0.01
        %v7391 = vmul.f32 %v7279, 0.01
        %v7392 = vmul.f32 %v7288, 0.01
        %v7393 = vmul.f32 %v7297, 0.01
        %v7394 = vmul.f32 %v7306, 0.01
        %v7395 = vmul.f32 %v7315, 0.01
        %v7396 = vmul.f32 %v7324, 0.01
        %v7397 = vmul.f32 %v7333, 0.01
        %v7398 = vsel %vm6566, %v5857, %v7334
        %v7399 = vsel %vm6567, %v5859, %v7335
        %v7400 = vsel %vm6568, %v5946, %v7336
        %v7401 = vsel %vm6569, %v5948, %v7337
        %v7402 = vsel %vm6570, %v6035, %v7338
        %v7403 = vsel %vm6571, %v6037, %v7339
        %v7404 = vsel %vm6572, %v6124, %v7340
        %v7405 = vsel %vm6573, %v6126, %v7341
        %v7406 = vsel %vm6574, %v6213, %v7342
        %v7407 = vsel %vm6575, %v6215, %v7343
        %v7408 = vsel %vm6576, %v6302, %v7344
        %v7409 = vsel %vm6577, %v6304, %v7345
        %v7410 = vsel %vm6578, %v6391, %v7346
        %v7411 = vsel %vm6579, %v6393, %v7347
        %v7412 = vsel %vm6580, %v6480, %v7348
        %v7413 = vsel %vm6581, %v6482, %v7349
        %v7414 = vsel %vm6582, %v5863, %v7350
        %v7415 = vsel %vm6583, %v5865, %v7351
        %v7416 = vsel %vm6584, %v5952, %v7352
        %v7417 = vsel %vm6585, %v5954, %v7353
        %v7418 = vsel %vm6586, %v6041, %v7354
        %v7419 = vsel %vm6587, %v6043, %v7355
        %v7420 = vsel %vm6588, %v6130, %v7356
        %v7421 = vsel %vm6589, %v6132, %v7357
        %v7422 = vsel %vm6590, %v6219, %v7358
        %v7423 = vsel %vm6591, %v6221, %v7359
        %v7424 = vsel %vm6592, %v6308, %v7360
        %v7425 = vsel %vm6593, %v6310, %v7361
        %v7426 = vsel %vm6594, %v6397, %v7362
        %v7427 = vsel %vm6595, %v6399, %v7363
        %v7428 = vsel %vm6596, %v6486, %v7364
        %v7429 = vsel %vm6597, %v6488, %v7365
        %v7430 = vsel %vm6598, %v5869, %v7366
        %v7431 = vsel %vm6599, %v5871, %v7367
        %v7432 = vsel %vm6600, %v5958, %v7368
        %v7433 = vsel %vm6601, %v5960, %v7369
        %v7434 = vsel %vm6602, %v6047, %v7370
        %v7435 = vsel %vm6603, %v6049, %v7371
        %v7436 = vsel %vm6604, %v6136, %v7372
        %v7437 = vsel %vm6605, %v6138, %v7373
        %v7438 = vsel %vm6606, %v6225, %v7374
        %v7439 = vsel %vm6607, %v6227, %v7375
        %v7440 = vsel %vm6608, %v6314, %v7376
        %v7441 = vsel %vm6609, %v6316, %v7377
        %v7442 = vsel %vm6610, %v6403, %v7378
        %v7443 = vsel %vm6611, %v6405, %v7379
        %v7444 = vsel %vm6612, %v6492, %v7380
        %v7445 = vsel %vm6613, %v6494, %v7381
        %v7446 = vsel %vm6614, %v5875, %v7382
        %v7447 = vsel %vm6615, %v5877, %v7383
        %v7448 = vsel %vm6616, %v5964, %v7384
        %v7449 = vsel %vm6617, %v5966, %v7385
        %v7450 = vsel %vm6618, %v6053, %v7386
        %v7451 = vsel %vm6619, %v6055, %v7387
        %v7452 = vsel %vm6620, %v6142, %v7388
        %v7453 = vsel %vm6621, %v6144, %v7389
        %v7454 = vsel %vm6622, %v6231, %v7390
        %v7455 = vsel %vm6623, %v6233, %v7391
        %v7456 = vsel %vm6624, %v6320, %v7392
        %v7457 = vsel %vm6625, %v6322, %v7393
        %v7458 = vsel %vm6626, %v6409, %v7394
        %v7459 = vsel %vm6627, %v6411, %v7395
        %v7460 = vsel %vm6628, %v6498, %v7396
        %v7461 = vsel %vm6629, %v6500, %v7397
        %s7462 = scalar_lea.vmem [#allocation2], 96
        %v7463 = vld [vmem:[%s7462] sm:$0xff]
        %v7464 = vld [vmem:[%s7462 + $0x8] sm:$0xff]
        %v7465 = vld [vmem:[%s7462 + $0x10] sm:$0xff]
        %s7466 = scalar_lea.vmem %s3, 128
        %v7467 = vld [vmem:[%s7466] sm:$0xff]
        %v7468 = vld [vmem:[%s7466 + $0x8] sm:$0xff]
        %v7469 = vld [vmem:[%s7466 + $0x10] sm:$0xff]
        %7471 = vset.pattern.permute.xlu0 0
        %7472 = vperm.xlu0 %7471, %v7467
        %v7473 = vpop.permute.xlu0 %7472
        %7476 = vset.pattern.permute.xlu0 0
        %7477 = vperm.xlu0 %7476, %v7468
        %v7478 = vpop.permute.xlu0 %7477
        %7481 = vset.pattern.permute.xlu0 0
        %7482 = vperm.xlu0 %7481, %v7469
        %v7483 = vpop.permute.xlu0 %7482
        %v7486 = vsel %vm2285, %v7463, 0
        %v7489 = vsel %vm2285, %v7464, 0
        %v7492 = vsel %vm2285, %v7465, 0
        %7494 = vmatprep.subr.mxu0 %v7399
        %7495 = vmatpush1.msra.mxu0 %v7398
        %7496 = vmatprep.subr.mxu0 %v7415
        %7497 = vmatpush1.msra.mxu0 %v7414
        %7498 = vmatprep.subr.mxu0 %v7431
        %7499 = vmatpush1.msra.mxu0 %v7430
        %7500 = vmatprep.subr.mxu0 %v7447
        %7501 = vmatpush1.msra.mxu0 %v7446
        %7502 = vmatprep.subr.mxu0 0.0
        %7503 = vmatpush1.msra.mxu0 0.0
        %7504 = vmatprep.subr.mxu0 0.0
        %7505 = vmatpush1.msra.mxu0 0.0
        %7506 = vmatprep.subr.mxu0 0.0
        %7507 = vmatpush1.msra.mxu0 0.0
        %7508 = vmatprep.subr.mxu0 0.0
        %7509 = vmatpush1.msra.mxu0 0.0
        %7510 = vmatprep.subr.mxu0 0.0
        %7511 = vmatpush1.msra.mxu0 0.0
        %7512 = vmatprep.subr.mxu0 0.0
        %7513 = vmatpush1.msra.mxu0 0.0
        %7514 = vmatprep.subr.mxu0 0.0
        %7515 = vmatpush1.msra.mxu0 0.0
        %7516 = vmatprep.subr.mxu0 0.0
        %7517 = vmatpush1.msra.mxu0 0.0
        %7518 = vmatprep.subr.mxu0 0.0
        %7519 = vmatpush1.msra.mxu0 0.0
        %7520 = vmatprep.subr.mxu0 0.0
        %7521 = vmatpush1.msra.mxu0 0.0
        %7522 = vmatprep.subr.mxu0 0.0
        %7523 = vmatpush1.msra.mxu0 0.0
        %7524 = vmatprep.subr.mxu0 0.0
        %7525 = vmatpush1.msra.mxu0 0.0
        %7526 = vmatprep.subr.mxu0 0.0
        %7527 = vmatpush1.msra.mxu0 0.0
        %7528 = vmatprep.subr.mxu0 0.0
        %7529 = vmatpush1.msra.mxu0 0.0
        %7530 = vmatprep.subr.mxu0 0.0
        %7531 = vmatpush1.msra.mxu0 0.0
        %7532 = vmatprep.subr.mxu0 0.0
        %7533 = vmatpush1.msra.mxu0 0.0
        %7534 = vmatprep.subr.mxu0 0.0
        %7535 = vmatpush1.msra.mxu0 0.0
        %7536 = vmatprep.subr.mxu0 0.0
        %7537 = vmatpush1.msra.mxu0 0.0
        %7538 = vmatprep.subr.mxu0 0.0
        %7539 = vmatpush1.msra.mxu0 0.0
        %7540 = vmatprep.subr.mxu0 0.0
        %7541 = vmatpush1.msra.mxu0 0.0
        %7542 = vmatprep.subr.mxu0 0.0
        %7543 = vmatpush1.msra.mxu0 0.0
        %7544 = vmatprep.subr.mxu0 0.0
        %7545 = vmatpush1.msra.mxu0 0.0
        %7546 = vmatprep.subr.mxu0 0.0
        %7547 = vmatpush1.msra.mxu0 0.0
        %7548 = vmatprep.subr.mxu0 0.0
        %7549 = vmatpush1.msra.mxu0 0.0
        %7550 = vmatprep.subr.mxu0 0.0
        %7551 = vmatpush1.msra.mxu0 0.0
        %7552 = vmatprep.subr.mxu0 0.0
        %7553 = vmatpush1.msra.mxu0 0.0
        %7554 = vmatprep.subr.mxu0 0.0
        %7555 = vmatpush1.msra.mxu0 0.0
        %7556 = vmatprep.subr.mxu0 0.0
        %7557 = vmatpush1.msra.mxu0 0.0
        %7558 = vmatprep.mubr.f32.mxu0 0.0
        %7559 = vmatmul.mubr.f32.gmra.mrb[0].mxu0 %v7486
        %v7560 = vpop.f32.mrb[0].mxu0
        %v7561 = vadd.f32 %v7473, %v7560
        %v7562 = vpop.f32.mrb[0].mxu0
        %v7563 = vadd.f32 %v7473, %v7562
        %7564 = vmatprep.mubr.f32.mxu0 0.0
        %7565 = vmatmul.mubr.f32.gmra.mrb[0].mxu0 %v7489
        %v7566 = vpop.f32.mrb[0].mxu0
        %v7567 = vadd.f32 %v7478, %v7566
        %v7568 = vpop.f32.mrb[0].mxu0
        %v7569 = vadd.f32 %v7478, %v7568
        %7570 = vmatprep.mubr.f32.mxu0 0.0
        %7571 = vmatmul.mubr.f32.gmra.mrb[0].mxu0 %v7492
        %v7572 = vpop.f32.mrb[0].mxu0
        %v7573 = vadd.f32 %v7483, %v7572
        %v7574 = vpop.f32.mrb[0].mxu0
        %v7575 = vadd.f32 %v7483, %v7574
        %7576 = vdwg.mxu0
        %7577 = vmatprep.subr.mxu0 %v7401
        %7578 = vmatpush1.msra.mxu0 %v7400
        %7579 = vmatprep.subr.mxu0 %v7417
        %7580 = vmatpush1.msra.mxu0 %v7416
        %7581 = vmatprep.subr.mxu0 %v7433
        %7582 = vmatpush1.msra.mxu0 %v7432
        %7583 = vmatprep.subr.mxu0 %v7449
        %7584 = vmatpush1.msra.mxu0 %v7448
        %7585 = vmatprep.subr.mxu0 0.0
        %7586 = vmatpush1.msra.mxu0 0.0
        %7587 = vmatprep.subr.mxu0 0.0
        %7588 = vmatpush1.msra.mxu0 0.0
        %7589 = vmatprep.subr.mxu0 0.0
        %7590 = vmatpush1.msra.mxu0 0.0
        %7591 = vmatprep.subr.mxu0 0.0
        %7592 = vmatpush1.msra.mxu0 0.0
        %7593 = vmatprep.subr.mxu0 0.0
        %7594 = vmatpush1.msra.mxu0 0.0
        %7595 = vmatprep.subr.mxu0 0.0
        %7596 = vmatpush1.msra.mxu0 0.0
        %7597 = vmatprep.subr.mxu0 0.0
        %7598 = vmatpush1.msra.mxu0 0.0
        %7599 = vmatprep.subr.mxu0 0.0
        %7600 = vmatpush1.msra.mxu0 0.0
        %7601 = vmatprep.subr.mxu0 0.0
        %7602 = vmatpush1.msra.mxu0 0.0
        %7603 = vmatprep.subr.mxu0 0.0
        %7604 = vmatpush1.msra.mxu0 0.0
        %7605 = vmatprep.subr.mxu0 0.0
        %7606 = vmatpush1.msra.mxu0 0.0
        %7607 = vmatprep.subr.mxu0 0.0
        %7608 = vmatpush1.msra.mxu0 0.0
        %7609 = vmatprep.subr.mxu0 0.0
        %7610 = vmatpush1.msra.mxu0 0.0
        %7611 = vmatprep.subr.mxu0 0.0
        %7612 = vmatpush1.msra.mxu0 0.0
        %7613 = vmatprep.subr.mxu0 0.0
        %7614 = vmatpush1.msra.mxu0 0.0
        %7615 = vmatprep.subr.mxu0 0.0
        %7616 = vmatpush1.msra.mxu0 0.0
        %7617 = vmatprep.subr.mxu0 0.0
        %7618 = vmatpush1.msra.mxu0 0.0
        %7619 = vmatprep.subr.mxu0 0.0
        %7620 = vmatpush1.msra.mxu0 0.0
        %7621 = vmatprep.subr.mxu0 0.0
        %7622 = vmatpush1.msra.mxu0 0.0
        %7623 = vmatprep.subr.mxu0 0.0
        %7624 = vmatpush1.msra.mxu0 0.0
        %7625 = vmatprep.subr.mxu0 0.0
        %7626 = vmatpush1.msra.mxu0 0.0
        %7627 = vmatprep.subr.mxu0 0.0
        %7628 = vmatpush1.msra.mxu0 0.0
        %7629 = vmatprep.subr.mxu0 0.0
        %7630 = vmatpush1.msra.mxu0 0.0
        %7631 = vmatprep.subr.mxu0 0.0
        %7632 = vmatpush1.msra.mxu0 0.0
        %7633 = vmatprep.subr.mxu0 0.0
        %7634 = vmatpush1.msra.mxu0 0.0
        %7635 = vmatprep.subr.mxu0 0.0
        %7636 = vmatpush1.msra.mxu0 0.0
        %7637 = vmatprep.subr.mxu0 0.0
        %7638 = vmatpush1.msra.mxu0 0.0
        %7639 = vmatprep.subr.mxu0 0.0
        %7640 = vmatpush1.msra.mxu0 0.0
        %7641 = vmatprep.mubr.f32.mxu0 0.0
        %7642 = vmatmul.mubr.f32.gmra.mrb[0].mxu0 %v7486
        %v7643 = vpop.f32.mrb[0].mxu0
        %v7644 = vadd.f32 %v7473, %v7643
        %v7645 = vpop.f32.mrb[0].mxu0
        %v7646 = vadd.f32 %v7473, %v7645
        %7647 = vmatprep.mubr.f32.mxu0 0.0
        %7648 = vmatmul.mubr.f32.gmra.mrb[0].mxu0 %v7489
        %v7649 = vpop.f32.mrb[0].mxu0
        %v7650 = vadd.f32 %v7478, %v7649
        %v7651 = vpop.f32.mrb[0].mxu0
        %v7652 = vadd.f32 %v7478, %v7651
        %7653 = vmatprep.mubr.f32.mxu0 0.0
        %7654 = vmatmul.mubr.f32.gmra.mrb[0].mxu0 %v7492
        %v7655 = vpop.f32.mrb[0].mxu0
        %v7656 = vadd.f32 %v7483, %v7655
        %v7657 = vpop.f32.mrb[0].mxu0
        %v7658 = vadd.f32 %v7483, %v7657
        %7659 = vdwg.mxu0
        %7660 = vmatprep.subr.mxu0 %v7403
        %7661 = vmatpush1.msra.mxu0 %v7402
        %7662 = vmatprep.subr.mxu0 %v7419
        %7663 = vmatpush1.msra.mxu0 %v7418
        %7664 = vmatprep.subr.mxu0 %v7435
        %7665 = vmatpush1.msra.mxu0 %v7434
        %7666 = vmatprep.subr.mxu0 %v7451
        %7667 = vmatpush1.msra.mxu0 %v7450
        %7668 = vmatprep.subr.mxu0 0.0
        %7669 = vmatpush1.msra.mxu0 0.0
        %7670 = vmatprep.subr.mxu0 0.0
        %7671 = vmatpush1.msra.mxu0 0.0
        %7672 = vmatprep.subr.mxu0 0.0
        %7673 = vmatpush1.msra.mxu0 0.0
        %7674 = vmatprep.subr.mxu0 0.0
        %7675 = vmatpush1.msra.mxu0 0.0
        %7676 = vmatprep.subr.mxu0 0.0
        %7677 = vmatpush1.msra.mxu0 0.0
        %7678 = vmatprep.subr.mxu0 0.0
        %7679 = vmatpush1.msra.mxu0 0.0
        %7680 = vmatprep.subr.mxu0 0.0
        %7681 = vmatpush1.msra.mxu0 0.0
        %7682 = vmatprep.subr.mxu0 0.0
        %7683 = vmatpush1.msra.mxu0 0.0
        %7684 = vmatprep.subr.mxu0 0.0
        %7685 = vmatpush1.msra.mxu0 0.0
        %7686 = vmatprep.subr.mxu0 0.0
        %7687 = vmatpush1.msra.mxu0 0.0
        %7688 = vmatprep.subr.mxu0 0.0
        %7689 = vmatpush1.msra.mxu0 0.0
        %7690 = vmatprep.subr.mxu0 0.0
        %7691 = vmatpush1.msra.mxu0 0.0
        %7692 = vmatprep.subr.mxu0 0.0
        %7693 = vmatpush1.msra.mxu0 0.0
        %7694 = vmatprep.subr.mxu0 0.0
        %7695 = vmatpush1.msra.mxu0 0.0
        %7696 = vmatprep.subr.mxu0 0.0
        %7697 = vmatpush1.msra.mxu0 0.0
        %7698 = vmatprep.subr.mxu0 0.0
        %7699 = vmatpush1.msra.mxu0 0.0
        %7700 = vmatprep.subr.mxu0 0.0
        %7701 = vmatpush1.msra.mxu0 0.0
        %7702 = vmatprep.subr.mxu0 0.0
        %7703 = vmatpush1.msra.mxu0 0.0
        %7704 = vmatprep.subr.mxu0 0.0
        %7705 = vmatpush1.msra.mxu0 0.0
        %7706 = vmatprep.subr.mxu0 0.0
        %7707 = vmatpush1.msra.mxu0 0.0
        %7708 = vmatprep.subr.mxu0 0.0
        %7709 = vmatpush1.msra.mxu0 0.0
        %7710 = vmatprep.subr.mxu0 0.0
        %7711 = vmatpush1.msra.mxu0 0.0
        %7712 = vmatprep.subr.mxu0 0.0
        %7713 = vmatpush1.msra.mxu0 0.0
        %7714 = vmatprep.subr.mxu0 0.0
        %7715 = vmatpush1.msra.mxu0 0.0
        %7716 = vmatprep.subr.mxu0 0.0
        %7717 = vmatpush1.msra.mxu0 0.0
        %7718 = vmatprep.subr.mxu0 0.0
        %7719 = vmatpush1.msra.mxu0 0.0
        %7720 = vmatprep.subr.mxu0 0.0
        %7721 = vmatpush1.msra.mxu0 0.0
        %7722 = vmatprep.subr.mxu0 0.0
        %7723 = vmatpush1.msra.mxu0 0.0
        %7724 = vmatprep.mubr.f32.mxu0 0.0
        %7725 = vmatmul.mubr.f32.gmra.mrb[0].mxu0 %v7486
        %v7726 = vpop.f32.mrb[0].mxu0
        %v7727 = vadd.f32 %v7473, %v7726
        %v7728 = vpop.f32.mrb[0].mxu0
        %v7729 = vadd.f32 %v7473, %v7728
        %7730 = vmatprep.mubr.f32.mxu0 0.0
        %7731 = vmatmul.mubr.f32.gmra.mrb[0].mxu0 %v7489
        %v7732 = vpop.f32.mrb[0].mxu0
        %v7733 = vadd.f32 %v7478, %v7732
        %v7734 = vpop.f32.mrb[0].mxu0
        %v7735 = vadd.f32 %v7478, %v7734
        %7736 = vmatprep.mubr.f32.mxu0 0.0
        %7737 = vmatmul.mubr.f32.gmra.mrb[0].mxu0 %v7492
        %v7738 = vpop.f32.mrb[0].mxu0
        %v7739 = vadd.f32 %v7483, %v7738
        %v7740 = vpop.f32.mrb[0].mxu0
        %v7741 = vadd.f32 %v7483, %v7740
        %7742 = vdwg.mxu0
        %7743 = vmatprep.subr.mxu0 %v7405
        %7744 = vmatpush1.msra.mxu0 %v7404
        %7745 = vmatprep.subr.mxu0 %v7421
        %7746 = vmatpush1.msra.mxu0 %v7420
        %7747 = vmatprep.subr.mxu0 %v7437
        %7748 = vmatpush1.msra.mxu0 %v7436
        %7749 = vmatprep.subr.mxu0 %v7453
        %7750 = vmatpush1.msra.mxu0 %v7452
        %7751 = vmatprep.subr.mxu0 0.0
        %7752 = vmatpush1.msra.mxu0 0.0
        %7753 = vmatprep.subr.mxu0 0.0
        %7754 = vmatpush1.msra.mxu0 0.0
        %7755 = vmatprep.subr.mxu0 0.0
        %7756 = vmatpush1.msra.mxu0 0.0
        %7757 = vmatprep.subr.mxu0 0.0
        %7758 = vmatpush1.msra.mxu0 0.0
        %7759 = vmatprep.subr.mxu0 0.0
        %7760 = vmatpush1.msra.mxu0 0.0
        %7761 = vmatprep.subr.mxu0 0.0
        %7762 = vmatpush1.msra.mxu0 0.0
        %7763 = vmatprep.subr.mxu0 0.0
        %7764 = vmatpush1.msra.mxu0 0.0
        %7765 = vmatprep.subr.mxu0 0.0
        %7766 = vmatpush1.msra.mxu0 0.0
        %7767 = vmatprep.subr.mxu0 0.0
        %7768 = vmatpush1.msra.mxu0 0.0
        %7769 = vmatprep.subr.mxu0 0.0
        %7770 = vmatpush1.msra.mxu0 0.0
        %7771 = vmatprep.subr.mxu0 0.0
        %7772 = vmatpush1.msra.mxu0 0.0
        %7773 = vmatprep.subr.mxu0 0.0
        %7774 = vmatpush1.msra.mxu0 0.0
        %7775 = vmatprep.subr.mxu0 0.0
        %7776 = vmatpush1.msra.mxu0 0.0
        %7777 = vmatprep.subr.mxu0 0.0
        %7778 = vmatpush1.msra.mxu0 0.0
        %7779 = vmatprep.subr.mxu0 0.0
        %7780 = vmatpush1.msra.mxu0 0.0
        %7781 = vmatprep.subr.mxu0 0.0
        %7782 = vmatpush1.msra.mxu0 0.0
        %7783 = vmatprep.subr.mxu0 0.0
        %7784 = vmatpush1.msra.mxu0 0.0
        %7785 = vmatprep.subr.mxu0 0.0
        %7786 = vmatpush1.msra.mxu0 0.0
        %7787 = vmatprep.subr.mxu0 0.0
        %7788 = vmatpush1.msra.mxu0 0.0
        %7789 = vmatprep.subr.mxu0 0.0
        %7790 = vmatpush1.msra.mxu0 0.0
        %7791 = vmatprep.subr.mxu0 0.0
        %7792 = vmatpush1.msra.mxu0 0.0
        %7793 = vmatprep.subr.mxu0 0.0
        %7794 = vmatpush1.msra.mxu0 0.0
        %7795 = vmatprep.subr.mxu0 0.0
        %7796 = vmatpush1.msra.mxu0 0.0
        %7797 = vmatprep.subr.mxu0 0.0
        %7798 = vmatpush1.msra.mxu0 0.0
        %7799 = vmatprep.subr.mxu0 0.0
        %7800 = vmatpush1.msra.mxu0 0.0
        %7801 = vmatprep.subr.mxu0 0.0
        %7802 = vmatpush1.msra.mxu0 0.0
        %7803 = vmatprep.subr.mxu0 0.0
        %7804 = vmatpush1.msra.mxu0 0.0
        %7805 = vmatprep.subr.mxu0 0.0
        %7806 = vmatpush1.msra.mxu0 0.0
        %7807 = vmatprep.mubr.f32.mxu0 0.0
        %7808 = vmatmul.mubr.f32.gmra.mrb[0].mxu0 %v7486
        %v7809 = vpop.f32.mrb[0].mxu0
        %v7810 = vadd.f32 %v7473, %v7809
        %v7811 = vpop.f32.mrb[0].mxu0
        %v7812 = vadd.f32 %v7473, %v7811
        %7813 = vmatprep.mubr.f32.mxu0 0.0
        %7814 = vmatmul.mubr.f32.gmra.mrb[0].mxu0 %v7489
        %v7815 = vpop.f32.mrb[0].mxu0
        %v7816 = vadd.f32 %v7478, %v7815
        %v7817 = vpop.f32.mrb[0].mxu0
        %v7818 = vadd.f32 %v7478, %v7817
        %7819 = vmatprep.mubr.f32.mxu0 0.0
        %7820 = vmatmul.mubr.f32.gmra.mrb[0].mxu0 %v7492
        %v7821 = vpop.f32.mrb[0].mxu0
        %v7822 = vadd.f32 %v7483, %v7821
        %v7823 = vpop.f32.mrb[0].mxu0
        %v7824 = vadd.f32 %v7483, %v7823
        %7825 = vdwg.mxu0
        %7826 = vmatprep.subr.mxu0 %v7407
        %7827 = vmatpush1.msra.mxu0 %v7406
        %7828 = vmatprep.subr.mxu0 %v7423
        %7829 = vmatpush1.msra.mxu0 %v7422
        %7830 = vmatprep.subr.mxu0 %v7439
        %7831 = vmatpush1.msra.mxu0 %v7438
        %7832 = vmatprep.subr.mxu0 %v7455
        %7833 = vmatpush1.msra.mxu0 %v7454
        %7834 = vmatprep.subr.mxu0 0.0
        %7835 = vmatpush1.msra.mxu0 0.0
        %7836 = vmatprep.subr.mxu0 0.0
        %7837 = vmatpush1.msra.mxu0 0.0
        %7838 = vmatprep.subr.mxu0 0.0
        %7839 = vmatpush1.msra.mxu0 0.0
        %7840 = vmatprep.subr.mxu0 0.0
        %7841 = vmatpush1.msra.mxu0 0.0
        %7842 = vmatprep.subr.mxu0 0.0
        %7843 = vmatpush1.msra.mxu0 0.0
        %7844 = vmatprep.subr.mxu0 0.0
        %7845 = vmatpush1.msra.mxu0 0.0
        %7846 = vmatprep.subr.mxu0 0.0
        %7847 = vmatpush1.msra.mxu0 0.0
        %7848 = vmatprep.subr.mxu0 0.0
        %7849 = vmatpush1.msra.mxu0 0.0
        %7850 = vmatprep.subr.mxu0 0.0
        %7851 = vmatpush1.msra.mxu0 0.0
        %7852 = vmatprep.subr.mxu0 0.0
        %7853 = vmatpush1.msra.mxu0 0.0
        %7854 = vmatprep.subr.mxu0 0.0
        %7855 = vmatpush1.msra.mxu0 0.0
        %7856 = vmatprep.subr.mxu0 0.0
        %7857 = vmatpush1.msra.mxu0 0.0
        %7858 = vmatprep.subr.mxu0 0.0
        %7859 = vmatpush1.msra.mxu0 0.0
        %7860 = vmatprep.subr.mxu0 0.0
        %7861 = vmatpush1.msra.mxu0 0.0
        %7862 = vmatprep.subr.mxu0 0.0
        %7863 = vmatpush1.msra.mxu0 0.0
        %7864 = vmatprep.subr.mxu0 0.0
        %7865 = vmatpush1.msra.mxu0 0.0
        %7866 = vmatprep.subr.mxu0 0.0
        %7867 = vmatpush1.msra.mxu0 0.0
        %7868 = vmatprep.subr.mxu0 0.0
        %7869 = vmatpush1.msra.mxu0 0.0
        %7870 = vmatprep.subr.mxu0 0.0
        %7871 = vmatpush1.msra.mxu0 0.0
        %7872 = vmatprep.subr.mxu0 0.0
        %7873 = vmatpush1.msra.mxu0 0.0
        %7874 = vmatprep.subr.mxu0 0.0
        %7875 = vmatpush1.msra.mxu0 0.0
        %7876 = vmatprep.subr.mxu0 0.0
        %7877 = vmatpush1.msra.mxu0 0.0
        %7878 = vmatprep.subr.mxu0 0.0
        %7879 = vmatpush1.msra.mxu0 0.0
        %7880 = vmatprep.subr.mxu0 0.0
        %7881 = vmatpush1.msra.mxu0 0.0
        %7882 = vmatprep.subr.mxu0 0.0
        %7883 = vmatpush1.msra.mxu0 0.0
        %7884 = vmatprep.subr.mxu0 0.0
        %7885 = vmatpush1.msra.mxu0 0.0
        %7886 = vmatprep.subr.mxu0 0.0
        %7887 = vmatpush1.msra.mxu0 0.0
        %7888 = vmatprep.subr.mxu0 0.0
        %7889 = vmatpush1.msra.mxu0 0.0
        %7890 = vmatprep.mubr.f32.mxu0 0.0
        %7891 = vmatmul.mubr.f32.gmra.mrb[0].mxu0 %v7486
        %v7892 = vpop.f32.mrb[0].mxu0
        %v7893 = vadd.f32 %v7473, %v7892
        %v7894 = vpop.f32.mrb[0].mxu0
        %v7895 = vadd.f32 %v7473, %v7894
        %7896 = vmatprep.mubr.f32.mxu0 0.0
        %7897 = vmatmul.mubr.f32.gmra.mrb[0].mxu0 %v7489
        %v7898 = vpop.f32.mrb[0].mxu0
        %v7899 = vadd.f32 %v7478, %v7898
        %v7900 = vpop.f32.mrb[0].mxu0
        %v7901 = vadd.f32 %v7478, %v7900
        %7902 = vmatprep.mubr.f32.mxu0 0.0
        %7903 = vmatmul.mubr.f32.gmra.mrb[0].mxu0 %v7492
        %v7904 = vpop.f32.mrb[0].mxu0
        %v7905 = vadd.f32 %v7483, %v7904
        %v7906 = vpop.f32.mrb[0].mxu0
        %v7907 = vadd.f32 %v7483, %v7906
        %7908 = vdwg.mxu0
        %7909 = vmatprep.subr.mxu0 %v7409
        %7910 = vmatpush1.msra.mxu0 %v7408
        %7911 = vmatprep.subr.mxu0 %v7425
        %7912 = vmatpush1.msra.mxu0 %v7424
        %7913 = vmatprep.subr.mxu0 %v7441
        %7914 = vmatpush1.msra.mxu0 %v7440
        %7915 = vmatprep.subr.mxu0 %v7457
        %7916 = vmatpush1.msra.mxu0 %v7456
        %7917 = vmatprep.subr.mxu0 0.0
        %7918 = vmatpush1.msra.mxu0 0.0
        %7919 = vmatprep.subr.mxu0 0.0
        %7920 = vmatpush1.msra.mxu0 0.0
        %7921 = vmatprep.subr.mxu0 0.0
        %7922 = vmatpush1.msra.mxu0 0.0
        %7923 = vmatprep.subr.mxu0 0.0
        %7924 = vmatpush1.msra.mxu0 0.0
        %7925 = vmatprep.subr.mxu0 0.0
        %7926 = vmatpush1.msra.mxu0 0.0
        %7927 = vmatprep.subr.mxu0 0.0
        %7928 = vmatpush1.msra.mxu0 0.0
        %7929 = vmatprep.subr.mxu0 0.0
        %7930 = vmatpush1.msra.mxu0 0.0
        %7931 = vmatprep.subr.mxu0 0.0
        %7932 = vmatpush1.msra.mxu0 0.0
        %7933 = vmatprep.subr.mxu0 0.0
        %7934 = vmatpush1.msra.mxu0 0.0
        %7935 = vmatprep.subr.mxu0 0.0
        %7936 = vmatpush1.msra.mxu0 0.0
        %7937 = vmatprep.subr.mxu0 0.0
        %7938 = vmatpush1.msra.mxu0 0.0
        %7939 = vmatprep.subr.mxu0 0.0
        %7940 = vmatpush1.msra.mxu0 0.0
        %7941 = vmatprep.subr.mxu0 0.0
        %7942 = vmatpush1.msra.mxu0 0.0
        %7943 = vmatprep.subr.mxu0 0.0
        %7944 = vmatpush1.msra.mxu0 0.0
        %7945 = vmatprep.subr.mxu0 0.0
        %7946 = vmatpush1.msra.mxu0 0.0
        %7947 = vmatprep.subr.mxu0 0.0
        %7948 = vmatpush1.msra.mxu0 0.0
        %7949 = vmatprep.subr.mxu0 0.0
        %7950 = vmatpush1.msra.mxu0 0.0
        %7951 = vmatprep.subr.mxu0 0.0
        %7952 = vmatpush1.msra.mxu0 0.0
        %7953 = vmatprep.subr.mxu0 0.0
        %7954 = vmatpush1.msra.mxu0 0.0
        %7955 = vmatprep.subr.mxu0 0.0
        %7956 = vmatpush1.msra.mxu0 0.0
        %7957 = vmatprep.subr.mxu0 0.0
        %7958 = vmatpush1.msra.mxu0 0.0
        %7959 = vmatprep.subr.mxu0 0.0
        %7960 = vmatpush1.msra.mxu0 0.0
        %7961 = vmatprep.subr.mxu0 0.0
        %7962 = vmatpush1.msra.mxu0 0.0
        %7963 = vmatprep.subr.mxu0 0.0
        %7964 = vmatpush1.msra.mxu0 0.0
        %7965 = vmatprep.subr.mxu0 0.0
        %7966 = vmatpush1.msra.mxu0 0.0
        %7967 = vmatprep.subr.mxu0 0.0
        %7968 = vmatpush1.msra.mxu0 0.0
        %7969 = vmatprep.subr.mxu0 0.0
        %7970 = vmatpush1.msra.mxu0 0.0
        %7971 = vmatprep.subr.mxu0 0.0
        %7972 = vmatpush1.msra.mxu0 0.0
        %7973 = vmatprep.mubr.f32.mxu0 0.0
        %7974 = vmatmul.mubr.f32.gmra.mrb[0].mxu0 %v7486
        %v7975 = vpop.f32.mrb[0].mxu0
        %v7976 = vadd.f32 %v7473, %v7975
        %v7977 = vpop.f32.mrb[0].mxu0
        %v7978 = vadd.f32 %v7473, %v7977
        %7979 = vmatprep.mubr.f32.mxu0 0.0
        %7980 = vmatmul.mubr.f32.gmra.mrb[0].mxu0 %v7489
        %v7981 = vpop.f32.mrb[0].mxu0
        %v7982 = vadd.f32 %v7478, %v7981
        %v7983 = vpop.f32.mrb[0].mxu0
        %v7984 = vadd.f32 %v7478, %v7983
        %7985 = vmatprep.mubr.f32.mxu0 0.0
        %7986 = vmatmul.mubr.f32.gmra.mrb[0].mxu0 %v7492
        %v7987 = vpop.f32.mrb[0].mxu0
        %v7988 = vadd.f32 %v7483, %v7987
        %v7989 = vpop.f32.mrb[0].mxu0
        %v7990 = vadd.f32 %v7483, %v7989
        %7991 = vdwg.mxu0
        %7992 = vmatprep.subr.mxu0 %v7411
        %7993 = vmatpush1.msra.mxu0 %v7410
        %7994 = vmatprep.subr.mxu0 %v7427
        %7995 = vmatpush1.msra.mxu0 %v7426
        %7996 = vmatprep.subr.mxu0 %v7443
        %7997 = vmatpush1.msra.mxu0 %v7442
        %7998 = vmatprep.subr.mxu0 %v7459
        %7999 = vmatpush1.msra.mxu0 %v7458
        %8000 = vmatprep.subr.mxu0 0.0
        %8001 = vmatpush1.msra.mxu0 0.0
        %8002 = vmatprep.subr.mxu0 0.0
        %8003 = vmatpush1.msra.mxu0 0.0
        %8004 = vmatprep.subr.mxu0 0.0
        %8005 = vmatpush1.msra.mxu0 0.0
        %8006 = vmatprep.subr.mxu0 0.0
        %8007 = vmatpush1.msra.mxu0 0.0
        %8008 = vmatprep.subr.mxu0 0.0
        %8009 = vmatpush1.msra.mxu0 0.0
        %8010 = vmatprep.subr.mxu0 0.0
        %8011 = vmatpush1.msra.mxu0 0.0
        %8012 = vmatprep.subr.mxu0 0.0
        %8013 = vmatpush1.msra.mxu0 0.0
        %8014 = vmatprep.subr.mxu0 0.0
        %8015 = vmatpush1.msra.mxu0 0.0
        %8016 = vmatprep.subr.mxu0 0.0
        %8017 = vmatpush1.msra.mxu0 0.0
        %8018 = vmatprep.subr.mxu0 0.0
        %8019 = vmatpush1.msra.mxu0 0.0
        %8020 = vmatprep.subr.mxu0 0.0
        %8021 = vmatpush1.msra.mxu0 0.0
        %8022 = vmatprep.subr.mxu0 0.0
        %8023 = vmatpush1.msra.mxu0 0.0
        %8024 = vmatprep.subr.mxu0 0.0
        %8025 = vmatpush1.msra.mxu0 0.0
        %8026 = vmatprep.subr.mxu0 0.0
        %8027 = vmatpush1.msra.mxu0 0.0
        %8028 = vmatprep.subr.mxu0 0.0
        %8029 = vmatpush1.msra.mxu0 0.0
        %8030 = vmatprep.subr.mxu0 0.0
        %8031 = vmatpush1.msra.mxu0 0.0
        %8032 = vmatprep.subr.mxu0 0.0
        %8033 = vmatpush1.msra.mxu0 0.0
        %8034 = vmatprep.subr.mxu0 0.0
        %8035 = vmatpush1.msra.mxu0 0.0
        %8036 = vmatprep.subr.mxu0 0.0
        %8037 = vmatpush1.msra.mxu0 0.0
        %8038 = vmatprep.subr.mxu0 0.0
        %8039 = vmatpush1.msra.mxu0 0.0
        %8040 = vmatprep.subr.mxu0 0.0
        %8041 = vmatpush1.msra.mxu0 0.0
        %8042 = vmatprep.subr.mxu0 0.0
        %8043 = vmatpush1.msra.mxu0 0.0
        %8044 = vmatprep.subr.mxu0 0.0
        %8045 = vmatpush1.msra.mxu0 0.0
        %8046 = vmatprep.subr.mxu0 0.0
        %8047 = vmatpush1.msra.mxu0 0.0
        %8048 = vmatprep.subr.mxu0 0.0
        %8049 = vmatpush1.msra.mxu0 0.0
        %8050 = vmatprep.subr.mxu0 0.0
        %8051 = vmatpush1.msra.mxu0 0.0
        %8052 = vmatprep.subr.mxu0 0.0
        %8053 = vmatpush1.msra.mxu0 0.0
        %8054 = vmatprep.subr.mxu0 0.0
        %8055 = vmatpush1.msra.mxu0 0.0
        %8056 = vmatprep.mubr.f32.mxu0 0.0
        %8057 = vmatmul.mubr.f32.gmra.mrb[0].mxu0 %v7486
        %v8058 = vpop.f32.mrb[0].mxu0
        %v8059 = vadd.f32 %v7473, %v8058
        %v8060 = vpop.f32.mrb[0].mxu0
        %v8061 = vadd.f32 %v7473, %v8060
        %8062 = vmatprep.mubr.f32.mxu0 0.0
        %8063 = vmatmul.mubr.f32.gmra.mrb[0].mxu0 %v7489
        %v8064 = vpop.f32.mrb[0].mxu0
        %v8065 = vadd.f32 %v7478, %v8064
        %v8066 = vpop.f32.mrb[0].mxu0
        %v8067 = vadd.f32 %v7478, %v8066
        %8068 = vmatprep.mubr.f32.mxu0 0.0
        %8069 = vmatmul.mubr.f32.gmra.mrb[0].mxu0 %v7492
        %v8070 = vpop.f32.mrb[0].mxu0
        %v8071 = vadd.f32 %v7483, %v8070
        %v8072 = vpop.f32.mrb[0].mxu0
        %v8073 = vadd.f32 %v7483, %v8072
        %8074 = vdwg.mxu0
        %8075 = vmatprep.subr.mxu0 %v7413
        %8076 = vmatpush1.msra.mxu0 %v7412
        %8077 = vmatprep.subr.mxu0 %v7429
        %8078 = vmatpush1.msra.mxu0 %v7428
        %8079 = vmatprep.subr.mxu0 %v7445
        %8080 = vmatpush1.msra.mxu0 %v7444
        %8081 = vmatprep.subr.mxu0 %v7461
        %8082 = vmatpush1.msra.mxu0 %v7460
        %8083 = vmatprep.subr.mxu0 0.0
        %8084 = vmatpush1.msra.mxu0 0.0
        %8085 = vmatprep.subr.mxu0 0.0
        %8086 = vmatpush1.msra.mxu0 0.0
        %8087 = vmatprep.subr.mxu0 0.0
        %8088 = vmatpush1.msra.mxu0 0.0
        %8089 = vmatprep.subr.mxu0 0.0
        %8090 = vmatpush1.msra.mxu0 0.0
        %8091 = vmatprep.subr.mxu0 0.0
        %8092 = vmatpush1.msra.mxu0 0.0
        %8093 = vmatprep.subr.mxu0 0.0
        %8094 = vmatpush1.msra.mxu0 0.0
        %8095 = vmatprep.subr.mxu0 0.0
        %8096 = vmatpush1.msra.mxu0 0.0
        %8097 = vmatprep.subr.mxu0 0.0
        %8098 = vmatpush1.msra.mxu0 0.0
        %8099 = vmatprep.subr.mxu0 0.0
        %8100 = vmatpush1.msra.mxu0 0.0
        %8101 = vmatprep.subr.mxu0 0.0
        %8102 = vmatpush1.msra.mxu0 0.0
        %8103 = vmatprep.subr.mxu0 0.0
        %8104 = vmatpush1.msra.mxu0 0.0
        %8105 = vmatprep.subr.mxu0 0.0
        %8106 = vmatpush1.msra.mxu0 0.0
        %8107 = vmatprep.subr.mxu0 0.0
        %8108 = vmatpush1.msra.mxu0 0.0
        %8109 = vmatprep.subr.mxu0 0.0
        %8110 = vmatpush1.msra.mxu0 0.0
        %8111 = vmatprep.subr.mxu0 0.0
        %8112 = vmatpush1.msra.mxu0 0.0
        %8113 = vmatprep.subr.mxu0 0.0
        %8114 = vmatpush1.msra.mxu0 0.0
        %8115 = vmatprep.subr.mxu0 0.0
        %8116 = vmatpush1.msra.mxu0 0.0
        %8117 = vmatprep.subr.mxu0 0.0
        %8118 = vmatpush1.msra.mxu0 0.0
        %8119 = vmatprep.subr.mxu0 0.0
        %8120 = vmatpush1.msra.mxu0 0.0
        %8121 = vmatprep.subr.mxu0 0.0
        %8122 = vmatpush1.msra.mxu0 0.0
        %8123 = vmatprep.subr.mxu0 0.0
        %8124 = vmatpush1.msra.mxu0 0.0
        %8125 = vmatprep.subr.mxu0 0.0
        %8126 = vmatpush1.msra.mxu0 0.0
        %8127 = vmatprep.subr.mxu0 0.0
        %8128 = vmatpush1.msra.mxu0 0.0
        %8129 = vmatprep.subr.mxu0 0.0
        %8130 = vmatpush1.msra.mxu0 0.0
        %8131 = vmatprep.subr.mxu0 0.0
        %8132 = vmatpush1.msra.mxu0 0.0
        %8133 = vmatprep.subr.mxu0 0.0
        %8134 = vmatpush1.msra.mxu0 0.0
        %8135 = vmatprep.subr.mxu0 0.0
        %8136 = vmatpush1.msra.mxu0 0.0
        %8137 = vmatprep.subr.mxu0 0.0
        %8138 = vmatpush1.msra.mxu0 0.0
        %8139 = vmatprep.mubr.f32.mxu0 0.0
        %8140 = vmatmul.mubr.f32.gmra.mrb[0].mxu0 %v7486
        %v8141 = vpop.f32.mrb[0].mxu0
        %v8142 = vadd.f32 %v7473, %v8141
        %v8143 = vpop.f32.mrb[0].mxu0
        %v8144 = vadd.f32 %v7473, %v8143
        %8145 = vmatprep.mubr.f32.mxu0 0.0
        %8146 = vmatmul.mubr.f32.gmra.mrb[0].mxu0 %v7489
        %v8147 = vpop.f32.mrb[0].mxu0
        %v8148 = vadd.f32 %v7478, %v8147
        %v8149 = vpop.f32.mrb[0].mxu0
        %v8150 = vadd.f32 %v7478, %v8149
        %8151 = vmatprep.mubr.f32.mxu0 0.0
        %8152 = vmatmul.mubr.f32.gmra.mrb[0].mxu0 %v7492
        %v8153 = vpop.f32.mrb[0].mxu0
        %v8154 = vadd.f32 %v7483, %v8153
        %v8155 = vpop.f32.mrb[0].mxu0
        %v8156 = vadd.f32 %v7483, %v8155
        %8157 = vdwg.mxu0
        %8158 = vst [vmem:[%s206] sm:$0xff] %v7561
        %8159 = vst [vmem:[%s206 + $0x8] sm:$0xff] %v7563
        %8160 = vst [vmem:[%s206 + $0x10] sm:$0xff] %v7644
        %8161 = vst [vmem:[%s206 + $0x18] sm:$0xff] %v7646
        %8162 = vst [vmem:[%s206 + $0x20] sm:$0xff] %v7727
        %8163 = vst [vmem:[%s206 + $0x28] sm:$0xff] %v7729
        %8164 = vst [vmem:[%s206 + $0x30] sm:$0xff] %v7810
        %8165 = vst [vmem:[%s206 + $0x38] sm:$0xff] %v7812
        %8166 = vst [vmem:[%s206 + $0x40] sm:$0xff] %v7893
        %8167 = vst [vmem:[%s206 + $0x48] sm:$0xff] %v7895
        %8168 = vst [vmem:[%s206 + $0x50] sm:$0xff] %v7976
        %8169 = vst [vmem:[%s206 + $0x58] sm:$0xff] %v7978
        %8170 = vst [vmem:[%s206 + $0x60] sm:$0xff] %v8059
        %8171 = vst [vmem:[%s206 + $0x68] sm:$0xff] %v8061
        %8172 = vst [vmem:[%s206 + $0x70] sm:$0xff] %v8142
        %8173 = vst [vmem:[%s206 + $0x78] sm:$0xff] %v8144
        %8174 = vst [vmem:[%s206 + $0x80] sm:$0xff] %v7567
        %8175 = vst [vmem:[%s206 + $0x88] sm:$0xff] %v7569
        %8176 = vst [vmem:[%s206 + $0x90] sm:$0xff] %v7650
        %8177 = vst [vmem:[%s206 + $0x98] sm:$0xff] %v7652
        %8178 = vst [vmem:[%s206 + $0xa0] sm:$0xff] %v7733
        %8179 = vst [vmem:[%s206 + $0xa8] sm:$0xff] %v7735
        %8180 = vst [vmem:[%s206 + $0xb0] sm:$0xff] %v7816
        %8181 = vst [vmem:[%s206 + $0xb8] sm:$0xff] %v7818
        %8182 = vst [vmem:[%s206 + $0xc0] sm:$0xff] %v7899
        %8183 = vst [vmem:[%s206 + $0xc8] sm:$0xff] %v7901
        %8184 = vst [vmem:[%s206 + $0xd0] sm:$0xff] %v7982
        %8185 = vst [vmem:[%s206 + $0xd8] sm:$0xff] %v7984
        %8186 = vst [vmem:[%s206 + $0xe0] sm:$0xff] %v8065
        %8187 = vst [vmem:[%s206 + $0xe8] sm:$0xff] %v8067
        %8188 = vst [vmem:[%s206 + $0xf0] sm:$0xff] %v8148
        %8189 = vst [vmem:[%s206 + $0xf8] sm:$0xff] %v8150
        %8190 = vst [vmem:[%s206 + $0x100] sm:$0x1] %v7573
        %8191 = vst [vmem:[%s206 + $0x108] sm:$0x1] %v7575
        %8192 = vst [vmem:[%s206 + $0x110] sm:$0x1] %v7656
        %8193 = vst [vmem:[%s206 + $0x118] sm:$0x1] %v7658
        %8194 = vst [vmem:[%s206 + $0x120] sm:$0x1] %v7739
        %8195 = vst [vmem:[%s206 + $0x128] sm:$0x1] %v7741
        %8196 = vst [vmem:[%s206 + $0x130] sm:$0x1] %v7822
        %8197 = vst [vmem:[%s206 + $0x138] sm:$0x1] %v7824
        %8198 = vst [vmem:[%s206 + $0x140] sm:$0x1] %v7905
        %8199 = vst [vmem:[%s206 + $0x148] sm:$0x1] %v7907
        %8200 = vst [vmem:[%s206 + $0x150] sm:$0x1] %v7988
        %8201 = vst [vmem:[%s206 + $0x158] sm:$0x1] %v7990
        %8202 = vst [vmem:[%s206 + $0x160] sm:$0x1] %v8071
        %8203 = vst [vmem:[%s206 + $0x168] sm:$0x1] %v8073
        %8204 = vst [vmem:[%s206 + $0x170] sm:$0x1] %v8154
        %8205 = vst [vmem:[%s206 + $0x178] sm:$0x1] %v8156
        %s8206 = sand.u32 %s116, 1
        %s8207 = scalar_lea.sflag [#allocation4], %s8206
        %s8208 = sand.u32 %s116, 1
        %s8209 = smul.addr %s8208, 384
        %s8210 = scalar_lea.vmem [#allocation5], %s8209
        // Predicated region
        $region41: #{implicit_network_forward.1} parent=35 // pred_check
          %p8211 = pneg %p126
        $region42: #{implicit_network_forward.1} parent=35 // pred_check_branch
          %8213 = sbr.rel (%p8211) target = $region44
        $region43: #{implicit_network_forward.1} parent=35 // pred_region
          %s8214 = smul.u32 16, %s19
          %s8216 = ssub.s32 6144, 6144
          %8217 = vsyncadd %s8207, %s8216
          %s8218 = smul.addr %s8214, 128
          %s8219 = scalar_lea.hbm %s4, %s8218
          %s8220 = sshll.u32 %s8210, 4
          %s8221 = int_to_ptr.vmem [resolvable:$true] %s8220
          %8226 = dma.vmem_to_hbm [thread:$0]  %s8221, 6144, %s8219, %s8207, 2048, 4096, 128
        $region44: #{implicit_network_forward.1} parent=35 // pred_fallthru
          _
      $region36: #{implicit_network_forward.1} parent=5 // pred_fallthru
        _
      %p8227 = scmp.le.s32.totalorder 2, %s14
      // Predicated region
      $region45: #{implicit_network_forward.1} parent=5 // pred_check
        %p8228 = pneg %p8227
      $region46: #{implicit_network_forward.1} parent=5 // pred_check_branch
        %8230 = sbr.rel (%p8228) target = $region48
      $region47: #{implicit_network_forward.1} parent=5 // pred_region
        %s8231 = ssub.s32 %s14, 2
        // Predicated region
        $region49: #{implicit_network_forward.1} parent=47 // pred_check
          %p8232 = pneg %p132
        $region50: #{implicit_network_forward.1} parent=47 // pred_check_branch
          %8234 = sbr.rel (%p8232) target = $region52
        $region51: #{implicit_network_forward.1} parent=47 // pred_region
          %s8235 = sand.u32 %s117, 1
          %s8236 = scalar_lea.sflag [#allocation4], %s8235
          %s8237 = sand.u32 %s117, 1
          %s8238 = smul.addr %s8237, 384
          %s8239 = scalar_lea.vmem [#allocation5], %s8238
          %8240 = dma.done %s8236, 6144
        $region52: #{implicit_network_forward.1} parent=47 // pred_fallthru
          _
      $region48: #{implicit_network_forward.1} parent=5 // pred_fallthru
        _
    $region6: #{implicit_network_forward.1} parent=1 // loop_footer
      %s18 = sadd.s32 1, %s14
    $region7: #{implicit_network_forward.1} parent=1 // loop_footer_branch
      %13 = sbr.rel target = $region3
    $region8: #{implicit_network_forward.1} parent=1 // loop_exit
      _
    %8241 = vsyncpa [#allocation3], 1
    %s8242 = scalar_lea.sflag [#allocation3], 1
    %8243 = vsyncpa %s8242, 1
    %8244 = vsyncpa [#allocation4], 1
    %s8245 = scalar_lea.sflag [#allocation4], 1
    %8246 = vsyncpa %s8245, 1

</llo_original>
